<compile_context>
chip_gen: v5e
topology: v5e:2x2
jax: 0.10.0
libtpu: 0.0.40
codegen_flags: <defaults>
</compile_context>

<pallas_src>
import numpy as np
import jax
import jax.numpy as jnp
from jax.experimental import pallas as pl
from jax.experimental.pallas import tpu as pltpu


# ----------------------------------------------------------------------------
# Host-side (trace-time) weight packing: conv -> banded matmul weights.
# ----------------------------------------------------------------------------
def _row_select(kh, stride, ho, hi):
    """S[i, oh, h] = 1 iff h == stride*oh + i  (tap-row selection)."""
    s = np.zeros((kh, ho, hi), np.float32)
    for i in range(kh):
        for oh in range(ho):
            s[i, oh, stride * oh + i] = 1.0
    return s


def _band_weight(w, wi, stride, wo):
    """w: (cout, cin, kh, kw) -> B: (kh, wi*cin, wo*cout) banded weights.

    B[i][wcol*cin + c, ow*cout + o] = w[o, c, i, wcol - stride*ow] inside the band.
    """
    w = np.asarray(w, np.float32)
    cout, cin, kh, kw = w.shape
    b = np.zeros((kh, wi * cin, wo * cout), np.float32)
    for i in range(kh):
        for ow in range(wo):
            for j in range(kw):
                col = stride * ow + j
                b[i, col * cin:(col + 1) * cin, ow * cout:(ow + 1) * cout] = w[:, :, i, j].T
    return b


def init_raw_params(key, num_channels, num_actions):
    """Synthetic parameters in PyTorch layouts (conv: OIHW, fc: in x out)."""
    ks = jax.random.split(key, 12)
    f32 = jnp.float32
    nrm = lambda k, shape, s: s * jax.random.normal(k, shape, f32)
    return {
        "w1": nrm(ks[0], (32, num_channels, 8, 8), 0.05), "b1": nrm(ks[1], (32,), 0.05),
        "w2": nrm(ks[2], (64, 32, 4, 4), 0.05),           "b2": nrm(ks[3], (64,), 0.05),
        "w3": nrm(ks[4], (64, 64, 3, 3), 0.05),           "b3": nrm(ks[5], (64,), 0.05),
        # fc1 rows indexed in PyTorch x.view(-1, 1024) order, i.e. (c, h, w)
        "wfc1": nrm(ks[6], (1024, 512), 0.03),            "bfc1": nrm(ks[7], (512,), 0.05),
        "wfc2": nrm(ks[8], (512, num_actions), 0.05),     "bfc2": nrm(ks[9], (num_actions,), 0.05),
        "wfc3": nrm(ks[10], (512, 1), 0.05),              "bfc3": nrm(ks[11], (1,), 0.05),
    }


def pack_params(raw):
    bf16, f32 = jnp.bfloat16, jnp.float32

    # Conv layers as banded matmuls on (H, W*C) slabs.
    w1b = _band_weight(raw["w1"], 64, 4, 15)      # (8, 256, 480)
    w2b = _band_weight(raw["w2"], 15, 2, 6)       # (4, 480, 384)
    w3b = _band_weight(raw["w3"], 6, 1, 4)        # (3, 384, 256)
    s1 = _row_select(8, 4, 15, 64)                # (8, 15, 64)
    s2 = _row_select(4, 2, 6, 15)                 # (4, 6, 15)
    s3 = _row_select(3, 1, 4, 6)                  # (3, 4, 6)
    sfc = _row_select(4, 1, 1, 4)                 # (4, 1, 4): picks row r of the 4x256 slab

    # fc1 rows: PyTorch flatten order (c, h, w) -> slab order (h, (w, c)).
    wfc1 = np.asarray(raw["wfc1"], np.float32)
    perm = np.arange(1024).reshape(64, 4, 4).transpose(1, 2, 0).reshape(-1)
    wfc1p = wfc1[perm].reshape(4, 256, 512)

    # Merged policy/value head.
    w23 = jnp.concatenate([raw["wfc2"], raw["wfc3"]], axis=1)                # (512, A+1)
    b23 = jnp.concatenate([raw["bfc2"], raw["bfc3"]]).reshape(1, -1)         # (1, A+1)

    tile_bias = lambda b, wo: np.tile(np.asarray(b, np.float32), wo).reshape(1, -1)

    return {
        "s1": jnp.asarray(s1, bf16),  "w1b": jnp.asarray(w1b, bf16),
        "b1s": jnp.asarray(tile_bias(raw["b1"], 15), f32),
        "s2": jnp.asarray(s2, bf16),  "w2b": jnp.asarray(w2b, bf16),
        "b2s": jnp.asarray(tile_bias(raw["b2"], 6), f32),
        "s3": jnp.asarray(s3, bf16),  "w3b": jnp.asarray(w3b, bf16),
        "b3s": jnp.asarray(tile_bias(raw["b3"], 4), f32),
        "sfc": jnp.asarray(sfc, bf16),
        "wfc1p": jnp.asarray(wfc1p, bf16),
        "bfc1": jnp.asarray(raw["bfc1"], f32).reshape(1, -1),
        "w23": w23.astype(f32), "b23": b23.astype(f32),
    }


# ----------------------------------------------------------------------------
# The fused Pallas kernel (one sample per grid step, weights VMEM-resident).
# ----------------------------------------------------------------------------
def a2c_fused_kernel(x_ref, s1_ref, w1_ref, b1_ref, s2_ref, w2_ref, b2_ref,
                     s3_ref, w3_ref, b3_ref, sfc_ref, wfc1_ref, bfc1_ref,
                     w23_ref, b23_ref, out_ref):
    f32, bf16 = jnp.float32, jnp.bfloat16

    def band_conv(x_slab, s_ref, w_ref, b_ref, taps):
        acc = None
        for i in range(taps):
            rows = jnp.dot(s_ref[i], x_slab, preferred_element_type=f32).astype(bf16)
            term = jnp.dot(rows, w_ref[i], preferred_element_type=f32)
            acc = term if acc is None else acc + term
        return jnp.maximum(acc + b_ref[...], 0.0).astype(bf16)

    x = x_ref[0]                                        # (64, 256) bf16
    y1 = band_conv(x, s1_ref, w1_ref, b1_ref, 8)        # (15, 480) conv 4->32, k8 s4
    y2 = band_conv(y1, s2_ref, w2_ref, b2_ref, 4)       # (6, 384)  conv 32->64, k4 s2
    y3 = band_conv(y2, s3_ref, w3_ref, b3_ref, 3)       # (4, 256)  conv 64->64, k3 s1

    # fc1 + ReLU: feature row r of y3 hits weight block r (f32 accumulation).
    h = None
    for r in range(4):
        row = jnp.dot(sfc_ref[r], y3, preferred_element_type=f32).astype(bf16)   # (1, 256)
        term = jnp.dot(row, wfc1_ref[r], preferred_element_type=f32)             # (1, 512)
        h = term if h is None else h + term
    h = jnp.maximum(h + bfc1_ref[...], 0.0)             # (1, 512) f32

    # Merged fc2/fc3 head: one (512, A+1) matmul; softmax over the first A lanes,
    # value lane A is taken from the raw f32 logits (pre-normalization).
    logits = jnp.dot(h, w23_ref[...], preferred_element_type=f32) + b23_ref[...]  # (1, A+1)
    num_act = logits.shape[-1] - 1
    lane = jax.lax.broadcasted_iota(jnp.int32, logits.shape, 1)
    is_pi = lane < num_act
    masked = jnp.where(is_pi, logits, -1e30)
    m = jnp.max(masked, axis=-1, keepdims=True)
    e = jnp.exp(masked - m)
    pi = e / jnp.sum(e, axis=-1, keepdims=True)
    out_ref[0] = jnp.where(is_pi, pi, logits)           # lanes [0, A) = pi, lane A = value


def a2c_cnn_forward(x, kp):
    """x: (N, C_in, 64, 64) NCHW float32 -> (pi flat (N*A,), v (N,))."""
    n, c_in = x.shape[0], x.shape[1]
    num_actions = kp["w23"].shape[1] - 1

    # Free layout plumbing: NCHW -> lane-dense row slab (N, 64, 64*C) in bf16.
    xs = jnp.transpose(x, (0, 2, 3, 1)).reshape(n, 64, 64 * c_in).astype(jnp.bfloat16)

    def w_spec(arr):
        r = arr.ndim
        return pl.BlockSpec(arr.shape, lambda i, _r=r: (0,) * _r)   # resident weights

    out = pl.pallas_call(
        a2c_fused_kernel,
        out_shape=jax.ShapeDtypeStruct((n, 1, num_actions + 1), jnp.float32),
        grid=(n,),
        in_specs=[
            pl.BlockSpec((1, 64, 64 * c_in), lambda i: (i, 0, 0)),
            w_spec(kp["s1"]), w_spec(kp["w1b"]), w_spec(kp["b1s"]),
            w_spec(kp["s2"]), w_spec(kp["w2b"]), w_spec(kp["b2s"]),
            w_spec(kp["s3"]), w_spec(kp["w3b"]), w_spec(kp["b3s"]),
            w_spec(kp["sfc"]), w_spec(kp["wfc1p"]), w_spec(kp["bfc1"]),
            w_spec(kp["w23"]), w_spec(kp["b23"]),
        ],
        out_specs=pl.BlockSpec((1, 1, num_actions + 1), lambda i: (i, 0, 0)),
        compiler_params=pltpu.CompilerParams(
            dimension_semantics=("parallel",),           # batch across v7x's 2 TCs
            vmem_limit_bytes=32 * 1024 * 1024),
    )(xs, kp["s1"], kp["w1b"], kp["b1s"], kp["s2"], kp["w2b"], kp["b2s"],
      kp["s3"], kp["w3b"], kp["b3s"], kp["sfc"], kp["wfc1p"], kp["bfc1"],
      kp["w23"], kp["b23"])

    pi = out[:, 0, :num_actions].reshape(-1)
    v = out[:, 0, num_actions].reshape(-1)
    return pi, v


# ----------------------------------------------------------------------------
# Pure-JAX reference (same bf16-rounded weights) for a correctness check.
# ----------------------------------------------------------------------------
def a2c_cnn_reference(x, raw):
    f32 = jnp.float32
    rb = lambda w: w.astype(jnp.bfloat16).astype(f32)   # match kernel weight rounding
    y = x.astype(jnp.bfloat16).astype(f32)
    for w, b, s in ((raw["w1"], raw["b1"], 4), (raw["w2"], raw["b2"], 2),
                    (raw["w3"], raw["b3"], 1)):
        y = jax.lax.conv_general_dilated(y, rb(w), (s, s), "VALID",
                                         dimension_numbers=("NCHW", "OIHW", "NCHW"))
        y = jax.nn.relu(y + b.reshape(1, -1, 1, 1))
    feat = y.reshape(y.shape[0], -1)                     # (N, 1024), PyTorch (c,h,w) order
    h = jax.nn.relu(feat @ rb(raw["wfc1"]) + raw["bfc1"])
    pi = jax.nn.softmax(h @ raw["wfc2"] + raw["bfc2"], axis=1)
    v = h @ raw["wfc3"] + raw["bfc3"]
    return pi.reshape(-1), v.reshape(-1)


if __name__ == "__main__":
    key = jax.random.PRNGKey(0)
    kx, kparam = jax.random.split(key)

    # The module's fc1 (fcin=1024) requires a 64x64 input.
    N, C_IN, RES, NUM_ACTIONS = 2, 4, 64, 6

    x = jax.random.normal(kx, (N, C_IN, RES, RES), jnp.float32)
    raw = init_raw_params(kparam, C_IN, NUM_ACTIONS)
    packed = pack_params(raw)

    fwd = jax.jit(a2c_cnn_forward)
    pi, v = jax.block_until_ready(fwd(x, packed))

    assert pi.shape == (N * NUM_ACTIONS,), pi.shape
    assert v.shape == (N,), v.shape
    assert bool(jnp.all(jnp.isfinite(pi))) and bool(jnp.all(jnp.isfinite(v)))
    assert bool(jnp.allclose(pi.reshape(N, NUM_ACTIONS).sum(-1), 1.0, atol=1e-4))

    pi_ref, v_ref = a2c_cnn_reference(x, raw)
    assert bool(jnp.allclose(pi, pi_ref, atol=5e-2)), (pi, pi_ref)
    assert bool(jnp.allclose(v, v_ref, atol=5e-2, rtol=5e-2)), (v, v_ref)

    print("KERNEL_OK")
</pallas_src>

<mosaic_0001>
module attributes {stable_mosaic.version = 11 : i64} {
  func.func @a2c_fused_kernel(%arg0: i32, %arg1: memref<1x64x256xbf16, #tpu.memory_space<vmem>>, %arg2: memref<8x15x64xbf16, #tpu.memory_space<vmem>>, %arg3: memref<8x256x480xbf16, #tpu.memory_space<vmem>>, %arg4: memref<1x480xf32, #tpu.memory_space<vmem>>, %arg5: memref<4x6x15xbf16, #tpu.memory_space<vmem>>, %arg6: memref<4x480x384xbf16, #tpu.memory_space<vmem>>, %arg7: memref<1x384xf32, #tpu.memory_space<vmem>>, %arg8: memref<3x4x6xbf16, #tpu.memory_space<vmem>>, %arg9: memref<3x384x256xbf16, #tpu.memory_space<vmem>>, %arg10: memref<1x256xf32, #tpu.memory_space<vmem>>, %arg11: memref<4x1x4xbf16, #tpu.memory_space<vmem>>, %arg12: memref<4x256x512xbf16, #tpu.memory_space<vmem>>, %arg13: memref<1x512xf32, #tpu.memory_space<vmem>>, %arg14: memref<512x7xf32, #tpu.memory_space<vmem>>, %arg15: memref<1x7xf32, #tpu.memory_space<vmem>>, %arg16: memref<1x1x7xf32, #tpu.memory_space<vmem>>) attributes {dimension_semantics = [#tpu.dimension_semantics<parallel>], iteration_bounds = array<i64: 2>, scalar_prefetch = 0 : i64, scratch_operands = 0 : i64, tpu.core_type = #tpu.core_type<tc>, window_params = [{transform_indices = @transform_0, window_bounds = array<i64: 1, 64, 256>}, {pipeline_mode = #tpu.pipeline_mode<synchronous>, transform_indices = @transform_1, window_bounds = array<i64: 8, 15, 64>}, {pipeline_mode = #tpu.pipeline_mode<synchronous>, transform_indices = @transform_2, window_bounds = array<i64: 8, 256, 480>}, {pipeline_mode = #tpu.pipeline_mode<synchronous>, transform_indices = @transform_3, window_bounds = array<i64: 1, 480>}, {pipeline_mode = #tpu.pipeline_mode<synchronous>, transform_indices = @transform_4, window_bounds = array<i64: 4, 6, 15>}, {pipeline_mode = #tpu.pipeline_mode<synchronous>, transform_indices = @transform_5, window_bounds = array<i64: 4, 480, 384>}, {pipeline_mode = #tpu.pipeline_mode<synchronous>, transform_indices = @transform_6, window_bounds = array<i64: 1, 384>}, {pipeline_mode = #tpu.pipeline_mode<synchronous>, transform_indices = @transform_7, window_bounds = array<i64: 3, 4, 6>}, {pipeline_mode = #tpu.pipeline_mode<synchronous>, transform_indices = @transform_8, window_bounds = array<i64: 3, 384, 256>}, {pipeline_mode = #tpu.pipeline_mode<synchronous>, transform_indices = @transform_9, window_bounds = array<i64: 1, 256>}, {pipeline_mode = #tpu.pipeline_mode<synchronous>, transform_indices = @transform_10, window_bounds = array<i64: 4, 1, 4>}, {pipeline_mode = #tpu.pipeline_mode<synchronous>, transform_indices = @transform_11, window_bounds = array<i64: 4, 256, 512>}, {pipeline_mode = #tpu.pipeline_mode<synchronous>, transform_indices = @transform_12, window_bounds = array<i64: 1, 512>}, {pipeline_mode = #tpu.pipeline_mode<synchronous>, transform_indices = @transform_13, window_bounds = array<i64: 512, 7>}, {pipeline_mode = #tpu.pipeline_mode<synchronous>, transform_indices = @transform_14, window_bounds = array<i64: 1, 7>}, {transform_indices = @transform_15, window_bounds = array<i64: 1, 1, 7>}]} {
    %c0 = arith.constant 0 : index
    %c0_0 = arith.constant 0 : index
    %c0_1 = arith.constant 0 : index
    %0 = vector.load %arg1[%c0, %c0_0, %c0_1] : memref<1x64x256xbf16, #tpu.memory_space<vmem>>, vector<1x64x256xbf16>
    %1 = vector.shape_cast %0 : vector<1x64x256xbf16> to vector<64x256xbf16>
    %c0_2 = arith.constant 0 : index
    %c0_3 = arith.constant 0 : index
    %c0_4 = arith.constant 0 : index
    %2 = vector.load %arg2[%c0_2, %c0_3, %c0_4] : memref<8x15x64xbf16, #tpu.memory_space<vmem>>, vector<1x15x64xbf16>
    %3 = vector.shape_cast %2 : vector<1x15x64xbf16> to vector<15x64xbf16>
    %cst = arith.constant dense<0.000000e+00> : vector<15x256xf32>
    %4 = tpu.matmul %3, %1, %cst {dimension_numbers = #tpu.dot_dimension_numbers<[1], [0], [0], [1], [0, 0, 1, 1], [], []>} : vector<15x64xbf16>, vector<64x256xbf16>, vector<15x256xf32> -> vector<15x256xf32>
    %5 = arith.truncf %4 : vector<15x256xf32> to vector<15x256xbf16>
    %c0_5 = arith.constant 0 : index
    %c0_6 = arith.constant 0 : index
    %c0_7 = arith.constant 0 : index
    %6 = vector.load %arg3[%c0_5, %c0_6, %c0_7] : memref<8x256x480xbf16, #tpu.memory_space<vmem>>, vector<1x256x480xbf16>
    %7 = vector.shape_cast %6 : vector<1x256x480xbf16> to vector<256x480xbf16>
    %cst_8 = arith.constant dense<0.000000e+00> : vector<15x480xf32>
    %8 = tpu.matmul %5, %7, %cst_8 {dimension_numbers = #tpu.dot_dimension_numbers<[1], [0], [0], [1], [0, 0, 1, 1], [], []>} : vector<15x256xbf16>, vector<256x480xbf16>, vector<15x480xf32> -> vector<15x480xf32>
    %c1 = arith.constant 1 : index
    %c0_9 = arith.constant 0 : index
    %c0_10 = arith.constant 0 : index
    %9 = vector.load %arg2[%c1, %c0_9, %c0_10] : memref<8x15x64xbf16, #tpu.memory_space<vmem>>, vector<1x15x64xbf16>
    %10 = vector.shape_cast %9 : vector<1x15x64xbf16> to vector<15x64xbf16>
    %cst_11 = arith.constant dense<0.000000e+00> : vector<15x256xf32>
    %11 = tpu.matmul %10, %1, %cst_11 {dimension_numbers = #tpu.dot_dimension_numbers<[1], [0], [0], [1], [0, 0, 1, 1], [], []>} : vector<15x64xbf16>, vector<64x256xbf16>, vector<15x256xf32> -> vector<15x256xf32>
    %12 = arith.truncf %11 : vector<15x256xf32> to vector<15x256xbf16>
    %c1_12 = arith.constant 1 : index
    %c0_13 = arith.constant 0 : index
    %c0_14 = arith.constant 0 : index
    %13 = vector.load %arg3[%c1_12, %c0_13, %c0_14] : memref<8x256x480xbf16, #tpu.memory_space<vmem>>, vector<1x256x480xbf16>
    %14 = vector.shape_cast %13 : vector<1x256x480xbf16> to vector<256x480xbf16>
    %cst_15 = arith.constant dense<0.000000e+00> : vector<15x480xf32>
    %15 = tpu.matmul %12, %14, %cst_15 {dimension_numbers = #tpu.dot_dimension_numbers<[1], [0], [0], [1], [0, 0, 1, 1], [], []>} : vector<15x256xbf16>, vector<256x480xbf16>, vector<15x480xf32> -> vector<15x480xf32>
    %16 = arith.addf %8, %15 : vector<15x480xf32>
    %c2 = arith.constant 2 : index
    %c0_16 = arith.constant 0 : index
    %c0_17 = arith.constant 0 : index
    %17 = vector.load %arg2[%c2, %c0_16, %c0_17] : memref<8x15x64xbf16, #tpu.memory_space<vmem>>, vector<1x15x64xbf16>
    %18 = vector.shape_cast %17 : vector<1x15x64xbf16> to vector<15x64xbf16>
    %cst_18 = arith.constant dense<0.000000e+00> : vector<15x256xf32>
    %19 = tpu.matmul %18, %1, %cst_18 {dimension_numbers = #tpu.dot_dimension_numbers<[1], [0], [0], [1], [0, 0, 1, 1], [], []>} : vector<15x64xbf16>, vector<64x256xbf16>, vector<15x256xf32> -> vector<15x256xf32>
    %20 = arith.truncf %19 : vector<15x256xf32> to vector<15x256xbf16>
    %c2_19 = arith.constant 2 : index
    %c0_20 = arith.constant 0 : index
    %c0_21 = arith.constant 0 : index
    %21 = vector.load %arg3[%c2_19, %c0_20, %c0_21] : memref<8x256x480xbf16, #tpu.memory_space<vmem>>, vector<1x256x480xbf16>
    %22 = vector.shape_cast %21 : vector<1x256x480xbf16> to vector<256x480xbf16>
    %cst_22 = arith.constant dense<0.000000e+00> : vector<15x480xf32>
    %23 = tpu.matmul %20, %22, %cst_22 {dimension_numbers = #tpu.dot_dimension_numbers<[1], [0], [0], [1], [0, 0, 1, 1], [], []>} : vector<15x256xbf16>, vector<256x480xbf16>, vector<15x480xf32> -> vector<15x480xf32>
    %24 = arith.addf %16, %23 : vector<15x480xf32>
    %c3 = arith.constant 3 : index
    %c0_23 = arith.constant 0 : index
    %c0_24 = arith.constant 0 : index
    %25 = vector.load %arg2[%c3, %c0_23, %c0_24] : memref<8x15x64xbf16, #tpu.memory_space<vmem>>, vector<1x15x64xbf16>
    %26 = vector.shape_cast %25 : vector<1x15x64xbf16> to vector<15x64xbf16>
    %cst_25 = arith.constant dense<0.000000e+00> : vector<15x256xf32>
    %27 = tpu.matmul %26, %1, %cst_25 {dimension_numbers = #tpu.dot_dimension_numbers<[1], [0], [0], [1], [0, 0, 1, 1], [], []>} : vector<15x64xbf16>, vector<64x256xbf16>, vector<15x256xf32> -> vector<15x256xf32>
    %28 = arith.truncf %27 : vector<15x256xf32> to vector<15x256xbf16>
    %c3_26 = arith.constant 3 : index
    %c0_27 = arith.constant 0 : index
    %c0_28 = arith.constant 0 : index
    %29 = vector.load %arg3[%c3_26, %c0_27, %c0_28] : memref<8x256x480xbf16, #tpu.memory_space<vmem>>, vector<1x256x480xbf16>
    %30 = vector.shape_cast %29 : vector<1x256x480xbf16> to vector<256x480xbf16>
    %cst_29 = arith.constant dense<0.000000e+00> : vector<15x480xf32>
    %31 = tpu.matmul %28, %30, %cst_29 {dimension_numbers = #tpu.dot_dimension_numbers<[1], [0], [0], [1], [0, 0, 1, 1], [], []>} : vector<15x256xbf16>, vector<256x480xbf16>, vector<15x480xf32> -> vector<15x480xf32>
    %32 = arith.addf %24, %31 : vector<15x480xf32>
    %c4 = arith.constant 4 : index
    %c0_30 = arith.constant 0 : index
    %c0_31 = arith.constant 0 : index
    %33 = vector.load %arg2[%c4, %c0_30, %c0_31] : memref<8x15x64xbf16, #tpu.memory_space<vmem>>, vector<1x15x64xbf16>
    %34 = vector.shape_cast %33 : vector<1x15x64xbf16> to vector<15x64xbf16>
    %cst_32 = arith.constant dense<0.000000e+00> : vector<15x256xf32>
    %35 = tpu.matmul %34, %1, %cst_32 {dimension_numbers = #tpu.dot_dimension_numbers<[1], [0], [0], [1], [0, 0, 1, 1], [], []>} : vector<15x64xbf16>, vector<64x256xbf16>, vector<15x256xf32> -> vector<15x256xf32>
    %36 = arith.truncf %35 : vector<15x256xf32> to vector<15x256xbf16>
    %c4_33 = arith.constant 4 : index
    %c0_34 = arith.constant 0 : index
    %c0_35 = arith.constant 0 : index
    %37 = vector.load %arg3[%c4_33, %c0_34, %c0_35] : memref<8x256x480xbf16, #tpu.memory_space<vmem>>, vector<1x256x480xbf16>
    %38 = vector.shape_cast %37 : vector<1x256x480xbf16> to vector<256x480xbf16>
    %cst_36 = arith.constant dense<0.000000e+00> : vector<15x480xf32>
    %39 = tpu.matmul %36, %38, %cst_36 {dimension_numbers = #tpu.dot_dimension_numbers<[1], [0], [0], [1], [0, 0, 1, 1], [], []>} : vector<15x256xbf16>, vector<256x480xbf16>, vector<15x480xf32> -> vector<15x480xf32>
    %40 = arith.addf %32, %39 : vector<15x480xf32>
    %c5 = arith.constant 5 : index
    %c0_37 = arith.constant 0 : index
    %c0_38 = arith.constant 0 : index
    %41 = vector.load %arg2[%c5, %c0_37, %c0_38] : memref<8x15x64xbf16, #tpu.memory_space<vmem>>, vector<1x15x64xbf16>
    %42 = vector.shape_cast %41 : vector<1x15x64xbf16> to vector<15x64xbf16>
    %cst_39 = arith.constant dense<0.000000e+00> : vector<15x256xf32>
    %43 = tpu.matmul %42, %1, %cst_39 {dimension_numbers = #tpu.dot_dimension_numbers<[1], [0], [0], [1], [0, 0, 1, 1], [], []>} : vector<15x64xbf16>, vector<64x256xbf16>, vector<15x256xf32> -> vector<15x256xf32>
    %44 = arith.truncf %43 : vector<15x256xf32> to vector<15x256xbf16>
    %c5_40 = arith.constant 5 : index
    %c0_41 = arith.constant 0 : index
    %c0_42 = arith.constant 0 : index
    %45 = vector.load %arg3[%c5_40, %c0_41, %c0_42] : memref<8x256x480xbf16, #tpu.memory_space<vmem>>, vector<1x256x480xbf16>
    %46 = vector.shape_cast %45 : vector<1x256x480xbf16> to vector<256x480xbf16>
    %cst_43 = arith.constant dense<0.000000e+00> : vector<15x480xf32>
    %47 = tpu.matmul %44, %46, %cst_43 {dimension_numbers = #tpu.dot_dimension_numbers<[1], [0], [0], [1], [0, 0, 1, 1], [], []>} : vector<15x256xbf16>, vector<256x480xbf16>, vector<15x480xf32> -> vector<15x480xf32>
    %48 = arith.addf %40, %47 : vector<15x480xf32>
    %c6 = arith.constant 6 : index
    %c0_44 = arith.constant 0 : index
    %c0_45 = arith.constant 0 : index
    %49 = vector.load %arg2[%c6, %c0_44, %c0_45] : memref<8x15x64xbf16, #tpu.memory_space<vmem>>, vector<1x15x64xbf16>
    %50 = vector.shape_cast %49 : vector<1x15x64xbf16> to vector<15x64xbf16>
    %cst_46 = arith.constant dense<0.000000e+00> : vector<15x256xf32>
    %51 = tpu.matmul %50, %1, %cst_46 {dimension_numbers = #tpu.dot_dimension_numbers<[1], [0], [0], [1], [0, 0, 1, 1], [], []>} : vector<15x64xbf16>, vector<64x256xbf16>, vector<15x256xf32> -> vector<15x256xf32>
    %52 = arith.truncf %51 : vector<15x256xf32> to vector<15x256xbf16>
    %c6_47 = arith.constant 6 : index
    %c0_48 = arith.constant 0 : index
    %c0_49 = arith.constant 0 : index
    %53 = vector.load %arg3[%c6_47, %c0_48, %c0_49] : memref<8x256x480xbf16, #tpu.memory_space<vmem>>, vector<1x256x480xbf16>
    %54 = vector.shape_cast %53 : vector<1x256x480xbf16> to vector<256x480xbf16>
    %cst_50 = arith.constant dense<0.000000e+00> : vector<15x480xf32>
    %55 = tpu.matmul %52, %54, %cst_50 {dimension_numbers = #tpu.dot_dimension_numbers<[1], [0], [0], [1], [0, 0, 1, 1], [], []>} : vector<15x256xbf16>, vector<256x480xbf16>, vector<15x480xf32> -> vector<15x480xf32>
    %56 = arith.addf %48, %55 : vector<15x480xf32>
    %c7 = arith.constant 7 : index
    %c0_51 = arith.constant 0 : index
    %c0_52 = arith.constant 0 : index
    %57 = vector.load %arg2[%c7, %c0_51, %c0_52] : memref<8x15x64xbf16, #tpu.memory_space<vmem>>, vector<1x15x64xbf16>
    %58 = vector.shape_cast %57 : vector<1x15x64xbf16> to vector<15x64xbf16>
    %cst_53 = arith.constant dense<0.000000e+00> : vector<15x256xf32>
    %59 = tpu.matmul %58, %1, %cst_53 {dimension_numbers = #tpu.dot_dimension_numbers<[1], [0], [0], [1], [0, 0, 1, 1], [], []>} : vector<15x64xbf16>, vector<64x256xbf16>, vector<15x256xf32> -> vector<15x256xf32>
    %60 = arith.truncf %59 : vector<15x256xf32> to vector<15x256xbf16>
    %c7_54 = arith.constant 7 : index
    %c0_55 = arith.constant 0 : index
    %c0_56 = arith.constant 0 : index
    %61 = vector.load %arg3[%c7_54, %c0_55, %c0_56] : memref<8x256x480xbf16, #tpu.memory_space<vmem>>, vector<1x256x480xbf16>
    %62 = vector.shape_cast %61 : vector<1x256x480xbf16> to vector<256x480xbf16>
    %cst_57 = arith.constant dense<0.000000e+00> : vector<15x480xf32>
    %63 = tpu.matmul %60, %62, %cst_57 {dimension_numbers = #tpu.dot_dimension_numbers<[1], [0], [0], [1], [0, 0, 1, 1], [], []>} : vector<15x256xbf16>, vector<256x480xbf16>, vector<15x480xf32> -> vector<15x480xf32>
    %64 = arith.addf %56, %63 : vector<15x480xf32>
    %c0_58 = arith.constant 0 : index
    %c0_59 = arith.constant 0 : index
    %65 = vector.load %arg4[%c0_58, %c0_59] : memref<1x480xf32, #tpu.memory_space<vmem>>, vector<1x480xf32>
    %66 = vector.broadcast %65 : vector<1x480xf32> to vector<15x480xf32>
    %67 = arith.addf %64, %66 : vector<15x480xf32>
    %cst_60 = arith.constant 0.000000e+00 : f32
    %68 = vector.broadcast %cst_60 : f32 to vector<15x480xf32>
    %69 = arith.maximumf %67, %68 : vector<15x480xf32>
    %70 = arith.truncf %69 : vector<15x480xf32> to vector<15x480xbf16>
    %c0_61 = arith.constant 0 : index
    %c0_62 = arith.constant 0 : index
    %c0_63 = arith.constant 0 : index
    %71 = vector.load %arg5[%c0_61, %c0_62, %c0_63] : memref<4x6x15xbf16, #tpu.memory_space<vmem>>, vector<1x6x15xbf16>
    %72 = vector.shape_cast %71 : vector<1x6x15xbf16> to vector<6x15xbf16>
    %cst_64 = arith.constant dense<0.000000e+00> : vector<6x480xf32>
    %73 = tpu.matmul %72, %70, %cst_64 {dimension_numbers = #tpu.dot_dimension_numbers<[1], [0], [0], [1], [0, 0, 1, 1], [], []>} : vector<6x15xbf16>, vector<15x480xbf16>, vector<6x480xf32> -> vector<6x480xf32>
    %74 = arith.truncf %73 : vector<6x480xf32> to vector<6x480xbf16>
    %c0_65 = arith.constant 0 : index
    %c0_66 = arith.constant 0 : index
    %c0_67 = arith.constant 0 : index
    %75 = vector.load %arg6[%c0_65, %c0_66, %c0_67] : memref<4x480x384xbf16, #tpu.memory_space<vmem>>, vector<1x480x384xbf16>
    %76 = vector.shape_cast %75 : vector<1x480x384xbf16> to vector<480x384xbf16>
    %cst_68 = arith.constant dense<0.000000e+00> : vector<6x384xf32>
    %77 = tpu.matmul %74, %76, %cst_68 {dimension_numbers = #tpu.dot_dimension_numbers<[1], [0], [0], [1], [0, 0, 1, 1], [], []>} : vector<6x480xbf16>, vector<480x384xbf16>, vector<6x384xf32> -> vector<6x384xf32>
    %c1_69 = arith.constant 1 : index
    %c0_70 = arith.constant 0 : index
    %c0_71 = arith.constant 0 : index
    %78 = vector.load %arg5[%c1_69, %c0_70, %c0_71] : memref<4x6x15xbf16, #tpu.memory_space<vmem>>, vector<1x6x15xbf16>
    %79 = vector.shape_cast %78 : vector<1x6x15xbf16> to vector<6x15xbf16>
    %cst_72 = arith.constant dense<0.000000e+00> : vector<6x480xf32>
    %80 = tpu.matmul %79, %70, %cst_72 {dimension_numbers = #tpu.dot_dimension_numbers<[1], [0], [0], [1], [0, 0, 1, 1], [], []>} : vector<6x15xbf16>, vector<15x480xbf16>, vector<6x480xf32> -> vector<6x480xf32>
    %81 = arith.truncf %80 : vector<6x480xf32> to vector<6x480xbf16>
    %c1_73 = arith.constant 1 : index
    %c0_74 = arith.constant 0 : index
    %c0_75 = arith.constant 0 : index
    %82 = vector.load %arg6[%c1_73, %c0_74, %c0_75] : memref<4x480x384xbf16, #tpu.memory_space<vmem>>, vector<1x480x384xbf16>
    %83 = vector.shape_cast %82 : vector<1x480x384xbf16> to vector<480x384xbf16>
    %cst_76 = arith.constant dense<0.000000e+00> : vector<6x384xf32>
    %84 = tpu.matmul %81, %83, %cst_76 {dimension_numbers = #tpu.dot_dimension_numbers<[1], [0], [0], [1], [0, 0, 1, 1], [], []>} : vector<6x480xbf16>, vector<480x384xbf16>, vector<6x384xf32> -> vector<6x384xf32>
    %85 = arith.addf %77, %84 : vector<6x384xf32>
    %c2_77 = arith.constant 2 : index
    %c0_78 = arith.constant 0 : index
    %c0_79 = arith.constant 0 : index
    %86 = vector.load %arg5[%c2_77, %c0_78, %c0_79] : memref<4x6x15xbf16, #tpu.memory_space<vmem>>, vector<1x6x15xbf16>
    %87 = vector.shape_cast %86 : vector<1x6x15xbf16> to vector<6x15xbf16>
    %cst_80 = arith.constant dense<0.000000e+00> : vector<6x480xf32>
    %88 = tpu.matmul %87, %70, %cst_80 {dimension_numbers = #tpu.dot_dimension_numbers<[1], [0], [0], [1], [0, 0, 1, 1], [], []>} : vector<6x15xbf16>, vector<15x480xbf16>, vector<6x480xf32> -> vector<6x480xf32>
    %89 = arith.truncf %88 : vector<6x480xf32> to vector<6x480xbf16>
    %c2_81 = arith.constant 2 : index
    %c0_82 = arith.constant 0 : index
    %c0_83 = arith.constant 0 : index
    %90 = vector.load %arg6[%c2_81, %c0_82, %c0_83] : memref<4x480x384xbf16, #tpu.memory_space<vmem>>, vector<1x480x384xbf16>
    %91 = vector.shape_cast %90 : vector<1x480x384xbf16> to vector<480x384xbf16>
    %cst_84 = arith.constant dense<0.000000e+00> : vector<6x384xf32>
    %92 = tpu.matmul %89, %91, %cst_84 {dimension_numbers = #tpu.dot_dimension_numbers<[1], [0], [0], [1], [0, 0, 1, 1], [], []>} : vector<6x480xbf16>, vector<480x384xbf16>, vector<6x384xf32> -> vector<6x384xf32>
    %93 = arith.addf %85, %92 : vector<6x384xf32>
    %c3_85 = arith.constant 3 : index
    %c0_86 = arith.constant 0 : index
    %c0_87 = arith.constant 0 : index
    %94 = vector.load %arg5[%c3_85, %c0_86, %c0_87] : memref<4x6x15xbf16, #tpu.memory_space<vmem>>, vector<1x6x15xbf16>
    %95 = vector.shape_cast %94 : vector<1x6x15xbf16> to vector<6x15xbf16>
    %cst_88 = arith.constant dense<0.000000e+00> : vector<6x480xf32>
    %96 = tpu.matmul %95, %70, %cst_88 {dimension_numbers = #tpu.dot_dimension_numbers<[1], [0], [0], [1], [0, 0, 1, 1], [], []>} : vector<6x15xbf16>, vector<15x480xbf16>, vector<6x480xf32> -> vector<6x480xf32>
    %97 = arith.truncf %96 : vector<6x480xf32> to vector<6x480xbf16>
    %c3_89 = arith.constant 3 : index
    %c0_90 = arith.constant 0 : index
    %c0_91 = arith.constant 0 : index
    %98 = vector.load %arg6[%c3_89, %c0_90, %c0_91] : memref<4x480x384xbf16, #tpu.memory_space<vmem>>, vector<1x480x384xbf16>
    %99 = vector.shape_cast %98 : vector<1x480x384xbf16> to vector<480x384xbf16>
    %cst_92 = arith.constant dense<0.000000e+00> : vector<6x384xf32>
    %100 = tpu.matmul %97, %99, %cst_92 {dimension_numbers = #tpu.dot_dimension_numbers<[1], [0], [0], [1], [0, 0, 1, 1], [], []>} : vector<6x480xbf16>, vector<480x384xbf16>, vector<6x384xf32> -> vector<6x384xf32>
    %101 = arith.addf %93, %100 : vector<6x384xf32>
    %c0_93 = arith.constant 0 : index
    %c0_94 = arith.constant 0 : index
    %102 = vector.load %arg7[%c0_93, %c0_94] : memref<1x384xf32, #tpu.memory_space<vmem>>, vector<1x384xf32>
    %103 = vector.broadcast %102 : vector<1x384xf32> to vector<6x384xf32>
    %104 = arith.addf %101, %103 : vector<6x384xf32>
    %cst_95 = arith.constant 0.000000e+00 : f32
    %105 = vector.broadcast %cst_95 : f32 to vector<6x384xf32>
    %106 = arith.maximumf %104, %105 : vector<6x384xf32>
    %107 = arith.truncf %106 : vector<6x384xf32> to vector<6x384xbf16>
    %c0_96 = arith.constant 0 : index
    %c0_97 = arith.constant 0 : index
    %c0_98 = arith.constant 0 : index
    %108 = vector.load %arg8[%c0_96, %c0_97, %c0_98] : memref<3x4x6xbf16, #tpu.memory_space<vmem>>, vector<1x4x6xbf16>
    %109 = vector.shape_cast %108 : vector<1x4x6xbf16> to vector<4x6xbf16>
    %cst_99 = arith.constant dense<0.000000e+00> : vector<4x384xf32>
    %110 = tpu.matmul %109, %107, %cst_99 {dimension_numbers = #tpu.dot_dimension_numbers<[1], [0], [0], [1], [0, 0, 1, 1], [], []>} : vector<4x6xbf16>, vector<6x384xbf16>, vector<4x384xf32> -> vector<4x384xf32>
    %111 = arith.truncf %110 : vector<4x384xf32> to vector<4x384xbf16>
    %c0_100 = arith.constant 0 : index
    %c0_101 = arith.constant 0 : index
    %c0_102 = arith.constant 0 : index
    %112 = vector.load %arg9[%c0_100, %c0_101, %c0_102] : memref<3x384x256xbf16, #tpu.memory_space<vmem>>, vector<1x384x256xbf16>
    %113 = vector.shape_cast %112 : vector<1x384x256xbf16> to vector<384x256xbf16>
    %cst_103 = arith.constant dense<0.000000e+00> : vector<4x256xf32>
    %114 = tpu.matmul %111, %113, %cst_103 {dimension_numbers = #tpu.dot_dimension_numbers<[1], [0], [0], [1], [0, 0, 1, 1], [], []>} : vector<4x384xbf16>, vector<384x256xbf16>, vector<4x256xf32> -> vector<4x256xf32>
    %c1_104 = arith.constant 1 : index
    %c0_105 = arith.constant 0 : index
    %c0_106 = arith.constant 0 : index
    %115 = vector.load %arg8[%c1_104, %c0_105, %c0_106] : memref<3x4x6xbf16, #tpu.memory_space<vmem>>, vector<1x4x6xbf16>
    %116 = vector.shape_cast %115 : vector<1x4x6xbf16> to vector<4x6xbf16>
    %cst_107 = arith.constant dense<0.000000e+00> : vector<4x384xf32>
    %117 = tpu.matmul %116, %107, %cst_107 {dimension_numbers = #tpu.dot_dimension_numbers<[1], [0], [0], [1], [0, 0, 1, 1], [], []>} : vector<4x6xbf16>, vector<6x384xbf16>, vector<4x384xf32> -> vector<4x384xf32>
    %118 = arith.truncf %117 : vector<4x384xf32> to vector<4x384xbf16>
    %c1_108 = arith.constant 1 : index
    %c0_109 = arith.constant 0 : index
    %c0_110 = arith.constant 0 : index
    %119 = vector.load %arg9[%c1_108, %c0_109, %c0_110] : memref<3x384x256xbf16, #tpu.memory_space<vmem>>, vector<1x384x256xbf16>
    %120 = vector.shape_cast %119 : vector<1x384x256xbf16> to vector<384x256xbf16>
    %cst_111 = arith.constant dense<0.000000e+00> : vector<4x256xf32>
    %121 = tpu.matmul %118, %120, %cst_111 {dimension_numbers = #tpu.dot_dimension_numbers<[1], [0], [0], [1], [0, 0, 1, 1], [], []>} : vector<4x384xbf16>, vector<384x256xbf16>, vector<4x256xf32> -> vector<4x256xf32>
    %122 = arith.addf %114, %121 : vector<4x256xf32>
    %c2_112 = arith.constant 2 : index
    %c0_113 = arith.constant 0 : index
    %c0_114 = arith.constant 0 : index
    %123 = vector.load %arg8[%c2_112, %c0_113, %c0_114] : memref<3x4x6xbf16, #tpu.memory_space<vmem>>, vector<1x4x6xbf16>
    %124 = vector.shape_cast %123 : vector<1x4x6xbf16> to vector<4x6xbf16>
    %cst_115 = arith.constant dense<0.000000e+00> : vector<4x384xf32>
    %125 = tpu.matmul %124, %107, %cst_115 {dimension_numbers = #tpu.dot_dimension_numbers<[1], [0], [0], [1], [0, 0, 1, 1], [], []>} : vector<4x6xbf16>, vector<6x384xbf16>, vector<4x384xf32> -> vector<4x384xf32>
    %126 = arith.truncf %125 : vector<4x384xf32> to vector<4x384xbf16>
    %c2_116 = arith.constant 2 : index
    %c0_117 = arith.constant 0 : index
    %c0_118 = arith.constant 0 : index
    %127 = vector.load %arg9[%c2_116, %c0_117, %c0_118] : memref<3x384x256xbf16, #tpu.memory_space<vmem>>, vector<1x384x256xbf16>
    %128 = vector.shape_cast %127 : vector<1x384x256xbf16> to vector<384x256xbf16>
    %cst_119 = arith.constant dense<0.000000e+00> : vector<4x256xf32>
    %129 = tpu.matmul %126, %128, %cst_119 {dimension_numbers = #tpu.dot_dimension_numbers<[1], [0], [0], [1], [0, 0, 1, 1], [], []>} : vector<4x384xbf16>, vector<384x256xbf16>, vector<4x256xf32> -> vector<4x256xf32>
    %130 = arith.addf %122, %129 : vector<4x256xf32>
    %c0_120 = arith.constant 0 : index
    %c0_121 = arith.constant 0 : index
    %131 = vector.load %arg10[%c0_120, %c0_121] : memref<1x256xf32, #tpu.memory_space<vmem>>, vector<1x256xf32>
    %132 = vector.broadcast %131 : vector<1x256xf32> to vector<4x256xf32>
    %133 = arith.addf %130, %132 : vector<4x256xf32>
    %cst_122 = arith.constant 0.000000e+00 : f32
    %134 = vector.broadcast %cst_122 : f32 to vector<4x256xf32>
    %135 = arith.maximumf %133, %134 : vector<4x256xf32>
    %136 = arith.truncf %135 : vector<4x256xf32> to vector<4x256xbf16>
    %c0_123 = arith.constant 0 : index
    %c0_124 = arith.constant 0 : index
    %c0_125 = arith.constant 0 : index
    %137 = vector.load %arg11[%c0_123, %c0_124, %c0_125] : memref<4x1x4xbf16, #tpu.memory_space<vmem>>, vector<1x1x4xbf16>
    %138 = vector.shape_cast %137 : vector<1x1x4xbf16> to vector<1x4xbf16>
    %cst_126 = arith.constant dense<0.000000e+00> : vector<1x256xf32>
    %139 = tpu.matmul %138, %136, %cst_126 {dimension_numbers = #tpu.dot_dimension_numbers<[1], [0], [0], [1], [0, 0, 1, 1], [], []>} : vector<1x4xbf16>, vector<4x256xbf16>, vector<1x256xf32> -> vector<1x256xf32>
    %140 = arith.truncf %139 : vector<1x256xf32> to vector<1x256xbf16>
    %c0_127 = arith.constant 0 : index
    %c0_128 = arith.constant 0 : index
    %c0_129 = arith.constant 0 : index
    %141 = vector.load %arg12[%c0_127, %c0_128, %c0_129] : memref<4x256x512xbf16, #tpu.memory_space<vmem>>, vector<1x256x512xbf16>
    %142 = vector.shape_cast %141 : vector<1x256x512xbf16> to vector<256x512xbf16>
    %cst_130 = arith.constant dense<0.000000e+00> : vector<1x512xf32>
    %143 = tpu.matmul %140, %142, %cst_130 {dimension_numbers = #tpu.dot_dimension_numbers<[1], [0], [0], [1], [0, 0, 1, 1], [], []>} : vector<1x256xbf16>, vector<256x512xbf16>, vector<1x512xf32> -> vector<1x512xf32>
    %c1_131 = arith.constant 1 : index
    %c0_132 = arith.constant 0 : index
    %c0_133 = arith.constant 0 : index
    %144 = vector.load %arg11[%c1_131, %c0_132, %c0_133] : memref<4x1x4xbf16, #tpu.memory_space<vmem>>, vector<1x1x4xbf16>
    %145 = vector.shape_cast %144 : vector<1x1x4xbf16> to vector<1x4xbf16>
    %cst_134 = arith.constant dense<0.000000e+00> : vector<1x256xf32>
    %146 = tpu.matmul %145, %136, %cst_134 {dimension_numbers = #tpu.dot_dimension_numbers<[1], [0], [0], [1], [0, 0, 1, 1], [], []>} : vector<1x4xbf16>, vector<4x256xbf16>, vector<1x256xf32> -> vector<1x256xf32>
    %147 = arith.truncf %146 : vector<1x256xf32> to vector<1x256xbf16>
    %c1_135 = arith.constant 1 : index
    %c0_136 = arith.constant 0 : index
    %c0_137 = arith.constant 0 : index
    %148 = vector.load %arg12[%c1_135, %c0_136, %c0_137] : memref<4x256x512xbf16, #tpu.memory_space<vmem>>, vector<1x256x512xbf16>
    %149 = vector.shape_cast %148 : vector<1x256x512xbf16> to vector<256x512xbf16>
    %cst_138 = arith.constant dense<0.000000e+00> : vector<1x512xf32>
    %150 = tpu.matmul %147, %149, %cst_138 {dimension_numbers = #tpu.dot_dimension_numbers<[1], [0], [0], [1], [0, 0, 1, 1], [], []>} : vector<1x256xbf16>, vector<256x512xbf16>, vector<1x512xf32> -> vector<1x512xf32>
    %151 = arith.addf %143, %150 : vector<1x512xf32>
    %c2_139 = arith.constant 2 : index
    %c0_140 = arith.constant 0 : index
    %c0_141 = arith.constant 0 : index
    %152 = vector.load %arg11[%c2_139, %c0_140, %c0_141] : memref<4x1x4xbf16, #tpu.memory_space<vmem>>, vector<1x1x4xbf16>
    %153 = vector.shape_cast %152 : vector<1x1x4xbf16> to vector<1x4xbf16>
    %cst_142 = arith.constant dense<0.000000e+00> : vector<1x256xf32>
    %154 = tpu.matmul %153, %136, %cst_142 {dimension_numbers = #tpu.dot_dimension_numbers<[1], [0], [0], [1], [0, 0, 1, 1], [], []>} : vector<1x4xbf16>, vector<4x256xbf16>, vector<1x256xf32> -> vector<1x256xf32>
    %155 = arith.truncf %154 : vector<1x256xf32> to vector<1x256xbf16>
    %c2_143 = arith.constant 2 : index
    %c0_144 = arith.constant 0 : index
    %c0_145 = arith.constant 0 : index
    %156 = vector.load %arg12[%c2_143, %c0_144, %c0_145] : memref<4x256x512xbf16, #tpu.memory_space<vmem>>, vector<1x256x512xbf16>
    %157 = vector.shape_cast %156 : vector<1x256x512xbf16> to vector<256x512xbf16>
    %cst_146 = arith.constant dense<0.000000e+00> : vector<1x512xf32>
    %158 = tpu.matmul %155, %157, %cst_146 {dimension_numbers = #tpu.dot_dimension_numbers<[1], [0], [0], [1], [0, 0, 1, 1], [], []>} : vector<1x256xbf16>, vector<256x512xbf16>, vector<1x512xf32> -> vector<1x512xf32>
    %159 = arith.addf %151, %158 : vector<1x512xf32>
    %c3_147 = arith.constant 3 : index
    %c0_148 = arith.constant 0 : index
    %c0_149 = arith.constant 0 : index
    %160 = vector.load %arg11[%c3_147, %c0_148, %c0_149] : memref<4x1x4xbf16, #tpu.memory_space<vmem>>, vector<1x1x4xbf16>
    %161 = vector.shape_cast %160 : vector<1x1x4xbf16> to vector<1x4xbf16>
    %cst_150 = arith.constant dense<0.000000e+00> : vector<1x256xf32>
    %162 = tpu.matmul %161, %136, %cst_150 {dimension_numbers = #tpu.dot_dimension_numbers<[1], [0], [0], [1], [0, 0, 1, 1], [], []>} : vector<1x4xbf16>, vector<4x256xbf16>, vector<1x256xf32> -> vector<1x256xf32>
    %163 = arith.truncf %162 : vector<1x256xf32> to vector<1x256xbf16>
    %c3_151 = arith.constant 3 : index
    %c0_152 = arith.constant 0 : index
    %c0_153 = arith.constant 0 : index
    %164 = vector.load %arg12[%c3_151, %c0_152, %c0_153] : memref<4x256x512xbf16, #tpu.memory_space<vmem>>, vector<1x256x512xbf16>
    %165 = vector.shape_cast %164 : vector<1x256x512xbf16> to vector<256x512xbf16>
    %cst_154 = arith.constant dense<0.000000e+00> : vector<1x512xf32>
    %166 = tpu.matmul %163, %165, %cst_154 {dimension_numbers = #tpu.dot_dimension_numbers<[1], [0], [0], [1], [0, 0, 1, 1], [], []>} : vector<1x256xbf16>, vector<256x512xbf16>, vector<1x512xf32> -> vector<1x512xf32>
    %167 = arith.addf %159, %166 : vector<1x512xf32>
    %c0_155 = arith.constant 0 : index
    %c0_156 = arith.constant 0 : index
    %168 = vector.load %arg13[%c0_155, %c0_156] : memref<1x512xf32, #tpu.memory_space<vmem>>, vector<1x512xf32>
    %169 = arith.addf %167, %168 : vector<1x512xf32>
    %cst_157 = arith.constant 0.000000e+00 : f32
    %170 = vector.broadcast %cst_157 : f32 to vector<1x512xf32>
    %171 = arith.maximumf %169, %170 : vector<1x512xf32>
    %c0_158 = arith.constant 0 : index
    %c0_159 = arith.constant 0 : index
    %172 = vector.load %arg14[%c0_158, %c0_159] : memref<512x7xf32, #tpu.memory_space<vmem>>, vector<512x7xf32>
    %cst_160 = arith.constant dense<0.000000e+00> : vector<1x7xf32>
    %173 = tpu.matmul %171, %172, %cst_160 {dimension_numbers = #tpu.dot_dimension_numbers<[1], [0], [0], [1], [0, 0, 1, 1], [], []>} : vector<1x512xf32>, vector<512x7xf32>, vector<1x7xf32> -> vector<1x7xf32>
    %c0_161 = arith.constant 0 : index
    %c0_162 = arith.constant 0 : index
    %174 = vector.load %arg15[%c0_161, %c0_162] : memref<1x7xf32, #tpu.memory_space<vmem>>, vector<1x7xf32>
    %175 = arith.addf %173, %174 : vector<1x7xf32>
    %176 = tpu.iota {dimensions = array<i32: 1>} : vector<1x7xi32>
    %c6_i32 = arith.constant 6 : i32
    %177 = vector.broadcast %c6_i32 : i32 to vector<1x7xi32>
    %178 = arith.cmpi slt, %176, %177 : vector<1x7xi32>
    %cst_163 = arith.constant -1.000000e+30 : f32
    %179 = vector.broadcast %cst_163 : f32 to vector<1x7xf32>
    %180 = arith.select %178, %175, %179 : vector<1x7xi1>, vector<1x7xf32>
    %cst_164 = arith.constant dense<0xFF800000> : vector<1xf32>
    %181 = vector.multi_reduction <maximumf>, %180, %cst_164 [1] : vector<1x7xf32> to vector<1xf32>
    %182 = vector.shape_cast %181 : vector<1xf32> to vector<1x1xf32>
    %183 = vector.broadcast %182 : vector<1x1xf32> to vector<1x7xf32>
    %184 = arith.subf %180, %183 : vector<1x7xf32>
    %185 = math.exp %184 : vector<1x7xf32>
    %cst_165 = arith.constant dense<0.000000e+00> : vector<1xf32>
    %186 = vector.multi_reduction <add>, %185, %cst_165 [1] : vector<1x7xf32> to vector<1xf32>
    %187 = vector.shape_cast %186 : vector<1xf32> to vector<1x1xf32>
    %188 = vector.broadcast %187 : vector<1x1xf32> to vector<1x7xf32>
    %189 = arith.divf %185, %188 : vector<1x7xf32>
    %190 = arith.select %178, %189, %175 : vector<1x7xi1>, vector<1x7xf32>
    %c0_166 = arith.constant 0 : index
    %c0_167 = arith.constant 0 : index
    %c0_168 = arith.constant 0 : index
    %191 = vector.load %arg16[%c0_166, %c0_167, %c0_168] : memref<1x1x7xf32, #tpu.memory_space<vmem>>, vector<1x1x7xf32>
    %192 = vector.shape_cast %191 : vector<1x1x7xf32> to vector<1x7xf32>
    %193 = vector.shape_cast %190 : vector<1x7xf32> to vector<1x1x7xf32>
    tpu.vector_store %arg16[%c0_166, %c0_167, %c0_168], %193 {strides = array<i32>} : memref<1x1x7xf32, #tpu.memory_space<vmem>>, vector<1x1x7xf32>,
    return
  }
  func.func @transform_0(%arg0: i32) -> (i32, i32, i32) {
    %c0_i32 = arith.constant 0 : i32
    %c0_i32_0 = arith.constant 0 : i32
    %c0_i32_1 = arith.constant 0 : i32
    return %arg0, %c0_i32, %c0_i32_0 : i32, i32, i32
  }
  func.func @transform_1(%arg0: i32) -> (i32, i32, i32) {
    %c0_i32 = arith.constant 0 : i32
    %c0_i32_0 = arith.constant 0 : i32
    %c0_i32_1 = arith.constant 0 : i32
    %c0_i32_2 = arith.constant 0 : i32
    return %c0_i32, %c0_i32_0, %c0_i32_1 : i32, i32, i32
  }
  func.func @transform_2(%arg0: i32) -> (i32, i32, i32) {
    %c0_i32 = arith.constant 0 : i32
    %c0_i32_0 = arith.constant 0 : i32
    %c0_i32_1 = arith.constant 0 : i32
    %c0_i32_2 = arith.constant 0 : i32
    return %c0_i32, %c0_i32_0, %c0_i32_1 : i32, i32, i32
  }
  func.func @transform_3(%arg0: i32) -> (i32, i32) {
    %c0_i32 = arith.constant 0 : i32
    %c0_i32_0 = arith.constant 0 : i32
    %c0_i32_1 = arith.constant 0 : i32
    return %c0_i32, %c0_i32_0 : i32, i32
  }
  func.func @transform_4(%arg0: i32) -> (i32, i32, i32) {
    %c0_i32 = arith.constant 0 : i32
    %c0_i32_0 = arith.constant 0 : i32
    %c0_i32_1 = arith.constant 0 : i32
    %c0_i32_2 = arith.constant 0 : i32
    return %c0_i32, %c0_i32_0, %c0_i32_1 : i32, i32, i32
  }
  func.func @transform_5(%arg0: i32) -> (i32, i32, i32) {
    %c0_i32 = arith.constant 0 : i32
    %c0_i32_0 = arith.constant 0 : i32
    %c0_i32_1 = arith.constant 0 : i32
    %c0_i32_2 = arith.constant 0 : i32
    return %c0_i32, %c0_i32_0, %c0_i32_1 : i32, i32, i32
  }
  func.func @transform_6(%arg0: i32) -> (i32, i32) {
    %c0_i32 = arith.constant 0 : i32
    %c0_i32_0 = arith.constant 0 : i32
    %c0_i32_1 = arith.constant 0 : i32
    return %c0_i32, %c0_i32_0 : i32, i32
  }
  func.func @transform_7(%arg0: i32) -> (i32, i32, i32) {
    %c0_i32 = arith.constant 0 : i32
    %c0_i32_0 = arith.constant 0 : i32
    %c0_i32_1 = arith.constant 0 : i32
    %c0_i32_2 = arith.constant 0 : i32
    return %c0_i32, %c0_i32_0, %c0_i32_1 : i32, i32, i32
  }
  func.func @transform_8(%arg0: i32) -> (i32, i32, i32) {
    %c0_i32 = arith.constant 0 : i32
    %c0_i32_0 = arith.constant 0 : i32
    %c0_i32_1 = arith.constant 0 : i32
    %c0_i32_2 = arith.constant 0 : i32
    return %c0_i32, %c0_i32_0, %c0_i32_1 : i32, i32, i32
  }
  func.func @transform_9(%arg0: i32) -> (i32, i32) {
    %c0_i32 = arith.constant 0 : i32
    %c0_i32_0 = arith.constant 0 : i32
    %c0_i32_1 = arith.constant 0 : i32
    return %c0_i32, %c0_i32_0 : i32, i32
  }
  func.func @transform_10(%arg0: i32) -> (i32, i32, i32) {
    %c0_i32 = arith.constant 0 : i32
    %c0_i32_0 = arith.constant 0 : i32
    %c0_i32_1 = arith.constant 0 : i32
    %c0_i32_2 = arith.constant 0 : i32
    return %c0_i32, %c0_i32_0, %c0_i32_1 : i32, i32, i32
  }
  func.func @transform_11(%arg0: i32) -> (i32, i32, i32) {
    %c0_i32 = arith.constant 0 : i32
    %c0_i32_0 = arith.constant 0 : i32
    %c0_i32_1 = arith.constant 0 : i32
    %c0_i32_2 = arith.constant 0 : i32
    return %c0_i32, %c0_i32_0, %c0_i32_1 : i32, i32, i32
  }
  func.func @transform_12(%arg0: i32) -> (i32, i32) {
    %c0_i32 = arith.constant 0 : i32
    %c0_i32_0 = arith.constant 0 : i32
    %c0_i32_1 = arith.constant 0 : i32
    return %c0_i32, %c0_i32_0 : i32, i32
  }
  func.func @transform_13(%arg0: i32) -> (i32, i32) {
    %c0_i32 = arith.constant 0 : i32
    %c0_i32_0 = arith.constant 0 : i32
    %c0_i32_1 = arith.constant 0 : i32
    return %c0_i32, %c0_i32_0 : i32, i32
  }
  func.func @transform_14(%arg0: i32) -> (i32, i32) {
    %c0_i32 = arith.constant 0 : i32
    %c0_i32_0 = arith.constant 0 : i32
    %c0_i32_1 = arith.constant 0 : i32
    return %c0_i32, %c0_i32_0 : i32, i32
  }
  func.func @transform_15(%arg0: i32) -> (i32, i32, i32) {
    %c0_i32 = arith.constant 0 : i32
    %c0_i32_0 = arith.constant 0 : i32
    %c0_i32_1 = arith.constant 0 : i32
    return %arg0, %c0_i32, %c0_i32_0 : i32, i32, i32
  }
}

</mosaic_0001>

<llo_original>
// kernel: squeeze.2
$region0: #{squeeze.2}
  %s0 = inlined_call_operand.vmem [shape: f32[2,6], index: 0, kind: input, shape index: {}]
  %s1 = inlined_call_operand.hbm [shape: f32[12], index: 1, kind: output, shape index: {}]
  $region1: #{squeeze.2} parent=0
    #allocation0 [shape = 'u8[512]{0}', space=vmem, size = 0x400, scoped, tag = 'operand span for operand 1']
    #allocation1 [shape = 's32[1]{0}', space=sflag, size = 0x4, scoped, tag = 'scoped memory for squeeze.2']
    #allocation2 [shape = 'u8[4096]{0}', space=vmem, size = 0x1000, scoped, tag = 'scoped mem for output reshape']
    #allocation3 [shape = 'u8[4096]{0}', space=vmem, size = 0x1000, scoped, tag = 'scoped mem for input reshape']
    %2 = vsyncpa [#allocation1], 0
    %s4 = ssub.s32 4, 1
    %v5 = vld [vmem:[%s0] sm:%s4]
    %6 = vst [vmem:[#allocation3] sm:%s4] %v5
    %v7 = vld [vmem:[#allocation3] sm:$0x1]
    %vm8 = vcmask 48128
    %9 = vst.msk [vmem:[#allocation2] sm:$0x1] %vm8, %v7
    %s10 = scalar_lea.vmem [#allocation3], 1
    %v11 = vld [vmem:[%s10] sm:$0x1]
    %12 = vrot.lane.b32.xlu0 %v11, 6
    %v13 = vpop.permute.xlu0 %12
    %vm14 = vcmask 97328
    %15 = vst.msk [vmem:[#allocation2] sm:$0x1] %vm14, %v13
    %s17 = ssub.s32 2, 1
    %v18 = vld [vmem:[#allocation2] sm:%s17]
    %s20 = ssub.s32 2, 1
    %21 = vst [vmem:[#allocation0] sm:%s20] %v18
    %23 = vsyncadd [#allocation1], 0
    %s25 = sshll.u32 [#allocation0], 4
    %s26 = int_to_ptr.vmem [resolvable:$true] %s25
    %s27 = sshll.u32 %s1, 4
    %s28 = int_to_ptr.hbm [resolvable:$true] %s27
    %30 = dma.vmem_to_hbm [thread:$0]  %s26, 16, %s28, [#allocation1]
    %32 = dma.done [#allocation1], 16
    %33 = vsyncpa [#allocation1], 1

// kernel: a2c_cnn_forward.1
$region0: #{a2c_cnn_forward.1}
  #allocation0 [shape = 'u32[]', space=smem, size = 0x4, offset = 0x4, fixed_abs, tag = 'smem constant byte address 0x4 - core index']
  #allocation1 [shape = 'u32[72,128]{1,0:T(1,128)}', space=vmem, size = 0x9000, scoped, tag = 'internal scratch']
  %s0 = inlined_call_operand.vmem [shape: bf16[2,64,256], index: 0, kind: input, shape index: {}]
  %s1 = inlined_call_operand.vmem [shape: bf16[8,15,64], index: 1, kind: input, shape index: {}]
  %s2 = inlined_call_operand.vmem [shape: bf16[8,256,480], index: 2, kind: input, shape index: {}]
  %s3 = inlined_call_operand.vmem [shape: f32[1,480], index: 3, kind: input, shape index: {}]
  %s4 = inlined_call_operand.vmem [shape: bf16[4,6,15], index: 4, kind: input, shape index: {}]
  %s5 = inlined_call_operand.vmem [shape: bf16[4,480,384], index: 5, kind: input, shape index: {}]
  %s6 = inlined_call_operand.vmem [shape: f32[1,384], index: 6, kind: input, shape index: {}]
  %s7 = inlined_call_operand.vmem [shape: bf16[3,4,6], index: 7, kind: input, shape index: {}]
  %s8 = inlined_call_operand.vmem [shape: bf16[3,384,256], index: 8, kind: input, shape index: {}]
  %s9 = inlined_call_operand.vmem [shape: f32[1,256], index: 9, kind: input, shape index: {}]
  %s10 = inlined_call_operand.vmem [shape: bf16[4,1,4], index: 10, kind: input, shape index: {}]
  %s11 = inlined_call_operand.vmem [shape: bf16[4,256,512], index: 11, kind: input, shape index: {}]
  %s12 = inlined_call_operand.vmem [shape: f32[1,512], index: 12, kind: input, shape index: {}]
  %s13 = inlined_call_operand.vmem [shape: f32[512,7], index: 13, kind: input, shape index: {}]
  %s14 = inlined_call_operand.vmem [shape: f32[1,7], index: 14, kind: input, shape index: {}]
  %s15 = inlined_call_operand.vmem [shape: f32[2,1,7], index: 15, kind: output, shape index: {}]
  %s16 = sld [smem:[#allocation0]]
  $region93: #{a2c_cnn_forward.1} parent=0
    _
  %s18 = ssub.s32 1, %s16
  %s19 = scalar_select 0, %s18, %s16
  loop: start=0, step=1, limit=4
  $region2: #{a2c_cnn_forward.1} parent=0 // loop_pre_header
    _
  $region3: #{a2c_cnn_forward.1} parent=0 // loop_header
    %s21 = sphi 0, %s25
    %p22 = scmp.ge.s32.totalorder %s21, 4
    %s31 = sphi 0, %s33
    %s34 = sphi 0, %s31
    %s35 = sphi 0, %s34
    %s51 = sphi 0, %s35
    %s55 = sphi 0, %s55
    %s57 = sphi 0, %s55
    %s58 = sphi 0, %s57
    %s72 = sphi 0, %s58
    %s76 = sphi 0, %s76
    %s78 = sphi 0, %s76
    %s79 = sphi 0, %s78
    %s93 = sphi 0, %s79
    %s97 = sphi 0, %s97
    %s99 = sphi 0, %s97
    %s100 = sphi 0, %s99
    %s114 = sphi 0, %s100
    %s118 = sphi 0, %s118
    %s120 = sphi 0, %s118
    %s121 = sphi 0, %s120
    %s135 = sphi 0, %s121
    %s139 = sphi 0, %s139
    %s141 = sphi 0, %s139
    %s142 = sphi 0, %s141
    %s156 = sphi 0, %s142
    %s160 = sphi 0, %s160
    %s162 = sphi 0, %s160
    %s163 = sphi 0, %s162
    %s177 = sphi 0, %s163
    %s181 = sphi 0, %s181
    %s183 = sphi 0, %s181
    %s184 = sphi 0, %s183
    %s198 = sphi 0, %s184
    %s202 = sphi 0, %s202
    %s204 = sphi 0, %s202
    %s205 = sphi 0, %s204
    %s219 = sphi 0, %s205
    %s223 = sphi 0, %s223
    %s225 = sphi 0, %s223
    %s226 = sphi 0, %s225
    %s240 = sphi 0, %s226
    %s244 = sphi 0, %s244
    %s246 = sphi 0, %s244
    %s247 = sphi 0, %s246
    %s261 = sphi 0, %s247
    %s265 = sphi 0, %s265
    %s267 = sphi 0, %s265
    %s268 = sphi 0, %s267
    %s282 = sphi 0, %s268
    %s286 = sphi 0, %s286
    %s288 = sphi 0, %s286
    %s289 = sphi 0, %s288
    %s303 = sphi 0, %s289
    %s307 = sphi 0, %s307
    %s309 = sphi 0, %s307
    %s310 = sphi 0, %s309
    %s324 = sphi 0, %s310
    %s328 = sphi 0, %s328
    %s330 = sphi 0, %s328
    %s331 = sphi 0, %s330
    %s345 = sphi 0, %s331
    %s351 = sphi 0, %s353
    %s354 = sphi 0, %s351
    %s355 = sphi 0, %s354
    %s371 = sphi 0, %s355
  $region4: #{a2c_cnn_forward.1} parent=0 // loop_header_branch
    %24 = sbr.rel (%p22) target = $region8
  $region5: #{a2c_cnn_forward.1} parent=0 // loop_body
    %s26 = ssub.s32 %s21, 1
    %s27 = ssub.s32 %s21, 2
    %s28 = sadd.s32 %s21, 1
    %s29 = ssub.s32 %s21, %s28
    %p30 = scmp.eq.s32.totalorder %s29, 0
    %s32 = sadd.s32 %s31, 1
    %s33 = scalar_select %p30, %s31, %s32
    %p36 = pneg %p30
    %p37 = scmp.eq.s32.totalorder %s21, 1
    %p38 = por %p36, %p37
    %p39 = scmp.ne.s32.totalorder %s31, %s34
    %p40 = scmp.eq.s32.totalorder %s21, 0
    %p41 = por %p39, %p40
    %p42 = scmp.ne.s32.totalorder %s31, %s34
    %p43 = scmp.eq.s32.totalorder %s26, 1
    %p44 = por %p42, %p43
    %p45 = scmp.ne.s32.totalorder %s34, %s35
    %p46 = scmp.eq.s32.totalorder %s26, 0
    %p47 = por %p45, %p46
    %p48 = scmp.ne.s32.totalorder %s34, %s35
    %p49 = scmp.eq.s32.totalorder %s27, 1
    %p50 = por %p48, %p49
    %p52 = scmp.ne.s32.totalorder %s35, %s51
    %p53 = scmp.eq.s32.totalorder %s27, 0
    %p54 = por %p52, %p53
    %s56 = sadd.s32 %s55, 1
    %p59 = scmp.eq.s32.totalorder %s21, 1
    %p60 = scmp.ne.s32.totalorder %s55, %s57
    %p61 = scmp.eq.s32.totalorder %s21, 0
    %p62 = por %p60, %p61
    %p63 = scmp.ne.s32.totalorder %s55, %s57
    %p64 = scmp.eq.s32.totalorder %s26, 1
    %p65 = por %p63, %p64
    %p66 = scmp.ne.s32.totalorder %s57, %s58
    %p67 = scmp.eq.s32.totalorder %s26, 0
    %p68 = por %p66, %p67
    %p69 = scmp.ne.s32.totalorder %s57, %s58
    %p70 = scmp.eq.s32.totalorder %s27, 1
    %p71 = por %p69, %p70
    %p73 = scmp.ne.s32.totalorder %s58, %s72
    %p74 = scmp.eq.s32.totalorder %s27, 0
    %p75 = por %p73, %p74
    %s77 = sadd.s32 %s76, 1
    %p80 = scmp.eq.s32.totalorder %s21, 1
    %p81 = scmp.ne.s32.totalorder %s76, %s78
    %p82 = scmp.eq.s32.totalorder %s21, 0
    %p83 = por %p81, %p82
    %p84 = scmp.ne.s32.totalorder %s76, %s78
    %p85 = scmp.eq.s32.totalorder %s26, 1
    %p86 = por %p84, %p85
    %p87 = scmp.ne.s32.totalorder %s78, %s79
    %p88 = scmp.eq.s32.totalorder %s26, 0
    %p89 = por %p87, %p88
    %p90 = scmp.ne.s32.totalorder %s78, %s79
    %p91 = scmp.eq.s32.totalorder %s27, 1
    %p92 = por %p90, %p91
    %p94 = scmp.ne.s32.totalorder %s79, %s93
    %p95 = scmp.eq.s32.totalorder %s27, 0
    %p96 = por %p94, %p95
    %s98 = sadd.s32 %s97, 1
    %p101 = scmp.eq.s32.totalorder %s21, 1
    %p102 = scmp.ne.s32.totalorder %s97, %s99
    %p103 = scmp.eq.s32.totalorder %s21, 0
    %p104 = por %p102, %p103
    %p105 = scmp.ne.s32.totalorder %s97, %s99
    %p106 = scmp.eq.s32.totalorder %s26, 1
    %p107 = por %p105, %p106
    %p108 = scmp.ne.s32.totalorder %s99, %s100
    %p109 = scmp.eq.s32.totalorder %s26, 0
    %p110 = por %p108, %p109
    %p111 = scmp.ne.s32.totalorder %s99, %s100
    %p112 = scmp.eq.s32.totalorder %s27, 1
    %p113 = por %p111, %p112
    %p115 = scmp.ne.s32.totalorder %s100, %s114
    %p116 = scmp.eq.s32.totalorder %s27, 0
    %p117 = por %p115, %p116
    %s119 = sadd.s32 %s118, 1
    %p122 = scmp.eq.s32.totalorder %s21, 1
    %p123 = scmp.ne.s32.totalorder %s118, %s120
    %p124 = scmp.eq.s32.totalorder %s21, 0
    %p125 = por %p123, %p124
    %p126 = scmp.ne.s32.totalorder %s118, %s120
    %p127 = scmp.eq.s32.totalorder %s26, 1
    %p128 = por %p126, %p127
    %p129 = scmp.ne.s32.totalorder %s120, %s121
    %p130 = scmp.eq.s32.totalorder %s26, 0
    %p131 = por %p129, %p130
    %p132 = scmp.ne.s32.totalorder %s120, %s121
    %p133 = scmp.eq.s32.totalorder %s27, 1
    %p134 = por %p132, %p133
    %p136 = scmp.ne.s32.totalorder %s121, %s135
    %p137 = scmp.eq.s32.totalorder %s27, 0
    %p138 = por %p136, %p137
    %s140 = sadd.s32 %s139, 1
    %p143 = scmp.eq.s32.totalorder %s21, 1
    %p144 = scmp.ne.s32.totalorder %s139, %s141
    %p145 = scmp.eq.s32.totalorder %s21, 0
    %p146 = por %p144, %p145
    %p147 = scmp.ne.s32.totalorder %s139, %s141
    %p148 = scmp.eq.s32.totalorder %s26, 1
    %p149 = por %p147, %p148
    %p150 = scmp.ne.s32.totalorder %s141, %s142
    %p151 = scmp.eq.s32.totalorder %s26, 0
    %p152 = por %p150, %p151
    %p153 = scmp.ne.s32.totalorder %s141, %s142
    %p154 = scmp.eq.s32.totalorder %s27, 1
    %p155 = por %p153, %p154
    %p157 = scmp.ne.s32.totalorder %s142, %s156
    %p158 = scmp.eq.s32.totalorder %s27, 0
    %p159 = por %p157, %p158
    %s161 = sadd.s32 %s160, 1
    %p164 = scmp.eq.s32.totalorder %s21, 1
    %p165 = scmp.ne.s32.totalorder %s160, %s162
    %p166 = scmp.eq.s32.totalorder %s21, 0
    %p167 = por %p165, %p166
    %p168 = scmp.ne.s32.totalorder %s160, %s162
    %p169 = scmp.eq.s32.totalorder %s26, 1
    %p170 = por %p168, %p169
    %p171 = scmp.ne.s32.totalorder %s162, %s163
    %p172 = scmp.eq.s32.totalorder %s26, 0
    %p173 = por %p171, %p172
    %p174 = scmp.ne.s32.totalorder %s162, %s163
    %p175 = scmp.eq.s32.totalorder %s27, 1
    %p176 = por %p174, %p175
    %p178 = scmp.ne.s32.totalorder %s163, %s177
    %p179 = scmp.eq.s32.totalorder %s27, 0
    %p180 = por %p178, %p179
    %s182 = sadd.s32 %s181, 1
    %p185 = scmp.eq.s32.totalorder %s21, 1
    %p186 = scmp.ne.s32.totalorder %s181, %s183
    %p187 = scmp.eq.s32.totalorder %s21, 0
    %p188 = por %p186, %p187
    %p189 = scmp.ne.s32.totalorder %s181, %s183
    %p190 = scmp.eq.s32.totalorder %s26, 1
    %p191 = por %p189, %p190
    %p192 = scmp.ne.s32.totalorder %s183, %s184
    %p193 = scmp.eq.s32.totalorder %s26, 0
    %p194 = por %p192, %p193
    %p195 = scmp.ne.s32.totalorder %s183, %s184
    %p196 = scmp.eq.s32.totalorder %s27, 1
    %p197 = por %p195, %p196
    %p199 = scmp.ne.s32.totalorder %s184, %s198
    %p200 = scmp.eq.s32.totalorder %s27, 0
    %p201 = por %p199, %p200
    %s203 = sadd.s32 %s202, 1
    %p206 = scmp.eq.s32.totalorder %s21, 1
    %p207 = scmp.ne.s32.totalorder %s202, %s204
    %p208 = scmp.eq.s32.totalorder %s21, 0
    %p209 = por %p207, %p208
    %p210 = scmp.ne.s32.totalorder %s202, %s204
    %p211 = scmp.eq.s32.totalorder %s26, 1
    %p212 = por %p210, %p211
    %p213 = scmp.ne.s32.totalorder %s204, %s205
    %p214 = scmp.eq.s32.totalorder %s26, 0
    %p215 = por %p213, %p214
    %p216 = scmp.ne.s32.totalorder %s204, %s205
    %p217 = scmp.eq.s32.totalorder %s27, 1
    %p218 = por %p216, %p217
    %p220 = scmp.ne.s32.totalorder %s205, %s219
    %p221 = scmp.eq.s32.totalorder %s27, 0
    %p222 = por %p220, %p221
    %s224 = sadd.s32 %s223, 1
    %p227 = scmp.eq.s32.totalorder %s21, 1
    %p228 = scmp.ne.s32.totalorder %s223, %s225
    %p229 = scmp.eq.s32.totalorder %s21, 0
    %p230 = por %p228, %p229
    %p231 = scmp.ne.s32.totalorder %s223, %s225
    %p232 = scmp.eq.s32.totalorder %s26, 1
    %p233 = por %p231, %p232
    %p234 = scmp.ne.s32.totalorder %s225, %s226
    %p235 = scmp.eq.s32.totalorder %s26, 0
    %p236 = por %p234, %p235
    %p237 = scmp.ne.s32.totalorder %s225, %s226
    %p238 = scmp.eq.s32.totalorder %s27, 1
    %p239 = por %p237, %p238
    %p241 = scmp.ne.s32.totalorder %s226, %s240
    %p242 = scmp.eq.s32.totalorder %s27, 0
    %p243 = por %p241, %p242
    %s245 = sadd.s32 %s244, 1
    %p248 = scmp.eq.s32.totalorder %s21, 1
    %p249 = scmp.ne.s32.totalorder %s244, %s246
    %p250 = scmp.eq.s32.totalorder %s21, 0
    %p251 = por %p249, %p250
    %p252 = scmp.ne.s32.totalorder %s244, %s246
    %p253 = scmp.eq.s32.totalorder %s26, 1
    %p254 = por %p252, %p253
    %p255 = scmp.ne.s32.totalorder %s246, %s247
    %p256 = scmp.eq.s32.totalorder %s26, 0
    %p257 = por %p255, %p256
    %p258 = scmp.ne.s32.totalorder %s246, %s247
    %p259 = scmp.eq.s32.totalorder %s27, 1
    %p260 = por %p258, %p259
    %p262 = scmp.ne.s32.totalorder %s247, %s261
    %p263 = scmp.eq.s32.totalorder %s27, 0
    %p264 = por %p262, %p263
    %s266 = sadd.s32 %s265, 1
    %p269 = scmp.eq.s32.totalorder %s21, 1
    %p270 = scmp.ne.s32.totalorder %s265, %s267
    %p271 = scmp.eq.s32.totalorder %s21, 0
    %p272 = por %p270, %p271
    %p273 = scmp.ne.s32.totalorder %s265, %s267
    %p274 = scmp.eq.s32.totalorder %s26, 1
    %p275 = por %p273, %p274
    %p276 = scmp.ne.s32.totalorder %s267, %s268
    %p277 = scmp.eq.s32.totalorder %s26, 0
    %p278 = por %p276, %p277
    %p279 = scmp.ne.s32.totalorder %s267, %s268
    %p280 = scmp.eq.s32.totalorder %s27, 1
    %p281 = por %p279, %p280
    %p283 = scmp.ne.s32.totalorder %s268, %s282
    %p284 = scmp.eq.s32.totalorder %s27, 0
    %p285 = por %p283, %p284
    %s287 = sadd.s32 %s286, 1
    %p290 = scmp.eq.s32.totalorder %s21, 1
    %p291 = scmp.ne.s32.totalorder %s286, %s288
    %p292 = scmp.eq.s32.totalorder %s21, 0
    %p293 = por %p291, %p292
    %p294 = scmp.ne.s32.totalorder %s286, %s288
    %p295 = scmp.eq.s32.totalorder %s26, 1
    %p296 = por %p294, %p295
    %p297 = scmp.ne.s32.totalorder %s288, %s289
    %p298 = scmp.eq.s32.totalorder %s26, 0
    %p299 = por %p297, %p298
    %p300 = scmp.ne.s32.totalorder %s288, %s289
    %p301 = scmp.eq.s32.totalorder %s27, 1
    %p302 = por %p300, %p301
    %p304 = scmp.ne.s32.totalorder %s289, %s303
    %p305 = scmp.eq.s32.totalorder %s27, 0
    %p306 = por %p304, %p305
    %s308 = sadd.s32 %s307, 1
    %p311 = scmp.eq.s32.totalorder %s21, 1
    %p312 = scmp.ne.s32.totalorder %s307, %s309
    %p313 = scmp.eq.s32.totalorder %s21, 0
    %p314 = por %p312, %p313
    %p315 = scmp.ne.s32.totalorder %s307, %s309
    %p316 = scmp.eq.s32.totalorder %s26, 1
    %p317 = por %p315, %p316
    %p318 = scmp.ne.s32.totalorder %s309, %s310
    %p319 = scmp.eq.s32.totalorder %s26, 0
    %p320 = por %p318, %p319
    %p321 = scmp.ne.s32.totalorder %s309, %s310
    %p322 = scmp.eq.s32.totalorder %s27, 1
    %p323 = por %p321, %p322
    %p325 = scmp.ne.s32.totalorder %s310, %s324
    %p326 = scmp.eq.s32.totalorder %s27, 0
    %p327 = por %p325, %p326
    %s329 = sadd.s32 %s328, 1
    %p332 = scmp.eq.s32.totalorder %s21, 1
    %p333 = scmp.ne.s32.totalorder %s328, %s330
    %p334 = scmp.eq.s32.totalorder %s21, 0
    %p335 = por %p333, %p334
    %p336 = scmp.ne.s32.totalorder %s328, %s330
    %p337 = scmp.eq.s32.totalorder %s26, 1
    %p338 = por %p336, %p337
    %p339 = scmp.ne.s32.totalorder %s330, %s331
    %p340 = scmp.eq.s32.totalorder %s26, 0
    %p341 = por %p339, %p340
    %p342 = scmp.ne.s32.totalorder %s330, %s331
    %p343 = scmp.eq.s32.totalorder %s27, 1
    %p344 = por %p342, %p343
    %p346 = scmp.ne.s32.totalorder %s331, %s345
    %p347 = scmp.eq.s32.totalorder %s27, 0
    %p348 = por %p346, %p347
    %s349 = ssub.s32 %s21, %s28
    %p350 = scmp.eq.s32.totalorder %s349, 0
    %s352 = sadd.s32 %s351, 1
    %s353 = scalar_select %p350, %s351, %s352
    %p356 = pneg %p350
    %p357 = scmp.eq.s32.totalorder %s21, 1
    %p358 = por %p356, %p357
    %p359 = scmp.ne.s32.totalorder %s351, %s354
    %p360 = scmp.eq.s32.totalorder %s21, 0
    %p361 = por %p359, %p360
    %p362 = scmp.ne.s32.totalorder %s351, %s354
    %p363 = scmp.eq.s32.totalorder %s26, 1
    %p364 = por %p362, %p363
    %p365 = scmp.ne.s32.totalorder %s354, %s355
    %p366 = scmp.eq.s32.totalorder %s26, 0
    %p367 = por %p365, %p366
    %p368 = scmp.ne.s32.totalorder %s354, %s355
    %p369 = scmp.eq.s32.totalorder %s27, 1
    %p370 = por %p368, %p369
    %p372 = scmp.ne.s32.totalorder %s355, %s371
    %p373 = scmp.eq.s32.totalorder %s27, 0
    %p374 = por %p372, %p373
    %p375 = scmp.le.s32.totalorder 1, %s21
    %p376 = scmp.lt.s32.totalorder %s21, 3
    %p377 = pnand %p375, %p376
    %p378 = pneg %p377
    // Predicated region
    $region9: #{a2c_cnn_forward.1} parent=5 // pred_check
      _
    $region10: #{a2c_cnn_forward.1} parent=5 // pred_check_branch
      %380 = sbr.rel (%p377) target = $region12
    $region11: #{a2c_cnn_forward.1} parent=5 // pred_region
      %s381 = ssub.s32 %s21, 1
      // Predicated region
      $region13: #{a2c_cnn_forward.1} parent=11 // pred_check
        %p382 = pneg %p68
      $region14: #{a2c_cnn_forward.1} parent=11 // pred_check_branch
        %384 = sbr.rel (%p382) target = $region16
      $region15: #{a2c_cnn_forward.1} parent=11 // pred_region
        _
      $region16: #{a2c_cnn_forward.1} parent=11 // pred_fallthru
        _
      // Predicated region
      $region17: #{a2c_cnn_forward.1} parent=11 // pred_check
        %p385 = pneg %p89
      $region18: #{a2c_cnn_forward.1} parent=11 // pred_check_branch
        %387 = sbr.rel (%p385) target = $region20
      $region19: #{a2c_cnn_forward.1} parent=11 // pred_region
        _
      $region20: #{a2c_cnn_forward.1} parent=11 // pred_fallthru
        _
      // Predicated region
      $region21: #{a2c_cnn_forward.1} parent=11 // pred_check
        %p388 = pneg %p110
      $region22: #{a2c_cnn_forward.1} parent=11 // pred_check_branch
        %390 = sbr.rel (%p388) target = $region24
      $region23: #{a2c_cnn_forward.1} parent=11 // pred_region
        _
      $region24: #{a2c_cnn_forward.1} parent=11 // pred_fallthru
        _
      // Predicated region
      $region25: #{a2c_cnn_forward.1} parent=11 // pred_check
        %p391 = pneg %p131
      $region26: #{a2c_cnn_forward.1} parent=11 // pred_check_branch
        %393 = sbr.rel (%p391) target = $region28
      $region27: #{a2c_cnn_forward.1} parent=11 // pred_region
        _
      $region28: #{a2c_cnn_forward.1} parent=11 // pred_fallthru
        _
      // Predicated region
      $region29: #{a2c_cnn_forward.1} parent=11 // pred_check
        %p394 = pneg %p152
      $region30: #{a2c_cnn_forward.1} parent=11 // pred_check_branch
        %396 = sbr.rel (%p394) target = $region32
      $region31: #{a2c_cnn_forward.1} parent=11 // pred_region
        _
      $region32: #{a2c_cnn_forward.1} parent=11 // pred_fallthru
        _
      // Predicated region
      $region33: #{a2c_cnn_forward.1} parent=11 // pred_check
        %p397 = pneg %p173
      $region34: #{a2c_cnn_forward.1} parent=11 // pred_check_branch
        %399 = sbr.rel (%p397) target = $region36
      $region35: #{a2c_cnn_forward.1} parent=11 // pred_region
        _
      $region36: #{a2c_cnn_forward.1} parent=11 // pred_fallthru
        _
      // Predicated region
      $region37: #{a2c_cnn_forward.1} parent=11 // pred_check
        %p400 = pneg %p194
      $region38: #{a2c_cnn_forward.1} parent=11 // pred_check_branch
        %402 = sbr.rel (%p400) target = $region40
      $region39: #{a2c_cnn_forward.1} parent=11 // pred_region
        _
      $region40: #{a2c_cnn_forward.1} parent=11 // pred_fallthru
        _
      // Predicated region
      $region41: #{a2c_cnn_forward.1} parent=11 // pred_check
        %p403 = pneg %p215
      $region42: #{a2c_cnn_forward.1} parent=11 // pred_check_branch
        %405 = sbr.rel (%p403) target = $region44
      $region43: #{a2c_cnn_forward.1} parent=11 // pred_region
        _
      $region44: #{a2c_cnn_forward.1} parent=11 // pred_fallthru
        _
      // Predicated region
      $region45: #{a2c_cnn_forward.1} parent=11 // pred_check
        %p406 = pneg %p236
      $region46: #{a2c_cnn_forward.1} parent=11 // pred_check_branch
        %408 = sbr.rel (%p406) target = $region48
      $region47: #{a2c_cnn_forward.1} parent=11 // pred_region
        _
      $region48: #{a2c_cnn_forward.1} parent=11 // pred_fallthru
        _
      // Predicated region
      $region49: #{a2c_cnn_forward.1} parent=11 // pred_check
        %p409 = pneg %p257
      $region50: #{a2c_cnn_forward.1} parent=11 // pred_check_branch
        %411 = sbr.rel (%p409) target = $region52
      $region51: #{a2c_cnn_forward.1} parent=11 // pred_region
        _
      $region52: #{a2c_cnn_forward.1} parent=11 // pred_fallthru
        _
      // Predicated region
      $region53: #{a2c_cnn_forward.1} parent=11 // pred_check
        %p412 = pneg %p278
      $region54: #{a2c_cnn_forward.1} parent=11 // pred_check_branch
        %414 = sbr.rel (%p412) target = $region56
      $region55: #{a2c_cnn_forward.1} parent=11 // pred_region
        _
      $region56: #{a2c_cnn_forward.1} parent=11 // pred_fallthru
        _
      // Predicated region
      $region57: #{a2c_cnn_forward.1} parent=11 // pred_check
        %p415 = pneg %p299
      $region58: #{a2c_cnn_forward.1} parent=11 // pred_check_branch
        %417 = sbr.rel (%p415) target = $region60
      $region59: #{a2c_cnn_forward.1} parent=11 // pred_region
        _
      $region60: #{a2c_cnn_forward.1} parent=11 // pred_fallthru
        _
      // Predicated region
      $region61: #{a2c_cnn_forward.1} parent=11 // pred_check
        %p418 = pneg %p320
      $region62: #{a2c_cnn_forward.1} parent=11 // pred_check_branch
        %420 = sbr.rel (%p418) target = $region64
      $region63: #{a2c_cnn_forward.1} parent=11 // pred_region
        _
      $region64: #{a2c_cnn_forward.1} parent=11 // pred_fallthru
        _
      // Predicated region
      $region65: #{a2c_cnn_forward.1} parent=11 // pred_check
        %p421 = pneg %p341
      $region66: #{a2c_cnn_forward.1} parent=11 // pred_check_branch
        %423 = sbr.rel (%p421) target = $region68
      $region67: #{a2c_cnn_forward.1} parent=11 // pred_region
        _
      $region68: #{a2c_cnn_forward.1} parent=11 // pred_fallthru
        _
    $region12: #{a2c_cnn_forward.1} parent=5 // pred_fallthru
      _
    %p424 = scmp.lt.s32.totalorder %s21, 2
    // Predicated region
    $region69: #{a2c_cnn_forward.1} parent=5 // pred_check
      %p425 = pneg %p424
    $region70: #{a2c_cnn_forward.1} parent=5 // pred_check_branch
      %427 = sbr.rel (%p425) target = $region72
    $region71: #{a2c_cnn_forward.1} parent=5 // pred_region
      // Predicated region
      $region73: #{a2c_cnn_forward.1} parent=71 // pred_check
        %p428 = pneg %p41
      $region74: #{a2c_cnn_forward.1} parent=71 // pred_check_branch
        %430 = sbr.rel (%p428) target = $region76
      $region75: #{a2c_cnn_forward.1} parent=71 // pred_region
        %p431 = scmp.lt.s32.totalorder %s21, 1
        %s432 = scalar_select %p431, %s21, 1
        %s433 = smul.addr %s432, 16
        %s434 = smul.addr %s433, 4
        %s435 = scalar_lea.vmem %s0, %s434
      $region76: #{a2c_cnn_forward.1} parent=71 // pred_fallthru
        _
    $region72: #{a2c_cnn_forward.1} parent=5 // pred_fallthru
      _
    %p436 = scmp.le.s32.totalorder 1, %s21
    %p437 = scmp.lt.s32.totalorder %s21, 3
    %p438 = pnand %p436, %p437
    %p439 = pneg %p438
    // Predicated region
    $region77: #{a2c_cnn_forward.1} parent=5 // pred_check
      _
    $region78: #{a2c_cnn_forward.1} parent=5 // pred_check_branch
      %441 = sbr.rel (%p438) target = $region80
    $region79: #{a2c_cnn_forward.1} parent=5 // pred_region
      %s442 = ssub.s32 %s21, 1
      %p443 = scmp.lt.s32.totalorder %s26, 1
      %s444 = scalar_select %p443, %s26, 1
      %s445 = smul.addr %s444, 16
      %s446 = smul.addr %s445, 4
      %s447 = scalar_lea.vmem %s0, %s446
      %p448 = pneg %p47
      %p449 = pneg %p44
      %p450 = pneg %p68
      %p451 = pneg %p65
      %p452 = pneg %p89
      %p453 = pneg %p86
      %p454 = pneg %p110
      %p455 = pneg %p107
      %p456 = pneg %p131
      %p457 = pneg %p128
      %p458 = pneg %p152
      %p459 = pneg %p149
      %p460 = pneg %p173
      %p461 = pneg %p170
      %p462 = pneg %p194
      %p463 = pneg %p191
      %p464 = pneg %p215
      %p465 = pneg %p212
      %p466 = pneg %p236
      %p467 = pneg %p233
      %p468 = pneg %p257
      %p469 = pneg %p254
      %p470 = pneg %p278
      %p471 = pneg %p275
      %p472 = pneg %p299
      %p473 = pneg %p296
      %p474 = pneg %p320
      %p475 = pneg %p317
      %p476 = pneg %p341
      %p477 = pneg %p338
      %p478 = pneg %p367
      %p479 = pneg %p364
      %p480 = scmp.lt.s32.totalorder %s26, 1
      %s481 = scalar_select %p480, %s26, 1
      %s482 = scalar_lea.vmem %s15, %s481
      %p483 = scmp.lt.s32.totalorder %s26, 1
      %s484 = scalar_select %p483, %s26, 1
      %s485 = smul.addr %s484, 16
      %s486 = smul.addr %s485, 4
      %s487 = scalar_lea.vmem %s0, %s486
      %p488 = scmp.lt.s32.totalorder %s26, 1
      %s489 = scalar_select %p488, %s26, 1
      %s490 = scalar_lea.vmem %s15, %s489
      %v492 = vld [vmem:[%s487] sm:$0xff]
      %v493 = vld [vmem:[%s487 + $0x8] sm:$0xff]
      %v494 = vld [vmem:[%s487 + $0x10] sm:$0xff]
      %v495 = vld [vmem:[%s487 + $0x18] sm:$0xff]
      %v496 = vld [vmem:[%s487 + $0x20] sm:$0xff]
      %v497 = vld [vmem:[%s487 + $0x28] sm:$0xff]
      %v498 = vld [vmem:[%s487 + $0x30] sm:$0xff]
      %v499 = vld [vmem:[%s487 + $0x38] sm:$0xff]
      %v500 = vld [vmem:[%s1] sm:$0xf]
      %v501 = vld [vmem:[%s1 + $0x4] sm:$0xf]
      %v504 = vunpack.c.l.b16 %v500
      %v505 = vunpack.c.l.b16 %v501
      %v506 = vpack.c.b16 %v505, %v504
      %v515 = vunpack.c.l.b16 %v492
      %v516 = vunpack.c.h.b16 %v492
      %v517 = vunpack.c.l.b16 %v493
      %v518 = vunpack.c.h.b16 %v493
      %v519 = vunpack.c.l.b16 %v494
      %v520 = vunpack.c.h.b16 %v494
      %v521 = vunpack.c.l.b16 %v495
      %v522 = vunpack.c.h.b16 %v495
      %v523 = vunpack.c.l.b16 %v496
      %v524 = vunpack.c.h.b16 %v496
      %v525 = vunpack.c.l.b16 %v497
      %v526 = vunpack.c.h.b16 %v497
      %v527 = vunpack.c.l.b16 %v498
      %v528 = vunpack.c.h.b16 %v498
      %v529 = vunpack.c.l.b16 %v499
      %v530 = vunpack.c.h.b16 %v499
      %v531 = vpack.c.b16 %v517, %v515
      %v532 = vpack.c.b16 %v518, %v516
      %v533 = vpack.c.b16 %v521, %v519
      %v534 = vpack.c.b16 %v522, %v520
      %v535 = vpack.c.b16 %v525, %v523
      %v536 = vpack.c.b16 %v526, %v524
      %v537 = vpack.c.b16 %v529, %v527
      %v538 = vpack.c.b16 %v530, %v528
      %vm547 = vcmask 523264
      %v549 = vsel %vm547, %v506, 0
      %551 = vmatpush.bf16.msra.mxu0 0
      %552 = vmatpush.bf16.msra.mxu0 0
      %553 = vmatpush.bf16.msra.mxu0 0
      %554 = vmatpush.bf16.msra.mxu0 0
      %555 = vmatpush.bf16.msra.mxu0 %v537
      %556 = vmatpush.bf16.msra.mxu0 %v535
      %557 = vmatpush.bf16.msra.mxu0 %v533
      %558 = vmatpush.bf16.msra.mxu0 %v531
      %559 = vmatmul.bf16.gmra.mxu0 %v549
      %v560 = vpop.f32.mrf.mxu0
      %v561 = vadd.f32 0.0, %v560
      %v562 = vpop.f32.mrf.mxu0
      %v563 = vadd.f32 0.0, %v562
      %564 = vdwg.mxu0
      %565 = vmatpush.bf16.msra.mxu0 0
      %566 = vmatpush.bf16.msra.mxu0 0
      %567 = vmatpush.bf16.msra.mxu0 0
      %568 = vmatpush.bf16.msra.mxu0 0
      %569 = vmatpush.bf16.msra.mxu0 %v538
      %570 = vmatpush.bf16.msra.mxu0 %v536
      %571 = vmatpush.bf16.msra.mxu0 %v534
      %572 = vmatpush.bf16.msra.mxu0 %v532
      %573 = vmatmul.bf16.gmra.mxu0 %v549
      %v574 = vpop.f32.mrf.mxu0
      %v575 = vadd.f32 0.0, %v574
      %v576 = vpop.f32.mrf.mxu0
      %v577 = vadd.f32 0.0, %v576
      %578 = vdwg.mxu0
      %v579 = vpack.c.bf16 %v563, %v561
      %v580 = vpack.c.bf16 %v577, %v575
      %v581 = vld [vmem:[%s2] sm:$0xff]
      %v582 = vld [vmem:[%s2 + $0x8] sm:$0xff]
      %v583 = vld [vmem:[%s2 + $0x10] sm:$0xff]
      %v584 = vld [vmem:[%s2 + $0x18] sm:$0xff]
      %v585 = vld [vmem:[%s2 + $0x20] sm:$0xff]
      %v586 = vld [vmem:[%s2 + $0x28] sm:$0xff]
      %v587 = vld [vmem:[%s2 + $0x30] sm:$0xff]
      %v588 = vld [vmem:[%s2 + $0x38] sm:$0xff]
      %v589 = vld [vmem:[%s2 + $0x40] sm:$0xff]
      %v590 = vld [vmem:[%s2 + $0x48] sm:$0xff]
      %v591 = vld [vmem:[%s2 + $0x50] sm:$0xff]
      %v592 = vld [vmem:[%s2 + $0x58] sm:$0xff]
      %v593 = vld [vmem:[%s2 + $0x60] sm:$0xff]
      %v594 = vld [vmem:[%s2 + $0x68] sm:$0xff]
      %v595 = vld [vmem:[%s2 + $0x70] sm:$0xff]
      %v596 = vld [vmem:[%s2 + $0x78] sm:$0xff]
      %v597 = vld [vmem:[%s2 + $0x80] sm:$0xff]
      %v598 = vld [vmem:[%s2 + $0x88] sm:$0xff]
      %v599 = vld [vmem:[%s2 + $0x90] sm:$0xff]
      %v600 = vld [vmem:[%s2 + $0x98] sm:$0xff]
      %v601 = vld [vmem:[%s2 + $0xa0] sm:$0xff]
      %v602 = vld [vmem:[%s2 + $0xa8] sm:$0xff]
      %v603 = vld [vmem:[%s2 + $0xb0] sm:$0xff]
      %v604 = vld [vmem:[%s2 + $0xb8] sm:$0xff]
      %v605 = vld [vmem:[%s2 + $0xc0] sm:$0xff]
      %v606 = vld [vmem:[%s2 + $0xc8] sm:$0xff]
      %v607 = vld [vmem:[%s2 + $0xd0] sm:$0xff]
      %v608 = vld [vmem:[%s2 + $0xd8] sm:$0xff]
      %v609 = vld [vmem:[%s2 + $0xe0] sm:$0xff]
      %v610 = vld [vmem:[%s2 + $0xe8] sm:$0xff]
      %v611 = vld [vmem:[%s2 + $0xf0] sm:$0xff]
      %v612 = vld [vmem:[%s2 + $0xf8] sm:$0xff]
      %v613 = vld [vmem:[%s2 + $0x100] sm:$0xff]
      %v614 = vld [vmem:[%s2 + $0x108] sm:$0xff]
      %v615 = vld [vmem:[%s2 + $0x110] sm:$0xff]
      %v616 = vld [vmem:[%s2 + $0x118] sm:$0xff]
      %v617 = vld [vmem:[%s2 + $0x120] sm:$0xff]
      %v618 = vld [vmem:[%s2 + $0x128] sm:$0xff]
      %v619 = vld [vmem:[%s2 + $0x130] sm:$0xff]
      %v620 = vld [vmem:[%s2 + $0x138] sm:$0xff]
      %v621 = vld [vmem:[%s2 + $0x140] sm:$0xff]
      %v622 = vld [vmem:[%s2 + $0x148] sm:$0xff]
      %v623 = vld [vmem:[%s2 + $0x150] sm:$0xff]
      %v624 = vld [vmem:[%s2 + $0x158] sm:$0xff]
      %v625 = vld [vmem:[%s2 + $0x160] sm:$0xff]
      %v626 = vld [vmem:[%s2 + $0x168] sm:$0xff]
      %v627 = vld [vmem:[%s2 + $0x170] sm:$0xff]
      %v628 = vld [vmem:[%s2 + $0x178] sm:$0xff]
      %v629 = vld [vmem:[%s2 + $0x180] sm:$0xff]
      %v630 = vld [vmem:[%s2 + $0x188] sm:$0xff]
      %v631 = vld [vmem:[%s2 + $0x190] sm:$0xff]
      %v632 = vld [vmem:[%s2 + $0x198] sm:$0xff]
      %v633 = vld [vmem:[%s2 + $0x1a0] sm:$0xff]
      %v634 = vld [vmem:[%s2 + $0x1a8] sm:$0xff]
      %v635 = vld [vmem:[%s2 + $0x1b0] sm:$0xff]
      %v636 = vld [vmem:[%s2 + $0x1b8] sm:$0xff]
      %v637 = vld [vmem:[%s2 + $0x1c0] sm:$0xff]
      %v638 = vld [vmem:[%s2 + $0x1c8] sm:$0xff]
      %v639 = vld [vmem:[%s2 + $0x1d0] sm:$0xff]
      %v640 = vld [vmem:[%s2 + $0x1d8] sm:$0xff]
      %v641 = vld [vmem:[%s2 + $0x1e0] sm:$0xff]
      %v642 = vld [vmem:[%s2 + $0x1e8] sm:$0xff]
      %v643 = vld [vmem:[%s2 + $0x1f0] sm:$0xff]
      %v644 = vld [vmem:[%s2 + $0x1f8] sm:$0xff]
      %s645 = scalar_lea.vmem %s1, 8
      %v646 = vld [vmem:[%s645] sm:$0xf]
      %v647 = vld [vmem:[%s645 + $0x4] sm:$0xf]
      %v650 = vunpack.c.l.b16 %v646
      %v651 = vunpack.c.l.b16 %v647
      %v652 = vpack.c.b16 %v651, %v650
      %v654 = vsel %vm547, %v652, 0
      %656 = vmatpush.bf16.msra.mxu0 0
      %657 = vmatpush.bf16.msra.mxu0 0
      %658 = vmatpush.bf16.msra.mxu0 0
      %659 = vmatpush.bf16.msra.mxu0 0
      %660 = vmatpush.bf16.msra.mxu0 %v537
      %661 = vmatpush.bf16.msra.mxu0 %v535
      %662 = vmatpush.bf16.msra.mxu0 %v533
      %663 = vmatpush.bf16.msra.mxu0 %v531
      %664 = vmatmul.bf16.gmra.mxu0 %v654
      %v665 = vpop.f32.mrf.mxu0
      %v666 = vadd.f32 0.0, %v665
      %v667 = vpop.f32.mrf.mxu0
      %v668 = vadd.f32 0.0, %v667
      %669 = vdwg.mxu0
      %670 = vmatpush.bf16.msra.mxu0 0
      %671 = vmatpush.bf16.msra.mxu0 0
      %672 = vmatpush.bf16.msra.mxu0 0
      %673 = vmatpush.bf16.msra.mxu0 0
      %674 = vmatpush.bf16.msra.mxu0 %v538
      %675 = vmatpush.bf16.msra.mxu0 %v536
      %676 = vmatpush.bf16.msra.mxu0 %v534
      %677 = vmatpush.bf16.msra.mxu0 %v532
      %678 = vmatmul.bf16.gmra.mxu0 %v654
      %v679 = vpop.f32.mrf.mxu0
      %v680 = vadd.f32 0.0, %v679
      %v681 = vpop.f32.mrf.mxu0
      %v682 = vadd.f32 0.0, %v681
      %683 = vdwg.mxu0
      %v684 = vpack.c.bf16 %v668, %v666
      %v685 = vpack.c.bf16 %v682, %v680
      %s686 = scalar_lea.vmem %s2, 512
      %v687 = vld [vmem:[%s686] sm:$0xff]
      %v688 = vld [vmem:[%s686 + $0x8] sm:$0xff]
      %v689 = vld [vmem:[%s686 + $0x10] sm:$0xff]
      %v690 = vld [vmem:[%s686 + $0x18] sm:$0xff]
      %v691 = vld [vmem:[%s686 + $0x20] sm:$0xff]
      %v692 = vld [vmem:[%s686 + $0x28] sm:$0xff]
      %v693 = vld [vmem:[%s686 + $0x30] sm:$0xff]
      %v694 = vld [vmem:[%s686 + $0x38] sm:$0xff]
      %v695 = vld [vmem:[%s686 + $0x40] sm:$0xff]
      %v696 = vld [vmem:[%s686 + $0x48] sm:$0xff]
      %v697 = vld [vmem:[%s686 + $0x50] sm:$0xff]
      %v698 = vld [vmem:[%s686 + $0x58] sm:$0xff]
      %v699 = vld [vmem:[%s686 + $0x60] sm:$0xff]
      %v700 = vld [vmem:[%s686 + $0x68] sm:$0xff]
      %v701 = vld [vmem:[%s686 + $0x70] sm:$0xff]
      %v702 = vld [vmem:[%s686 + $0x78] sm:$0xff]
      %v703 = vld [vmem:[%s686 + $0x80] sm:$0xff]
      %v704 = vld [vmem:[%s686 + $0x88] sm:$0xff]
      %v705 = vld [vmem:[%s686 + $0x90] sm:$0xff]
      %v706 = vld [vmem:[%s686 + $0x98] sm:$0xff]
      %v707 = vld [vmem:[%s686 + $0xa0] sm:$0xff]
      %v708 = vld [vmem:[%s686 + $0xa8] sm:$0xff]
      %v709 = vld [vmem:[%s686 + $0xb0] sm:$0xff]
      %v710 = vld [vmem:[%s686 + $0xb8] sm:$0xff]
      %v711 = vld [vmem:[%s686 + $0xc0] sm:$0xff]
      %v712 = vld [vmem:[%s686 + $0xc8] sm:$0xff]
      %v713 = vld [vmem:[%s686 + $0xd0] sm:$0xff]
      %v714 = vld [vmem:[%s686 + $0xd8] sm:$0xff]
      %v715 = vld [vmem:[%s686 + $0xe0] sm:$0xff]
      %v716 = vld [vmem:[%s686 + $0xe8] sm:$0xff]
      %v717 = vld [vmem:[%s686 + $0xf0] sm:$0xff]
      %v718 = vld [vmem:[%s686 + $0xf8] sm:$0xff]
      %v719 = vld [vmem:[%s686 + $0x100] sm:$0xff]
      %v720 = vld [vmem:[%s686 + $0x108] sm:$0xff]
      %v721 = vld [vmem:[%s686 + $0x110] sm:$0xff]
      %v722 = vld [vmem:[%s686 + $0x118] sm:$0xff]
      %v723 = vld [vmem:[%s686 + $0x120] sm:$0xff]
      %v724 = vld [vmem:[%s686 + $0x128] sm:$0xff]
      %v725 = vld [vmem:[%s686 + $0x130] sm:$0xff]
      %v726 = vld [vmem:[%s686 + $0x138] sm:$0xff]
      %v727 = vld [vmem:[%s686 + $0x140] sm:$0xff]
      %v728 = vld [vmem:[%s686 + $0x148] sm:$0xff]
      %v729 = vld [vmem:[%s686 + $0x150] sm:$0xff]
      %v730 = vld [vmem:[%s686 + $0x158] sm:$0xff]
      %v731 = vld [vmem:[%s686 + $0x160] sm:$0xff]
      %v732 = vld [vmem:[%s686 + $0x168] sm:$0xff]
      %v733 = vld [vmem:[%s686 + $0x170] sm:$0xff]
      %v734 = vld [vmem:[%s686 + $0x178] sm:$0xff]
      %v735 = vld [vmem:[%s686 + $0x180] sm:$0xff]
      %v736 = vld [vmem:[%s686 + $0x188] sm:$0xff]
      %v737 = vld [vmem:[%s686 + $0x190] sm:$0xff]
      %v738 = vld [vmem:[%s686 + $0x198] sm:$0xff]
      %v739 = vld [vmem:[%s686 + $0x1a0] sm:$0xff]
      %v740 = vld [vmem:[%s686 + $0x1a8] sm:$0xff]
      %v741 = vld [vmem:[%s686 + $0x1b0] sm:$0xff]
      %v742 = vld [vmem:[%s686 + $0x1b8] sm:$0xff]
      %v743 = vld [vmem:[%s686 + $0x1c0] sm:$0xff]
      %v744 = vld [vmem:[%s686 + $0x1c8] sm:$0xff]
      %v745 = vld [vmem:[%s686 + $0x1d0] sm:$0xff]
      %v746 = vld [vmem:[%s686 + $0x1d8] sm:$0xff]
      %v747 = vld [vmem:[%s686 + $0x1e0] sm:$0xff]
      %v748 = vld [vmem:[%s686 + $0x1e8] sm:$0xff]
      %v749 = vld [vmem:[%s686 + $0x1f0] sm:$0xff]
      %v750 = vld [vmem:[%s686 + $0x1f8] sm:$0xff]
      %v815 = vunpack.c.l.b16 %v687
      %v816 = vunpack.c.h.b16 %v687
      %v817 = vunpack.c.l.b16 %v688
      %v818 = vunpack.c.h.b16 %v688
      %v819 = vunpack.c.l.b16 %v689
      %v820 = vunpack.c.h.b16 %v689
      %v821 = vunpack.c.l.b16 %v690
      %v822 = vunpack.c.h.b16 %v690
      %v823 = vunpack.c.l.b16 %v691
      %v824 = vunpack.c.h.b16 %v691
      %v825 = vunpack.c.l.b16 %v692
      %v826 = vunpack.c.h.b16 %v692
      %v827 = vunpack.c.l.b16 %v693
      %v828 = vunpack.c.h.b16 %v693
      %v829 = vunpack.c.l.b16 %v694
      %v830 = vunpack.c.h.b16 %v694
      %v831 = vunpack.c.l.b16 %v695
      %v832 = vunpack.c.h.b16 %v695
      %v833 = vunpack.c.l.b16 %v696
      %v834 = vunpack.c.h.b16 %v696
      %v835 = vunpack.c.l.b16 %v697
      %v836 = vunpack.c.h.b16 %v697
      %v837 = vunpack.c.l.b16 %v698
      %v838 = vunpack.c.h.b16 %v698
      %v839 = vunpack.c.l.b16 %v699
      %v840 = vunpack.c.h.b16 %v699
      %v841 = vunpack.c.l.b16 %v700
      %v842 = vunpack.c.h.b16 %v700
      %v843 = vunpack.c.l.b16 %v701
      %v844 = vunpack.c.h.b16 %v701
      %v845 = vunpack.c.l.b16 %v702
      %v846 = vunpack.c.h.b16 %v702
      %v847 = vunpack.c.l.b16 %v703
      %v848 = vunpack.c.h.b16 %v703
      %v849 = vunpack.c.l.b16 %v704
      %v850 = vunpack.c.h.b16 %v704
      %v851 = vunpack.c.l.b16 %v705
      %v852 = vunpack.c.h.b16 %v705
      %v853 = vunpack.c.l.b16 %v706
      %v854 = vunpack.c.h.b16 %v706
      %v855 = vunpack.c.l.b16 %v707
      %v856 = vunpack.c.h.b16 %v707
      %v857 = vunpack.c.l.b16 %v708
      %v858 = vunpack.c.h.b16 %v708
      %v859 = vunpack.c.l.b16 %v709
      %v860 = vunpack.c.h.b16 %v709
      %v861 = vunpack.c.l.b16 %v710
      %v862 = vunpack.c.h.b16 %v710
      %v863 = vunpack.c.l.b16 %v711
      %v864 = vunpack.c.h.b16 %v711
      %v865 = vunpack.c.l.b16 %v712
      %v866 = vunpack.c.h.b16 %v712
      %v867 = vunpack.c.l.b16 %v713
      %v868 = vunpack.c.h.b16 %v713
      %v869 = vunpack.c.l.b16 %v714
      %v870 = vunpack.c.h.b16 %v714
      %v871 = vunpack.c.l.b16 %v715
      %v872 = vunpack.c.h.b16 %v715
      %v873 = vunpack.c.l.b16 %v716
      %v874 = vunpack.c.h.b16 %v716
      %v875 = vunpack.c.l.b16 %v717
      %v876 = vunpack.c.h.b16 %v717
      %v877 = vunpack.c.l.b16 %v718
      %v878 = vunpack.c.h.b16 %v718
      %v879 = vunpack.c.l.b16 %v719
      %v880 = vunpack.c.h.b16 %v719
      %v881 = vunpack.c.l.b16 %v720
      %v882 = vunpack.c.h.b16 %v720
      %v883 = vunpack.c.l.b16 %v721
      %v884 = vunpack.c.h.b16 %v721
      %v885 = vunpack.c.l.b16 %v722
      %v886 = vunpack.c.h.b16 %v722
      %v887 = vunpack.c.l.b16 %v723
      %v888 = vunpack.c.h.b16 %v723
      %v889 = vunpack.c.l.b16 %v724
      %v890 = vunpack.c.h.b16 %v724
      %v891 = vunpack.c.l.b16 %v725
      %v892 = vunpack.c.h.b16 %v725
      %v893 = vunpack.c.l.b16 %v726
      %v894 = vunpack.c.h.b16 %v726
      %v895 = vunpack.c.l.b16 %v727
      %v896 = vunpack.c.h.b16 %v727
      %v897 = vunpack.c.l.b16 %v728
      %v898 = vunpack.c.h.b16 %v728
      %v899 = vunpack.c.l.b16 %v729
      %v900 = vunpack.c.h.b16 %v729
      %v901 = vunpack.c.l.b16 %v730
      %v902 = vunpack.c.h.b16 %v730
      %v903 = vunpack.c.l.b16 %v731
      %v904 = vunpack.c.h.b16 %v731
      %v905 = vunpack.c.l.b16 %v732
      %v906 = vunpack.c.h.b16 %v732
      %v907 = vunpack.c.l.b16 %v733
      %v908 = vunpack.c.h.b16 %v733
      %v909 = vunpack.c.l.b16 %v734
      %v910 = vunpack.c.h.b16 %v734
      %v911 = vunpack.c.l.b16 %v735
      %v912 = vunpack.c.h.b16 %v735
      %v913 = vunpack.c.l.b16 %v736
      %v914 = vunpack.c.h.b16 %v736
      %v915 = vunpack.c.l.b16 %v737
      %v916 = vunpack.c.h.b16 %v737
      %v917 = vunpack.c.l.b16 %v738
      %v918 = vunpack.c.h.b16 %v738
      %v919 = vunpack.c.l.b16 %v739
      %v920 = vunpack.c.h.b16 %v739
      %v921 = vunpack.c.l.b16 %v740
      %v922 = vunpack.c.h.b16 %v740
      %v923 = vunpack.c.l.b16 %v741
      %v924 = vunpack.c.h.b16 %v741
      %v925 = vunpack.c.l.b16 %v742
      %v926 = vunpack.c.h.b16 %v742
      %v927 = vunpack.c.l.b16 %v743
      %v928 = vunpack.c.h.b16 %v743
      %v929 = vunpack.c.l.b16 %v744
      %v930 = vunpack.c.h.b16 %v744
      %v931 = vunpack.c.l.b16 %v745
      %v932 = vunpack.c.h.b16 %v745
      %v933 = vunpack.c.l.b16 %v746
      %v934 = vunpack.c.h.b16 %v746
      %v935 = vunpack.c.l.b16 %v747
      %v936 = vunpack.c.h.b16 %v747
      %v937 = vunpack.c.l.b16 %v748
      %v938 = vunpack.c.h.b16 %v748
      %v939 = vunpack.c.l.b16 %v749
      %v940 = vunpack.c.h.b16 %v749
      %v941 = vunpack.c.l.b16 %v750
      %v942 = vunpack.c.h.b16 %v750
      %v943 = vpack.c.b16 %v819, %v815
      %v944 = vpack.c.b16 %v820, %v816
      %v945 = vpack.c.b16 %v821, %v817
      %v946 = vpack.c.b16 %v822, %v818
      %v947 = vpack.c.b16 %v827, %v823
      %v948 = vpack.c.b16 %v828, %v824
      %v949 = vpack.c.b16 %v829, %v825
      %v950 = vpack.c.b16 %v830, %v826
      %v951 = vpack.c.b16 %v835, %v831
      %v952 = vpack.c.b16 %v836, %v832
      %v953 = vpack.c.b16 %v837, %v833
      %v954 = vpack.c.b16 %v838, %v834
      %v955 = vpack.c.b16 %v843, %v839
      %v956 = vpack.c.b16 %v844, %v840
      %v957 = vpack.c.b16 %v845, %v841
      %v958 = vpack.c.b16 %v846, %v842
      %v959 = vpack.c.b16 %v851, %v847
      %v960 = vpack.c.b16 %v852, %v848
      %v961 = vpack.c.b16 %v853, %v849
      %v962 = vpack.c.b16 %v854, %v850
      %v963 = vpack.c.b16 %v859, %v855
      %v964 = vpack.c.b16 %v860, %v856
      %v965 = vpack.c.b16 %v861, %v857
      %v966 = vpack.c.b16 %v862, %v858
      %v967 = vpack.c.b16 %v867, %v863
      %v968 = vpack.c.b16 %v868, %v864
      %v969 = vpack.c.b16 %v869, %v865
      %v970 = vpack.c.b16 %v870, %v866
      %v971 = vpack.c.b16 %v875, %v871
      %v972 = vpack.c.b16 %v876, %v872
      %v973 = vpack.c.b16 %v877, %v873
      %v974 = vpack.c.b16 %v878, %v874
      %v975 = vpack.c.b16 %v883, %v879
      %v976 = vpack.c.b16 %v884, %v880
      %v977 = vpack.c.b16 %v885, %v881
      %v978 = vpack.c.b16 %v886, %v882
      %v979 = vpack.c.b16 %v891, %v887
      %v980 = vpack.c.b16 %v892, %v888
      %v981 = vpack.c.b16 %v893, %v889
      %v982 = vpack.c.b16 %v894, %v890
      %v983 = vpack.c.b16 %v899, %v895
      %v984 = vpack.c.b16 %v900, %v896
      %v985 = vpack.c.b16 %v901, %v897
      %v986 = vpack.c.b16 %v902, %v898
      %v987 = vpack.c.b16 %v907, %v903
      %v988 = vpack.c.b16 %v908, %v904
      %v989 = vpack.c.b16 %v909, %v905
      %v990 = vpack.c.b16 %v910, %v906
      %v991 = vpack.c.b16 %v915, %v911
      %v992 = vpack.c.b16 %v916, %v912
      %v993 = vpack.c.b16 %v917, %v913
      %v994 = vpack.c.b16 %v918, %v914
      %v995 = vpack.c.b16 %v923, %v919
      %v996 = vpack.c.b16 %v924, %v920
      %v997 = vpack.c.b16 %v925, %v921
      %v998 = vpack.c.b16 %v926, %v922
      %v999 = vpack.c.b16 %v931, %v927
      %v1000 = vpack.c.b16 %v932, %v928
      %v1001 = vpack.c.b16 %v933, %v929
      %v1002 = vpack.c.b16 %v934, %v930
      %v1003 = vpack.c.b16 %v939, %v935
      %v1004 = vpack.c.b16 %v940, %v936
      %v1005 = vpack.c.b16 %v941, %v937
      %v1006 = vpack.c.b16 %v942, %v938
      %1071 = vmatpush.bf16.msra.mxu0 %v971
      %1072 = vmatpush.bf16.msra.mxu0 %v967
      %1073 = vmatpush.bf16.msra.mxu0 %v963
      %1074 = vmatpush.bf16.msra.mxu0 %v959
      %1075 = vmatpush.bf16.msra.mxu0 %v955
      %1076 = vmatpush.bf16.msra.mxu0 %v951
      %1077 = vmatpush.bf16.msra.mxu0 %v947
      %1078 = vmatpush.bf16.msra.mxu0 %v943
      %1079 = vmatmul.bf16.gmra.mxu0 %v684
      %v1080 = vpop.f32.mrf.mxu0
      %v1081 = vadd.f32 0.0, %v1080
      %v1082 = vpop.f32.mrf.mxu0
      %v1083 = vadd.f32 0.0, %v1082
      %1084 = vdwg.mxu0
      %1085 = vmatpush.bf16.msra.mxu0 %v1003
      %1086 = vmatpush.bf16.msra.mxu0 %v999
      %1087 = vmatpush.bf16.msra.mxu0 %v995
      %1088 = vmatpush.bf16.msra.mxu0 %v991
      %1089 = vmatpush.bf16.msra.mxu0 %v987
      %1090 = vmatpush.bf16.msra.mxu0 %v983
      %1091 = vmatpush.bf16.msra.mxu0 %v979
      %1092 = vmatpush.bf16.msra.mxu0 %v975
      %1093 = vmatmul.bf16.gmra.mxu0 %v685
      %v1094 = vpop.f32.mrf.mxu0
      %v1095 = vadd.f32 %v1081, %v1094
      %v1096 = vpop.f32.mrf.mxu0
      %v1097 = vadd.f32 %v1083, %v1096
      %1098 = vdwg.mxu0
      %1099 = vmatpush.bf16.msra.mxu0 %v972
      %1100 = vmatpush.bf16.msra.mxu0 %v968
      %1101 = vmatpush.bf16.msra.mxu0 %v964
      %1102 = vmatpush.bf16.msra.mxu0 %v960
      %1103 = vmatpush.bf16.msra.mxu0 %v956
      %1104 = vmatpush.bf16.msra.mxu0 %v952
      %1105 = vmatpush.bf16.msra.mxu0 %v948
      %1106 = vmatpush.bf16.msra.mxu0 %v944
      %1107 = vmatmul.bf16.gmra.mxu0 %v684
      %v1108 = vpop.f32.mrf.mxu0
      %v1109 = vadd.f32 0.0, %v1108
      %v1110 = vpop.f32.mrf.mxu0
      %v1111 = vadd.f32 0.0, %v1110
      %1112 = vdwg.mxu0
      %1113 = vmatpush.bf16.msra.mxu0 %v1004
      %1114 = vmatpush.bf16.msra.mxu0 %v1000
      %1115 = vmatpush.bf16.msra.mxu0 %v996
      %1116 = vmatpush.bf16.msra.mxu0 %v992
      %1117 = vmatpush.bf16.msra.mxu0 %v988
      %1118 = vmatpush.bf16.msra.mxu0 %v984
      %1119 = vmatpush.bf16.msra.mxu0 %v980
      %1120 = vmatpush.bf16.msra.mxu0 %v976
      %1121 = vmatmul.bf16.gmra.mxu0 %v685
      %v1122 = vpop.f32.mrf.mxu0
      %v1123 = vadd.f32 %v1109, %v1122
      %v1124 = vpop.f32.mrf.mxu0
      %v1125 = vadd.f32 %v1111, %v1124
      %1126 = vdwg.mxu0
      %1127 = vmatpush.bf16.msra.mxu0 %v973
      %1128 = vmatpush.bf16.msra.mxu0 %v969
      %1129 = vmatpush.bf16.msra.mxu0 %v965
      %1130 = vmatpush.bf16.msra.mxu0 %v961
      %1131 = vmatpush.bf16.msra.mxu0 %v957
      %1132 = vmatpush.bf16.msra.mxu0 %v953
      %1133 = vmatpush.bf16.msra.mxu0 %v949
      %1134 = vmatpush.bf16.msra.mxu0 %v945
      %1135 = vmatmul.bf16.gmra.mxu0 %v684
      %v1136 = vpop.f32.mrf.mxu0
      %v1137 = vadd.f32 0.0, %v1136
      %v1138 = vpop.f32.mrf.mxu0
      %v1139 = vadd.f32 0.0, %v1138
      %1140 = vdwg.mxu0
      %1141 = vmatpush.bf16.msra.mxu0 %v1005
      %1142 = vmatpush.bf16.msra.mxu0 %v1001
      %1143 = vmatpush.bf16.msra.mxu0 %v997
      %1144 = vmatpush.bf16.msra.mxu0 %v993
      %1145 = vmatpush.bf16.msra.mxu0 %v989
      %1146 = vmatpush.bf16.msra.mxu0 %v985
      %1147 = vmatpush.bf16.msra.mxu0 %v981
      %1148 = vmatpush.bf16.msra.mxu0 %v977
      %1149 = vmatmul.bf16.gmra.mxu0 %v685
      %v1150 = vpop.f32.mrf.mxu0
      %v1151 = vadd.f32 %v1137, %v1150
      %v1152 = vpop.f32.mrf.mxu0
      %v1153 = vadd.f32 %v1139, %v1152
      %1154 = vdwg.mxu0
      %1155 = vmatpush.bf16.msra.mxu0 %v974
      %1156 = vmatpush.bf16.msra.mxu0 %v970
      %1157 = vmatpush.bf16.msra.mxu0 %v966
      %1158 = vmatpush.bf16.msra.mxu0 %v962
      %1159 = vmatpush.bf16.msra.mxu0 %v958
      %1160 = vmatpush.bf16.msra.mxu0 %v954
      %1161 = vmatpush.bf16.msra.mxu0 %v950
      %1162 = vmatpush.bf16.msra.mxu0 %v946
      %1163 = vmatmul.bf16.gmra.mxu0 %v684
      %v1164 = vpop.f32.mrf.mxu0
      %v1165 = vadd.f32 0.0, %v1164
      %v1166 = vpop.f32.mrf.mxu0
      %v1167 = vadd.f32 0.0, %v1166
      %1168 = vdwg.mxu0
      %1169 = vmatpush.bf16.msra.mxu0 %v1006
      %1170 = vmatpush.bf16.msra.mxu0 %v1002
      %1171 = vmatpush.bf16.msra.mxu0 %v998
      %1172 = vmatpush.bf16.msra.mxu0 %v994
      %1173 = vmatpush.bf16.msra.mxu0 %v990
      %1174 = vmatpush.bf16.msra.mxu0 %v986
      %1175 = vmatpush.bf16.msra.mxu0 %v982
      %1176 = vmatpush.bf16.msra.mxu0 %v978
      %1177 = vmatmul.bf16.gmra.mxu0 %v685
      %v1178 = vpop.f32.mrf.mxu0
      %v1179 = vadd.f32 %v1165, %v1178
      %v1180 = vpop.f32.mrf.mxu0
      %v1181 = vadd.f32 %v1167, %v1180
      %1182 = vdwg.mxu0
      %v1247 = vunpack.c.l.b16 %v581
      %v1248 = vunpack.c.h.b16 %v581
      %v1249 = vunpack.c.l.b16 %v582
      %v1250 = vunpack.c.h.b16 %v582
      %v1251 = vunpack.c.l.b16 %v583
      %v1252 = vunpack.c.h.b16 %v583
      %v1253 = vunpack.c.l.b16 %v584
      %v1254 = vunpack.c.h.b16 %v584
      %v1255 = vunpack.c.l.b16 %v585
      %v1256 = vunpack.c.h.b16 %v585
      %v1257 = vunpack.c.l.b16 %v586
      %v1258 = vunpack.c.h.b16 %v586
      %v1259 = vunpack.c.l.b16 %v587
      %v1260 = vunpack.c.h.b16 %v587
      %v1261 = vunpack.c.l.b16 %v588
      %v1262 = vunpack.c.h.b16 %v588
      %v1263 = vunpack.c.l.b16 %v589
      %v1264 = vunpack.c.h.b16 %v589
      %v1265 = vunpack.c.l.b16 %v590
      %v1266 = vunpack.c.h.b16 %v590
      %v1267 = vunpack.c.l.b16 %v591
      %v1268 = vunpack.c.h.b16 %v591
      %v1269 = vunpack.c.l.b16 %v592
      %v1270 = vunpack.c.h.b16 %v592
      %v1271 = vunpack.c.l.b16 %v593
      %v1272 = vunpack.c.h.b16 %v593
      %v1273 = vunpack.c.l.b16 %v594
      %v1274 = vunpack.c.h.b16 %v594
      %v1275 = vunpack.c.l.b16 %v595
      %v1276 = vunpack.c.h.b16 %v595
      %v1277 = vunpack.c.l.b16 %v596
      %v1278 = vunpack.c.h.b16 %v596
      %v1279 = vunpack.c.l.b16 %v597
      %v1280 = vunpack.c.h.b16 %v597
      %v1281 = vunpack.c.l.b16 %v598
      %v1282 = vunpack.c.h.b16 %v598
      %v1283 = vunpack.c.l.b16 %v599
      %v1284 = vunpack.c.h.b16 %v599
      %v1285 = vunpack.c.l.b16 %v600
      %v1286 = vunpack.c.h.b16 %v600
      %v1287 = vunpack.c.l.b16 %v601
      %v1288 = vunpack.c.h.b16 %v601
      %v1289 = vunpack.c.l.b16 %v602
      %v1290 = vunpack.c.h.b16 %v602
      %v1291 = vunpack.c.l.b16 %v603
      %v1292 = vunpack.c.h.b16 %v603
      %v1293 = vunpack.c.l.b16 %v604
      %v1294 = vunpack.c.h.b16 %v604
      %v1295 = vunpack.c.l.b16 %v605
      %v1296 = vunpack.c.h.b16 %v605
      %v1297 = vunpack.c.l.b16 %v606
      %v1298 = vunpack.c.h.b16 %v606
      %v1299 = vunpack.c.l.b16 %v607
      %v1300 = vunpack.c.h.b16 %v607
      %v1301 = vunpack.c.l.b16 %v608
      %v1302 = vunpack.c.h.b16 %v608
      %v1303 = vunpack.c.l.b16 %v609
      %v1304 = vunpack.c.h.b16 %v609
      %v1305 = vunpack.c.l.b16 %v610
      %v1306 = vunpack.c.h.b16 %v610
      %v1307 = vunpack.c.l.b16 %v611
      %v1308 = vunpack.c.h.b16 %v611
      %v1309 = vunpack.c.l.b16 %v612
      %v1310 = vunpack.c.h.b16 %v612
      %v1311 = vunpack.c.l.b16 %v613
      %v1312 = vunpack.c.h.b16 %v613
      %v1313 = vunpack.c.l.b16 %v614
      %v1314 = vunpack.c.h.b16 %v614
      %v1315 = vunpack.c.l.b16 %v615
      %v1316 = vunpack.c.h.b16 %v615
      %v1317 = vunpack.c.l.b16 %v616
      %v1318 = vunpack.c.h.b16 %v616
      %v1319 = vunpack.c.l.b16 %v617
      %v1320 = vunpack.c.h.b16 %v617
      %v1321 = vunpack.c.l.b16 %v618
      %v1322 = vunpack.c.h.b16 %v618
      %v1323 = vunpack.c.l.b16 %v619
      %v1324 = vunpack.c.h.b16 %v619
      %v1325 = vunpack.c.l.b16 %v620
      %v1326 = vunpack.c.h.b16 %v620
      %v1327 = vunpack.c.l.b16 %v621
      %v1328 = vunpack.c.h.b16 %v621
      %v1329 = vunpack.c.l.b16 %v622
      %v1330 = vunpack.c.h.b16 %v622
      %v1331 = vunpack.c.l.b16 %v623
      %v1332 = vunpack.c.h.b16 %v623
      %v1333 = vunpack.c.l.b16 %v624
      %v1334 = vunpack.c.h.b16 %v624
      %v1335 = vunpack.c.l.b16 %v625
      %v1336 = vunpack.c.h.b16 %v625
      %v1337 = vunpack.c.l.b16 %v626
      %v1338 = vunpack.c.h.b16 %v626
      %v1339 = vunpack.c.l.b16 %v627
      %v1340 = vunpack.c.h.b16 %v627
      %v1341 = vunpack.c.l.b16 %v628
      %v1342 = vunpack.c.h.b16 %v628
      %v1343 = vunpack.c.l.b16 %v629
      %v1344 = vunpack.c.h.b16 %v629
      %v1345 = vunpack.c.l.b16 %v630
      %v1346 = vunpack.c.h.b16 %v630
      %v1347 = vunpack.c.l.b16 %v631
      %v1348 = vunpack.c.h.b16 %v631
      %v1349 = vunpack.c.l.b16 %v632
      %v1350 = vunpack.c.h.b16 %v632
      %v1351 = vunpack.c.l.b16 %v633
      %v1352 = vunpack.c.h.b16 %v633
      %v1353 = vunpack.c.l.b16 %v634
      %v1354 = vunpack.c.h.b16 %v634
      %v1355 = vunpack.c.l.b16 %v635
      %v1356 = vunpack.c.h.b16 %v635
      %v1357 = vunpack.c.l.b16 %v636
      %v1358 = vunpack.c.h.b16 %v636
      %v1359 = vunpack.c.l.b16 %v637
      %v1360 = vunpack.c.h.b16 %v637
      %v1361 = vunpack.c.l.b16 %v638
      %v1362 = vunpack.c.h.b16 %v638
      %v1363 = vunpack.c.l.b16 %v639
      %v1364 = vunpack.c.h.b16 %v639
      %v1365 = vunpack.c.l.b16 %v640
      %v1366 = vunpack.c.h.b16 %v640
      %v1367 = vunpack.c.l.b16 %v641
      %v1368 = vunpack.c.h.b16 %v641
      %v1369 = vunpack.c.l.b16 %v642
      %v1370 = vunpack.c.h.b16 %v642
      %v1371 = vunpack.c.l.b16 %v643
      %v1372 = vunpack.c.h.b16 %v643
      %v1373 = vunpack.c.l.b16 %v644
      %v1374 = vunpack.c.h.b16 %v644
      %v1375 = vpack.c.b16 %v1251, %v1247
      %v1376 = vpack.c.b16 %v1252, %v1248
      %v1377 = vpack.c.b16 %v1253, %v1249
      %v1378 = vpack.c.b16 %v1254, %v1250
      %v1379 = vpack.c.b16 %v1259, %v1255
      %v1380 = vpack.c.b16 %v1260, %v1256
      %v1381 = vpack.c.b16 %v1261, %v1257
      %v1382 = vpack.c.b16 %v1262, %v1258
      %v1383 = vpack.c.b16 %v1267, %v1263
      %v1384 = vpack.c.b16 %v1268, %v1264
      %v1385 = vpack.c.b16 %v1269, %v1265
      %v1386 = vpack.c.b16 %v1270, %v1266
      %v1387 = vpack.c.b16 %v1275, %v1271
      %v1388 = vpack.c.b16 %v1276, %v1272
      %v1389 = vpack.c.b16 %v1277, %v1273
      %v1390 = vpack.c.b16 %v1278, %v1274
      %v1391 = vpack.c.b16 %v1283, %v1279
      %v1392 = vpack.c.b16 %v1284, %v1280
      %v1393 = vpack.c.b16 %v1285, %v1281
      %v1394 = vpack.c.b16 %v1286, %v1282
      %v1395 = vpack.c.b16 %v1291, %v1287
      %v1396 = vpack.c.b16 %v1292, %v1288
      %v1397 = vpack.c.b16 %v1293, %v1289
      %v1398 = vpack.c.b16 %v1294, %v1290
      %v1399 = vpack.c.b16 %v1299, %v1295
      %v1400 = vpack.c.b16 %v1300, %v1296
      %v1401 = vpack.c.b16 %v1301, %v1297
      %v1402 = vpack.c.b16 %v1302, %v1298
      %v1403 = vpack.c.b16 %v1307, %v1303
      %v1404 = vpack.c.b16 %v1308, %v1304
      %v1405 = vpack.c.b16 %v1309, %v1305
      %v1406 = vpack.c.b16 %v1310, %v1306
      %v1407 = vpack.c.b16 %v1315, %v1311
      %v1408 = vpack.c.b16 %v1316, %v1312
      %v1409 = vpack.c.b16 %v1317, %v1313
      %v1410 = vpack.c.b16 %v1318, %v1314
      %v1411 = vpack.c.b16 %v1323, %v1319
      %v1412 = vpack.c.b16 %v1324, %v1320
      %v1413 = vpack.c.b16 %v1325, %v1321
      %v1414 = vpack.c.b16 %v1326, %v1322
      %v1415 = vpack.c.b16 %v1331, %v1327
      %v1416 = vpack.c.b16 %v1332, %v1328
      %v1417 = vpack.c.b16 %v1333, %v1329
      %v1418 = vpack.c.b16 %v1334, %v1330
      %v1419 = vpack.c.b16 %v1339, %v1335
      %v1420 = vpack.c.b16 %v1340, %v1336
      %v1421 = vpack.c.b16 %v1341, %v1337
      %v1422 = vpack.c.b16 %v1342, %v1338
      %v1423 = vpack.c.b16 %v1347, %v1343
      %v1424 = vpack.c.b16 %v1348, %v1344
      %v1425 = vpack.c.b16 %v1349, %v1345
      %v1426 = vpack.c.b16 %v1350, %v1346
      %v1427 = vpack.c.b16 %v1355, %v1351
      %v1428 = vpack.c.b16 %v1356, %v1352
      %v1429 = vpack.c.b16 %v1357, %v1353
      %v1430 = vpack.c.b16 %v1358, %v1354
      %v1431 = vpack.c.b16 %v1363, %v1359
      %v1432 = vpack.c.b16 %v1364, %v1360
      %v1433 = vpack.c.b16 %v1365, %v1361
      %v1434 = vpack.c.b16 %v1366, %v1362
      %v1435 = vpack.c.b16 %v1371, %v1367
      %v1436 = vpack.c.b16 %v1372, %v1368
      %v1437 = vpack.c.b16 %v1373, %v1369
      %v1438 = vpack.c.b16 %v1374, %v1370
      %1503 = vmatpush.bf16.msra.mxu0 %v1403
      %1504 = vmatpush.bf16.msra.mxu0 %v1399
      %1505 = vmatpush.bf16.msra.mxu0 %v1395
      %1506 = vmatpush.bf16.msra.mxu0 %v1391
      %1507 = vmatpush.bf16.msra.mxu0 %v1387
      %1508 = vmatpush.bf16.msra.mxu0 %v1383
      %1509 = vmatpush.bf16.msra.mxu0 %v1379
      %1510 = vmatpush.bf16.msra.mxu0 %v1375
      %1511 = vmatmul.bf16.gmra.mxu0 %v579
      %v1512 = vpop.f32.mrf.mxu0
      %v1513 = vadd.f32 %v1095, %v1512
      %v1514 = vpop.f32.mrf.mxu0
      %v1515 = vadd.f32 %v1097, %v1514
      %1516 = vdwg.mxu0
      %1517 = vmatpush.bf16.msra.mxu0 %v1435
      %1518 = vmatpush.bf16.msra.mxu0 %v1431
      %1519 = vmatpush.bf16.msra.mxu0 %v1427
      %1520 = vmatpush.bf16.msra.mxu0 %v1423
      %1521 = vmatpush.bf16.msra.mxu0 %v1419
      %1522 = vmatpush.bf16.msra.mxu0 %v1415
      %1523 = vmatpush.bf16.msra.mxu0 %v1411
      %1524 = vmatpush.bf16.msra.mxu0 %v1407
      %1525 = vmatmul.bf16.gmra.mxu0 %v580
      %v1526 = vpop.f32.mrf.mxu0
      %v1527 = vadd.f32 %v1513, %v1526
      %v1528 = vpop.f32.mrf.mxu0
      %v1529 = vadd.f32 %v1515, %v1528
      %1530 = vdwg.mxu0
      %1531 = vmatpush.bf16.msra.mxu0 %v1404
      %1532 = vmatpush.bf16.msra.mxu0 %v1400
      %1533 = vmatpush.bf16.msra.mxu0 %v1396
      %1534 = vmatpush.bf16.msra.mxu0 %v1392
      %1535 = vmatpush.bf16.msra.mxu0 %v1388
      %1536 = vmatpush.bf16.msra.mxu0 %v1384
      %1537 = vmatpush.bf16.msra.mxu0 %v1380
      %1538 = vmatpush.bf16.msra.mxu0 %v1376
      %1539 = vmatmul.bf16.gmra.mxu0 %v579
      %v1540 = vpop.f32.mrf.mxu0
      %v1541 = vadd.f32 %v1123, %v1540
      %v1542 = vpop.f32.mrf.mxu0
      %v1543 = vadd.f32 %v1125, %v1542
      %1544 = vdwg.mxu0
      %1545 = vmatpush.bf16.msra.mxu0 %v1436
      %1546 = vmatpush.bf16.msra.mxu0 %v1432
      %1547 = vmatpush.bf16.msra.mxu0 %v1428
      %1548 = vmatpush.bf16.msra.mxu0 %v1424
      %1549 = vmatpush.bf16.msra.mxu0 %v1420
      %1550 = vmatpush.bf16.msra.mxu0 %v1416
      %1551 = vmatpush.bf16.msra.mxu0 %v1412
      %1552 = vmatpush.bf16.msra.mxu0 %v1408
      %1553 = vmatmul.bf16.gmra.mxu0 %v580
      %v1554 = vpop.f32.mrf.mxu0
      %v1555 = vadd.f32 %v1541, %v1554
      %v1556 = vpop.f32.mrf.mxu0
      %v1557 = vadd.f32 %v1543, %v1556
      %1558 = vdwg.mxu0
      %1559 = vmatpush.bf16.msra.mxu0 %v1405
      %1560 = vmatpush.bf16.msra.mxu0 %v1401
      %1561 = vmatpush.bf16.msra.mxu0 %v1397
      %1562 = vmatpush.bf16.msra.mxu0 %v1393
      %1563 = vmatpush.bf16.msra.mxu0 %v1389
      %1564 = vmatpush.bf16.msra.mxu0 %v1385
      %1565 = vmatpush.bf16.msra.mxu0 %v1381
      %1566 = vmatpush.bf16.msra.mxu0 %v1377
      %1567 = vmatmul.bf16.gmra.mxu0 %v579
      %v1568 = vpop.f32.mrf.mxu0
      %v1569 = vadd.f32 %v1151, %v1568
      %v1570 = vpop.f32.mrf.mxu0
      %v1571 = vadd.f32 %v1153, %v1570
      %1572 = vdwg.mxu0
      %1573 = vmatpush.bf16.msra.mxu0 %v1437
      %1574 = vmatpush.bf16.msra.mxu0 %v1433
      %1575 = vmatpush.bf16.msra.mxu0 %v1429
      %1576 = vmatpush.bf16.msra.mxu0 %v1425
      %1577 = vmatpush.bf16.msra.mxu0 %v1421
      %1578 = vmatpush.bf16.msra.mxu0 %v1417
      %1579 = vmatpush.bf16.msra.mxu0 %v1413
      %1580 = vmatpush.bf16.msra.mxu0 %v1409
      %1581 = vmatmul.bf16.gmra.mxu0 %v580
      %v1582 = vpop.f32.mrf.mxu0
      %v1583 = vadd.f32 %v1569, %v1582
      %v1584 = vpop.f32.mrf.mxu0
      %v1585 = vadd.f32 %v1571, %v1584
      %1586 = vdwg.mxu0
      %1587 = vmatpush.bf16.msra.mxu0 %v1406
      %1588 = vmatpush.bf16.msra.mxu0 %v1402
      %1589 = vmatpush.bf16.msra.mxu0 %v1398
      %1590 = vmatpush.bf16.msra.mxu0 %v1394
      %1591 = vmatpush.bf16.msra.mxu0 %v1390
      %1592 = vmatpush.bf16.msra.mxu0 %v1386
      %1593 = vmatpush.bf16.msra.mxu0 %v1382
      %1594 = vmatpush.bf16.msra.mxu0 %v1378
      %1595 = vmatmul.bf16.gmra.mxu0 %v579
      %v1596 = vpop.f32.mrf.mxu0
      %v1597 = vadd.f32 %v1179, %v1596
      %v1598 = vpop.f32.mrf.mxu0
      %v1599 = vadd.f32 %v1181, %v1598
      %1600 = vdwg.mxu0
      %1601 = vmatpush.bf16.msra.mxu0 %v1438
      %1602 = vmatpush.bf16.msra.mxu0 %v1434
      %1603 = vmatpush.bf16.msra.mxu0 %v1430
      %1604 = vmatpush.bf16.msra.mxu0 %v1426
      %1605 = vmatpush.bf16.msra.mxu0 %v1422
      %1606 = vmatpush.bf16.msra.mxu0 %v1418
      %1607 = vmatpush.bf16.msra.mxu0 %v1414
      %1608 = vmatpush.bf16.msra.mxu0 %v1410
      %1609 = vmatmul.bf16.gmra.mxu0 %v580
      %v1610 = vpop.f32.mrf.mxu0
      %v1611 = vadd.f32 %v1597, %v1610
      %v1612 = vpop.f32.mrf.mxu0
      %v1613 = vadd.f32 %v1599, %v1612
      %1614 = vdwg.mxu0
      %s1615 = scalar_lea.vmem %s1, 16
      %v1616 = vld [vmem:[%s1615] sm:$0xf]
      %v1617 = vld [vmem:[%s1615 + $0x4] sm:$0xf]
      %v1620 = vunpack.c.l.b16 %v1616
      %v1621 = vunpack.c.l.b16 %v1617
      %v1622 = vpack.c.b16 %v1621, %v1620
      %v1624 = vsel %vm547, %v1622, 0
      %1626 = vmatpush.bf16.msra.mxu0 0
      %1627 = vmatpush.bf16.msra.mxu0 0
      %1628 = vmatpush.bf16.msra.mxu0 0
      %1629 = vmatpush.bf16.msra.mxu0 0
      %1630 = vmatpush.bf16.msra.mxu0 %v537
      %1631 = vmatpush.bf16.msra.mxu0 %v535
      %1632 = vmatpush.bf16.msra.mxu0 %v533
      %1633 = vmatpush.bf16.msra.mxu0 %v531
      %1634 = vmatmul.bf16.gmra.mxu0 %v1624
      %v1635 = vpop.f32.mrf.mxu0
      %v1636 = vadd.f32 0.0, %v1635
      %v1637 = vpop.f32.mrf.mxu0
      %v1638 = vadd.f32 0.0, %v1637
      %1639 = vdwg.mxu0
      %1640 = vmatpush.bf16.msra.mxu0 0
      %1641 = vmatpush.bf16.msra.mxu0 0
      %1642 = vmatpush.bf16.msra.mxu0 0
      %1643 = vmatpush.bf16.msra.mxu0 0
      %1644 = vmatpush.bf16.msra.mxu0 %v538
      %1645 = vmatpush.bf16.msra.mxu0 %v536
      %1646 = vmatpush.bf16.msra.mxu0 %v534
      %1647 = vmatpush.bf16.msra.mxu0 %v532
      %1648 = vmatmul.bf16.gmra.mxu0 %v1624
      %v1649 = vpop.f32.mrf.mxu0
      %v1650 = vadd.f32 0.0, %v1649
      %v1651 = vpop.f32.mrf.mxu0
      %v1652 = vadd.f32 0.0, %v1651
      %1653 = vdwg.mxu0
      %v1654 = vpack.c.bf16 %v1638, %v1636
      %v1655 = vpack.c.bf16 %v1652, %v1650
      %s1656 = scalar_lea.vmem %s2, 1024
      %v1657 = vld [vmem:[%s1656] sm:$0xff]
      %v1658 = vld [vmem:[%s1656 + $0x8] sm:$0xff]
      %v1659 = vld [vmem:[%s1656 + $0x10] sm:$0xff]
      %v1660 = vld [vmem:[%s1656 + $0x18] sm:$0xff]
      %v1661 = vld [vmem:[%s1656 + $0x20] sm:$0xff]
      %v1662 = vld [vmem:[%s1656 + $0x28] sm:$0xff]
      %v1663 = vld [vmem:[%s1656 + $0x30] sm:$0xff]
      %v1664 = vld [vmem:[%s1656 + $0x38] sm:$0xff]
      %v1665 = vld [vmem:[%s1656 + $0x40] sm:$0xff]
      %v1666 = vld [vmem:[%s1656 + $0x48] sm:$0xff]
      %v1667 = vld [vmem:[%s1656 + $0x50] sm:$0xff]
      %v1668 = vld [vmem:[%s1656 + $0x58] sm:$0xff]
      %v1669 = vld [vmem:[%s1656 + $0x60] sm:$0xff]
      %v1670 = vld [vmem:[%s1656 + $0x68] sm:$0xff]
      %v1671 = vld [vmem:[%s1656 + $0x70] sm:$0xff]
      %v1672 = vld [vmem:[%s1656 + $0x78] sm:$0xff]
      %v1673 = vld [vmem:[%s1656 + $0x80] sm:$0xff]
      %v1674 = vld [vmem:[%s1656 + $0x88] sm:$0xff]
      %v1675 = vld [vmem:[%s1656 + $0x90] sm:$0xff]
      %v1676 = vld [vmem:[%s1656 + $0x98] sm:$0xff]
      %v1677 = vld [vmem:[%s1656 + $0xa0] sm:$0xff]
      %v1678 = vld [vmem:[%s1656 + $0xa8] sm:$0xff]
      %v1679 = vld [vmem:[%s1656 + $0xb0] sm:$0xff]
      %v1680 = vld [vmem:[%s1656 + $0xb8] sm:$0xff]
      %v1681 = vld [vmem:[%s1656 + $0xc0] sm:$0xff]
      %v1682 = vld [vmem:[%s1656 + $0xc8] sm:$0xff]
      %v1683 = vld [vmem:[%s1656 + $0xd0] sm:$0xff]
      %v1684 = vld [vmem:[%s1656 + $0xd8] sm:$0xff]
      %v1685 = vld [vmem:[%s1656 + $0xe0] sm:$0xff]
      %v1686 = vld [vmem:[%s1656 + $0xe8] sm:$0xff]
      %v1687 = vld [vmem:[%s1656 + $0xf0] sm:$0xff]
      %v1688 = vld [vmem:[%s1656 + $0xf8] sm:$0xff]
      %v1689 = vld [vmem:[%s1656 + $0x100] sm:$0xff]
      %v1690 = vld [vmem:[%s1656 + $0x108] sm:$0xff]
      %v1691 = vld [vmem:[%s1656 + $0x110] sm:$0xff]
      %v1692 = vld [vmem:[%s1656 + $0x118] sm:$0xff]
      %v1693 = vld [vmem:[%s1656 + $0x120] sm:$0xff]
      %v1694 = vld [vmem:[%s1656 + $0x128] sm:$0xff]
      %v1695 = vld [vmem:[%s1656 + $0x130] sm:$0xff]
      %v1696 = vld [vmem:[%s1656 + $0x138] sm:$0xff]
      %v1697 = vld [vmem:[%s1656 + $0x140] sm:$0xff]
      %v1698 = vld [vmem:[%s1656 + $0x148] sm:$0xff]
      %v1699 = vld [vmem:[%s1656 + $0x150] sm:$0xff]
      %v1700 = vld [vmem:[%s1656 + $0x158] sm:$0xff]
      %v1701 = vld [vmem:[%s1656 + $0x160] sm:$0xff]
      %v1702 = vld [vmem:[%s1656 + $0x168] sm:$0xff]
      %v1703 = vld [vmem:[%s1656 + $0x170] sm:$0xff]
      %v1704 = vld [vmem:[%s1656 + $0x178] sm:$0xff]
      %v1705 = vld [vmem:[%s1656 + $0x180] sm:$0xff]
      %v1706 = vld [vmem:[%s1656 + $0x188] sm:$0xff]
      %v1707 = vld [vmem:[%s1656 + $0x190] sm:$0xff]
      %v1708 = vld [vmem:[%s1656 + $0x198] sm:$0xff]
      %v1709 = vld [vmem:[%s1656 + $0x1a0] sm:$0xff]
      %v1710 = vld [vmem:[%s1656 + $0x1a8] sm:$0xff]
      %v1711 = vld [vmem:[%s1656 + $0x1b0] sm:$0xff]
      %v1712 = vld [vmem:[%s1656 + $0x1b8] sm:$0xff]
      %v1713 = vld [vmem:[%s1656 + $0x1c0] sm:$0xff]
      %v1714 = vld [vmem:[%s1656 + $0x1c8] sm:$0xff]
      %v1715 = vld [vmem:[%s1656 + $0x1d0] sm:$0xff]
      %v1716 = vld [vmem:[%s1656 + $0x1d8] sm:$0xff]
      %v1717 = vld [vmem:[%s1656 + $0x1e0] sm:$0xff]
      %v1718 = vld [vmem:[%s1656 + $0x1e8] sm:$0xff]
      %v1719 = vld [vmem:[%s1656 + $0x1f0] sm:$0xff]
      %v1720 = vld [vmem:[%s1656 + $0x1f8] sm:$0xff]
      %v1785 = vunpack.c.l.b16 %v1657
      %v1786 = vunpack.c.h.b16 %v1657
      %v1787 = vunpack.c.l.b16 %v1658
      %v1788 = vunpack.c.h.b16 %v1658
      %v1789 = vunpack.c.l.b16 %v1659
      %v1790 = vunpack.c.h.b16 %v1659
      %v1791 = vunpack.c.l.b16 %v1660
      %v1792 = vunpack.c.h.b16 %v1660
      %v1793 = vunpack.c.l.b16 %v1661
      %v1794 = vunpack.c.h.b16 %v1661
      %v1795 = vunpack.c.l.b16 %v1662
      %v1796 = vunpack.c.h.b16 %v1662
      %v1797 = vunpack.c.l.b16 %v1663
      %v1798 = vunpack.c.h.b16 %v1663
      %v1799 = vunpack.c.l.b16 %v1664
      %v1800 = vunpack.c.h.b16 %v1664
      %v1801 = vunpack.c.l.b16 %v1665
      %v1802 = vunpack.c.h.b16 %v1665
      %v1803 = vunpack.c.l.b16 %v1666
      %v1804 = vunpack.c.h.b16 %v1666
      %v1805 = vunpack.c.l.b16 %v1667
      %v1806 = vunpack.c.h.b16 %v1667
      %v1807 = vunpack.c.l.b16 %v1668
      %v1808 = vunpack.c.h.b16 %v1668
      %v1809 = vunpack.c.l.b16 %v1669
      %v1810 = vunpack.c.h.b16 %v1669
      %v1811 = vunpack.c.l.b16 %v1670
      %v1812 = vunpack.c.h.b16 %v1670
      %v1813 = vunpack.c.l.b16 %v1671
      %v1814 = vunpack.c.h.b16 %v1671
      %v1815 = vunpack.c.l.b16 %v1672
      %v1816 = vunpack.c.h.b16 %v1672
      %v1817 = vunpack.c.l.b16 %v1673
      %v1818 = vunpack.c.h.b16 %v1673
      %v1819 = vunpack.c.l.b16 %v1674
      %v1820 = vunpack.c.h.b16 %v1674
      %v1821 = vunpack.c.l.b16 %v1675
      %v1822 = vunpack.c.h.b16 %v1675
      %v1823 = vunpack.c.l.b16 %v1676
      %v1824 = vunpack.c.h.b16 %v1676
      %v1825 = vunpack.c.l.b16 %v1677
      %v1826 = vunpack.c.h.b16 %v1677
      %v1827 = vunpack.c.l.b16 %v1678
      %v1828 = vunpack.c.h.b16 %v1678
      %v1829 = vunpack.c.l.b16 %v1679
      %v1830 = vunpack.c.h.b16 %v1679
      %v1831 = vunpack.c.l.b16 %v1680
      %v1832 = vunpack.c.h.b16 %v1680
      %v1833 = vunpack.c.l.b16 %v1681
      %v1834 = vunpack.c.h.b16 %v1681
      %v1835 = vunpack.c.l.b16 %v1682
      %v1836 = vunpack.c.h.b16 %v1682
      %v1837 = vunpack.c.l.b16 %v1683
      %v1838 = vunpack.c.h.b16 %v1683
      %v1839 = vunpack.c.l.b16 %v1684
      %v1840 = vunpack.c.h.b16 %v1684
      %v1841 = vunpack.c.l.b16 %v1685
      %v1842 = vunpack.c.h.b16 %v1685
      %v1843 = vunpack.c.l.b16 %v1686
      %v1844 = vunpack.c.h.b16 %v1686
      %v1845 = vunpack.c.l.b16 %v1687
      %v1846 = vunpack.c.h.b16 %v1687
      %v1847 = vunpack.c.l.b16 %v1688
      %v1848 = vunpack.c.h.b16 %v1688
      %v1849 = vunpack.c.l.b16 %v1689
      %v1850 = vunpack.c.h.b16 %v1689
      %v1851 = vunpack.c.l.b16 %v1690
      %v1852 = vunpack.c.h.b16 %v1690
      %v1853 = vunpack.c.l.b16 %v1691
      %v1854 = vunpack.c.h.b16 %v1691
      %v1855 = vunpack.c.l.b16 %v1692
      %v1856 = vunpack.c.h.b16 %v1692
      %v1857 = vunpack.c.l.b16 %v1693
      %v1858 = vunpack.c.h.b16 %v1693
      %v1859 = vunpack.c.l.b16 %v1694
      %v1860 = vunpack.c.h.b16 %v1694
      %v1861 = vunpack.c.l.b16 %v1695
      %v1862 = vunpack.c.h.b16 %v1695
      %v1863 = vunpack.c.l.b16 %v1696
      %v1864 = vunpack.c.h.b16 %v1696
      %v1865 = vunpack.c.l.b16 %v1697
      %v1866 = vunpack.c.h.b16 %v1697
      %v1867 = vunpack.c.l.b16 %v1698
      %v1868 = vunpack.c.h.b16 %v1698
      %v1869 = vunpack.c.l.b16 %v1699
      %v1870 = vunpack.c.h.b16 %v1699
      %v1871 = vunpack.c.l.b16 %v1700
      %v1872 = vunpack.c.h.b16 %v1700
      %v1873 = vunpack.c.l.b16 %v1701
      %v1874 = vunpack.c.h.b16 %v1701
      %v1875 = vunpack.c.l.b16 %v1702
      %v1876 = vunpack.c.h.b16 %v1702
      %v1877 = vunpack.c.l.b16 %v1703
      %v1878 = vunpack.c.h.b16 %v1703
      %v1879 = vunpack.c.l.b16 %v1704
      %v1880 = vunpack.c.h.b16 %v1704
      %v1881 = vunpack.c.l.b16 %v1705
      %v1882 = vunpack.c.h.b16 %v1705
      %v1883 = vunpack.c.l.b16 %v1706
      %v1884 = vunpack.c.h.b16 %v1706
      %v1885 = vunpack.c.l.b16 %v1707
      %v1886 = vunpack.c.h.b16 %v1707
      %v1887 = vunpack.c.l.b16 %v1708
      %v1888 = vunpack.c.h.b16 %v1708
      %v1889 = vunpack.c.l.b16 %v1709
      %v1890 = vunpack.c.h.b16 %v1709
      %v1891 = vunpack.c.l.b16 %v1710
      %v1892 = vunpack.c.h.b16 %v1710
      %v1893 = vunpack.c.l.b16 %v1711
      %v1894 = vunpack.c.h.b16 %v1711
      %v1895 = vunpack.c.l.b16 %v1712
      %v1896 = vunpack.c.h.b16 %v1712
      %v1897 = vunpack.c.l.b16 %v1713
      %v1898 = vunpack.c.h.b16 %v1713
      %v1899 = vunpack.c.l.b16 %v1714
      %v1900 = vunpack.c.h.b16 %v1714
      %v1901 = vunpack.c.l.b16 %v1715
      %v1902 = vunpack.c.h.b16 %v1715
      %v1903 = vunpack.c.l.b16 %v1716
      %v1904 = vunpack.c.h.b16 %v1716
      %v1905 = vunpack.c.l.b16 %v1717
      %v1906 = vunpack.c.h.b16 %v1717
      %v1907 = vunpack.c.l.b16 %v1718
      %v1908 = vunpack.c.h.b16 %v1718
      %v1909 = vunpack.c.l.b16 %v1719
      %v1910 = vunpack.c.h.b16 %v1719
      %v1911 = vunpack.c.l.b16 %v1720
      %v1912 = vunpack.c.h.b16 %v1720
      %v1913 = vpack.c.b16 %v1789, %v1785
      %v1914 = vpack.c.b16 %v1790, %v1786
      %v1915 = vpack.c.b16 %v1791, %v1787
      %v1916 = vpack.c.b16 %v1792, %v1788
      %v1917 = vpack.c.b16 %v1797, %v1793
      %v1918 = vpack.c.b16 %v1798, %v1794
      %v1919 = vpack.c.b16 %v1799, %v1795
      %v1920 = vpack.c.b16 %v1800, %v1796
      %v1921 = vpack.c.b16 %v1805, %v1801
      %v1922 = vpack.c.b16 %v1806, %v1802
      %v1923 = vpack.c.b16 %v1807, %v1803
      %v1924 = vpack.c.b16 %v1808, %v1804
      %v1925 = vpack.c.b16 %v1813, %v1809
      %v1926 = vpack.c.b16 %v1814, %v1810
      %v1927 = vpack.c.b16 %v1815, %v1811
      %v1928 = vpack.c.b16 %v1816, %v1812
      %v1929 = vpack.c.b16 %v1821, %v1817
      %v1930 = vpack.c.b16 %v1822, %v1818
      %v1931 = vpack.c.b16 %v1823, %v1819
      %v1932 = vpack.c.b16 %v1824, %v1820
      %v1933 = vpack.c.b16 %v1829, %v1825
      %v1934 = vpack.c.b16 %v1830, %v1826
      %v1935 = vpack.c.b16 %v1831, %v1827
      %v1936 = vpack.c.b16 %v1832, %v1828
      %v1937 = vpack.c.b16 %v1837, %v1833
      %v1938 = vpack.c.b16 %v1838, %v1834
      %v1939 = vpack.c.b16 %v1839, %v1835
      %v1940 = vpack.c.b16 %v1840, %v1836
      %v1941 = vpack.c.b16 %v1845, %v1841
      %v1942 = vpack.c.b16 %v1846, %v1842
      %v1943 = vpack.c.b16 %v1847, %v1843
      %v1944 = vpack.c.b16 %v1848, %v1844
      %v1945 = vpack.c.b16 %v1853, %v1849
      %v1946 = vpack.c.b16 %v1854, %v1850
      %v1947 = vpack.c.b16 %v1855, %v1851
      %v1948 = vpack.c.b16 %v1856, %v1852
      %v1949 = vpack.c.b16 %v1861, %v1857
      %v1950 = vpack.c.b16 %v1862, %v1858
      %v1951 = vpack.c.b16 %v1863, %v1859
      %v1952 = vpack.c.b16 %v1864, %v1860
      %v1953 = vpack.c.b16 %v1869, %v1865
      %v1954 = vpack.c.b16 %v1870, %v1866
      %v1955 = vpack.c.b16 %v1871, %v1867
      %v1956 = vpack.c.b16 %v1872, %v1868
      %v1957 = vpack.c.b16 %v1877, %v1873
      %v1958 = vpack.c.b16 %v1878, %v1874
      %v1959 = vpack.c.b16 %v1879, %v1875
      %v1960 = vpack.c.b16 %v1880, %v1876
      %v1961 = vpack.c.b16 %v1885, %v1881
      %v1962 = vpack.c.b16 %v1886, %v1882
      %v1963 = vpack.c.b16 %v1887, %v1883
      %v1964 = vpack.c.b16 %v1888, %v1884
      %v1965 = vpack.c.b16 %v1893, %v1889
      %v1966 = vpack.c.b16 %v1894, %v1890
      %v1967 = vpack.c.b16 %v1895, %v1891
      %v1968 = vpack.c.b16 %v1896, %v1892
      %v1969 = vpack.c.b16 %v1901, %v1897
      %v1970 = vpack.c.b16 %v1902, %v1898
      %v1971 = vpack.c.b16 %v1903, %v1899
      %v1972 = vpack.c.b16 %v1904, %v1900
      %v1973 = vpack.c.b16 %v1909, %v1905
      %v1974 = vpack.c.b16 %v1910, %v1906
      %v1975 = vpack.c.b16 %v1911, %v1907
      %v1976 = vpack.c.b16 %v1912, %v1908
      %2041 = vmatpush.bf16.msra.mxu0 %v1941
      %2042 = vmatpush.bf16.msra.mxu0 %v1937
      %2043 = vmatpush.bf16.msra.mxu0 %v1933
      %2044 = vmatpush.bf16.msra.mxu0 %v1929
      %2045 = vmatpush.bf16.msra.mxu0 %v1925
      %2046 = vmatpush.bf16.msra.mxu0 %v1921
      %2047 = vmatpush.bf16.msra.mxu0 %v1917
      %2048 = vmatpush.bf16.msra.mxu0 %v1913
      %2049 = vmatmul.bf16.gmra.mxu0 %v1654
      %v2050 = vpop.f32.mrf.mxu0
      %v2051 = vadd.f32 0.0, %v2050
      %v2052 = vpop.f32.mrf.mxu0
      %v2053 = vadd.f32 0.0, %v2052
      %2054 = vdwg.mxu0
      %2055 = vmatpush.bf16.msra.mxu0 %v1973
      %2056 = vmatpush.bf16.msra.mxu0 %v1969
      %2057 = vmatpush.bf16.msra.mxu0 %v1965
      %2058 = vmatpush.bf16.msra.mxu0 %v1961
      %2059 = vmatpush.bf16.msra.mxu0 %v1957
      %2060 = vmatpush.bf16.msra.mxu0 %v1953
      %2061 = vmatpush.bf16.msra.mxu0 %v1949
      %2062 = vmatpush.bf16.msra.mxu0 %v1945
      %2063 = vmatmul.bf16.gmra.mxu0 %v1655
      %v2064 = vpop.f32.mrf.mxu0
      %v2065 = vadd.f32 %v2051, %v2064
      %v2066 = vpop.f32.mrf.mxu0
      %v2067 = vadd.f32 %v2053, %v2066
      %2068 = vdwg.mxu0
      %2069 = vmatpush.bf16.msra.mxu0 %v1942
      %2070 = vmatpush.bf16.msra.mxu0 %v1938
      %2071 = vmatpush.bf16.msra.mxu0 %v1934
      %2072 = vmatpush.bf16.msra.mxu0 %v1930
      %2073 = vmatpush.bf16.msra.mxu0 %v1926
      %2074 = vmatpush.bf16.msra.mxu0 %v1922
      %2075 = vmatpush.bf16.msra.mxu0 %v1918
      %2076 = vmatpush.bf16.msra.mxu0 %v1914
      %2077 = vmatmul.bf16.gmra.mxu0 %v1654
      %v2078 = vpop.f32.mrf.mxu0
      %v2079 = vadd.f32 0.0, %v2078
      %v2080 = vpop.f32.mrf.mxu0
      %v2081 = vadd.f32 0.0, %v2080
      %2082 = vdwg.mxu0
      %2083 = vmatpush.bf16.msra.mxu0 %v1974
      %2084 = vmatpush.bf16.msra.mxu0 %v1970
      %2085 = vmatpush.bf16.msra.mxu0 %v1966
      %2086 = vmatpush.bf16.msra.mxu0 %v1962
      %2087 = vmatpush.bf16.msra.mxu0 %v1958
      %2088 = vmatpush.bf16.msra.mxu0 %v1954
      %2089 = vmatpush.bf16.msra.mxu0 %v1950
      %2090 = vmatpush.bf16.msra.mxu0 %v1946
      %2091 = vmatmul.bf16.gmra.mxu0 %v1655
      %v2092 = vpop.f32.mrf.mxu0
      %v2093 = vadd.f32 %v2079, %v2092
      %v2094 = vpop.f32.mrf.mxu0
      %v2095 = vadd.f32 %v2081, %v2094
      %2096 = vdwg.mxu0
      %2097 = vmatpush.bf16.msra.mxu0 %v1943
      %2098 = vmatpush.bf16.msra.mxu0 %v1939
      %2099 = vmatpush.bf16.msra.mxu0 %v1935
      %2100 = vmatpush.bf16.msra.mxu0 %v1931
      %2101 = vmatpush.bf16.msra.mxu0 %v1927
      %2102 = vmatpush.bf16.msra.mxu0 %v1923
      %2103 = vmatpush.bf16.msra.mxu0 %v1919
      %2104 = vmatpush.bf16.msra.mxu0 %v1915
      %2105 = vmatmul.bf16.gmra.mxu0 %v1654
      %v2106 = vpop.f32.mrf.mxu0
      %v2107 = vadd.f32 0.0, %v2106
      %v2108 = vpop.f32.mrf.mxu0
      %v2109 = vadd.f32 0.0, %v2108
      %2110 = vdwg.mxu0
      %2111 = vmatpush.bf16.msra.mxu0 %v1975
      %2112 = vmatpush.bf16.msra.mxu0 %v1971
      %2113 = vmatpush.bf16.msra.mxu0 %v1967
      %2114 = vmatpush.bf16.msra.mxu0 %v1963
      %2115 = vmatpush.bf16.msra.mxu0 %v1959
      %2116 = vmatpush.bf16.msra.mxu0 %v1955
      %2117 = vmatpush.bf16.msra.mxu0 %v1951
      %2118 = vmatpush.bf16.msra.mxu0 %v1947
      %2119 = vmatmul.bf16.gmra.mxu0 %v1655
      %v2120 = vpop.f32.mrf.mxu0
      %v2121 = vadd.f32 %v2107, %v2120
      %v2122 = vpop.f32.mrf.mxu0
      %v2123 = vadd.f32 %v2109, %v2122
      %2124 = vdwg.mxu0
      %2125 = vmatpush.bf16.msra.mxu0 %v1944
      %2126 = vmatpush.bf16.msra.mxu0 %v1940
      %2127 = vmatpush.bf16.msra.mxu0 %v1936
      %2128 = vmatpush.bf16.msra.mxu0 %v1932
      %2129 = vmatpush.bf16.msra.mxu0 %v1928
      %2130 = vmatpush.bf16.msra.mxu0 %v1924
      %2131 = vmatpush.bf16.msra.mxu0 %v1920
      %2132 = vmatpush.bf16.msra.mxu0 %v1916
      %2133 = vmatmul.bf16.gmra.mxu0 %v1654
      %v2134 = vpop.f32.mrf.mxu0
      %v2135 = vadd.f32 0.0, %v2134
      %v2136 = vpop.f32.mrf.mxu0
      %v2137 = vadd.f32 0.0, %v2136
      %2138 = vdwg.mxu0
      %2139 = vmatpush.bf16.msra.mxu0 %v1976
      %2140 = vmatpush.bf16.msra.mxu0 %v1972
      %2141 = vmatpush.bf16.msra.mxu0 %v1968
      %2142 = vmatpush.bf16.msra.mxu0 %v1964
      %2143 = vmatpush.bf16.msra.mxu0 %v1960
      %2144 = vmatpush.bf16.msra.mxu0 %v1956
      %2145 = vmatpush.bf16.msra.mxu0 %v1952
      %2146 = vmatpush.bf16.msra.mxu0 %v1948
      %2147 = vmatmul.bf16.gmra.mxu0 %v1655
      %v2148 = vpop.f32.mrf.mxu0
      %v2149 = vadd.f32 %v2135, %v2148
      %v2150 = vpop.f32.mrf.mxu0
      %v2151 = vadd.f32 %v2137, %v2150
      %2152 = vdwg.mxu0
      %v2153 = vadd.f32 %v1527, %v2065
      %v2154 = vadd.f32 %v1555, %v2093
      %v2155 = vadd.f32 %v1583, %v2121
      %v2156 = vadd.f32 %v1611, %v2149
      %v2157 = vadd.f32 %v1529, %v2067
      %v2158 = vadd.f32 %v1557, %v2095
      %v2159 = vadd.f32 %v1585, %v2123
      %v2160 = vadd.f32 %v1613, %v2151
      %s2161 = scalar_lea.vmem %s1, 24
      %v2162 = vld [vmem:[%s2161] sm:$0xf]
      %v2163 = vld [vmem:[%s2161 + $0x4] sm:$0xf]
      %v2166 = vunpack.c.l.b16 %v2162
      %v2167 = vunpack.c.l.b16 %v2163
      %v2168 = vpack.c.b16 %v2167, %v2166
      %v2170 = vsel %vm547, %v2168, 0
      %2172 = vmatpush.bf16.msra.mxu0 0
      %2173 = vmatpush.bf16.msra.mxu0 0
      %2174 = vmatpush.bf16.msra.mxu0 0
      %2175 = vmatpush.bf16.msra.mxu0 0
      %2176 = vmatpush.bf16.msra.mxu0 %v537
      %2177 = vmatpush.bf16.msra.mxu0 %v535
      %2178 = vmatpush.bf16.msra.mxu0 %v533
      %2179 = vmatpush.bf16.msra.mxu0 %v531
      %2180 = vmatmul.bf16.gmra.mxu0 %v2170
      %v2181 = vpop.f32.mrf.mxu0
      %v2182 = vadd.f32 0.0, %v2181
      %v2183 = vpop.f32.mrf.mxu0
      %v2184 = vadd.f32 0.0, %v2183
      %2185 = vdwg.mxu0
      %2186 = vmatpush.bf16.msra.mxu0 0
      %2187 = vmatpush.bf16.msra.mxu0 0
      %2188 = vmatpush.bf16.msra.mxu0 0
      %2189 = vmatpush.bf16.msra.mxu0 0
      %2190 = vmatpush.bf16.msra.mxu0 %v538
      %2191 = vmatpush.bf16.msra.mxu0 %v536
      %2192 = vmatpush.bf16.msra.mxu0 %v534
      %2193 = vmatpush.bf16.msra.mxu0 %v532
      %2194 = vmatmul.bf16.gmra.mxu0 %v2170
      %v2195 = vpop.f32.mrf.mxu0
      %v2196 = vadd.f32 0.0, %v2195
      %v2197 = vpop.f32.mrf.mxu0
      %v2198 = vadd.f32 0.0, %v2197
      %2199 = vdwg.mxu0
      %v2200 = vpack.c.bf16 %v2184, %v2182
      %v2201 = vpack.c.bf16 %v2198, %v2196
      %s2202 = scalar_lea.vmem %s2, 1536
      %v2203 = vld [vmem:[%s2202] sm:$0xff]
      %v2204 = vld [vmem:[%s2202 + $0x8] sm:$0xff]
      %v2205 = vld [vmem:[%s2202 + $0x10] sm:$0xff]
      %v2206 = vld [vmem:[%s2202 + $0x18] sm:$0xff]
      %v2207 = vld [vmem:[%s2202 + $0x20] sm:$0xff]
      %v2208 = vld [vmem:[%s2202 + $0x28] sm:$0xff]
      %v2209 = vld [vmem:[%s2202 + $0x30] sm:$0xff]
      %v2210 = vld [vmem:[%s2202 + $0x38] sm:$0xff]
      %v2211 = vld [vmem:[%s2202 + $0x40] sm:$0xff]
      %v2212 = vld [vmem:[%s2202 + $0x48] sm:$0xff]
      %v2213 = vld [vmem:[%s2202 + $0x50] sm:$0xff]
      %v2214 = vld [vmem:[%s2202 + $0x58] sm:$0xff]
      %v2215 = vld [vmem:[%s2202 + $0x60] sm:$0xff]
      %v2216 = vld [vmem:[%s2202 + $0x68] sm:$0xff]
      %v2217 = vld [vmem:[%s2202 + $0x70] sm:$0xff]
      %v2218 = vld [vmem:[%s2202 + $0x78] sm:$0xff]
      %v2219 = vld [vmem:[%s2202 + $0x80] sm:$0xff]
      %v2220 = vld [vmem:[%s2202 + $0x88] sm:$0xff]
      %v2221 = vld [vmem:[%s2202 + $0x90] sm:$0xff]
      %v2222 = vld [vmem:[%s2202 + $0x98] sm:$0xff]
      %v2223 = vld [vmem:[%s2202 + $0xa0] sm:$0xff]
      %v2224 = vld [vmem:[%s2202 + $0xa8] sm:$0xff]
      %v2225 = vld [vmem:[%s2202 + $0xb0] sm:$0xff]
      %v2226 = vld [vmem:[%s2202 + $0xb8] sm:$0xff]
      %v2227 = vld [vmem:[%s2202 + $0xc0] sm:$0xff]
      %v2228 = vld [vmem:[%s2202 + $0xc8] sm:$0xff]
      %v2229 = vld [vmem:[%s2202 + $0xd0] sm:$0xff]
      %v2230 = vld [vmem:[%s2202 + $0xd8] sm:$0xff]
      %v2231 = vld [vmem:[%s2202 + $0xe0] sm:$0xff]
      %v2232 = vld [vmem:[%s2202 + $0xe8] sm:$0xff]
      %v2233 = vld [vmem:[%s2202 + $0xf0] sm:$0xff]
      %v2234 = vld [vmem:[%s2202 + $0xf8] sm:$0xff]
      %v2235 = vld [vmem:[%s2202 + $0x100] sm:$0xff]
      %v2236 = vld [vmem:[%s2202 + $0x108] sm:$0xff]
      %v2237 = vld [vmem:[%s2202 + $0x110] sm:$0xff]
      %v2238 = vld [vmem:[%s2202 + $0x118] sm:$0xff]
      %v2239 = vld [vmem:[%s2202 + $0x120] sm:$0xff]
      %v2240 = vld [vmem:[%s2202 + $0x128] sm:$0xff]
      %v2241 = vld [vmem:[%s2202 + $0x130] sm:$0xff]
      %v2242 = vld [vmem:[%s2202 + $0x138] sm:$0xff]
      %v2243 = vld [vmem:[%s2202 + $0x140] sm:$0xff]
      %v2244 = vld [vmem:[%s2202 + $0x148] sm:$0xff]
      %v2245 = vld [vmem:[%s2202 + $0x150] sm:$0xff]
      %v2246 = vld [vmem:[%s2202 + $0x158] sm:$0xff]
      %v2247 = vld [vmem:[%s2202 + $0x160] sm:$0xff]
      %v2248 = vld [vmem:[%s2202 + $0x168] sm:$0xff]
      %v2249 = vld [vmem:[%s2202 + $0x170] sm:$0xff]
      %v2250 = vld [vmem:[%s2202 + $0x178] sm:$0xff]
      %v2251 = vld [vmem:[%s2202 + $0x180] sm:$0xff]
      %v2252 = vld [vmem:[%s2202 + $0x188] sm:$0xff]
      %v2253 = vld [vmem:[%s2202 + $0x190] sm:$0xff]
      %v2254 = vld [vmem:[%s2202 + $0x198] sm:$0xff]
      %v2255 = vld [vmem:[%s2202 + $0x1a0] sm:$0xff]
      %v2256 = vld [vmem:[%s2202 + $0x1a8] sm:$0xff]
      %v2257 = vld [vmem:[%s2202 + $0x1b0] sm:$0xff]
      %v2258 = vld [vmem:[%s2202 + $0x1b8] sm:$0xff]
      %v2259 = vld [vmem:[%s2202 + $0x1c0] sm:$0xff]
      %v2260 = vld [vmem:[%s2202 + $0x1c8] sm:$0xff]
      %v2261 = vld [vmem:[%s2202 + $0x1d0] sm:$0xff]
      %v2262 = vld [vmem:[%s2202 + $0x1d8] sm:$0xff]
      %v2263 = vld [vmem:[%s2202 + $0x1e0] sm:$0xff]
      %v2264 = vld [vmem:[%s2202 + $0x1e8] sm:$0xff]
      %v2265 = vld [vmem:[%s2202 + $0x1f0] sm:$0xff]
      %v2266 = vld [vmem:[%s2202 + $0x1f8] sm:$0xff]
      %v2331 = vunpack.c.l.b16 %v2203
      %v2332 = vunpack.c.h.b16 %v2203
      %v2333 = vunpack.c.l.b16 %v2204
      %v2334 = vunpack.c.h.b16 %v2204
      %v2335 = vunpack.c.l.b16 %v2205
      %v2336 = vunpack.c.h.b16 %v2205
      %v2337 = vunpack.c.l.b16 %v2206
      %v2338 = vunpack.c.h.b16 %v2206
      %v2339 = vunpack.c.l.b16 %v2207
      %v2340 = vunpack.c.h.b16 %v2207
      %v2341 = vunpack.c.l.b16 %v2208
      %v2342 = vunpack.c.h.b16 %v2208
      %v2343 = vunpack.c.l.b16 %v2209
      %v2344 = vunpack.c.h.b16 %v2209
      %v2345 = vunpack.c.l.b16 %v2210
      %v2346 = vunpack.c.h.b16 %v2210
      %v2347 = vunpack.c.l.b16 %v2211
      %v2348 = vunpack.c.h.b16 %v2211
      %v2349 = vunpack.c.l.b16 %v2212
      %v2350 = vunpack.c.h.b16 %v2212
      %v2351 = vunpack.c.l.b16 %v2213
      %v2352 = vunpack.c.h.b16 %v2213
      %v2353 = vunpack.c.l.b16 %v2214
      %v2354 = vunpack.c.h.b16 %v2214
      %v2355 = vunpack.c.l.b16 %v2215
      %v2356 = vunpack.c.h.b16 %v2215
      %v2357 = vunpack.c.l.b16 %v2216
      %v2358 = vunpack.c.h.b16 %v2216
      %v2359 = vunpack.c.l.b16 %v2217
      %v2360 = vunpack.c.h.b16 %v2217
      %v2361 = vunpack.c.l.b16 %v2218
      %v2362 = vunpack.c.h.b16 %v2218
      %v2363 = vunpack.c.l.b16 %v2219
      %v2364 = vunpack.c.h.b16 %v2219
      %v2365 = vunpack.c.l.b16 %v2220
      %v2366 = vunpack.c.h.b16 %v2220
      %v2367 = vunpack.c.l.b16 %v2221
      %v2368 = vunpack.c.h.b16 %v2221
      %v2369 = vunpack.c.l.b16 %v2222
      %v2370 = vunpack.c.h.b16 %v2222
      %v2371 = vunpack.c.l.b16 %v2223
      %v2372 = vunpack.c.h.b16 %v2223
      %v2373 = vunpack.c.l.b16 %v2224
      %v2374 = vunpack.c.h.b16 %v2224
      %v2375 = vunpack.c.l.b16 %v2225
      %v2376 = vunpack.c.h.b16 %v2225
      %v2377 = vunpack.c.l.b16 %v2226
      %v2378 = vunpack.c.h.b16 %v2226
      %v2379 = vunpack.c.l.b16 %v2227
      %v2380 = vunpack.c.h.b16 %v2227
      %v2381 = vunpack.c.l.b16 %v2228
      %v2382 = vunpack.c.h.b16 %v2228
      %v2383 = vunpack.c.l.b16 %v2229
      %v2384 = vunpack.c.h.b16 %v2229
      %v2385 = vunpack.c.l.b16 %v2230
      %v2386 = vunpack.c.h.b16 %v2230
      %v2387 = vunpack.c.l.b16 %v2231
      %v2388 = vunpack.c.h.b16 %v2231
      %v2389 = vunpack.c.l.b16 %v2232
      %v2390 = vunpack.c.h.b16 %v2232
      %v2391 = vunpack.c.l.b16 %v2233
      %v2392 = vunpack.c.h.b16 %v2233
      %v2393 = vunpack.c.l.b16 %v2234
      %v2394 = vunpack.c.h.b16 %v2234
      %v2395 = vunpack.c.l.b16 %v2235
      %v2396 = vunpack.c.h.b16 %v2235
      %v2397 = vunpack.c.l.b16 %v2236
      %v2398 = vunpack.c.h.b16 %v2236
      %v2399 = vunpack.c.l.b16 %v2237
      %v2400 = vunpack.c.h.b16 %v2237
      %v2401 = vunpack.c.l.b16 %v2238
      %v2402 = vunpack.c.h.b16 %v2238
      %v2403 = vunpack.c.l.b16 %v2239
      %v2404 = vunpack.c.h.b16 %v2239
      %v2405 = vunpack.c.l.b16 %v2240
      %v2406 = vunpack.c.h.b16 %v2240
      %v2407 = vunpack.c.l.b16 %v2241
      %v2408 = vunpack.c.h.b16 %v2241
      %v2409 = vunpack.c.l.b16 %v2242
      %v2410 = vunpack.c.h.b16 %v2242
      %v2411 = vunpack.c.l.b16 %v2243
      %v2412 = vunpack.c.h.b16 %v2243
      %v2413 = vunpack.c.l.b16 %v2244
      %v2414 = vunpack.c.h.b16 %v2244
      %v2415 = vunpack.c.l.b16 %v2245
      %v2416 = vunpack.c.h.b16 %v2245
      %v2417 = vunpack.c.l.b16 %v2246
      %v2418 = vunpack.c.h.b16 %v2246
      %v2419 = vunpack.c.l.b16 %v2247
      %v2420 = vunpack.c.h.b16 %v2247
      %v2421 = vunpack.c.l.b16 %v2248
      %v2422 = vunpack.c.h.b16 %v2248
      %v2423 = vunpack.c.l.b16 %v2249
      %v2424 = vunpack.c.h.b16 %v2249
      %v2425 = vunpack.c.l.b16 %v2250
      %v2426 = vunpack.c.h.b16 %v2250
      %v2427 = vunpack.c.l.b16 %v2251
      %v2428 = vunpack.c.h.b16 %v2251
      %v2429 = vunpack.c.l.b16 %v2252
      %v2430 = vunpack.c.h.b16 %v2252
      %v2431 = vunpack.c.l.b16 %v2253
      %v2432 = vunpack.c.h.b16 %v2253
      %v2433 = vunpack.c.l.b16 %v2254
      %v2434 = vunpack.c.h.b16 %v2254
      %v2435 = vunpack.c.l.b16 %v2255
      %v2436 = vunpack.c.h.b16 %v2255
      %v2437 = vunpack.c.l.b16 %v2256
      %v2438 = vunpack.c.h.b16 %v2256
      %v2439 = vunpack.c.l.b16 %v2257
      %v2440 = vunpack.c.h.b16 %v2257
      %v2441 = vunpack.c.l.b16 %v2258
      %v2442 = vunpack.c.h.b16 %v2258
      %v2443 = vunpack.c.l.b16 %v2259
      %v2444 = vunpack.c.h.b16 %v2259
      %v2445 = vunpack.c.l.b16 %v2260
      %v2446 = vunpack.c.h.b16 %v2260
      %v2447 = vunpack.c.l.b16 %v2261
      %v2448 = vunpack.c.h.b16 %v2261
      %v2449 = vunpack.c.l.b16 %v2262
      %v2450 = vunpack.c.h.b16 %v2262
      %v2451 = vunpack.c.l.b16 %v2263
      %v2452 = vunpack.c.h.b16 %v2263
      %v2453 = vunpack.c.l.b16 %v2264
      %v2454 = vunpack.c.h.b16 %v2264
      %v2455 = vunpack.c.l.b16 %v2265
      %v2456 = vunpack.c.h.b16 %v2265
      %v2457 = vunpack.c.l.b16 %v2266
      %v2458 = vunpack.c.h.b16 %v2266
      %v2459 = vpack.c.b16 %v2335, %v2331
      %v2460 = vpack.c.b16 %v2336, %v2332
      %v2461 = vpack.c.b16 %v2337, %v2333
      %v2462 = vpack.c.b16 %v2338, %v2334
      %v2463 = vpack.c.b16 %v2343, %v2339
      %v2464 = vpack.c.b16 %v2344, %v2340
      %v2465 = vpack.c.b16 %v2345, %v2341
      %v2466 = vpack.c.b16 %v2346, %v2342
      %v2467 = vpack.c.b16 %v2351, %v2347
      %v2468 = vpack.c.b16 %v2352, %v2348
      %v2469 = vpack.c.b16 %v2353, %v2349
      %v2470 = vpack.c.b16 %v2354, %v2350
      %v2471 = vpack.c.b16 %v2359, %v2355
      %v2472 = vpack.c.b16 %v2360, %v2356
      %v2473 = vpack.c.b16 %v2361, %v2357
      %v2474 = vpack.c.b16 %v2362, %v2358
      %v2475 = vpack.c.b16 %v2367, %v2363
      %v2476 = vpack.c.b16 %v2368, %v2364
      %v2477 = vpack.c.b16 %v2369, %v2365
      %v2478 = vpack.c.b16 %v2370, %v2366
      %v2479 = vpack.c.b16 %v2375, %v2371
      %v2480 = vpack.c.b16 %v2376, %v2372
      %v2481 = vpack.c.b16 %v2377, %v2373
      %v2482 = vpack.c.b16 %v2378, %v2374
      %v2483 = vpack.c.b16 %v2383, %v2379
      %v2484 = vpack.c.b16 %v2384, %v2380
      %v2485 = vpack.c.b16 %v2385, %v2381
      %v2486 = vpack.c.b16 %v2386, %v2382
      %v2487 = vpack.c.b16 %v2391, %v2387
      %v2488 = vpack.c.b16 %v2392, %v2388
      %v2489 = vpack.c.b16 %v2393, %v2389
      %v2490 = vpack.c.b16 %v2394, %v2390
      %v2491 = vpack.c.b16 %v2399, %v2395
      %v2492 = vpack.c.b16 %v2400, %v2396
      %v2493 = vpack.c.b16 %v2401, %v2397
      %v2494 = vpack.c.b16 %v2402, %v2398
      %v2495 = vpack.c.b16 %v2407, %v2403
      %v2496 = vpack.c.b16 %v2408, %v2404
      %v2497 = vpack.c.b16 %v2409, %v2405
      %v2498 = vpack.c.b16 %v2410, %v2406
      %v2499 = vpack.c.b16 %v2415, %v2411
      %v2500 = vpack.c.b16 %v2416, %v2412
      %v2501 = vpack.c.b16 %v2417, %v2413
      %v2502 = vpack.c.b16 %v2418, %v2414
      %v2503 = vpack.c.b16 %v2423, %v2419
      %v2504 = vpack.c.b16 %v2424, %v2420
      %v2505 = vpack.c.b16 %v2425, %v2421
      %v2506 = vpack.c.b16 %v2426, %v2422
      %v2507 = vpack.c.b16 %v2431, %v2427
      %v2508 = vpack.c.b16 %v2432, %v2428
      %v2509 = vpack.c.b16 %v2433, %v2429
      %v2510 = vpack.c.b16 %v2434, %v2430
      %v2511 = vpack.c.b16 %v2439, %v2435
      %v2512 = vpack.c.b16 %v2440, %v2436
      %v2513 = vpack.c.b16 %v2441, %v2437
      %v2514 = vpack.c.b16 %v2442, %v2438
      %v2515 = vpack.c.b16 %v2447, %v2443
      %v2516 = vpack.c.b16 %v2448, %v2444
      %v2517 = vpack.c.b16 %v2449, %v2445
      %v2518 = vpack.c.b16 %v2450, %v2446
      %v2519 = vpack.c.b16 %v2455, %v2451
      %v2520 = vpack.c.b16 %v2456, %v2452
      %v2521 = vpack.c.b16 %v2457, %v2453
      %v2522 = vpack.c.b16 %v2458, %v2454
      %2587 = vmatpush.bf16.msra.mxu0 %v2487
      %2588 = vmatpush.bf16.msra.mxu0 %v2483
      %2589 = vmatpush.bf16.msra.mxu0 %v2479
      %2590 = vmatpush.bf16.msra.mxu0 %v2475
      %2591 = vmatpush.bf16.msra.mxu0 %v2471
      %2592 = vmatpush.bf16.msra.mxu0 %v2467
      %2593 = vmatpush.bf16.msra.mxu0 %v2463
      %2594 = vmatpush.bf16.msra.mxu0 %v2459
      %2595 = vmatmul.bf16.gmra.mxu0 %v2200
      %v2596 = vpop.f32.mrf.mxu0
      %v2597 = vadd.f32 0.0, %v2596
      %v2598 = vpop.f32.mrf.mxu0
      %v2599 = vadd.f32 0.0, %v2598
      %2600 = vdwg.mxu0
      %2601 = vmatpush.bf16.msra.mxu0 %v2519
      %2602 = vmatpush.bf16.msra.mxu0 %v2515
      %2603 = vmatpush.bf16.msra.mxu0 %v2511
      %2604 = vmatpush.bf16.msra.mxu0 %v2507
      %2605 = vmatpush.bf16.msra.mxu0 %v2503
      %2606 = vmatpush.bf16.msra.mxu0 %v2499
      %2607 = vmatpush.bf16.msra.mxu0 %v2495
      %2608 = vmatpush.bf16.msra.mxu0 %v2491
      %2609 = vmatmul.bf16.gmra.mxu0 %v2201
      %v2610 = vpop.f32.mrf.mxu0
      %v2611 = vadd.f32 %v2597, %v2610
      %v2612 = vpop.f32.mrf.mxu0
      %v2613 = vadd.f32 %v2599, %v2612
      %2614 = vdwg.mxu0
      %2615 = vmatpush.bf16.msra.mxu0 %v2488
      %2616 = vmatpush.bf16.msra.mxu0 %v2484
      %2617 = vmatpush.bf16.msra.mxu0 %v2480
      %2618 = vmatpush.bf16.msra.mxu0 %v2476
      %2619 = vmatpush.bf16.msra.mxu0 %v2472
      %2620 = vmatpush.bf16.msra.mxu0 %v2468
      %2621 = vmatpush.bf16.msra.mxu0 %v2464
      %2622 = vmatpush.bf16.msra.mxu0 %v2460
      %2623 = vmatmul.bf16.gmra.mxu0 %v2200
      %v2624 = vpop.f32.mrf.mxu0
      %v2625 = vadd.f32 0.0, %v2624
      %v2626 = vpop.f32.mrf.mxu0
      %v2627 = vadd.f32 0.0, %v2626
      %2628 = vdwg.mxu0
      %2629 = vmatpush.bf16.msra.mxu0 %v2520
      %2630 = vmatpush.bf16.msra.mxu0 %v2516
      %2631 = vmatpush.bf16.msra.mxu0 %v2512
      %2632 = vmatpush.bf16.msra.mxu0 %v2508
      %2633 = vmatpush.bf16.msra.mxu0 %v2504
      %2634 = vmatpush.bf16.msra.mxu0 %v2500
      %2635 = vmatpush.bf16.msra.mxu0 %v2496
      %2636 = vmatpush.bf16.msra.mxu0 %v2492
      %2637 = vmatmul.bf16.gmra.mxu0 %v2201
      %v2638 = vpop.f32.mrf.mxu0
      %v2639 = vadd.f32 %v2625, %v2638
      %v2640 = vpop.f32.mrf.mxu0
      %v2641 = vadd.f32 %v2627, %v2640
      %2642 = vdwg.mxu0
      %2643 = vmatpush.bf16.msra.mxu0 %v2489
      %2644 = vmatpush.bf16.msra.mxu0 %v2485
      %2645 = vmatpush.bf16.msra.mxu0 %v2481
      %2646 = vmatpush.bf16.msra.mxu0 %v2477
      %2647 = vmatpush.bf16.msra.mxu0 %v2473
      %2648 = vmatpush.bf16.msra.mxu0 %v2469
      %2649 = vmatpush.bf16.msra.mxu0 %v2465
      %2650 = vmatpush.bf16.msra.mxu0 %v2461
      %2651 = vmatmul.bf16.gmra.mxu0 %v2200
      %v2652 = vpop.f32.mrf.mxu0
      %v2653 = vadd.f32 0.0, %v2652
      %v2654 = vpop.f32.mrf.mxu0
      %v2655 = vadd.f32 0.0, %v2654
      %2656 = vdwg.mxu0
      %2657 = vmatpush.bf16.msra.mxu0 %v2521
      %2658 = vmatpush.bf16.msra.mxu0 %v2517
      %2659 = vmatpush.bf16.msra.mxu0 %v2513
      %2660 = vmatpush.bf16.msra.mxu0 %v2509
      %2661 = vmatpush.bf16.msra.mxu0 %v2505
      %2662 = vmatpush.bf16.msra.mxu0 %v2501
      %2663 = vmatpush.bf16.msra.mxu0 %v2497
      %2664 = vmatpush.bf16.msra.mxu0 %v2493
      %2665 = vmatmul.bf16.gmra.mxu0 %v2201
      %v2666 = vpop.f32.mrf.mxu0
      %v2667 = vadd.f32 %v2653, %v2666
      %v2668 = vpop.f32.mrf.mxu0
      %v2669 = vadd.f32 %v2655, %v2668
      %2670 = vdwg.mxu0
      %2671 = vmatpush.bf16.msra.mxu0 %v2490
      %2672 = vmatpush.bf16.msra.mxu0 %v2486
      %2673 = vmatpush.bf16.msra.mxu0 %v2482
      %2674 = vmatpush.bf16.msra.mxu0 %v2478
      %2675 = vmatpush.bf16.msra.mxu0 %v2474
      %2676 = vmatpush.bf16.msra.mxu0 %v2470
      %2677 = vmatpush.bf16.msra.mxu0 %v2466
      %2678 = vmatpush.bf16.msra.mxu0 %v2462
      %2679 = vmatmul.bf16.gmra.mxu0 %v2200
      %v2680 = vpop.f32.mrf.mxu0
      %v2681 = vadd.f32 0.0, %v2680
      %v2682 = vpop.f32.mrf.mxu0
      %v2683 = vadd.f32 0.0, %v2682
      %2684 = vdwg.mxu0
      %2685 = vmatpush.bf16.msra.mxu0 %v2522
      %2686 = vmatpush.bf16.msra.mxu0 %v2518
      %2687 = vmatpush.bf16.msra.mxu0 %v2514
      %2688 = vmatpush.bf16.msra.mxu0 %v2510
      %2689 = vmatpush.bf16.msra.mxu0 %v2506
      %2690 = vmatpush.bf16.msra.mxu0 %v2502
      %2691 = vmatpush.bf16.msra.mxu0 %v2498
      %2692 = vmatpush.bf16.msra.mxu0 %v2494
      %2693 = vmatmul.bf16.gmra.mxu0 %v2201
      %v2694 = vpop.f32.mrf.mxu0
      %v2695 = vadd.f32 %v2681, %v2694
      %v2696 = vpop.f32.mrf.mxu0
      %v2697 = vadd.f32 %v2683, %v2696
      %2698 = vdwg.mxu0
      %v2699 = vadd.f32 %v2153, %v2611
      %v2700 = vadd.f32 %v2154, %v2639
      %v2701 = vadd.f32 %v2155, %v2667
      %v2702 = vadd.f32 %v2156, %v2695
      %v2703 = vadd.f32 %v2157, %v2613
      %v2704 = vadd.f32 %v2158, %v2641
      %v2705 = vadd.f32 %v2159, %v2669
      %v2706 = vadd.f32 %v2160, %v2697
      %s2707 = scalar_lea.vmem %s1, 32
      %v2708 = vld [vmem:[%s2707] sm:$0xf]
      %v2709 = vld [vmem:[%s2707 + $0x4] sm:$0xf]
      %v2712 = vunpack.c.l.b16 %v2708
      %v2713 = vunpack.c.l.b16 %v2709
      %v2714 = vpack.c.b16 %v2713, %v2712
      %v2716 = vsel %vm547, %v2714, 0
      %2718 = vmatpush.bf16.msra.mxu0 0
      %2719 = vmatpush.bf16.msra.mxu0 0
      %2720 = vmatpush.bf16.msra.mxu0 0
      %2721 = vmatpush.bf16.msra.mxu0 0
      %2722 = vmatpush.bf16.msra.mxu0 %v537
      %2723 = vmatpush.bf16.msra.mxu0 %v535
      %2724 = vmatpush.bf16.msra.mxu0 %v533
      %2725 = vmatpush.bf16.msra.mxu0 %v531
      %2726 = vmatmul.bf16.gmra.mxu0 %v2716
      %v2727 = vpop.f32.mrf.mxu0
      %v2728 = vadd.f32 0.0, %v2727
      %v2729 = vpop.f32.mrf.mxu0
      %v2730 = vadd.f32 0.0, %v2729
      %2731 = vdwg.mxu0
      %2732 = vmatpush.bf16.msra.mxu0 0
      %2733 = vmatpush.bf16.msra.mxu0 0
      %2734 = vmatpush.bf16.msra.mxu0 0
      %2735 = vmatpush.bf16.msra.mxu0 0
      %2736 = vmatpush.bf16.msra.mxu0 %v538
      %2737 = vmatpush.bf16.msra.mxu0 %v536
      %2738 = vmatpush.bf16.msra.mxu0 %v534
      %2739 = vmatpush.bf16.msra.mxu0 %v532
      %2740 = vmatmul.bf16.gmra.mxu0 %v2716
      %v2741 = vpop.f32.mrf.mxu0
      %v2742 = vadd.f32 0.0, %v2741
      %v2743 = vpop.f32.mrf.mxu0
      %v2744 = vadd.f32 0.0, %v2743
      %2745 = vdwg.mxu0
      %v2746 = vpack.c.bf16 %v2730, %v2728
      %v2747 = vpack.c.bf16 %v2744, %v2742
      %s2748 = scalar_lea.vmem %s2, 2048
      %v2749 = vld [vmem:[%s2748] sm:$0xff]
      %v2750 = vld [vmem:[%s2748 + $0x8] sm:$0xff]
      %v2751 = vld [vmem:[%s2748 + $0x10] sm:$0xff]
      %v2752 = vld [vmem:[%s2748 + $0x18] sm:$0xff]
      %v2753 = vld [vmem:[%s2748 + $0x20] sm:$0xff]
      %v2754 = vld [vmem:[%s2748 + $0x28] sm:$0xff]
      %v2755 = vld [vmem:[%s2748 + $0x30] sm:$0xff]
      %v2756 = vld [vmem:[%s2748 + $0x38] sm:$0xff]
      %v2757 = vld [vmem:[%s2748 + $0x40] sm:$0xff]
      %v2758 = vld [vmem:[%s2748 + $0x48] sm:$0xff]
      %v2759 = vld [vmem:[%s2748 + $0x50] sm:$0xff]
      %v2760 = vld [vmem:[%s2748 + $0x58] sm:$0xff]
      %v2761 = vld [vmem:[%s2748 + $0x60] sm:$0xff]
      %v2762 = vld [vmem:[%s2748 + $0x68] sm:$0xff]
      %v2763 = vld [vmem:[%s2748 + $0x70] sm:$0xff]
      %v2764 = vld [vmem:[%s2748 + $0x78] sm:$0xff]
      %v2765 = vld [vmem:[%s2748 + $0x80] sm:$0xff]
      %v2766 = vld [vmem:[%s2748 + $0x88] sm:$0xff]
      %v2767 = vld [vmem:[%s2748 + $0x90] sm:$0xff]
      %v2768 = vld [vmem:[%s2748 + $0x98] sm:$0xff]
      %v2769 = vld [vmem:[%s2748 + $0xa0] sm:$0xff]
      %v2770 = vld [vmem:[%s2748 + $0xa8] sm:$0xff]
      %v2771 = vld [vmem:[%s2748 + $0xb0] sm:$0xff]
      %v2772 = vld [vmem:[%s2748 + $0xb8] sm:$0xff]
      %v2773 = vld [vmem:[%s2748 + $0xc0] sm:$0xff]
      %v2774 = vld [vmem:[%s2748 + $0xc8] sm:$0xff]
      %v2775 = vld [vmem:[%s2748 + $0xd0] sm:$0xff]
      %v2776 = vld [vmem:[%s2748 + $0xd8] sm:$0xff]
      %v2777 = vld [vmem:[%s2748 + $0xe0] sm:$0xff]
      %v2778 = vld [vmem:[%s2748 + $0xe8] sm:$0xff]
      %v2779 = vld [vmem:[%s2748 + $0xf0] sm:$0xff]
      %v2780 = vld [vmem:[%s2748 + $0xf8] sm:$0xff]
      %v2781 = vld [vmem:[%s2748 + $0x100] sm:$0xff]
      %v2782 = vld [vmem:[%s2748 + $0x108] sm:$0xff]
      %v2783 = vld [vmem:[%s2748 + $0x110] sm:$0xff]
      %v2784 = vld [vmem:[%s2748 + $0x118] sm:$0xff]
      %v2785 = vld [vmem:[%s2748 + $0x120] sm:$0xff]
      %v2786 = vld [vmem:[%s2748 + $0x128] sm:$0xff]
      %v2787 = vld [vmem:[%s2748 + $0x130] sm:$0xff]
      %v2788 = vld [vmem:[%s2748 + $0x138] sm:$0xff]
      %v2789 = vld [vmem:[%s2748 + $0x140] sm:$0xff]
      %v2790 = vld [vmem:[%s2748 + $0x148] sm:$0xff]
      %v2791 = vld [vmem:[%s2748 + $0x150] sm:$0xff]
      %v2792 = vld [vmem:[%s2748 + $0x158] sm:$0xff]
      %v2793 = vld [vmem:[%s2748 + $0x160] sm:$0xff]
      %v2794 = vld [vmem:[%s2748 + $0x168] sm:$0xff]
      %v2795 = vld [vmem:[%s2748 + $0x170] sm:$0xff]
      %v2796 = vld [vmem:[%s2748 + $0x178] sm:$0xff]
      %v2797 = vld [vmem:[%s2748 + $0x180] sm:$0xff]
      %v2798 = vld [vmem:[%s2748 + $0x188] sm:$0xff]
      %v2799 = vld [vmem:[%s2748 + $0x190] sm:$0xff]
      %v2800 = vld [vmem:[%s2748 + $0x198] sm:$0xff]
      %v2801 = vld [vmem:[%s2748 + $0x1a0] sm:$0xff]
      %v2802 = vld [vmem:[%s2748 + $0x1a8] sm:$0xff]
      %v2803 = vld [vmem:[%s2748 + $0x1b0] sm:$0xff]
      %v2804 = vld [vmem:[%s2748 + $0x1b8] sm:$0xff]
      %v2805 = vld [vmem:[%s2748 + $0x1c0] sm:$0xff]
      %v2806 = vld [vmem:[%s2748 + $0x1c8] sm:$0xff]
      %v2807 = vld [vmem:[%s2748 + $0x1d0] sm:$0xff]
      %v2808 = vld [vmem:[%s2748 + $0x1d8] sm:$0xff]
      %v2809 = vld [vmem:[%s2748 + $0x1e0] sm:$0xff]
      %v2810 = vld [vmem:[%s2748 + $0x1e8] sm:$0xff]
      %v2811 = vld [vmem:[%s2748 + $0x1f0] sm:$0xff]
      %v2812 = vld [vmem:[%s2748 + $0x1f8] sm:$0xff]
      %v2877 = vunpack.c.l.b16 %v2749
      %v2878 = vunpack.c.h.b16 %v2749
      %v2879 = vunpack.c.l.b16 %v2750
      %v2880 = vunpack.c.h.b16 %v2750
      %v2881 = vunpack.c.l.b16 %v2751
      %v2882 = vunpack.c.h.b16 %v2751
      %v2883 = vunpack.c.l.b16 %v2752
      %v2884 = vunpack.c.h.b16 %v2752
      %v2885 = vunpack.c.l.b16 %v2753
      %v2886 = vunpack.c.h.b16 %v2753
      %v2887 = vunpack.c.l.b16 %v2754
      %v2888 = vunpack.c.h.b16 %v2754
      %v2889 = vunpack.c.l.b16 %v2755
      %v2890 = vunpack.c.h.b16 %v2755
      %v2891 = vunpack.c.l.b16 %v2756
      %v2892 = vunpack.c.h.b16 %v2756
      %v2893 = vunpack.c.l.b16 %v2757
      %v2894 = vunpack.c.h.b16 %v2757
      %v2895 = vunpack.c.l.b16 %v2758
      %v2896 = vunpack.c.h.b16 %v2758
      %v2897 = vunpack.c.l.b16 %v2759
      %v2898 = vunpack.c.h.b16 %v2759
      %v2899 = vunpack.c.l.b16 %v2760
      %v2900 = vunpack.c.h.b16 %v2760
      %v2901 = vunpack.c.l.b16 %v2761
      %v2902 = vunpack.c.h.b16 %v2761
      %v2903 = vunpack.c.l.b16 %v2762
      %v2904 = vunpack.c.h.b16 %v2762
      %v2905 = vunpack.c.l.b16 %v2763
      %v2906 = vunpack.c.h.b16 %v2763
      %v2907 = vunpack.c.l.b16 %v2764
      %v2908 = vunpack.c.h.b16 %v2764
      %v2909 = vunpack.c.l.b16 %v2765
      %v2910 = vunpack.c.h.b16 %v2765
      %v2911 = vunpack.c.l.b16 %v2766
      %v2912 = vunpack.c.h.b16 %v2766
      %v2913 = vunpack.c.l.b16 %v2767
      %v2914 = vunpack.c.h.b16 %v2767
      %v2915 = vunpack.c.l.b16 %v2768
      %v2916 = vunpack.c.h.b16 %v2768
      %v2917 = vunpack.c.l.b16 %v2769
      %v2918 = vunpack.c.h.b16 %v2769
      %v2919 = vunpack.c.l.b16 %v2770
      %v2920 = vunpack.c.h.b16 %v2770
      %v2921 = vunpack.c.l.b16 %v2771
      %v2922 = vunpack.c.h.b16 %v2771
      %v2923 = vunpack.c.l.b16 %v2772
      %v2924 = vunpack.c.h.b16 %v2772
      %v2925 = vunpack.c.l.b16 %v2773
      %v2926 = vunpack.c.h.b16 %v2773
      %v2927 = vunpack.c.l.b16 %v2774
      %v2928 = vunpack.c.h.b16 %v2774
      %v2929 = vunpack.c.l.b16 %v2775
      %v2930 = vunpack.c.h.b16 %v2775
      %v2931 = vunpack.c.l.b16 %v2776
      %v2932 = vunpack.c.h.b16 %v2776
      %v2933 = vunpack.c.l.b16 %v2777
      %v2934 = vunpack.c.h.b16 %v2777
      %v2935 = vunpack.c.l.b16 %v2778
      %v2936 = vunpack.c.h.b16 %v2778
      %v2937 = vunpack.c.l.b16 %v2779
      %v2938 = vunpack.c.h.b16 %v2779
      %v2939 = vunpack.c.l.b16 %v2780
      %v2940 = vunpack.c.h.b16 %v2780
      %v2941 = vunpack.c.l.b16 %v2781
      %v2942 = vunpack.c.h.b16 %v2781
      %v2943 = vunpack.c.l.b16 %v2782
      %v2944 = vunpack.c.h.b16 %v2782
      %v2945 = vunpack.c.l.b16 %v2783
      %v2946 = vunpack.c.h.b16 %v2783
      %v2947 = vunpack.c.l.b16 %v2784
      %v2948 = vunpack.c.h.b16 %v2784
      %v2949 = vunpack.c.l.b16 %v2785
      %v2950 = vunpack.c.h.b16 %v2785
      %v2951 = vunpack.c.l.b16 %v2786
      %v2952 = vunpack.c.h.b16 %v2786
      %v2953 = vunpack.c.l.b16 %v2787
      %v2954 = vunpack.c.h.b16 %v2787
      %v2955 = vunpack.c.l.b16 %v2788
      %v2956 = vunpack.c.h.b16 %v2788
      %v2957 = vunpack.c.l.b16 %v2789
      %v2958 = vunpack.c.h.b16 %v2789
      %v2959 = vunpack.c.l.b16 %v2790
      %v2960 = vunpack.c.h.b16 %v2790
      %v2961 = vunpack.c.l.b16 %v2791
      %v2962 = vunpack.c.h.b16 %v2791
      %v2963 = vunpack.c.l.b16 %v2792
      %v2964 = vunpack.c.h.b16 %v2792
      %v2965 = vunpack.c.l.b16 %v2793
      %v2966 = vunpack.c.h.b16 %v2793
      %v2967 = vunpack.c.l.b16 %v2794
      %v2968 = vunpack.c.h.b16 %v2794
      %v2969 = vunpack.c.l.b16 %v2795
      %v2970 = vunpack.c.h.b16 %v2795
      %v2971 = vunpack.c.l.b16 %v2796
      %v2972 = vunpack.c.h.b16 %v2796
      %v2973 = vunpack.c.l.b16 %v2797
      %v2974 = vunpack.c.h.b16 %v2797
      %v2975 = vunpack.c.l.b16 %v2798
      %v2976 = vunpack.c.h.b16 %v2798
      %v2977 = vunpack.c.l.b16 %v2799
      %v2978 = vunpack.c.h.b16 %v2799
      %v2979 = vunpack.c.l.b16 %v2800
      %v2980 = vunpack.c.h.b16 %v2800
      %v2981 = vunpack.c.l.b16 %v2801
      %v2982 = vunpack.c.h.b16 %v2801
      %v2983 = vunpack.c.l.b16 %v2802
      %v2984 = vunpack.c.h.b16 %v2802
      %v2985 = vunpack.c.l.b16 %v2803
      %v2986 = vunpack.c.h.b16 %v2803
      %v2987 = vunpack.c.l.b16 %v2804
      %v2988 = vunpack.c.h.b16 %v2804
      %v2989 = vunpack.c.l.b16 %v2805
      %v2990 = vunpack.c.h.b16 %v2805
      %v2991 = vunpack.c.l.b16 %v2806
      %v2992 = vunpack.c.h.b16 %v2806
      %v2993 = vunpack.c.l.b16 %v2807
      %v2994 = vunpack.c.h.b16 %v2807
      %v2995 = vunpack.c.l.b16 %v2808
      %v2996 = vunpack.c.h.b16 %v2808
      %v2997 = vunpack.c.l.b16 %v2809
      %v2998 = vunpack.c.h.b16 %v2809
      %v2999 = vunpack.c.l.b16 %v2810
      %v3000 = vunpack.c.h.b16 %v2810
      %v3001 = vunpack.c.l.b16 %v2811
      %v3002 = vunpack.c.h.b16 %v2811
      %v3003 = vunpack.c.l.b16 %v2812
      %v3004 = vunpack.c.h.b16 %v2812
      %v3005 = vpack.c.b16 %v2881, %v2877
      %v3006 = vpack.c.b16 %v2882, %v2878
      %v3007 = vpack.c.b16 %v2883, %v2879
      %v3008 = vpack.c.b16 %v2884, %v2880
      %v3009 = vpack.c.b16 %v2889, %v2885
      %v3010 = vpack.c.b16 %v2890, %v2886
      %v3011 = vpack.c.b16 %v2891, %v2887
      %v3012 = vpack.c.b16 %v2892, %v2888
      %v3013 = vpack.c.b16 %v2897, %v2893
      %v3014 = vpack.c.b16 %v2898, %v2894
      %v3015 = vpack.c.b16 %v2899, %v2895
      %v3016 = vpack.c.b16 %v2900, %v2896
      %v3017 = vpack.c.b16 %v2905, %v2901
      %v3018 = vpack.c.b16 %v2906, %v2902
      %v3019 = vpack.c.b16 %v2907, %v2903
      %v3020 = vpack.c.b16 %v2908, %v2904
      %v3021 = vpack.c.b16 %v2913, %v2909
      %v3022 = vpack.c.b16 %v2914, %v2910
      %v3023 = vpack.c.b16 %v2915, %v2911
      %v3024 = vpack.c.b16 %v2916, %v2912
      %v3025 = vpack.c.b16 %v2921, %v2917
      %v3026 = vpack.c.b16 %v2922, %v2918
      %v3027 = vpack.c.b16 %v2923, %v2919
      %v3028 = vpack.c.b16 %v2924, %v2920
      %v3029 = vpack.c.b16 %v2929, %v2925
      %v3030 = vpack.c.b16 %v2930, %v2926
      %v3031 = vpack.c.b16 %v2931, %v2927
      %v3032 = vpack.c.b16 %v2932, %v2928
      %v3033 = vpack.c.b16 %v2937, %v2933
      %v3034 = vpack.c.b16 %v2938, %v2934
      %v3035 = vpack.c.b16 %v2939, %v2935
      %v3036 = vpack.c.b16 %v2940, %v2936
      %v3037 = vpack.c.b16 %v2945, %v2941
      %v3038 = vpack.c.b16 %v2946, %v2942
      %v3039 = vpack.c.b16 %v2947, %v2943
      %v3040 = vpack.c.b16 %v2948, %v2944
      %v3041 = vpack.c.b16 %v2953, %v2949
      %v3042 = vpack.c.b16 %v2954, %v2950
      %v3043 = vpack.c.b16 %v2955, %v2951
      %v3044 = vpack.c.b16 %v2956, %v2952
      %v3045 = vpack.c.b16 %v2961, %v2957
      %v3046 = vpack.c.b16 %v2962, %v2958
      %v3047 = vpack.c.b16 %v2963, %v2959
      %v3048 = vpack.c.b16 %v2964, %v2960
      %v3049 = vpack.c.b16 %v2969, %v2965
      %v3050 = vpack.c.b16 %v2970, %v2966
      %v3051 = vpack.c.b16 %v2971, %v2967
      %v3052 = vpack.c.b16 %v2972, %v2968
      %v3053 = vpack.c.b16 %v2977, %v2973
      %v3054 = vpack.c.b16 %v2978, %v2974
      %v3055 = vpack.c.b16 %v2979, %v2975
      %v3056 = vpack.c.b16 %v2980, %v2976
      %v3057 = vpack.c.b16 %v2985, %v2981
      %v3058 = vpack.c.b16 %v2986, %v2982
      %v3059 = vpack.c.b16 %v2987, %v2983
      %v3060 = vpack.c.b16 %v2988, %v2984
      %v3061 = vpack.c.b16 %v2993, %v2989
      %v3062 = vpack.c.b16 %v2994, %v2990
      %v3063 = vpack.c.b16 %v2995, %v2991
      %v3064 = vpack.c.b16 %v2996, %v2992
      %v3065 = vpack.c.b16 %v3001, %v2997
      %v3066 = vpack.c.b16 %v3002, %v2998
      %v3067 = vpack.c.b16 %v3003, %v2999
      %v3068 = vpack.c.b16 %v3004, %v3000
      %3133 = vmatpush.bf16.msra.mxu0 %v3033
      %3134 = vmatpush.bf16.msra.mxu0 %v3029
      %3135 = vmatpush.bf16.msra.mxu0 %v3025
      %3136 = vmatpush.bf16.msra.mxu0 %v3021
      %3137 = vmatpush.bf16.msra.mxu0 %v3017
      %3138 = vmatpush.bf16.msra.mxu0 %v3013
      %3139 = vmatpush.bf16.msra.mxu0 %v3009
      %3140 = vmatpush.bf16.msra.mxu0 %v3005
      %3141 = vmatmul.bf16.gmra.mxu0 %v2746
      %v3142 = vpop.f32.mrf.mxu0
      %v3143 = vadd.f32 0.0, %v3142
      %v3144 = vpop.f32.mrf.mxu0
      %v3145 = vadd.f32 0.0, %v3144
      %3146 = vdwg.mxu0
      %3147 = vmatpush.bf16.msra.mxu0 %v3065
      %3148 = vmatpush.bf16.msra.mxu0 %v3061
      %3149 = vmatpush.bf16.msra.mxu0 %v3057
      %3150 = vmatpush.bf16.msra.mxu0 %v3053
      %3151 = vmatpush.bf16.msra.mxu0 %v3049
      %3152 = vmatpush.bf16.msra.mxu0 %v3045
      %3153 = vmatpush.bf16.msra.mxu0 %v3041
      %3154 = vmatpush.bf16.msra.mxu0 %v3037
      %3155 = vmatmul.bf16.gmra.mxu0 %v2747
      %v3156 = vpop.f32.mrf.mxu0
      %v3157 = vadd.f32 %v3143, %v3156
      %v3158 = vpop.f32.mrf.mxu0
      %v3159 = vadd.f32 %v3145, %v3158
      %3160 = vdwg.mxu0
      %3161 = vmatpush.bf16.msra.mxu0 %v3034
      %3162 = vmatpush.bf16.msra.mxu0 %v3030
      %3163 = vmatpush.bf16.msra.mxu0 %v3026
      %3164 = vmatpush.bf16.msra.mxu0 %v3022
      %3165 = vmatpush.bf16.msra.mxu0 %v3018
      %3166 = vmatpush.bf16.msra.mxu0 %v3014
      %3167 = vmatpush.bf16.msra.mxu0 %v3010
      %3168 = vmatpush.bf16.msra.mxu0 %v3006
      %3169 = vmatmul.bf16.gmra.mxu0 %v2746
      %v3170 = vpop.f32.mrf.mxu0
      %v3171 = vadd.f32 0.0, %v3170
      %v3172 = vpop.f32.mrf.mxu0
      %v3173 = vadd.f32 0.0, %v3172
      %3174 = vdwg.mxu0
      %3175 = vmatpush.bf16.msra.mxu0 %v3066
      %3176 = vmatpush.bf16.msra.mxu0 %v3062
      %3177 = vmatpush.bf16.msra.mxu0 %v3058
      %3178 = vmatpush.bf16.msra.mxu0 %v3054
      %3179 = vmatpush.bf16.msra.mxu0 %v3050
      %3180 = vmatpush.bf16.msra.mxu0 %v3046
      %3181 = vmatpush.bf16.msra.mxu0 %v3042
      %3182 = vmatpush.bf16.msra.mxu0 %v3038
      %3183 = vmatmul.bf16.gmra.mxu0 %v2747
      %v3184 = vpop.f32.mrf.mxu0
      %v3185 = vadd.f32 %v3171, %v3184
      %v3186 = vpop.f32.mrf.mxu0
      %v3187 = vadd.f32 %v3173, %v3186
      %3188 = vdwg.mxu0
      %3189 = vmatpush.bf16.msra.mxu0 %v3035
      %3190 = vmatpush.bf16.msra.mxu0 %v3031
      %3191 = vmatpush.bf16.msra.mxu0 %v3027
      %3192 = vmatpush.bf16.msra.mxu0 %v3023
      %3193 = vmatpush.bf16.msra.mxu0 %v3019
      %3194 = vmatpush.bf16.msra.mxu0 %v3015
      %3195 = vmatpush.bf16.msra.mxu0 %v3011
      %3196 = vmatpush.bf16.msra.mxu0 %v3007
      %3197 = vmatmul.bf16.gmra.mxu0 %v2746
      %v3198 = vpop.f32.mrf.mxu0
      %v3199 = vadd.f32 0.0, %v3198
      %v3200 = vpop.f32.mrf.mxu0
      %v3201 = vadd.f32 0.0, %v3200
      %3202 = vdwg.mxu0
      %3203 = vmatpush.bf16.msra.mxu0 %v3067
      %3204 = vmatpush.bf16.msra.mxu0 %v3063
      %3205 = vmatpush.bf16.msra.mxu0 %v3059
      %3206 = vmatpush.bf16.msra.mxu0 %v3055
      %3207 = vmatpush.bf16.msra.mxu0 %v3051
      %3208 = vmatpush.bf16.msra.mxu0 %v3047
      %3209 = vmatpush.bf16.msra.mxu0 %v3043
      %3210 = vmatpush.bf16.msra.mxu0 %v3039
      %3211 = vmatmul.bf16.gmra.mxu0 %v2747
      %v3212 = vpop.f32.mrf.mxu0
      %v3213 = vadd.f32 %v3199, %v3212
      %v3214 = vpop.f32.mrf.mxu0
      %v3215 = vadd.f32 %v3201, %v3214
      %3216 = vdwg.mxu0
      %3217 = vmatpush.bf16.msra.mxu0 %v3036
      %3218 = vmatpush.bf16.msra.mxu0 %v3032
      %3219 = vmatpush.bf16.msra.mxu0 %v3028
      %3220 = vmatpush.bf16.msra.mxu0 %v3024
      %3221 = vmatpush.bf16.msra.mxu0 %v3020
      %3222 = vmatpush.bf16.msra.mxu0 %v3016
      %3223 = vmatpush.bf16.msra.mxu0 %v3012
      %3224 = vmatpush.bf16.msra.mxu0 %v3008
      %3225 = vmatmul.bf16.gmra.mxu0 %v2746
      %v3226 = vpop.f32.mrf.mxu0
      %v3227 = vadd.f32 0.0, %v3226
      %v3228 = vpop.f32.mrf.mxu0
      %v3229 = vadd.f32 0.0, %v3228
      %3230 = vdwg.mxu0
      %3231 = vmatpush.bf16.msra.mxu0 %v3068
      %3232 = vmatpush.bf16.msra.mxu0 %v3064
      %3233 = vmatpush.bf16.msra.mxu0 %v3060
      %3234 = vmatpush.bf16.msra.mxu0 %v3056
      %3235 = vmatpush.bf16.msra.mxu0 %v3052
      %3236 = vmatpush.bf16.msra.mxu0 %v3048
      %3237 = vmatpush.bf16.msra.mxu0 %v3044
      %3238 = vmatpush.bf16.msra.mxu0 %v3040
      %3239 = vmatmul.bf16.gmra.mxu0 %v2747
      %v3240 = vpop.f32.mrf.mxu0
      %v3241 = vadd.f32 %v3227, %v3240
      %v3242 = vpop.f32.mrf.mxu0
      %v3243 = vadd.f32 %v3229, %v3242
      %3244 = vdwg.mxu0
      %v3245 = vadd.f32 %v2699, %v3157
      %v3246 = vadd.f32 %v2700, %v3185
      %v3247 = vadd.f32 %v2701, %v3213
      %v3248 = vadd.f32 %v2702, %v3241
      %v3249 = vadd.f32 %v2703, %v3159
      %v3250 = vadd.f32 %v2704, %v3187
      %v3251 = vadd.f32 %v2705, %v3215
      %v3252 = vadd.f32 %v2706, %v3243
      %s3253 = scalar_lea.vmem %s1, 40
      %v3254 = vld [vmem:[%s3253] sm:$0xf]
      %v3255 = vld [vmem:[%s3253 + $0x4] sm:$0xf]
      %v3258 = vunpack.c.l.b16 %v3254
      %v3259 = vunpack.c.l.b16 %v3255
      %v3260 = vpack.c.b16 %v3259, %v3258
      %v3262 = vsel %vm547, %v3260, 0
      %3264 = vmatpush.bf16.msra.mxu0 0
      %3265 = vmatpush.bf16.msra.mxu0 0
      %3266 = vmatpush.bf16.msra.mxu0 0
      %3267 = vmatpush.bf16.msra.mxu0 0
      %3268 = vmatpush.bf16.msra.mxu0 %v537
      %3269 = vmatpush.bf16.msra.mxu0 %v535
      %3270 = vmatpush.bf16.msra.mxu0 %v533
      %3271 = vmatpush.bf16.msra.mxu0 %v531
      %3272 = vmatmul.bf16.gmra.mxu0 %v3262
      %v3273 = vpop.f32.mrf.mxu0
      %v3274 = vadd.f32 0.0, %v3273
      %v3275 = vpop.f32.mrf.mxu0
      %v3276 = vadd.f32 0.0, %v3275
      %3277 = vdwg.mxu0
      %3278 = vmatpush.bf16.msra.mxu0 0
      %3279 = vmatpush.bf16.msra.mxu0 0
      %3280 = vmatpush.bf16.msra.mxu0 0
      %3281 = vmatpush.bf16.msra.mxu0 0
      %3282 = vmatpush.bf16.msra.mxu0 %v538
      %3283 = vmatpush.bf16.msra.mxu0 %v536
      %3284 = vmatpush.bf16.msra.mxu0 %v534
      %3285 = vmatpush.bf16.msra.mxu0 %v532
      %3286 = vmatmul.bf16.gmra.mxu0 %v3262
      %v3287 = vpop.f32.mrf.mxu0
      %v3288 = vadd.f32 0.0, %v3287
      %v3289 = vpop.f32.mrf.mxu0
      %v3290 = vadd.f32 0.0, %v3289
      %3291 = vdwg.mxu0
      %v3292 = vpack.c.bf16 %v3276, %v3274
      %v3293 = vpack.c.bf16 %v3290, %v3288
      %s3294 = scalar_lea.vmem %s2, 2560
      %v3295 = vld [vmem:[%s3294] sm:$0xff]
      %v3296 = vld [vmem:[%s3294 + $0x8] sm:$0xff]
      %v3297 = vld [vmem:[%s3294 + $0x10] sm:$0xff]
      %v3298 = vld [vmem:[%s3294 + $0x18] sm:$0xff]
      %v3299 = vld [vmem:[%s3294 + $0x20] sm:$0xff]
      %v3300 = vld [vmem:[%s3294 + $0x28] sm:$0xff]
      %v3301 = vld [vmem:[%s3294 + $0x30] sm:$0xff]
      %v3302 = vld [vmem:[%s3294 + $0x38] sm:$0xff]
      %v3303 = vld [vmem:[%s3294 + $0x40] sm:$0xff]
      %v3304 = vld [vmem:[%s3294 + $0x48] sm:$0xff]
      %v3305 = vld [vmem:[%s3294 + $0x50] sm:$0xff]
      %v3306 = vld [vmem:[%s3294 + $0x58] sm:$0xff]
      %v3307 = vld [vmem:[%s3294 + $0x60] sm:$0xff]
      %v3308 = vld [vmem:[%s3294 + $0x68] sm:$0xff]
      %v3309 = vld [vmem:[%s3294 + $0x70] sm:$0xff]
      %v3310 = vld [vmem:[%s3294 + $0x78] sm:$0xff]
      %v3311 = vld [vmem:[%s3294 + $0x80] sm:$0xff]
      %v3312 = vld [vmem:[%s3294 + $0x88] sm:$0xff]
      %v3313 = vld [vmem:[%s3294 + $0x90] sm:$0xff]
      %v3314 = vld [vmem:[%s3294 + $0x98] sm:$0xff]
      %v3315 = vld [vmem:[%s3294 + $0xa0] sm:$0xff]
      %v3316 = vld [vmem:[%s3294 + $0xa8] sm:$0xff]
      %v3317 = vld [vmem:[%s3294 + $0xb0] sm:$0xff]
      %v3318 = vld [vmem:[%s3294 + $0xb8] sm:$0xff]
      %v3319 = vld [vmem:[%s3294 + $0xc0] sm:$0xff]
      %v3320 = vld [vmem:[%s3294 + $0xc8] sm:$0xff]
      %v3321 = vld [vmem:[%s3294 + $0xd0] sm:$0xff]
      %v3322 = vld [vmem:[%s3294 + $0xd8] sm:$0xff]
      %v3323 = vld [vmem:[%s3294 + $0xe0] sm:$0xff]
      %v3324 = vld [vmem:[%s3294 + $0xe8] sm:$0xff]
      %v3325 = vld [vmem:[%s3294 + $0xf0] sm:$0xff]
      %v3326 = vld [vmem:[%s3294 + $0xf8] sm:$0xff]
      %v3327 = vld [vmem:[%s3294 + $0x100] sm:$0xff]
      %v3328 = vld [vmem:[%s3294 + $0x108] sm:$0xff]
      %v3329 = vld [vmem:[%s3294 + $0x110] sm:$0xff]
      %v3330 = vld [vmem:[%s3294 + $0x118] sm:$0xff]
      %v3331 = vld [vmem:[%s3294 + $0x120] sm:$0xff]
      %v3332 = vld [vmem:[%s3294 + $0x128] sm:$0xff]
      %v3333 = vld [vmem:[%s3294 + $0x130] sm:$0xff]
      %v3334 = vld [vmem:[%s3294 + $0x138] sm:$0xff]
      %v3335 = vld [vmem:[%s3294 + $0x140] sm:$0xff]
      %v3336 = vld [vmem:[%s3294 + $0x148] sm:$0xff]
      %v3337 = vld [vmem:[%s3294 + $0x150] sm:$0xff]
      %v3338 = vld [vmem:[%s3294 + $0x158] sm:$0xff]
      %v3339 = vld [vmem:[%s3294 + $0x160] sm:$0xff]
      %v3340 = vld [vmem:[%s3294 + $0x168] sm:$0xff]
      %v3341 = vld [vmem:[%s3294 + $0x170] sm:$0xff]
      %v3342 = vld [vmem:[%s3294 + $0x178] sm:$0xff]
      %v3343 = vld [vmem:[%s3294 + $0x180] sm:$0xff]
      %v3344 = vld [vmem:[%s3294 + $0x188] sm:$0xff]
      %v3345 = vld [vmem:[%s3294 + $0x190] sm:$0xff]
      %v3346 = vld [vmem:[%s3294 + $0x198] sm:$0xff]
      %v3347 = vld [vmem:[%s3294 + $0x1a0] sm:$0xff]
      %v3348 = vld [vmem:[%s3294 + $0x1a8] sm:$0xff]
      %v3349 = vld [vmem:[%s3294 + $0x1b0] sm:$0xff]
      %v3350 = vld [vmem:[%s3294 + $0x1b8] sm:$0xff]
      %v3351 = vld [vmem:[%s3294 + $0x1c0] sm:$0xff]
      %v3352 = vld [vmem:[%s3294 + $0x1c8] sm:$0xff]
      %v3353 = vld [vmem:[%s3294 + $0x1d0] sm:$0xff]
      %v3354 = vld [vmem:[%s3294 + $0x1d8] sm:$0xff]
      %v3355 = vld [vmem:[%s3294 + $0x1e0] sm:$0xff]
      %v3356 = vld [vmem:[%s3294 + $0x1e8] sm:$0xff]
      %v3357 = vld [vmem:[%s3294 + $0x1f0] sm:$0xff]
      %v3358 = vld [vmem:[%s3294 + $0x1f8] sm:$0xff]
      %v3423 = vunpack.c.l.b16 %v3295
      %v3424 = vunpack.c.h.b16 %v3295
      %v3425 = vunpack.c.l.b16 %v3296
      %v3426 = vunpack.c.h.b16 %v3296
      %v3427 = vunpack.c.l.b16 %v3297
      %v3428 = vunpack.c.h.b16 %v3297
      %v3429 = vunpack.c.l.b16 %v3298
      %v3430 = vunpack.c.h.b16 %v3298
      %v3431 = vunpack.c.l.b16 %v3299
      %v3432 = vunpack.c.h.b16 %v3299
      %v3433 = vunpack.c.l.b16 %v3300
      %v3434 = vunpack.c.h.b16 %v3300
      %v3435 = vunpack.c.l.b16 %v3301
      %v3436 = vunpack.c.h.b16 %v3301
      %v3437 = vunpack.c.l.b16 %v3302
      %v3438 = vunpack.c.h.b16 %v3302
      %v3439 = vunpack.c.l.b16 %v3303
      %v3440 = vunpack.c.h.b16 %v3303
      %v3441 = vunpack.c.l.b16 %v3304
      %v3442 = vunpack.c.h.b16 %v3304
      %v3443 = vunpack.c.l.b16 %v3305
      %v3444 = vunpack.c.h.b16 %v3305
      %v3445 = vunpack.c.l.b16 %v3306
      %v3446 = vunpack.c.h.b16 %v3306
      %v3447 = vunpack.c.l.b16 %v3307
      %v3448 = vunpack.c.h.b16 %v3307
      %v3449 = vunpack.c.l.b16 %v3308
      %v3450 = vunpack.c.h.b16 %v3308
      %v3451 = vunpack.c.l.b16 %v3309
      %v3452 = vunpack.c.h.b16 %v3309
      %v3453 = vunpack.c.l.b16 %v3310
      %v3454 = vunpack.c.h.b16 %v3310
      %v3455 = vunpack.c.l.b16 %v3311
      %v3456 = vunpack.c.h.b16 %v3311
      %v3457 = vunpack.c.l.b16 %v3312
      %v3458 = vunpack.c.h.b16 %v3312
      %v3459 = vunpack.c.l.b16 %v3313
      %v3460 = vunpack.c.h.b16 %v3313
      %v3461 = vunpack.c.l.b16 %v3314
      %v3462 = vunpack.c.h.b16 %v3314
      %v3463 = vunpack.c.l.b16 %v3315
      %v3464 = vunpack.c.h.b16 %v3315
      %v3465 = vunpack.c.l.b16 %v3316
      %v3466 = vunpack.c.h.b16 %v3316
      %v3467 = vunpack.c.l.b16 %v3317
      %v3468 = vunpack.c.h.b16 %v3317
      %v3469 = vunpack.c.l.b16 %v3318
      %v3470 = vunpack.c.h.b16 %v3318
      %v3471 = vunpack.c.l.b16 %v3319
      %v3472 = vunpack.c.h.b16 %v3319
      %v3473 = vunpack.c.l.b16 %v3320
      %v3474 = vunpack.c.h.b16 %v3320
      %v3475 = vunpack.c.l.b16 %v3321
      %v3476 = vunpack.c.h.b16 %v3321
      %v3477 = vunpack.c.l.b16 %v3322
      %v3478 = vunpack.c.h.b16 %v3322
      %v3479 = vunpack.c.l.b16 %v3323
      %v3480 = vunpack.c.h.b16 %v3323
      %v3481 = vunpack.c.l.b16 %v3324
      %v3482 = vunpack.c.h.b16 %v3324
      %v3483 = vunpack.c.l.b16 %v3325
      %v3484 = vunpack.c.h.b16 %v3325
      %v3485 = vunpack.c.l.b16 %v3326
      %v3486 = vunpack.c.h.b16 %v3326
      %v3487 = vunpack.c.l.b16 %v3327
      %v3488 = vunpack.c.h.b16 %v3327
      %v3489 = vunpack.c.l.b16 %v3328
      %v3490 = vunpack.c.h.b16 %v3328
      %v3491 = vunpack.c.l.b16 %v3329
      %v3492 = vunpack.c.h.b16 %v3329
      %v3493 = vunpack.c.l.b16 %v3330
      %v3494 = vunpack.c.h.b16 %v3330
      %v3495 = vunpack.c.l.b16 %v3331
      %v3496 = vunpack.c.h.b16 %v3331
      %v3497 = vunpack.c.l.b16 %v3332
      %v3498 = vunpack.c.h.b16 %v3332
      %v3499 = vunpack.c.l.b16 %v3333
      %v3500 = vunpack.c.h.b16 %v3333
      %v3501 = vunpack.c.l.b16 %v3334
      %v3502 = vunpack.c.h.b16 %v3334
      %v3503 = vunpack.c.l.b16 %v3335
      %v3504 = vunpack.c.h.b16 %v3335
      %v3505 = vunpack.c.l.b16 %v3336
      %v3506 = vunpack.c.h.b16 %v3336
      %v3507 = vunpack.c.l.b16 %v3337
      %v3508 = vunpack.c.h.b16 %v3337
      %v3509 = vunpack.c.l.b16 %v3338
      %v3510 = vunpack.c.h.b16 %v3338
      %v3511 = vunpack.c.l.b16 %v3339
      %v3512 = vunpack.c.h.b16 %v3339
      %v3513 = vunpack.c.l.b16 %v3340
      %v3514 = vunpack.c.h.b16 %v3340
      %v3515 = vunpack.c.l.b16 %v3341
      %v3516 = vunpack.c.h.b16 %v3341
      %v3517 = vunpack.c.l.b16 %v3342
      %v3518 = vunpack.c.h.b16 %v3342
      %v3519 = vunpack.c.l.b16 %v3343
      %v3520 = vunpack.c.h.b16 %v3343
      %v3521 = vunpack.c.l.b16 %v3344
      %v3522 = vunpack.c.h.b16 %v3344
      %v3523 = vunpack.c.l.b16 %v3345
      %v3524 = vunpack.c.h.b16 %v3345
      %v3525 = vunpack.c.l.b16 %v3346
      %v3526 = vunpack.c.h.b16 %v3346
      %v3527 = vunpack.c.l.b16 %v3347
      %v3528 = vunpack.c.h.b16 %v3347
      %v3529 = vunpack.c.l.b16 %v3348
      %v3530 = vunpack.c.h.b16 %v3348
      %v3531 = vunpack.c.l.b16 %v3349
      %v3532 = vunpack.c.h.b16 %v3349
      %v3533 = vunpack.c.l.b16 %v3350
      %v3534 = vunpack.c.h.b16 %v3350
      %v3535 = vunpack.c.l.b16 %v3351
      %v3536 = vunpack.c.h.b16 %v3351
      %v3537 = vunpack.c.l.b16 %v3352
      %v3538 = vunpack.c.h.b16 %v3352
      %v3539 = vunpack.c.l.b16 %v3353
      %v3540 = vunpack.c.h.b16 %v3353
      %v3541 = vunpack.c.l.b16 %v3354
      %v3542 = vunpack.c.h.b16 %v3354
      %v3543 = vunpack.c.l.b16 %v3355
      %v3544 = vunpack.c.h.b16 %v3355
      %v3545 = vunpack.c.l.b16 %v3356
      %v3546 = vunpack.c.h.b16 %v3356
      %v3547 = vunpack.c.l.b16 %v3357
      %v3548 = vunpack.c.h.b16 %v3357
      %v3549 = vunpack.c.l.b16 %v3358
      %v3550 = vunpack.c.h.b16 %v3358
      %v3551 = vpack.c.b16 %v3427, %v3423
      %v3552 = vpack.c.b16 %v3428, %v3424
      %v3553 = vpack.c.b16 %v3429, %v3425
      %v3554 = vpack.c.b16 %v3430, %v3426
      %v3555 = vpack.c.b16 %v3435, %v3431
      %v3556 = vpack.c.b16 %v3436, %v3432
      %v3557 = vpack.c.b16 %v3437, %v3433
      %v3558 = vpack.c.b16 %v3438, %v3434
      %v3559 = vpack.c.b16 %v3443, %v3439
      %v3560 = vpack.c.b16 %v3444, %v3440
      %v3561 = vpack.c.b16 %v3445, %v3441
      %v3562 = vpack.c.b16 %v3446, %v3442
      %v3563 = vpack.c.b16 %v3451, %v3447
      %v3564 = vpack.c.b16 %v3452, %v3448
      %v3565 = vpack.c.b16 %v3453, %v3449
      %v3566 = vpack.c.b16 %v3454, %v3450
      %v3567 = vpack.c.b16 %v3459, %v3455
      %v3568 = vpack.c.b16 %v3460, %v3456
      %v3569 = vpack.c.b16 %v3461, %v3457
      %v3570 = vpack.c.b16 %v3462, %v3458
      %v3571 = vpack.c.b16 %v3467, %v3463
      %v3572 = vpack.c.b16 %v3468, %v3464
      %v3573 = vpack.c.b16 %v3469, %v3465
      %v3574 = vpack.c.b16 %v3470, %v3466
      %v3575 = vpack.c.b16 %v3475, %v3471
      %v3576 = vpack.c.b16 %v3476, %v3472
      %v3577 = vpack.c.b16 %v3477, %v3473
      %v3578 = vpack.c.b16 %v3478, %v3474
      %v3579 = vpack.c.b16 %v3483, %v3479
      %v3580 = vpack.c.b16 %v3484, %v3480
      %v3581 = vpack.c.b16 %v3485, %v3481
      %v3582 = vpack.c.b16 %v3486, %v3482
      %v3583 = vpack.c.b16 %v3491, %v3487
      %v3584 = vpack.c.b16 %v3492, %v3488
      %v3585 = vpack.c.b16 %v3493, %v3489
      %v3586 = vpack.c.b16 %v3494, %v3490
      %v3587 = vpack.c.b16 %v3499, %v3495
      %v3588 = vpack.c.b16 %v3500, %v3496
      %v3589 = vpack.c.b16 %v3501, %v3497
      %v3590 = vpack.c.b16 %v3502, %v3498
      %v3591 = vpack.c.b16 %v3507, %v3503
      %v3592 = vpack.c.b16 %v3508, %v3504
      %v3593 = vpack.c.b16 %v3509, %v3505
      %v3594 = vpack.c.b16 %v3510, %v3506
      %v3595 = vpack.c.b16 %v3515, %v3511
      %v3596 = vpack.c.b16 %v3516, %v3512
      %v3597 = vpack.c.b16 %v3517, %v3513
      %v3598 = vpack.c.b16 %v3518, %v3514
      %v3599 = vpack.c.b16 %v3523, %v3519
      %v3600 = vpack.c.b16 %v3524, %v3520
      %v3601 = vpack.c.b16 %v3525, %v3521
      %v3602 = vpack.c.b16 %v3526, %v3522
      %v3603 = vpack.c.b16 %v3531, %v3527
      %v3604 = vpack.c.b16 %v3532, %v3528
      %v3605 = vpack.c.b16 %v3533, %v3529
      %v3606 = vpack.c.b16 %v3534, %v3530
      %v3607 = vpack.c.b16 %v3539, %v3535
      %v3608 = vpack.c.b16 %v3540, %v3536
      %v3609 = vpack.c.b16 %v3541, %v3537
      %v3610 = vpack.c.b16 %v3542, %v3538
      %v3611 = vpack.c.b16 %v3547, %v3543
      %v3612 = vpack.c.b16 %v3548, %v3544
      %v3613 = vpack.c.b16 %v3549, %v3545
      %v3614 = vpack.c.b16 %v3550, %v3546
      %3679 = vmatpush.bf16.msra.mxu0 %v3579
      %3680 = vmatpush.bf16.msra.mxu0 %v3575
      %3681 = vmatpush.bf16.msra.mxu0 %v3571
      %3682 = vmatpush.bf16.msra.mxu0 %v3567
      %3683 = vmatpush.bf16.msra.mxu0 %v3563
      %3684 = vmatpush.bf16.msra.mxu0 %v3559
      %3685 = vmatpush.bf16.msra.mxu0 %v3555
      %3686 = vmatpush.bf16.msra.mxu0 %v3551
      %3687 = vmatmul.bf16.gmra.mxu0 %v3292
      %v3688 = vpop.f32.mrf.mxu0
      %v3689 = vadd.f32 0.0, %v3688
      %v3690 = vpop.f32.mrf.mxu0
      %v3691 = vadd.f32 0.0, %v3690
      %3692 = vdwg.mxu0
      %3693 = vmatpush.bf16.msra.mxu0 %v3611
      %3694 = vmatpush.bf16.msra.mxu0 %v3607
      %3695 = vmatpush.bf16.msra.mxu0 %v3603
      %3696 = vmatpush.bf16.msra.mxu0 %v3599
      %3697 = vmatpush.bf16.msra.mxu0 %v3595
      %3698 = vmatpush.bf16.msra.mxu0 %v3591
      %3699 = vmatpush.bf16.msra.mxu0 %v3587
      %3700 = vmatpush.bf16.msra.mxu0 %v3583
      %3701 = vmatmul.bf16.gmra.mxu0 %v3293
      %v3702 = vpop.f32.mrf.mxu0
      %v3703 = vadd.f32 %v3689, %v3702
      %v3704 = vpop.f32.mrf.mxu0
      %v3705 = vadd.f32 %v3691, %v3704
      %3706 = vdwg.mxu0
      %3707 = vmatpush.bf16.msra.mxu0 %v3580
      %3708 = vmatpush.bf16.msra.mxu0 %v3576
      %3709 = vmatpush.bf16.msra.mxu0 %v3572
      %3710 = vmatpush.bf16.msra.mxu0 %v3568
      %3711 = vmatpush.bf16.msra.mxu0 %v3564
      %3712 = vmatpush.bf16.msra.mxu0 %v3560
      %3713 = vmatpush.bf16.msra.mxu0 %v3556
      %3714 = vmatpush.bf16.msra.mxu0 %v3552
      %3715 = vmatmul.bf16.gmra.mxu0 %v3292
      %v3716 = vpop.f32.mrf.mxu0
      %v3717 = vadd.f32 0.0, %v3716
      %v3718 = vpop.f32.mrf.mxu0
      %v3719 = vadd.f32 0.0, %v3718
      %3720 = vdwg.mxu0
      %3721 = vmatpush.bf16.msra.mxu0 %v3612
      %3722 = vmatpush.bf16.msra.mxu0 %v3608
      %3723 = vmatpush.bf16.msra.mxu0 %v3604
      %3724 = vmatpush.bf16.msra.mxu0 %v3600
      %3725 = vmatpush.bf16.msra.mxu0 %v3596
      %3726 = vmatpush.bf16.msra.mxu0 %v3592
      %3727 = vmatpush.bf16.msra.mxu0 %v3588
      %3728 = vmatpush.bf16.msra.mxu0 %v3584
      %3729 = vmatmul.bf16.gmra.mxu0 %v3293
      %v3730 = vpop.f32.mrf.mxu0
      %v3731 = vadd.f32 %v3717, %v3730
      %v3732 = vpop.f32.mrf.mxu0
      %v3733 = vadd.f32 %v3719, %v3732
      %3734 = vdwg.mxu0
      %3735 = vmatpush.bf16.msra.mxu0 %v3581
      %3736 = vmatpush.bf16.msra.mxu0 %v3577
      %3737 = vmatpush.bf16.msra.mxu0 %v3573
      %3738 = vmatpush.bf16.msra.mxu0 %v3569
      %3739 = vmatpush.bf16.msra.mxu0 %v3565
      %3740 = vmatpush.bf16.msra.mxu0 %v3561
      %3741 = vmatpush.bf16.msra.mxu0 %v3557
      %3742 = vmatpush.bf16.msra.mxu0 %v3553
      %3743 = vmatmul.bf16.gmra.mxu0 %v3292
      %v3744 = vpop.f32.mrf.mxu0
      %v3745 = vadd.f32 0.0, %v3744
      %v3746 = vpop.f32.mrf.mxu0
      %v3747 = vadd.f32 0.0, %v3746
      %3748 = vdwg.mxu0
      %3749 = vmatpush.bf16.msra.mxu0 %v3613
      %3750 = vmatpush.bf16.msra.mxu0 %v3609
      %3751 = vmatpush.bf16.msra.mxu0 %v3605
      %3752 = vmatpush.bf16.msra.mxu0 %v3601
      %3753 = vmatpush.bf16.msra.mxu0 %v3597
      %3754 = vmatpush.bf16.msra.mxu0 %v3593
      %3755 = vmatpush.bf16.msra.mxu0 %v3589
      %3756 = vmatpush.bf16.msra.mxu0 %v3585
      %3757 = vmatmul.bf16.gmra.mxu0 %v3293
      %v3758 = vpop.f32.mrf.mxu0
      %v3759 = vadd.f32 %v3745, %v3758
      %v3760 = vpop.f32.mrf.mxu0
      %v3761 = vadd.f32 %v3747, %v3760
      %3762 = vdwg.mxu0
      %3763 = vmatpush.bf16.msra.mxu0 %v3582
      %3764 = vmatpush.bf16.msra.mxu0 %v3578
      %3765 = vmatpush.bf16.msra.mxu0 %v3574
      %3766 = vmatpush.bf16.msra.mxu0 %v3570
      %3767 = vmatpush.bf16.msra.mxu0 %v3566
      %3768 = vmatpush.bf16.msra.mxu0 %v3562
      %3769 = vmatpush.bf16.msra.mxu0 %v3558
      %3770 = vmatpush.bf16.msra.mxu0 %v3554
      %3771 = vmatmul.bf16.gmra.mxu0 %v3292
      %v3772 = vpop.f32.mrf.mxu0
      %v3773 = vadd.f32 0.0, %v3772
      %v3774 = vpop.f32.mrf.mxu0
      %v3775 = vadd.f32 0.0, %v3774
      %3776 = vdwg.mxu0
      %3777 = vmatpush.bf16.msra.mxu0 %v3614
      %3778 = vmatpush.bf16.msra.mxu0 %v3610
      %3779 = vmatpush.bf16.msra.mxu0 %v3606
      %3780 = vmatpush.bf16.msra.mxu0 %v3602
      %3781 = vmatpush.bf16.msra.mxu0 %v3598
      %3782 = vmatpush.bf16.msra.mxu0 %v3594
      %3783 = vmatpush.bf16.msra.mxu0 %v3590
      %3784 = vmatpush.bf16.msra.mxu0 %v3586
      %3785 = vmatmul.bf16.gmra.mxu0 %v3293
      %v3786 = vpop.f32.mrf.mxu0
      %v3787 = vadd.f32 %v3773, %v3786
      %v3788 = vpop.f32.mrf.mxu0
      %v3789 = vadd.f32 %v3775, %v3788
      %3790 = vdwg.mxu0
      %v3791 = vadd.f32 %v3245, %v3703
      %v3792 = vadd.f32 %v3246, %v3731
      %v3793 = vadd.f32 %v3247, %v3759
      %v3794 = vadd.f32 %v3248, %v3787
      %v3795 = vadd.f32 %v3249, %v3705
      %v3796 = vadd.f32 %v3250, %v3733
      %v3797 = vadd.f32 %v3251, %v3761
      %v3798 = vadd.f32 %v3252, %v3789
      %s3799 = scalar_lea.vmem %s1, 48
      %v3800 = vld [vmem:[%s3799] sm:$0xf]
      %v3801 = vld [vmem:[%s3799 + $0x4] sm:$0xf]
      %v3804 = vunpack.c.l.b16 %v3800
      %v3805 = vunpack.c.l.b16 %v3801
      %v3806 = vpack.c.b16 %v3805, %v3804
      %v3808 = vsel %vm547, %v3806, 0
      %3810 = vmatpush.bf16.msra.mxu0 0
      %3811 = vmatpush.bf16.msra.mxu0 0
      %3812 = vmatpush.bf16.msra.mxu0 0
      %3813 = vmatpush.bf16.msra.mxu0 0
      %3814 = vmatpush.bf16.msra.mxu0 %v537
      %3815 = vmatpush.bf16.msra.mxu0 %v535
      %3816 = vmatpush.bf16.msra.mxu0 %v533
      %3817 = vmatpush.bf16.msra.mxu0 %v531
      %3818 = vmatmul.bf16.gmra.mxu0 %v3808
      %v3819 = vpop.f32.mrf.mxu0
      %v3820 = vadd.f32 0.0, %v3819
      %v3821 = vpop.f32.mrf.mxu0
      %v3822 = vadd.f32 0.0, %v3821
      %3823 = vdwg.mxu0
      %3824 = vmatpush.bf16.msra.mxu0 0
      %3825 = vmatpush.bf16.msra.mxu0 0
      %3826 = vmatpush.bf16.msra.mxu0 0
      %3827 = vmatpush.bf16.msra.mxu0 0
      %3828 = vmatpush.bf16.msra.mxu0 %v538
      %3829 = vmatpush.bf16.msra.mxu0 %v536
      %3830 = vmatpush.bf16.msra.mxu0 %v534
      %3831 = vmatpush.bf16.msra.mxu0 %v532
      %3832 = vmatmul.bf16.gmra.mxu0 %v3808
      %v3833 = vpop.f32.mrf.mxu0
      %v3834 = vadd.f32 0.0, %v3833
      %v3835 = vpop.f32.mrf.mxu0
      %v3836 = vadd.f32 0.0, %v3835
      %3837 = vdwg.mxu0
      %v3838 = vpack.c.bf16 %v3822, %v3820
      %v3839 = vpack.c.bf16 %v3836, %v3834
      %s3840 = scalar_lea.vmem %s2, 3072
      %v3841 = vld [vmem:[%s3840] sm:$0xff]
      %v3842 = vld [vmem:[%s3840 + $0x8] sm:$0xff]
      %v3843 = vld [vmem:[%s3840 + $0x10] sm:$0xff]
      %v3844 = vld [vmem:[%s3840 + $0x18] sm:$0xff]
      %v3845 = vld [vmem:[%s3840 + $0x20] sm:$0xff]
      %v3846 = vld [vmem:[%s3840 + $0x28] sm:$0xff]
      %v3847 = vld [vmem:[%s3840 + $0x30] sm:$0xff]
      %v3848 = vld [vmem:[%s3840 + $0x38] sm:$0xff]
      %v3849 = vld [vmem:[%s3840 + $0x40] sm:$0xff]
      %v3850 = vld [vmem:[%s3840 + $0x48] sm:$0xff]
      %v3851 = vld [vmem:[%s3840 + $0x50] sm:$0xff]
      %v3852 = vld [vmem:[%s3840 + $0x58] sm:$0xff]
      %v3853 = vld [vmem:[%s3840 + $0x60] sm:$0xff]
      %v3854 = vld [vmem:[%s3840 + $0x68] sm:$0xff]
      %v3855 = vld [vmem:[%s3840 + $0x70] sm:$0xff]
      %v3856 = vld [vmem:[%s3840 + $0x78] sm:$0xff]
      %v3857 = vld [vmem:[%s3840 + $0x80] sm:$0xff]
      %v3858 = vld [vmem:[%s3840 + $0x88] sm:$0xff]
      %v3859 = vld [vmem:[%s3840 + $0x90] sm:$0xff]
      %v3860 = vld [vmem:[%s3840 + $0x98] sm:$0xff]
      %v3861 = vld [vmem:[%s3840 + $0xa0] sm:$0xff]
      %v3862 = vld [vmem:[%s3840 + $0xa8] sm:$0xff]
      %v3863 = vld [vmem:[%s3840 + $0xb0] sm:$0xff]
      %v3864 = vld [vmem:[%s3840 + $0xb8] sm:$0xff]
      %v3865 = vld [vmem:[%s3840 + $0xc0] sm:$0xff]
      %v3866 = vld [vmem:[%s3840 + $0xc8] sm:$0xff]
      %v3867 = vld [vmem:[%s3840 + $0xd0] sm:$0xff]
      %v3868 = vld [vmem:[%s3840 + $0xd8] sm:$0xff]
      %v3869 = vld [vmem:[%s3840 + $0xe0] sm:$0xff]
      %v3870 = vld [vmem:[%s3840 + $0xe8] sm:$0xff]
      %v3871 = vld [vmem:[%s3840 + $0xf0] sm:$0xff]
      %v3872 = vld [vmem:[%s3840 + $0xf8] sm:$0xff]
      %v3873 = vld [vmem:[%s3840 + $0x100] sm:$0xff]
      %v3874 = vld [vmem:[%s3840 + $0x108] sm:$0xff]
      %v3875 = vld [vmem:[%s3840 + $0x110] sm:$0xff]
      %v3876 = vld [vmem:[%s3840 + $0x118] sm:$0xff]
      %v3877 = vld [vmem:[%s3840 + $0x120] sm:$0xff]
      %v3878 = vld [vmem:[%s3840 + $0x128] sm:$0xff]
      %v3879 = vld [vmem:[%s3840 + $0x130] sm:$0xff]
      %v3880 = vld [vmem:[%s3840 + $0x138] sm:$0xff]
      %v3881 = vld [vmem:[%s3840 + $0x140] sm:$0xff]
      %v3882 = vld [vmem:[%s3840 + $0x148] sm:$0xff]
      %v3883 = vld [vmem:[%s3840 + $0x150] sm:$0xff]
      %v3884 = vld [vmem:[%s3840 + $0x158] sm:$0xff]
      %v3885 = vld [vmem:[%s3840 + $0x160] sm:$0xff]
      %v3886 = vld [vmem:[%s3840 + $0x168] sm:$0xff]
      %v3887 = vld [vmem:[%s3840 + $0x170] sm:$0xff]
      %v3888 = vld [vmem:[%s3840 + $0x178] sm:$0xff]
      %v3889 = vld [vmem:[%s3840 + $0x180] sm:$0xff]
      %v3890 = vld [vmem:[%s3840 + $0x188] sm:$0xff]
      %v3891 = vld [vmem:[%s3840 + $0x190] sm:$0xff]
      %v3892 = vld [vmem:[%s3840 + $0x198] sm:$0xff]
      %v3893 = vld [vmem:[%s3840 + $0x1a0] sm:$0xff]
      %v3894 = vld [vmem:[%s3840 + $0x1a8] sm:$0xff]
      %v3895 = vld [vmem:[%s3840 + $0x1b0] sm:$0xff]
      %v3896 = vld [vmem:[%s3840 + $0x1b8] sm:$0xff]
      %v3897 = vld [vmem:[%s3840 + $0x1c0] sm:$0xff]
      %v3898 = vld [vmem:[%s3840 + $0x1c8] sm:$0xff]
      %v3899 = vld [vmem:[%s3840 + $0x1d0] sm:$0xff]
      %v3900 = vld [vmem:[%s3840 + $0x1d8] sm:$0xff]
      %v3901 = vld [vmem:[%s3840 + $0x1e0] sm:$0xff]
      %v3902 = vld [vmem:[%s3840 + $0x1e8] sm:$0xff]
      %v3903 = vld [vmem:[%s3840 + $0x1f0] sm:$0xff]
      %v3904 = vld [vmem:[%s3840 + $0x1f8] sm:$0xff]
      %v3969 = vunpack.c.l.b16 %v3841
      %v3970 = vunpack.c.h.b16 %v3841
      %v3971 = vunpack.c.l.b16 %v3842
      %v3972 = vunpack.c.h.b16 %v3842
      %v3973 = vunpack.c.l.b16 %v3843
      %v3974 = vunpack.c.h.b16 %v3843
      %v3975 = vunpack.c.l.b16 %v3844
      %v3976 = vunpack.c.h.b16 %v3844
      %v3977 = vunpack.c.l.b16 %v3845
      %v3978 = vunpack.c.h.b16 %v3845
      %v3979 = vunpack.c.l.b16 %v3846
      %v3980 = vunpack.c.h.b16 %v3846
      %v3981 = vunpack.c.l.b16 %v3847
      %v3982 = vunpack.c.h.b16 %v3847
      %v3983 = vunpack.c.l.b16 %v3848
      %v3984 = vunpack.c.h.b16 %v3848
      %v3985 = vunpack.c.l.b16 %v3849
      %v3986 = vunpack.c.h.b16 %v3849
      %v3987 = vunpack.c.l.b16 %v3850
      %v3988 = vunpack.c.h.b16 %v3850
      %v3989 = vunpack.c.l.b16 %v3851
      %v3990 = vunpack.c.h.b16 %v3851
      %v3991 = vunpack.c.l.b16 %v3852
      %v3992 = vunpack.c.h.b16 %v3852
      %v3993 = vunpack.c.l.b16 %v3853
      %v3994 = vunpack.c.h.b16 %v3853
      %v3995 = vunpack.c.l.b16 %v3854
      %v3996 = vunpack.c.h.b16 %v3854
      %v3997 = vunpack.c.l.b16 %v3855
      %v3998 = vunpack.c.h.b16 %v3855
      %v3999 = vunpack.c.l.b16 %v3856
      %v4000 = vunpack.c.h.b16 %v3856
      %v4001 = vunpack.c.l.b16 %v3857
      %v4002 = vunpack.c.h.b16 %v3857
      %v4003 = vunpack.c.l.b16 %v3858
      %v4004 = vunpack.c.h.b16 %v3858
      %v4005 = vunpack.c.l.b16 %v3859
      %v4006 = vunpack.c.h.b16 %v3859
      %v4007 = vunpack.c.l.b16 %v3860
      %v4008 = vunpack.c.h.b16 %v3860
      %v4009 = vunpack.c.l.b16 %v3861
      %v4010 = vunpack.c.h.b16 %v3861
      %v4011 = vunpack.c.l.b16 %v3862
      %v4012 = vunpack.c.h.b16 %v3862
      %v4013 = vunpack.c.l.b16 %v3863
      %v4014 = vunpack.c.h.b16 %v3863
      %v4015 = vunpack.c.l.b16 %v3864
      %v4016 = vunpack.c.h.b16 %v3864
      %v4017 = vunpack.c.l.b16 %v3865
      %v4018 = vunpack.c.h.b16 %v3865
      %v4019 = vunpack.c.l.b16 %v3866
      %v4020 = vunpack.c.h.b16 %v3866
      %v4021 = vunpack.c.l.b16 %v3867
      %v4022 = vunpack.c.h.b16 %v3867
      %v4023 = vunpack.c.l.b16 %v3868
      %v4024 = vunpack.c.h.b16 %v3868
      %v4025 = vunpack.c.l.b16 %v3869
      %v4026 = vunpack.c.h.b16 %v3869
      %v4027 = vunpack.c.l.b16 %v3870
      %v4028 = vunpack.c.h.b16 %v3870
      %v4029 = vunpack.c.l.b16 %v3871
      %v4030 = vunpack.c.h.b16 %v3871
      %v4031 = vunpack.c.l.b16 %v3872
      %v4032 = vunpack.c.h.b16 %v3872
      %v4033 = vunpack.c.l.b16 %v3873
      %v4034 = vunpack.c.h.b16 %v3873
      %v4035 = vunpack.c.l.b16 %v3874
      %v4036 = vunpack.c.h.b16 %v3874
      %v4037 = vunpack.c.l.b16 %v3875
      %v4038 = vunpack.c.h.b16 %v3875
      %v4039 = vunpack.c.l.b16 %v3876
      %v4040 = vunpack.c.h.b16 %v3876
      %v4041 = vunpack.c.l.b16 %v3877
      %v4042 = vunpack.c.h.b16 %v3877
      %v4043 = vunpack.c.l.b16 %v3878
      %v4044 = vunpack.c.h.b16 %v3878
      %v4045 = vunpack.c.l.b16 %v3879
      %v4046 = vunpack.c.h.b16 %v3879
      %v4047 = vunpack.c.l.b16 %v3880
      %v4048 = vunpack.c.h.b16 %v3880
      %v4049 = vunpack.c.l.b16 %v3881
      %v4050 = vunpack.c.h.b16 %v3881
      %v4051 = vunpack.c.l.b16 %v3882
      %v4052 = vunpack.c.h.b16 %v3882
      %v4053 = vunpack.c.l.b16 %v3883
      %v4054 = vunpack.c.h.b16 %v3883
      %v4055 = vunpack.c.l.b16 %v3884
      %v4056 = vunpack.c.h.b16 %v3884
      %v4057 = vunpack.c.l.b16 %v3885
      %v4058 = vunpack.c.h.b16 %v3885
      %v4059 = vunpack.c.l.b16 %v3886
      %v4060 = vunpack.c.h.b16 %v3886
      %v4061 = vunpack.c.l.b16 %v3887
      %v4062 = vunpack.c.h.b16 %v3887
      %v4063 = vunpack.c.l.b16 %v3888
      %v4064 = vunpack.c.h.b16 %v3888
      %v4065 = vunpack.c.l.b16 %v3889
      %v4066 = vunpack.c.h.b16 %v3889
      %v4067 = vunpack.c.l.b16 %v3890
      %v4068 = vunpack.c.h.b16 %v3890
      %v4069 = vunpack.c.l.b16 %v3891
      %v4070 = vunpack.c.h.b16 %v3891
      %v4071 = vunpack.c.l.b16 %v3892
      %v4072 = vunpack.c.h.b16 %v3892
      %v4073 = vunpack.c.l.b16 %v3893
      %v4074 = vunpack.c.h.b16 %v3893
      %v4075 = vunpack.c.l.b16 %v3894
      %v4076 = vunpack.c.h.b16 %v3894
      %v4077 = vunpack.c.l.b16 %v3895
      %v4078 = vunpack.c.h.b16 %v3895
      %v4079 = vunpack.c.l.b16 %v3896
      %v4080 = vunpack.c.h.b16 %v3896
      %v4081 = vunpack.c.l.b16 %v3897
      %v4082 = vunpack.c.h.b16 %v3897
      %v4083 = vunpack.c.l.b16 %v3898
      %v4084 = vunpack.c.h.b16 %v3898
      %v4085 = vunpack.c.l.b16 %v3899
      %v4086 = vunpack.c.h.b16 %v3899
      %v4087 = vunpack.c.l.b16 %v3900
      %v4088 = vunpack.c.h.b16 %v3900
      %v4089 = vunpack.c.l.b16 %v3901
      %v4090 = vunpack.c.h.b16 %v3901
      %v4091 = vunpack.c.l.b16 %v3902
      %v4092 = vunpack.c.h.b16 %v3902
      %v4093 = vunpack.c.l.b16 %v3903
      %v4094 = vunpack.c.h.b16 %v3903
      %v4095 = vunpack.c.l.b16 %v3904
      %v4096 = vunpack.c.h.b16 %v3904
      %v4097 = vpack.c.b16 %v3973, %v3969
      %v4098 = vpack.c.b16 %v3974, %v3970
      %v4099 = vpack.c.b16 %v3975, %v3971
      %v4100 = vpack.c.b16 %v3976, %v3972
      %v4101 = vpack.c.b16 %v3981, %v3977
      %v4102 = vpack.c.b16 %v3982, %v3978
      %v4103 = vpack.c.b16 %v3983, %v3979
      %v4104 = vpack.c.b16 %v3984, %v3980
      %v4105 = vpack.c.b16 %v3989, %v3985
      %v4106 = vpack.c.b16 %v3990, %v3986
      %v4107 = vpack.c.b16 %v3991, %v3987
      %v4108 = vpack.c.b16 %v3992, %v3988
      %v4109 = vpack.c.b16 %v3997, %v3993
      %v4110 = vpack.c.b16 %v3998, %v3994
      %v4111 = vpack.c.b16 %v3999, %v3995
      %v4112 = vpack.c.b16 %v4000, %v3996
      %v4113 = vpack.c.b16 %v4005, %v4001
      %v4114 = vpack.c.b16 %v4006, %v4002
      %v4115 = vpack.c.b16 %v4007, %v4003
      %v4116 = vpack.c.b16 %v4008, %v4004
      %v4117 = vpack.c.b16 %v4013, %v4009
      %v4118 = vpack.c.b16 %v4014, %v4010
      %v4119 = vpack.c.b16 %v4015, %v4011
      %v4120 = vpack.c.b16 %v4016, %v4012
      %v4121 = vpack.c.b16 %v4021, %v4017
      %v4122 = vpack.c.b16 %v4022, %v4018
      %v4123 = vpack.c.b16 %v4023, %v4019
      %v4124 = vpack.c.b16 %v4024, %v4020
      %v4125 = vpack.c.b16 %v4029, %v4025
      %v4126 = vpack.c.b16 %v4030, %v4026
      %v4127 = vpack.c.b16 %v4031, %v4027
      %v4128 = vpack.c.b16 %v4032, %v4028
      %v4129 = vpack.c.b16 %v4037, %v4033
      %v4130 = vpack.c.b16 %v4038, %v4034
      %v4131 = vpack.c.b16 %v4039, %v4035
      %v4132 = vpack.c.b16 %v4040, %v4036
      %v4133 = vpack.c.b16 %v4045, %v4041
      %v4134 = vpack.c.b16 %v4046, %v4042
      %v4135 = vpack.c.b16 %v4047, %v4043
      %v4136 = vpack.c.b16 %v4048, %v4044
      %v4137 = vpack.c.b16 %v4053, %v4049
      %v4138 = vpack.c.b16 %v4054, %v4050
      %v4139 = vpack.c.b16 %v4055, %v4051
      %v4140 = vpack.c.b16 %v4056, %v4052
      %v4141 = vpack.c.b16 %v4061, %v4057
      %v4142 = vpack.c.b16 %v4062, %v4058
      %v4143 = vpack.c.b16 %v4063, %v4059
      %v4144 = vpack.c.b16 %v4064, %v4060
      %v4145 = vpack.c.b16 %v4069, %v4065
      %v4146 = vpack.c.b16 %v4070, %v4066
      %v4147 = vpack.c.b16 %v4071, %v4067
      %v4148 = vpack.c.b16 %v4072, %v4068
      %v4149 = vpack.c.b16 %v4077, %v4073
      %v4150 = vpack.c.b16 %v4078, %v4074
      %v4151 = vpack.c.b16 %v4079, %v4075
      %v4152 = vpack.c.b16 %v4080, %v4076
      %v4153 = vpack.c.b16 %v4085, %v4081
      %v4154 = vpack.c.b16 %v4086, %v4082
      %v4155 = vpack.c.b16 %v4087, %v4083
      %v4156 = vpack.c.b16 %v4088, %v4084
      %v4157 = vpack.c.b16 %v4093, %v4089
      %v4158 = vpack.c.b16 %v4094, %v4090
      %v4159 = vpack.c.b16 %v4095, %v4091
      %v4160 = vpack.c.b16 %v4096, %v4092
      %4225 = vmatpush.bf16.msra.mxu0 %v4125
      %4226 = vmatpush.bf16.msra.mxu0 %v4121
      %4227 = vmatpush.bf16.msra.mxu0 %v4117
      %4228 = vmatpush.bf16.msra.mxu0 %v4113
      %4229 = vmatpush.bf16.msra.mxu0 %v4109
      %4230 = vmatpush.bf16.msra.mxu0 %v4105
      %4231 = vmatpush.bf16.msra.mxu0 %v4101
      %4232 = vmatpush.bf16.msra.mxu0 %v4097
      %4233 = vmatmul.bf16.gmra.mxu0 %v3838
      %v4234 = vpop.f32.mrf.mxu0
      %v4235 = vadd.f32 0.0, %v4234
      %v4236 = vpop.f32.mrf.mxu0
      %v4237 = vadd.f32 0.0, %v4236
      %4238 = vdwg.mxu0
      %4239 = vmatpush.bf16.msra.mxu0 %v4157
      %4240 = vmatpush.bf16.msra.mxu0 %v4153
      %4241 = vmatpush.bf16.msra.mxu0 %v4149
      %4242 = vmatpush.bf16.msra.mxu0 %v4145
      %4243 = vmatpush.bf16.msra.mxu0 %v4141
      %4244 = vmatpush.bf16.msra.mxu0 %v4137
      %4245 = vmatpush.bf16.msra.mxu0 %v4133
      %4246 = vmatpush.bf16.msra.mxu0 %v4129
      %4247 = vmatmul.bf16.gmra.mxu0 %v3839
      %v4248 = vpop.f32.mrf.mxu0
      %v4249 = vadd.f32 %v4235, %v4248
      %v4250 = vpop.f32.mrf.mxu0
      %v4251 = vadd.f32 %v4237, %v4250
      %4252 = vdwg.mxu0
      %4253 = vmatpush.bf16.msra.mxu0 %v4126
      %4254 = vmatpush.bf16.msra.mxu0 %v4122
      %4255 = vmatpush.bf16.msra.mxu0 %v4118
      %4256 = vmatpush.bf16.msra.mxu0 %v4114
      %4257 = vmatpush.bf16.msra.mxu0 %v4110
      %4258 = vmatpush.bf16.msra.mxu0 %v4106
      %4259 = vmatpush.bf16.msra.mxu0 %v4102
      %4260 = vmatpush.bf16.msra.mxu0 %v4098
      %4261 = vmatmul.bf16.gmra.mxu0 %v3838
      %v4262 = vpop.f32.mrf.mxu0
      %v4263 = vadd.f32 0.0, %v4262
      %v4264 = vpop.f32.mrf.mxu0
      %v4265 = vadd.f32 0.0, %v4264
      %4266 = vdwg.mxu0
      %4267 = vmatpush.bf16.msra.mxu0 %v4158
      %4268 = vmatpush.bf16.msra.mxu0 %v4154
      %4269 = vmatpush.bf16.msra.mxu0 %v4150
      %4270 = vmatpush.bf16.msra.mxu0 %v4146
      %4271 = vmatpush.bf16.msra.mxu0 %v4142
      %4272 = vmatpush.bf16.msra.mxu0 %v4138
      %4273 = vmatpush.bf16.msra.mxu0 %v4134
      %4274 = vmatpush.bf16.msra.mxu0 %v4130
      %4275 = vmatmul.bf16.gmra.mxu0 %v3839
      %v4276 = vpop.f32.mrf.mxu0
      %v4277 = vadd.f32 %v4263, %v4276
      %v4278 = vpop.f32.mrf.mxu0
      %v4279 = vadd.f32 %v4265, %v4278
      %4280 = vdwg.mxu0
      %4281 = vmatpush.bf16.msra.mxu0 %v4127
      %4282 = vmatpush.bf16.msra.mxu0 %v4123
      %4283 = vmatpush.bf16.msra.mxu0 %v4119
      %4284 = vmatpush.bf16.msra.mxu0 %v4115
      %4285 = vmatpush.bf16.msra.mxu0 %v4111
      %4286 = vmatpush.bf16.msra.mxu0 %v4107
      %4287 = vmatpush.bf16.msra.mxu0 %v4103
      %4288 = vmatpush.bf16.msra.mxu0 %v4099
      %4289 = vmatmul.bf16.gmra.mxu0 %v3838
      %v4290 = vpop.f32.mrf.mxu0
      %v4291 = vadd.f32 0.0, %v4290
      %v4292 = vpop.f32.mrf.mxu0
      %v4293 = vadd.f32 0.0, %v4292
      %4294 = vdwg.mxu0
      %4295 = vmatpush.bf16.msra.mxu0 %v4159
      %4296 = vmatpush.bf16.msra.mxu0 %v4155
      %4297 = vmatpush.bf16.msra.mxu0 %v4151
      %4298 = vmatpush.bf16.msra.mxu0 %v4147
      %4299 = vmatpush.bf16.msra.mxu0 %v4143
      %4300 = vmatpush.bf16.msra.mxu0 %v4139
      %4301 = vmatpush.bf16.msra.mxu0 %v4135
      %4302 = vmatpush.bf16.msra.mxu0 %v4131
      %4303 = vmatmul.bf16.gmra.mxu0 %v3839
      %v4304 = vpop.f32.mrf.mxu0
      %v4305 = vadd.f32 %v4291, %v4304
      %v4306 = vpop.f32.mrf.mxu0
      %v4307 = vadd.f32 %v4293, %v4306
      %4308 = vdwg.mxu0
      %4309 = vmatpush.bf16.msra.mxu0 %v4128
      %4310 = vmatpush.bf16.msra.mxu0 %v4124
      %4311 = vmatpush.bf16.msra.mxu0 %v4120
      %4312 = vmatpush.bf16.msra.mxu0 %v4116
      %4313 = vmatpush.bf16.msra.mxu0 %v4112
      %4314 = vmatpush.bf16.msra.mxu0 %v4108
      %4315 = vmatpush.bf16.msra.mxu0 %v4104
      %4316 = vmatpush.bf16.msra.mxu0 %v4100
      %4317 = vmatmul.bf16.gmra.mxu0 %v3838
      %v4318 = vpop.f32.mrf.mxu0
      %v4319 = vadd.f32 0.0, %v4318
      %v4320 = vpop.f32.mrf.mxu0
      %v4321 = vadd.f32 0.0, %v4320
      %4322 = vdwg.mxu0
      %4323 = vmatpush.bf16.msra.mxu0 %v4160
      %4324 = vmatpush.bf16.msra.mxu0 %v4156
      %4325 = vmatpush.bf16.msra.mxu0 %v4152
      %4326 = vmatpush.bf16.msra.mxu0 %v4148
      %4327 = vmatpush.bf16.msra.mxu0 %v4144
      %4328 = vmatpush.bf16.msra.mxu0 %v4140
      %4329 = vmatpush.bf16.msra.mxu0 %v4136
      %4330 = vmatpush.bf16.msra.mxu0 %v4132
      %4331 = vmatmul.bf16.gmra.mxu0 %v3839
      %v4332 = vpop.f32.mrf.mxu0
      %v4333 = vadd.f32 %v4319, %v4332
      %v4334 = vpop.f32.mrf.mxu0
      %v4335 = vadd.f32 %v4321, %v4334
      %4336 = vdwg.mxu0
      %v4337 = vadd.f32 %v3791, %v4249
      %v4338 = vadd.f32 %v3792, %v4277
      %v4339 = vadd.f32 %v3793, %v4305
      %v4340 = vadd.f32 %v3794, %v4333
      %v4341 = vadd.f32 %v3795, %v4251
      %v4342 = vadd.f32 %v3796, %v4279
      %v4343 = vadd.f32 %v3797, %v4307
      %v4344 = vadd.f32 %v3798, %v4335
      %s4345 = scalar_lea.vmem %s1, 56
      %v4346 = vld [vmem:[%s4345] sm:$0xf]
      %v4347 = vld [vmem:[%s4345 + $0x4] sm:$0xf]
      %v4350 = vunpack.c.l.b16 %v4346
      %v4351 = vunpack.c.l.b16 %v4347
      %v4352 = vpack.c.b16 %v4351, %v4350
      %v4354 = vsel %vm547, %v4352, 0
      %4356 = vmatpush.bf16.msra.mxu0 0
      %4357 = vmatpush.bf16.msra.mxu0 0
      %4358 = vmatpush.bf16.msra.mxu0 0
      %4359 = vmatpush.bf16.msra.mxu0 0
      %4360 = vmatpush.bf16.msra.mxu0 %v537
      %4361 = vmatpush.bf16.msra.mxu0 %v535
      %4362 = vmatpush.bf16.msra.mxu0 %v533
      %4363 = vmatpush.bf16.msra.mxu0 %v531
      %4364 = vmatmul.bf16.gmra.mxu0 %v4354
      %v4365 = vpop.f32.mrf.mxu0
      %v4366 = vadd.f32 0.0, %v4365
      %v4367 = vpop.f32.mrf.mxu0
      %v4368 = vadd.f32 0.0, %v4367
      %4369 = vdwg.mxu0
      %4370 = vmatpush.bf16.msra.mxu0 0
      %4371 = vmatpush.bf16.msra.mxu0 0
      %4372 = vmatpush.bf16.msra.mxu0 0
      %4373 = vmatpush.bf16.msra.mxu0 0
      %4374 = vmatpush.bf16.msra.mxu0 %v538
      %4375 = vmatpush.bf16.msra.mxu0 %v536
      %4376 = vmatpush.bf16.msra.mxu0 %v534
      %4377 = vmatpush.bf16.msra.mxu0 %v532
      %4378 = vmatmul.bf16.gmra.mxu0 %v4354
      %v4379 = vpop.f32.mrf.mxu0
      %v4380 = vadd.f32 0.0, %v4379
      %v4381 = vpop.f32.mrf.mxu0
      %v4382 = vadd.f32 0.0, %v4381
      %4383 = vdwg.mxu0
      %v4384 = vpack.c.bf16 %v4368, %v4366
      %v4385 = vpack.c.bf16 %v4382, %v4380
      %s4386 = scalar_lea.vmem %s2, 3584
      %v4387 = vld [vmem:[%s4386] sm:$0xff]
      %v4388 = vld [vmem:[%s4386 + $0x8] sm:$0xff]
      %v4389 = vld [vmem:[%s4386 + $0x10] sm:$0xff]
      %v4390 = vld [vmem:[%s4386 + $0x18] sm:$0xff]
      %v4391 = vld [vmem:[%s4386 + $0x20] sm:$0xff]
      %v4392 = vld [vmem:[%s4386 + $0x28] sm:$0xff]
      %v4393 = vld [vmem:[%s4386 + $0x30] sm:$0xff]
      %v4394 = vld [vmem:[%s4386 + $0x38] sm:$0xff]
      %v4395 = vld [vmem:[%s4386 + $0x40] sm:$0xff]
      %v4396 = vld [vmem:[%s4386 + $0x48] sm:$0xff]
      %v4397 = vld [vmem:[%s4386 + $0x50] sm:$0xff]
      %v4398 = vld [vmem:[%s4386 + $0x58] sm:$0xff]
      %v4399 = vld [vmem:[%s4386 + $0x60] sm:$0xff]
      %v4400 = vld [vmem:[%s4386 + $0x68] sm:$0xff]
      %v4401 = vld [vmem:[%s4386 + $0x70] sm:$0xff]
      %v4402 = vld [vmem:[%s4386 + $0x78] sm:$0xff]
      %v4403 = vld [vmem:[%s4386 + $0x80] sm:$0xff]
      %v4404 = vld [vmem:[%s4386 + $0x88] sm:$0xff]
      %v4405 = vld [vmem:[%s4386 + $0x90] sm:$0xff]
      %v4406 = vld [vmem:[%s4386 + $0x98] sm:$0xff]
      %v4407 = vld [vmem:[%s4386 + $0xa0] sm:$0xff]
      %v4408 = vld [vmem:[%s4386 + $0xa8] sm:$0xff]
      %v4409 = vld [vmem:[%s4386 + $0xb0] sm:$0xff]
      %v4410 = vld [vmem:[%s4386 + $0xb8] sm:$0xff]
      %v4411 = vld [vmem:[%s4386 + $0xc0] sm:$0xff]
      %v4412 = vld [vmem:[%s4386 + $0xc8] sm:$0xff]
      %v4413 = vld [vmem:[%s4386 + $0xd0] sm:$0xff]
      %v4414 = vld [vmem:[%s4386 + $0xd8] sm:$0xff]
      %v4415 = vld [vmem:[%s4386 + $0xe0] sm:$0xff]
      %v4416 = vld [vmem:[%s4386 + $0xe8] sm:$0xff]
      %v4417 = vld [vmem:[%s4386 + $0xf0] sm:$0xff]
      %v4418 = vld [vmem:[%s4386 + $0xf8] sm:$0xff]
      %v4419 = vld [vmem:[%s4386 + $0x100] sm:$0xff]
      %v4420 = vld [vmem:[%s4386 + $0x108] sm:$0xff]
      %v4421 = vld [vmem:[%s4386 + $0x110] sm:$0xff]
      %v4422 = vld [vmem:[%s4386 + $0x118] sm:$0xff]
      %v4423 = vld [vmem:[%s4386 + $0x120] sm:$0xff]
      %v4424 = vld [vmem:[%s4386 + $0x128] sm:$0xff]
      %v4425 = vld [vmem:[%s4386 + $0x130] sm:$0xff]
      %v4426 = vld [vmem:[%s4386 + $0x138] sm:$0xff]
      %v4427 = vld [vmem:[%s4386 + $0x140] sm:$0xff]
      %v4428 = vld [vmem:[%s4386 + $0x148] sm:$0xff]
      %v4429 = vld [vmem:[%s4386 + $0x150] sm:$0xff]
      %v4430 = vld [vmem:[%s4386 + $0x158] sm:$0xff]
      %v4431 = vld [vmem:[%s4386 + $0x160] sm:$0xff]
      %v4432 = vld [vmem:[%s4386 + $0x168] sm:$0xff]
      %v4433 = vld [vmem:[%s4386 + $0x170] sm:$0xff]
      %v4434 = vld [vmem:[%s4386 + $0x178] sm:$0xff]
      %v4435 = vld [vmem:[%s4386 + $0x180] sm:$0xff]
      %v4436 = vld [vmem:[%s4386 + $0x188] sm:$0xff]
      %v4437 = vld [vmem:[%s4386 + $0x190] sm:$0xff]
      %v4438 = vld [vmem:[%s4386 + $0x198] sm:$0xff]
      %v4439 = vld [vmem:[%s4386 + $0x1a0] sm:$0xff]
      %v4440 = vld [vmem:[%s4386 + $0x1a8] sm:$0xff]
      %v4441 = vld [vmem:[%s4386 + $0x1b0] sm:$0xff]
      %v4442 = vld [vmem:[%s4386 + $0x1b8] sm:$0xff]
      %v4443 = vld [vmem:[%s4386 + $0x1c0] sm:$0xff]
      %v4444 = vld [vmem:[%s4386 + $0x1c8] sm:$0xff]
      %v4445 = vld [vmem:[%s4386 + $0x1d0] sm:$0xff]
      %v4446 = vld [vmem:[%s4386 + $0x1d8] sm:$0xff]
      %v4447 = vld [vmem:[%s4386 + $0x1e0] sm:$0xff]
      %v4448 = vld [vmem:[%s4386 + $0x1e8] sm:$0xff]
      %v4449 = vld [vmem:[%s4386 + $0x1f0] sm:$0xff]
      %v4450 = vld [vmem:[%s4386 + $0x1f8] sm:$0xff]
      %v4515 = vunpack.c.l.b16 %v4387
      %v4516 = vunpack.c.h.b16 %v4387
      %v4517 = vunpack.c.l.b16 %v4388
      %v4518 = vunpack.c.h.b16 %v4388
      %v4519 = vunpack.c.l.b16 %v4389
      %v4520 = vunpack.c.h.b16 %v4389
      %v4521 = vunpack.c.l.b16 %v4390
      %v4522 = vunpack.c.h.b16 %v4390
      %v4523 = vunpack.c.l.b16 %v4391
      %v4524 = vunpack.c.h.b16 %v4391
      %v4525 = vunpack.c.l.b16 %v4392
      %v4526 = vunpack.c.h.b16 %v4392
      %v4527 = vunpack.c.l.b16 %v4393
      %v4528 = vunpack.c.h.b16 %v4393
      %v4529 = vunpack.c.l.b16 %v4394
      %v4530 = vunpack.c.h.b16 %v4394
      %v4531 = vunpack.c.l.b16 %v4395
      %v4532 = vunpack.c.h.b16 %v4395
      %v4533 = vunpack.c.l.b16 %v4396
      %v4534 = vunpack.c.h.b16 %v4396
      %v4535 = vunpack.c.l.b16 %v4397
      %v4536 = vunpack.c.h.b16 %v4397
      %v4537 = vunpack.c.l.b16 %v4398
      %v4538 = vunpack.c.h.b16 %v4398
      %v4539 = vunpack.c.l.b16 %v4399
      %v4540 = vunpack.c.h.b16 %v4399
      %v4541 = vunpack.c.l.b16 %v4400
      %v4542 = vunpack.c.h.b16 %v4400
      %v4543 = vunpack.c.l.b16 %v4401
      %v4544 = vunpack.c.h.b16 %v4401
      %v4545 = vunpack.c.l.b16 %v4402
      %v4546 = vunpack.c.h.b16 %v4402
      %v4547 = vunpack.c.l.b16 %v4403
      %v4548 = vunpack.c.h.b16 %v4403
      %v4549 = vunpack.c.l.b16 %v4404
      %v4550 = vunpack.c.h.b16 %v4404
      %v4551 = vunpack.c.l.b16 %v4405
      %v4552 = vunpack.c.h.b16 %v4405
      %v4553 = vunpack.c.l.b16 %v4406
      %v4554 = vunpack.c.h.b16 %v4406
      %v4555 = vunpack.c.l.b16 %v4407
      %v4556 = vunpack.c.h.b16 %v4407
      %v4557 = vunpack.c.l.b16 %v4408
      %v4558 = vunpack.c.h.b16 %v4408
      %v4559 = vunpack.c.l.b16 %v4409
      %v4560 = vunpack.c.h.b16 %v4409
      %v4561 = vunpack.c.l.b16 %v4410
      %v4562 = vunpack.c.h.b16 %v4410
      %v4563 = vunpack.c.l.b16 %v4411
      %v4564 = vunpack.c.h.b16 %v4411
      %v4565 = vunpack.c.l.b16 %v4412
      %v4566 = vunpack.c.h.b16 %v4412
      %v4567 = vunpack.c.l.b16 %v4413
      %v4568 = vunpack.c.h.b16 %v4413
      %v4569 = vunpack.c.l.b16 %v4414
      %v4570 = vunpack.c.h.b16 %v4414
      %v4571 = vunpack.c.l.b16 %v4415
      %v4572 = vunpack.c.h.b16 %v4415
      %v4573 = vunpack.c.l.b16 %v4416
      %v4574 = vunpack.c.h.b16 %v4416
      %v4575 = vunpack.c.l.b16 %v4417
      %v4576 = vunpack.c.h.b16 %v4417
      %v4577 = vunpack.c.l.b16 %v4418
      %v4578 = vunpack.c.h.b16 %v4418
      %v4579 = vunpack.c.l.b16 %v4419
      %v4580 = vunpack.c.h.b16 %v4419
      %v4581 = vunpack.c.l.b16 %v4420
      %v4582 = vunpack.c.h.b16 %v4420
      %v4583 = vunpack.c.l.b16 %v4421
      %v4584 = vunpack.c.h.b16 %v4421
      %v4585 = vunpack.c.l.b16 %v4422
      %v4586 = vunpack.c.h.b16 %v4422
      %v4587 = vunpack.c.l.b16 %v4423
      %v4588 = vunpack.c.h.b16 %v4423
      %v4589 = vunpack.c.l.b16 %v4424
      %v4590 = vunpack.c.h.b16 %v4424
      %v4591 = vunpack.c.l.b16 %v4425
      %v4592 = vunpack.c.h.b16 %v4425
      %v4593 = vunpack.c.l.b16 %v4426
      %v4594 = vunpack.c.h.b16 %v4426
      %v4595 = vunpack.c.l.b16 %v4427
      %v4596 = vunpack.c.h.b16 %v4427
      %v4597 = vunpack.c.l.b16 %v4428
      %v4598 = vunpack.c.h.b16 %v4428
      %v4599 = vunpack.c.l.b16 %v4429
      %v4600 = vunpack.c.h.b16 %v4429
      %v4601 = vunpack.c.l.b16 %v4430
      %v4602 = vunpack.c.h.b16 %v4430
      %v4603 = vunpack.c.l.b16 %v4431
      %v4604 = vunpack.c.h.b16 %v4431
      %v4605 = vunpack.c.l.b16 %v4432
      %v4606 = vunpack.c.h.b16 %v4432
      %v4607 = vunpack.c.l.b16 %v4433
      %v4608 = vunpack.c.h.b16 %v4433
      %v4609 = vunpack.c.l.b16 %v4434
      %v4610 = vunpack.c.h.b16 %v4434
      %v4611 = vunpack.c.l.b16 %v4435
      %v4612 = vunpack.c.h.b16 %v4435
      %v4613 = vunpack.c.l.b16 %v4436
      %v4614 = vunpack.c.h.b16 %v4436
      %v4615 = vunpack.c.l.b16 %v4437
      %v4616 = vunpack.c.h.b16 %v4437
      %v4617 = vunpack.c.l.b16 %v4438
      %v4618 = vunpack.c.h.b16 %v4438
      %v4619 = vunpack.c.l.b16 %v4439
      %v4620 = vunpack.c.h.b16 %v4439
      %v4621 = vunpack.c.l.b16 %v4440
      %v4622 = vunpack.c.h.b16 %v4440
      %v4623 = vunpack.c.l.b16 %v4441
      %v4624 = vunpack.c.h.b16 %v4441
      %v4625 = vunpack.c.l.b16 %v4442
      %v4626 = vunpack.c.h.b16 %v4442
      %v4627 = vunpack.c.l.b16 %v4443
      %v4628 = vunpack.c.h.b16 %v4443
      %v4629 = vunpack.c.l.b16 %v4444
      %v4630 = vunpack.c.h.b16 %v4444
      %v4631 = vunpack.c.l.b16 %v4445
      %v4632 = vunpack.c.h.b16 %v4445
      %v4633 = vunpack.c.l.b16 %v4446
      %v4634 = vunpack.c.h.b16 %v4446
      %v4635 = vunpack.c.l.b16 %v4447
      %v4636 = vunpack.c.h.b16 %v4447
      %v4637 = vunpack.c.l.b16 %v4448
      %v4638 = vunpack.c.h.b16 %v4448
      %v4639 = vunpack.c.l.b16 %v4449
      %v4640 = vunpack.c.h.b16 %v4449
      %v4641 = vunpack.c.l.b16 %v4450
      %v4642 = vunpack.c.h.b16 %v4450
      %v4643 = vpack.c.b16 %v4519, %v4515
      %v4644 = vpack.c.b16 %v4520, %v4516
      %v4645 = vpack.c.b16 %v4521, %v4517
      %v4646 = vpack.c.b16 %v4522, %v4518
      %v4647 = vpack.c.b16 %v4527, %v4523
      %v4648 = vpack.c.b16 %v4528, %v4524
      %v4649 = vpack.c.b16 %v4529, %v4525
      %v4650 = vpack.c.b16 %v4530, %v4526
      %v4651 = vpack.c.b16 %v4535, %v4531
      %v4652 = vpack.c.b16 %v4536, %v4532
      %v4653 = vpack.c.b16 %v4537, %v4533
      %v4654 = vpack.c.b16 %v4538, %v4534
      %v4655 = vpack.c.b16 %v4543, %v4539
      %v4656 = vpack.c.b16 %v4544, %v4540
      %v4657 = vpack.c.b16 %v4545, %v4541
      %v4658 = vpack.c.b16 %v4546, %v4542
      %v4659 = vpack.c.b16 %v4551, %v4547
      %v4660 = vpack.c.b16 %v4552, %v4548
      %v4661 = vpack.c.b16 %v4553, %v4549
      %v4662 = vpack.c.b16 %v4554, %v4550
      %v4663 = vpack.c.b16 %v4559, %v4555
      %v4664 = vpack.c.b16 %v4560, %v4556
      %v4665 = vpack.c.b16 %v4561, %v4557
      %v4666 = vpack.c.b16 %v4562, %v4558
      %v4667 = vpack.c.b16 %v4567, %v4563
      %v4668 = vpack.c.b16 %v4568, %v4564
      %v4669 = vpack.c.b16 %v4569, %v4565
      %v4670 = vpack.c.b16 %v4570, %v4566
      %v4671 = vpack.c.b16 %v4575, %v4571
      %v4672 = vpack.c.b16 %v4576, %v4572
      %v4673 = vpack.c.b16 %v4577, %v4573
      %v4674 = vpack.c.b16 %v4578, %v4574
      %v4675 = vpack.c.b16 %v4583, %v4579
      %v4676 = vpack.c.b16 %v4584, %v4580
      %v4677 = vpack.c.b16 %v4585, %v4581
      %v4678 = vpack.c.b16 %v4586, %v4582
      %v4679 = vpack.c.b16 %v4591, %v4587
      %v4680 = vpack.c.b16 %v4592, %v4588
      %v4681 = vpack.c.b16 %v4593, %v4589
      %v4682 = vpack.c.b16 %v4594, %v4590
      %v4683 = vpack.c.b16 %v4599, %v4595
      %v4684 = vpack.c.b16 %v4600, %v4596
      %v4685 = vpack.c.b16 %v4601, %v4597
      %v4686 = vpack.c.b16 %v4602, %v4598
      %v4687 = vpack.c.b16 %v4607, %v4603
      %v4688 = vpack.c.b16 %v4608, %v4604
      %v4689 = vpack.c.b16 %v4609, %v4605
      %v4690 = vpack.c.b16 %v4610, %v4606
      %v4691 = vpack.c.b16 %v4615, %v4611
      %v4692 = vpack.c.b16 %v4616, %v4612
      %v4693 = vpack.c.b16 %v4617, %v4613
      %v4694 = vpack.c.b16 %v4618, %v4614
      %v4695 = vpack.c.b16 %v4623, %v4619
      %v4696 = vpack.c.b16 %v4624, %v4620
      %v4697 = vpack.c.b16 %v4625, %v4621
      %v4698 = vpack.c.b16 %v4626, %v4622
      %v4699 = vpack.c.b16 %v4631, %v4627
      %v4700 = vpack.c.b16 %v4632, %v4628
      %v4701 = vpack.c.b16 %v4633, %v4629
      %v4702 = vpack.c.b16 %v4634, %v4630
      %v4703 = vpack.c.b16 %v4639, %v4635
      %v4704 = vpack.c.b16 %v4640, %v4636
      %v4705 = vpack.c.b16 %v4641, %v4637
      %v4706 = vpack.c.b16 %v4642, %v4638
      %4771 = vmatpush.bf16.msra.mxu0 %v4671
      %4772 = vmatpush.bf16.msra.mxu0 %v4667
      %4773 = vmatpush.bf16.msra.mxu0 %v4663
      %4774 = vmatpush.bf16.msra.mxu0 %v4659
      %4775 = vmatpush.bf16.msra.mxu0 %v4655
      %4776 = vmatpush.bf16.msra.mxu0 %v4651
      %4777 = vmatpush.bf16.msra.mxu0 %v4647
      %4778 = vmatpush.bf16.msra.mxu0 %v4643
      %4779 = vmatmul.bf16.gmra.mxu0 %v4384
      %v4780 = vpop.f32.mrf.mxu0
      %v4781 = vadd.f32 0.0, %v4780
      %v4782 = vpop.f32.mrf.mxu0
      %v4783 = vadd.f32 0.0, %v4782
      %4784 = vdwg.mxu0
      %4785 = vmatpush.bf16.msra.mxu0 %v4703
      %4786 = vmatpush.bf16.msra.mxu0 %v4699
      %4787 = vmatpush.bf16.msra.mxu0 %v4695
      %4788 = vmatpush.bf16.msra.mxu0 %v4691
      %4789 = vmatpush.bf16.msra.mxu0 %v4687
      %4790 = vmatpush.bf16.msra.mxu0 %v4683
      %4791 = vmatpush.bf16.msra.mxu0 %v4679
      %4792 = vmatpush.bf16.msra.mxu0 %v4675
      %4793 = vmatmul.bf16.gmra.mxu0 %v4385
      %v4794 = vpop.f32.mrf.mxu0
      %v4795 = vadd.f32 %v4781, %v4794
      %v4796 = vpop.f32.mrf.mxu0
      %v4797 = vadd.f32 %v4783, %v4796
      %4798 = vdwg.mxu0
      %4799 = vmatpush.bf16.msra.mxu0 %v4672
      %4800 = vmatpush.bf16.msra.mxu0 %v4668
      %4801 = vmatpush.bf16.msra.mxu0 %v4664
      %4802 = vmatpush.bf16.msra.mxu0 %v4660
      %4803 = vmatpush.bf16.msra.mxu0 %v4656
      %4804 = vmatpush.bf16.msra.mxu0 %v4652
      %4805 = vmatpush.bf16.msra.mxu0 %v4648
      %4806 = vmatpush.bf16.msra.mxu0 %v4644
      %4807 = vmatmul.bf16.gmra.mxu0 %v4384
      %v4808 = vpop.f32.mrf.mxu0
      %v4809 = vadd.f32 0.0, %v4808
      %v4810 = vpop.f32.mrf.mxu0
      %v4811 = vadd.f32 0.0, %v4810
      %4812 = vdwg.mxu0
      %4813 = vmatpush.bf16.msra.mxu0 %v4704
      %4814 = vmatpush.bf16.msra.mxu0 %v4700
      %4815 = vmatpush.bf16.msra.mxu0 %v4696
      %4816 = vmatpush.bf16.msra.mxu0 %v4692
      %4817 = vmatpush.bf16.msra.mxu0 %v4688
      %4818 = vmatpush.bf16.msra.mxu0 %v4684
      %4819 = vmatpush.bf16.msra.mxu0 %v4680
      %4820 = vmatpush.bf16.msra.mxu0 %v4676
      %4821 = vmatmul.bf16.gmra.mxu0 %v4385
      %v4822 = vpop.f32.mrf.mxu0
      %v4823 = vadd.f32 %v4809, %v4822
      %v4824 = vpop.f32.mrf.mxu0
      %v4825 = vadd.f32 %v4811, %v4824
      %4826 = vdwg.mxu0
      %4827 = vmatpush.bf16.msra.mxu0 %v4673
      %4828 = vmatpush.bf16.msra.mxu0 %v4669
      %4829 = vmatpush.bf16.msra.mxu0 %v4665
      %4830 = vmatpush.bf16.msra.mxu0 %v4661
      %4831 = vmatpush.bf16.msra.mxu0 %v4657
      %4832 = vmatpush.bf16.msra.mxu0 %v4653
      %4833 = vmatpush.bf16.msra.mxu0 %v4649
      %4834 = vmatpush.bf16.msra.mxu0 %v4645
      %4835 = vmatmul.bf16.gmra.mxu0 %v4384
      %v4836 = vpop.f32.mrf.mxu0
      %v4837 = vadd.f32 0.0, %v4836
      %v4838 = vpop.f32.mrf.mxu0
      %v4839 = vadd.f32 0.0, %v4838
      %4840 = vdwg.mxu0
      %4841 = vmatpush.bf16.msra.mxu0 %v4705
      %4842 = vmatpush.bf16.msra.mxu0 %v4701
      %4843 = vmatpush.bf16.msra.mxu0 %v4697
      %4844 = vmatpush.bf16.msra.mxu0 %v4693
      %4845 = vmatpush.bf16.msra.mxu0 %v4689
      %4846 = vmatpush.bf16.msra.mxu0 %v4685
      %4847 = vmatpush.bf16.msra.mxu0 %v4681
      %4848 = vmatpush.bf16.msra.mxu0 %v4677
      %4849 = vmatmul.bf16.gmra.mxu0 %v4385
      %v4850 = vpop.f32.mrf.mxu0
      %v4851 = vadd.f32 %v4837, %v4850
      %v4852 = vpop.f32.mrf.mxu0
      %v4853 = vadd.f32 %v4839, %v4852
      %4854 = vdwg.mxu0
      %4855 = vmatpush.bf16.msra.mxu0 %v4674
      %4856 = vmatpush.bf16.msra.mxu0 %v4670
      %4857 = vmatpush.bf16.msra.mxu0 %v4666
      %4858 = vmatpush.bf16.msra.mxu0 %v4662
      %4859 = vmatpush.bf16.msra.mxu0 %v4658
      %4860 = vmatpush.bf16.msra.mxu0 %v4654
      %4861 = vmatpush.bf16.msra.mxu0 %v4650
      %4862 = vmatpush.bf16.msra.mxu0 %v4646
      %4863 = vmatmul.bf16.gmra.mxu0 %v4384
      %v4864 = vpop.f32.mrf.mxu0
      %v4865 = vadd.f32 0.0, %v4864
      %v4866 = vpop.f32.mrf.mxu0
      %v4867 = vadd.f32 0.0, %v4866
      %4868 = vdwg.mxu0
      %4869 = vmatpush.bf16.msra.mxu0 %v4706
      %4870 = vmatpush.bf16.msra.mxu0 %v4702
      %4871 = vmatpush.bf16.msra.mxu0 %v4698
      %4872 = vmatpush.bf16.msra.mxu0 %v4694
      %4873 = vmatpush.bf16.msra.mxu0 %v4690
      %4874 = vmatpush.bf16.msra.mxu0 %v4686
      %4875 = vmatpush.bf16.msra.mxu0 %v4682
      %4876 = vmatpush.bf16.msra.mxu0 %v4678
      %4877 = vmatmul.bf16.gmra.mxu0 %v4385
      %v4878 = vpop.f32.mrf.mxu0
      %v4879 = vadd.f32 %v4865, %v4878
      %v4880 = vpop.f32.mrf.mxu0
      %v4881 = vadd.f32 %v4867, %v4880
      %4882 = vdwg.mxu0
      %v4883 = vadd.f32 %v4337, %v4795
      %v4884 = vadd.f32 %v4338, %v4823
      %v4885 = vadd.f32 %v4339, %v4851
      %v4886 = vadd.f32 %v4340, %v4879
      %v4887 = vadd.f32 %v4341, %v4797
      %v4888 = vadd.f32 %v4342, %v4825
      %v4889 = vadd.f32 %v4343, %v4853
      %v4890 = vadd.f32 %v4344, %v4881
      %v4891 = vld [vmem:[%s3] sm:$0xf]
      %v4893 = vperm.slane %v4891, 0
      %v4894 = vperm.slane %v4891, 1
      %v4895 = vperm.slane %v4891, 2
      %v4896 = vperm.slane %v4891, 3
      %v4901 = vadd.f32 %v4883, %v4893
      %v4902 = vadd.f32 %v4884, %v4894
      %v4903 = vadd.f32 %v4885, %v4895
      %v4904 = vadd.f32 %v4886, %v4896
      %v4905 = vadd.f32 %v4887, %v4893
      %v4906 = vadd.f32 %v4888, %v4894
      %v4907 = vadd.f32 %v4889, %v4895
      %v4908 = vadd.f32 %v4890, %v4896
      %v4909 = vmax.f32 %v4901, 0.0
      %v4910 = vmax.f32 %v4902, 0.0
      %v4911 = vmax.f32 %v4903, 0.0
      %v4912 = vmax.f32 %v4904, 0.0
      %v4913 = vmax.f32 %v4905, 0.0
      %v4914 = vmax.f32 %v4906, 0.0
      %v4915 = vmax.f32 %v4907, 0.0
      %v4916 = vmax.f32 %v4908, 0.0
      %v4917 = vpack.c.bf16 %v4913, %v4909
      %v4918 = vpack.c.bf16 %v4914, %v4910
      %v4919 = vpack.c.bf16 %v4915, %v4911
      %v4920 = vpack.c.bf16 %v4916, %v4912
      %v4921 = vld [vmem:[%s4] sm:$0x7]
      %vm4922 = vcmask 121856
      %v4924 = vsel %vm4922, %v4921, 0
      %vm4926 = vcmask 1046528
      %vm4927 = vcmask 1047552
      %v4928 = vsel %vm4926, 4294967295, 65535
      %v4929 = vsel %vm4927, %v4928, 0
      %v4931 = vand.u32 %v4917, %v4929
      %v4934 = vand.u32 %v4918, %v4929
      %v4937 = vand.u32 %v4919, %v4929
      %v4940 = vand.u32 %v4920, %v4929
      %4942 = vmatpush.bf16.msra.mxu0 0
      %4943 = vmatpush.bf16.msra.mxu0 0
      %4944 = vmatpush.bf16.msra.mxu0 0
      %4945 = vmatpush.bf16.msra.mxu0 0
      %4946 = vmatpush.bf16.msra.mxu0 0
      %4947 = vmatpush.bf16.msra.mxu0 0
      %4948 = vmatpush.bf16.msra.mxu0 0
      %4949 = vmatpush.bf16.msra.mxu0 %v4931
      %4950 = vmatmul.bf16.gmra.mxu0 %v4924
      %v4951 = vpop.f32.mrf.mxu0
      %v4952 = vadd.f32 0.0, %v4951
      %v4953 = vpop.f32.mrf.mxu0
      %4954 = vdwg.mxu0
      %4955 = vmatpush.bf16.msra.mxu0 0
      %4956 = vmatpush.bf16.msra.mxu0 0
      %4957 = vmatpush.bf16.msra.mxu0 0
      %4958 = vmatpush.bf16.msra.mxu0 0
      %4959 = vmatpush.bf16.msra.mxu0 0
      %4960 = vmatpush.bf16.msra.mxu0 0
      %4961 = vmatpush.bf16.msra.mxu0 0
      %4962 = vmatpush.bf16.msra.mxu0 %v4934
      %4963 = vmatmul.bf16.gmra.mxu0 %v4924
      %v4964 = vpop.f32.mrf.mxu0
      %v4965 = vadd.f32 0.0, %v4964
      %v4966 = vpop.f32.mrf.mxu0
      %4967 = vdwg.mxu0
      %4968 = vmatpush.bf16.msra.mxu0 0
      %4969 = vmatpush.bf16.msra.mxu0 0
      %4970 = vmatpush.bf16.msra.mxu0 0
      %4971 = vmatpush.bf16.msra.mxu0 0
      %4972 = vmatpush.bf16.msra.mxu0 0
      %4973 = vmatpush.bf16.msra.mxu0 0
      %4974 = vmatpush.bf16.msra.mxu0 0
      %4975 = vmatpush.bf16.msra.mxu0 %v4937
      %4976 = vmatmul.bf16.gmra.mxu0 %v4924
      %v4977 = vpop.f32.mrf.mxu0
      %v4978 = vadd.f32 0.0, %v4977
      %v4979 = vpop.f32.mrf.mxu0
      %4980 = vdwg.mxu0
      %4981 = vmatpush.bf16.msra.mxu0 0
      %4982 = vmatpush.bf16.msra.mxu0 0
      %4983 = vmatpush.bf16.msra.mxu0 0
      %4984 = vmatpush.bf16.msra.mxu0 0
      %4985 = vmatpush.bf16.msra.mxu0 0
      %4986 = vmatpush.bf16.msra.mxu0 0
      %4987 = vmatpush.bf16.msra.mxu0 0
      %4988 = vmatpush.bf16.msra.mxu0 %v4940
      %4989 = vmatmul.bf16.gmra.mxu0 %v4924
      %v4990 = vpop.f32.mrf.mxu0
      %v4991 = vadd.f32 0.0, %v4990
      %v4992 = vpop.f32.mrf.mxu0
      %4993 = vdwg.mxu0
      %v4994 = vpack.c.bf16 %v4952, %v4952
      %v4995 = vpack.c.bf16 %v4965, %v4965
      %v4996 = vpack.c.bf16 %v4978, %v4978
      %v4997 = vpack.c.bf16 %v4991, %v4991
      %v4998 = vld [vmem:[%s5] sm:$0xff]
      %v4999 = vld [vmem:[%s5 + $0x8] sm:$0xf]
      %v5000 = vld [vmem:[%s5 + $0xc] sm:$0xff]
      %v5001 = vld [vmem:[%s5 + $0x14] sm:$0xf]
      %v5002 = vld [vmem:[%s5 + $0x18] sm:$0xff]
      %v5003 = vld [vmem:[%s5 + $0x20] sm:$0xf]
      %v5004 = vld [vmem:[%s5 + $0x24] sm:$0xff]
      %v5005 = vld [vmem:[%s5 + $0x2c] sm:$0xf]
      %v5006 = vld [vmem:[%s5 + $0x30] sm:$0xff]
      %v5007 = vld [vmem:[%s5 + $0x38] sm:$0xf]
      %v5008 = vld [vmem:[%s5 + $0x3c] sm:$0xff]
      %v5009 = vld [vmem:[%s5 + $0x44] sm:$0xf]
      %v5010 = vld [vmem:[%s5 + $0x48] sm:$0xff]
      %v5011 = vld [vmem:[%s5 + $0x50] sm:$0xf]
      %v5012 = vld [vmem:[%s5 + $0x54] sm:$0xff]
      %v5013 = vld [vmem:[%s5 + $0x5c] sm:$0xf]
      %v5014 = vld [vmem:[%s5 + $0x60] sm:$0xff]
      %v5015 = vld [vmem:[%s5 + $0x68] sm:$0xf]
      %v5016 = vld [vmem:[%s5 + $0x6c] sm:$0xff]
      %v5017 = vld [vmem:[%s5 + $0x74] sm:$0xf]
      %v5018 = vld [vmem:[%s5 + $0x78] sm:$0xff]
      %v5019 = vld [vmem:[%s5 + $0x80] sm:$0xf]
      %v5020 = vld [vmem:[%s5 + $0x84] sm:$0xff]
      %v5021 = vld [vmem:[%s5 + $0x8c] sm:$0xf]
      %v5022 = vld [vmem:[%s5 + $0x90] sm:$0xff]
      %v5023 = vld [vmem:[%s5 + $0x98] sm:$0xf]
      %v5024 = vld [vmem:[%s5 + $0x9c] sm:$0xff]
      %v5025 = vld [vmem:[%s5 + $0xa4] sm:$0xf]
      %v5026 = vld [vmem:[%s5 + $0xa8] sm:$0xff]
      %v5027 = vld [vmem:[%s5 + $0xb0] sm:$0xf]
      %v5028 = vld [vmem:[%s5 + $0xb4] sm:$0xff]
      %v5029 = vld [vmem:[%s5 + $0xbc] sm:$0xf]
      %v5030 = vld [vmem:[%s5 + $0xc0] sm:$0xff]
      %v5031 = vld [vmem:[%s5 + $0xc8] sm:$0xf]
      %v5032 = vld [vmem:[%s5 + $0xcc] sm:$0xff]
      %v5033 = vld [vmem:[%s5 + $0xd4] sm:$0xf]
      %v5034 = vld [vmem:[%s5 + $0xd8] sm:$0xff]
      %v5035 = vld [vmem:[%s5 + $0xe0] sm:$0xf]
      %v5036 = vld [vmem:[%s5 + $0xe4] sm:$0xff]
      %v5037 = vld [vmem:[%s5 + $0xec] sm:$0xf]
      %v5038 = vld [vmem:[%s5 + $0xf0] sm:$0xff]
      %v5039 = vld [vmem:[%s5 + $0xf8] sm:$0xf]
      %v5040 = vld [vmem:[%s5 + $0xfc] sm:$0xff]
      %v5041 = vld [vmem:[%s5 + $0x104] sm:$0xf]
      %v5042 = vld [vmem:[%s5 + $0x108] sm:$0xff]
      %v5043 = vld [vmem:[%s5 + $0x110] sm:$0xf]
      %v5044 = vld [vmem:[%s5 + $0x114] sm:$0xff]
      %v5045 = vld [vmem:[%s5 + $0x11c] sm:$0xf]
      %v5046 = vld [vmem:[%s5 + $0x120] sm:$0xff]
      %v5047 = vld [vmem:[%s5 + $0x128] sm:$0xf]
      %v5048 = vld [vmem:[%s5 + $0x12c] sm:$0xff]
      %v5049 = vld [vmem:[%s5 + $0x134] sm:$0xf]
      %v5050 = vld [vmem:[%s5 + $0x138] sm:$0xff]
      %v5051 = vld [vmem:[%s5 + $0x140] sm:$0xf]
      %v5052 = vld [vmem:[%s5 + $0x144] sm:$0xff]
      %v5053 = vld [vmem:[%s5 + $0x14c] sm:$0xf]
      %v5054 = vld [vmem:[%s5 + $0x150] sm:$0xff]
      %v5055 = vld [vmem:[%s5 + $0x158] sm:$0xf]
      %v5056 = vld [vmem:[%s5 + $0x15c] sm:$0xff]
      %v5057 = vld [vmem:[%s5 + $0x164] sm:$0xf]
      %v5058 = vld [vmem:[%s5 + $0x168] sm:$0xff]
      %v5059 = vld [vmem:[%s5 + $0x170] sm:$0xf]
      %v5060 = vld [vmem:[%s5 + $0x174] sm:$0xff]
      %v5061 = vld [vmem:[%s5 + $0x17c] sm:$0xf]
      %v5062 = vld [vmem:[%s5 + $0x180] sm:$0xff]
      %v5063 = vld [vmem:[%s5 + $0x188] sm:$0xf]
      %v5064 = vld [vmem:[%s5 + $0x18c] sm:$0xff]
      %v5065 = vld [vmem:[%s5 + $0x194] sm:$0xf]
      %v5066 = vld [vmem:[%s5 + $0x198] sm:$0xff]
      %v5067 = vld [vmem:[%s5 + $0x1a0] sm:$0xf]
      %v5068 = vld [vmem:[%s5 + $0x1a4] sm:$0xff]
      %v5069 = vld [vmem:[%s5 + $0x1ac] sm:$0xf]
      %v5070 = vld [vmem:[%s5 + $0x1b0] sm:$0xff]
      %v5071 = vld [vmem:[%s5 + $0x1b8] sm:$0xf]
      %v5072 = vld [vmem:[%s5 + $0x1bc] sm:$0xff]
      %v5073 = vld [vmem:[%s5 + $0x1c4] sm:$0xf]
      %v5074 = vld [vmem:[%s5 + $0x1c8] sm:$0xff]
      %v5075 = vld [vmem:[%s5 + $0x1d0] sm:$0xf]
      %v5076 = vld [vmem:[%s5 + $0x1d4] sm:$0xff]
      %v5077 = vld [vmem:[%s5 + $0x1dc] sm:$0xf]
      %v5078 = vld [vmem:[%s5 + $0x1e0] sm:$0xff]
      %v5079 = vld [vmem:[%s5 + $0x1e8] sm:$0xf]
      %v5080 = vld [vmem:[%s5 + $0x1ec] sm:$0xff]
      %v5081 = vld [vmem:[%s5 + $0x1f4] sm:$0xf]
      %v5082 = vld [vmem:[%s5 + $0x1f8] sm:$0xff]
      %v5083 = vld [vmem:[%s5 + $0x200] sm:$0xf]
      %v5084 = vld [vmem:[%s5 + $0x204] sm:$0xff]
      %v5085 = vld [vmem:[%s5 + $0x20c] sm:$0xf]
      %v5086 = vld [vmem:[%s5 + $0x210] sm:$0xff]
      %v5087 = vld [vmem:[%s5 + $0x218] sm:$0xf]
      %v5088 = vld [vmem:[%s5 + $0x21c] sm:$0xff]
      %v5089 = vld [vmem:[%s5 + $0x224] sm:$0xf]
      %v5090 = vld [vmem:[%s5 + $0x228] sm:$0xff]
      %v5091 = vld [vmem:[%s5 + $0x230] sm:$0xf]
      %v5092 = vld [vmem:[%s5 + $0x234] sm:$0xff]
      %v5093 = vld [vmem:[%s5 + $0x23c] sm:$0xf]
      %v5094 = vld [vmem:[%s5 + $0x240] sm:$0xff]
      %v5095 = vld [vmem:[%s5 + $0x248] sm:$0xf]
      %v5096 = vld [vmem:[%s5 + $0x24c] sm:$0xff]
      %v5097 = vld [vmem:[%s5 + $0x254] sm:$0xf]
      %v5098 = vld [vmem:[%s5 + $0x258] sm:$0xff]
      %v5099 = vld [vmem:[%s5 + $0x260] sm:$0xf]
      %v5100 = vld [vmem:[%s5 + $0x264] sm:$0xff]
      %v5101 = vld [vmem:[%s5 + $0x26c] sm:$0xf]
      %v5102 = vld [vmem:[%s5 + $0x270] sm:$0xff]
      %v5103 = vld [vmem:[%s5 + $0x278] sm:$0xf]
      %v5104 = vld [vmem:[%s5 + $0x27c] sm:$0xff]
      %v5105 = vld [vmem:[%s5 + $0x284] sm:$0xf]
      %v5106 = vld [vmem:[%s5 + $0x288] sm:$0xff]
      %v5107 = vld [vmem:[%s5 + $0x290] sm:$0xf]
      %v5108 = vld [vmem:[%s5 + $0x294] sm:$0xff]
      %v5109 = vld [vmem:[%s5 + $0x29c] sm:$0xf]
      %v5110 = vld [vmem:[%s5 + $0x2a0] sm:$0xff]
      %v5111 = vld [vmem:[%s5 + $0x2a8] sm:$0xf]
      %v5112 = vld [vmem:[%s5 + $0x2ac] sm:$0xff]
      %v5113 = vld [vmem:[%s5 + $0x2b4] sm:$0xf]
      %v5114 = vld [vmem:[%s5 + $0x2b8] sm:$0xff]
      %v5115 = vld [vmem:[%s5 + $0x2c0] sm:$0xf]
      %v5116 = vld [vmem:[%s5 + $0x2c4] sm:$0xff]
      %v5117 = vld [vmem:[%s5 + $0x2cc] sm:$0xf]
      %s5118 = scalar_lea.vmem %s4, 4
      %v5119 = vld [vmem:[%s5118] sm:$0x7]
      %v5121 = vsel %vm4922, %v5119, 0
      %5123 = vmatpush.bf16.msra.mxu0 0
      %5124 = vmatpush.bf16.msra.mxu0 0
      %5125 = vmatpush.bf16.msra.mxu0 0
      %5126 = vmatpush.bf16.msra.mxu0 0
      %5127 = vmatpush.bf16.msra.mxu0 0
      %5128 = vmatpush.bf16.msra.mxu0 0
      %5129 = vmatpush.bf16.msra.mxu0 0
      %5130 = vmatpush.bf16.msra.mxu0 %v4931
      %5131 = vmatmul.bf16.gmra.mxu0 %v5121
      %v5132 = vpop.f32.mrf.mxu0
      %v5133 = vadd.f32 0.0, %v5132
      %v5134 = vpop.f32.mrf.mxu0
      %5135 = vdwg.mxu0
      %5136 = vmatpush.bf16.msra.mxu0 0
      %5137 = vmatpush.bf16.msra.mxu0 0
      %5138 = vmatpush.bf16.msra.mxu0 0
      %5139 = vmatpush.bf16.msra.mxu0 0
      %5140 = vmatpush.bf16.msra.mxu0 0
      %5141 = vmatpush.bf16.msra.mxu0 0
      %5142 = vmatpush.bf16.msra.mxu0 0
      %5143 = vmatpush.bf16.msra.mxu0 %v4934
      %5144 = vmatmul.bf16.gmra.mxu0 %v5121
      %v5145 = vpop.f32.mrf.mxu0
      %v5146 = vadd.f32 0.0, %v5145
      %v5147 = vpop.f32.mrf.mxu0
      %5148 = vdwg.mxu0
      %5149 = vmatpush.bf16.msra.mxu0 0
      %5150 = vmatpush.bf16.msra.mxu0 0
      %5151 = vmatpush.bf16.msra.mxu0 0
      %5152 = vmatpush.bf16.msra.mxu0 0
      %5153 = vmatpush.bf16.msra.mxu0 0
      %5154 = vmatpush.bf16.msra.mxu0 0
      %5155 = vmatpush.bf16.msra.mxu0 0
      %5156 = vmatpush.bf16.msra.mxu0 %v4937
      %5157 = vmatmul.bf16.gmra.mxu0 %v5121
      %v5158 = vpop.f32.mrf.mxu0
      %v5159 = vadd.f32 0.0, %v5158
      %v5160 = vpop.f32.mrf.mxu0
      %5161 = vdwg.mxu0
      %5162 = vmatpush.bf16.msra.mxu0 0
      %5163 = vmatpush.bf16.msra.mxu0 0
      %5164 = vmatpush.bf16.msra.mxu0 0
      %5165 = vmatpush.bf16.msra.mxu0 0
      %5166 = vmatpush.bf16.msra.mxu0 0
      %5167 = vmatpush.bf16.msra.mxu0 0
      %5168 = vmatpush.bf16.msra.mxu0 0
      %5169 = vmatpush.bf16.msra.mxu0 %v4940
      %5170 = vmatmul.bf16.gmra.mxu0 %v5121
      %v5171 = vpop.f32.mrf.mxu0
      %v5172 = vadd.f32 0.0, %v5171
      %v5173 = vpop.f32.mrf.mxu0
      %5174 = vdwg.mxu0
      %v5175 = vpack.c.bf16 %v5133, %v5133
      %v5176 = vpack.c.bf16 %v5146, %v5146
      %v5177 = vpack.c.bf16 %v5159, %v5159
      %v5178 = vpack.c.bf16 %v5172, %v5172
      %s5179 = scalar_lea.vmem %s5, 720
      %v5180 = vld [vmem:[%s5179] sm:$0xff]
      %v5181 = vld [vmem:[%s5179 + $0x8] sm:$0xf]
      %v5182 = vld [vmem:[%s5179 + $0xc] sm:$0xff]
      %v5183 = vld [vmem:[%s5179 + $0x14] sm:$0xf]
      %v5184 = vld [vmem:[%s5179 + $0x18] sm:$0xff]
      %v5185 = vld [vmem:[%s5179 + $0x20] sm:$0xf]
      %v5186 = vld [vmem:[%s5179 + $0x24] sm:$0xff]
      %v5187 = vld [vmem:[%s5179 + $0x2c] sm:$0xf]
      %v5188 = vld [vmem:[%s5179 + $0x30] sm:$0xff]
      %v5189 = vld [vmem:[%s5179 + $0x38] sm:$0xf]
      %v5190 = vld [vmem:[%s5179 + $0x3c] sm:$0xff]
      %v5191 = vld [vmem:[%s5179 + $0x44] sm:$0xf]
      %v5192 = vld [vmem:[%s5179 + $0x48] sm:$0xff]
      %v5193 = vld [vmem:[%s5179 + $0x50] sm:$0xf]
      %v5194 = vld [vmem:[%s5179 + $0x54] sm:$0xff]
      %v5195 = vld [vmem:[%s5179 + $0x5c] sm:$0xf]
      %v5196 = vld [vmem:[%s5179 + $0x60] sm:$0xff]
      %v5197 = vld [vmem:[%s5179 + $0x68] sm:$0xf]
      %v5198 = vld [vmem:[%s5179 + $0x6c] sm:$0xff]
      %v5199 = vld [vmem:[%s5179 + $0x74] sm:$0xf]
      %v5200 = vld [vmem:[%s5179 + $0x78] sm:$0xff]
      %v5201 = vld [vmem:[%s5179 + $0x80] sm:$0xf]
      %v5202 = vld [vmem:[%s5179 + $0x84] sm:$0xff]
      %v5203 = vld [vmem:[%s5179 + $0x8c] sm:$0xf]
      %v5204 = vld [vmem:[%s5179 + $0x90] sm:$0xff]
      %v5205 = vld [vmem:[%s5179 + $0x98] sm:$0xf]
      %v5206 = vld [vmem:[%s5179 + $0x9c] sm:$0xff]
      %v5207 = vld [vmem:[%s5179 + $0xa4] sm:$0xf]
      %v5208 = vld [vmem:[%s5179 + $0xa8] sm:$0xff]
      %v5209 = vld [vmem:[%s5179 + $0xb0] sm:$0xf]
      %v5210 = vld [vmem:[%s5179 + $0xb4] sm:$0xff]
      %v5211 = vld [vmem:[%s5179 + $0xbc] sm:$0xf]
      %v5212 = vld [vmem:[%s5179 + $0xc0] sm:$0xff]
      %v5213 = vld [vmem:[%s5179 + $0xc8] sm:$0xf]
      %v5214 = vld [vmem:[%s5179 + $0xcc] sm:$0xff]
      %v5215 = vld [vmem:[%s5179 + $0xd4] sm:$0xf]
      %v5216 = vld [vmem:[%s5179 + $0xd8] sm:$0xff]
      %v5217 = vld [vmem:[%s5179 + $0xe0] sm:$0xf]
      %v5218 = vld [vmem:[%s5179 + $0xe4] sm:$0xff]
      %v5219 = vld [vmem:[%s5179 + $0xec] sm:$0xf]
      %v5220 = vld [vmem:[%s5179 + $0xf0] sm:$0xff]
      %v5221 = vld [vmem:[%s5179 + $0xf8] sm:$0xf]
      %v5222 = vld [vmem:[%s5179 + $0xfc] sm:$0xff]
      %v5223 = vld [vmem:[%s5179 + $0x104] sm:$0xf]
      %v5224 = vld [vmem:[%s5179 + $0x108] sm:$0xff]
      %v5225 = vld [vmem:[%s5179 + $0x110] sm:$0xf]
      %v5226 = vld [vmem:[%s5179 + $0x114] sm:$0xff]
      %v5227 = vld [vmem:[%s5179 + $0x11c] sm:$0xf]
      %v5228 = vld [vmem:[%s5179 + $0x120] sm:$0xff]
      %v5229 = vld [vmem:[%s5179 + $0x128] sm:$0xf]
      %v5230 = vld [vmem:[%s5179 + $0x12c] sm:$0xff]
      %v5231 = vld [vmem:[%s5179 + $0x134] sm:$0xf]
      %v5232 = vld [vmem:[%s5179 + $0x138] sm:$0xff]
      %v5233 = vld [vmem:[%s5179 + $0x140] sm:$0xf]
      %v5234 = vld [vmem:[%s5179 + $0x144] sm:$0xff]
      %v5235 = vld [vmem:[%s5179 + $0x14c] sm:$0xf]
      %v5236 = vld [vmem:[%s5179 + $0x150] sm:$0xff]
      %v5237 = vld [vmem:[%s5179 + $0x158] sm:$0xf]
      %v5238 = vld [vmem:[%s5179 + $0x15c] sm:$0xff]
      %v5239 = vld [vmem:[%s5179 + $0x164] sm:$0xf]
      %v5240 = vld [vmem:[%s5179 + $0x168] sm:$0xff]
      %v5241 = vld [vmem:[%s5179 + $0x170] sm:$0xf]
      %v5242 = vld [vmem:[%s5179 + $0x174] sm:$0xff]
      %v5243 = vld [vmem:[%s5179 + $0x17c] sm:$0xf]
      %v5244 = vld [vmem:[%s5179 + $0x180] sm:$0xff]
      %v5245 = vld [vmem:[%s5179 + $0x188] sm:$0xf]
      %v5246 = vld [vmem:[%s5179 + $0x18c] sm:$0xff]
      %v5247 = vld [vmem:[%s5179 + $0x194] sm:$0xf]
      %v5248 = vld [vmem:[%s5179 + $0x198] sm:$0xff]
      %v5249 = vld [vmem:[%s5179 + $0x1a0] sm:$0xf]
      %v5250 = vld [vmem:[%s5179 + $0x1a4] sm:$0xff]
      %v5251 = vld [vmem:[%s5179 + $0x1ac] sm:$0xf]
      %v5252 = vld [vmem:[%s5179 + $0x1b0] sm:$0xff]
      %v5253 = vld [vmem:[%s5179 + $0x1b8] sm:$0xf]
      %v5254 = vld [vmem:[%s5179 + $0x1bc] sm:$0xff]
      %v5255 = vld [vmem:[%s5179 + $0x1c4] sm:$0xf]
      %v5256 = vld [vmem:[%s5179 + $0x1c8] sm:$0xff]
      %v5257 = vld [vmem:[%s5179 + $0x1d0] sm:$0xf]
      %v5258 = vld [vmem:[%s5179 + $0x1d4] sm:$0xff]
      %v5259 = vld [vmem:[%s5179 + $0x1dc] sm:$0xf]
      %v5260 = vld [vmem:[%s5179 + $0x1e0] sm:$0xff]
      %v5261 = vld [vmem:[%s5179 + $0x1e8] sm:$0xf]
      %v5262 = vld [vmem:[%s5179 + $0x1ec] sm:$0xff]
      %v5263 = vld [vmem:[%s5179 + $0x1f4] sm:$0xf]
      %v5264 = vld [vmem:[%s5179 + $0x1f8] sm:$0xff]
      %v5265 = vld [vmem:[%s5179 + $0x200] sm:$0xf]
      %v5266 = vld [vmem:[%s5179 + $0x204] sm:$0xff]
      %v5267 = vld [vmem:[%s5179 + $0x20c] sm:$0xf]
      %v5268 = vld [vmem:[%s5179 + $0x210] sm:$0xff]
      %v5269 = vld [vmem:[%s5179 + $0x218] sm:$0xf]
      %v5270 = vld [vmem:[%s5179 + $0x21c] sm:$0xff]
      %v5271 = vld [vmem:[%s5179 + $0x224] sm:$0xf]
      %v5272 = vld [vmem:[%s5179 + $0x228] sm:$0xff]
      %v5273 = vld [vmem:[%s5179 + $0x230] sm:$0xf]
      %v5274 = vld [vmem:[%s5179 + $0x234] sm:$0xff]
      %v5275 = vld [vmem:[%s5179 + $0x23c] sm:$0xf]
      %v5276 = vld [vmem:[%s5179 + $0x240] sm:$0xff]
      %v5277 = vld [vmem:[%s5179 + $0x248] sm:$0xf]
      %v5278 = vld [vmem:[%s5179 + $0x24c] sm:$0xff]
      %v5279 = vld [vmem:[%s5179 + $0x254] sm:$0xf]
      %v5280 = vld [vmem:[%s5179 + $0x258] sm:$0xff]
      %v5281 = vld [vmem:[%s5179 + $0x260] sm:$0xf]
      %v5282 = vld [vmem:[%s5179 + $0x264] sm:$0xff]
      %v5283 = vld [vmem:[%s5179 + $0x26c] sm:$0xf]
      %v5284 = vld [vmem:[%s5179 + $0x270] sm:$0xff]
      %v5285 = vld [vmem:[%s5179 + $0x278] sm:$0xf]
      %v5286 = vld [vmem:[%s5179 + $0x27c] sm:$0xff]
      %v5287 = vld [vmem:[%s5179 + $0x284] sm:$0xf]
      %v5288 = vld [vmem:[%s5179 + $0x288] sm:$0xff]
      %v5289 = vld [vmem:[%s5179 + $0x290] sm:$0xf]
      %v5290 = vld [vmem:[%s5179 + $0x294] sm:$0xff]
      %v5291 = vld [vmem:[%s5179 + $0x29c] sm:$0xf]
      %v5292 = vld [vmem:[%s5179 + $0x2a0] sm:$0xff]
      %v5293 = vld [vmem:[%s5179 + $0x2a8] sm:$0xf]
      %v5294 = vld [vmem:[%s5179 + $0x2ac] sm:$0xff]
      %v5295 = vld [vmem:[%s5179 + $0x2b4] sm:$0xf]
      %v5296 = vld [vmem:[%s5179 + $0x2b8] sm:$0xff]
      %v5297 = vld [vmem:[%s5179 + $0x2c0] sm:$0xf]
      %v5298 = vld [vmem:[%s5179 + $0x2c4] sm:$0xff]
      %v5299 = vld [vmem:[%s5179 + $0x2cc] sm:$0xf]
      %v5420 = vunpack.c.l.b16 %v5180
      %v5421 = vunpack.c.h.b16 %v5180
      %v5422 = vunpack.c.l.b16 %v5181
      %v5423 = vunpack.c.l.b16 %v5182
      %v5424 = vunpack.c.h.b16 %v5182
      %v5425 = vunpack.c.l.b16 %v5183
      %v5426 = vunpack.c.l.b16 %v5184
      %v5427 = vunpack.c.h.b16 %v5184
      %v5428 = vunpack.c.l.b16 %v5185
      %v5429 = vunpack.c.l.b16 %v5186
      %v5430 = vunpack.c.h.b16 %v5186
      %v5431 = vunpack.c.l.b16 %v5187
      %v5432 = vunpack.c.l.b16 %v5188
      %v5433 = vunpack.c.h.b16 %v5188
      %v5434 = vunpack.c.l.b16 %v5189
      %v5435 = vunpack.c.l.b16 %v5190
      %v5436 = vunpack.c.h.b16 %v5190
      %v5437 = vunpack.c.l.b16 %v5191
      %v5438 = vunpack.c.l.b16 %v5192
      %v5439 = vunpack.c.h.b16 %v5192
      %v5440 = vunpack.c.l.b16 %v5193
      %v5441 = vunpack.c.l.b16 %v5194
      %v5442 = vunpack.c.h.b16 %v5194
      %v5443 = vunpack.c.l.b16 %v5195
      %v5444 = vunpack.c.l.b16 %v5196
      %v5445 = vunpack.c.h.b16 %v5196
      %v5446 = vunpack.c.l.b16 %v5197
      %v5447 = vunpack.c.l.b16 %v5198
      %v5448 = vunpack.c.h.b16 %v5198
      %v5449 = vunpack.c.l.b16 %v5199
      %v5450 = vunpack.c.l.b16 %v5200
      %v5451 = vunpack.c.h.b16 %v5200
      %v5452 = vunpack.c.l.b16 %v5201
      %v5453 = vunpack.c.l.b16 %v5202
      %v5454 = vunpack.c.h.b16 %v5202
      %v5455 = vunpack.c.l.b16 %v5203
      %v5456 = vunpack.c.l.b16 %v5204
      %v5457 = vunpack.c.h.b16 %v5204
      %v5458 = vunpack.c.l.b16 %v5205
      %v5459 = vunpack.c.l.b16 %v5206
      %v5460 = vunpack.c.h.b16 %v5206
      %v5461 = vunpack.c.l.b16 %v5207
      %v5462 = vunpack.c.l.b16 %v5208
      %v5463 = vunpack.c.h.b16 %v5208
      %v5464 = vunpack.c.l.b16 %v5209
      %v5465 = vunpack.c.l.b16 %v5210
      %v5466 = vunpack.c.h.b16 %v5210
      %v5467 = vunpack.c.l.b16 %v5211
      %v5468 = vunpack.c.l.b16 %v5212
      %v5469 = vunpack.c.h.b16 %v5212
      %v5470 = vunpack.c.l.b16 %v5213
      %v5471 = vunpack.c.l.b16 %v5214
      %v5472 = vunpack.c.h.b16 %v5214
      %v5473 = vunpack.c.l.b16 %v5215
      %v5474 = vunpack.c.l.b16 %v5216
      %v5475 = vunpack.c.h.b16 %v5216
      %v5476 = vunpack.c.l.b16 %v5217
      %v5477 = vunpack.c.l.b16 %v5218
      %v5478 = vunpack.c.h.b16 %v5218
      %v5479 = vunpack.c.l.b16 %v5219
      %v5480 = vunpack.c.l.b16 %v5220
      %v5481 = vunpack.c.h.b16 %v5220
      %v5482 = vunpack.c.l.b16 %v5221
      %v5483 = vunpack.c.l.b16 %v5222
      %v5484 = vunpack.c.h.b16 %v5222
      %v5485 = vunpack.c.l.b16 %v5223
      %v5486 = vunpack.c.l.b16 %v5224
      %v5487 = vunpack.c.h.b16 %v5224
      %v5488 = vunpack.c.l.b16 %v5225
      %v5489 = vunpack.c.l.b16 %v5226
      %v5490 = vunpack.c.h.b16 %v5226
      %v5491 = vunpack.c.l.b16 %v5227
      %v5492 = vunpack.c.l.b16 %v5228
      %v5493 = vunpack.c.h.b16 %v5228
      %v5494 = vunpack.c.l.b16 %v5229
      %v5495 = vunpack.c.l.b16 %v5230
      %v5496 = vunpack.c.h.b16 %v5230
      %v5497 = vunpack.c.l.b16 %v5231
      %v5498 = vunpack.c.l.b16 %v5232
      %v5499 = vunpack.c.h.b16 %v5232
      %v5500 = vunpack.c.l.b16 %v5233
      %v5501 = vunpack.c.l.b16 %v5234
      %v5502 = vunpack.c.h.b16 %v5234
      %v5503 = vunpack.c.l.b16 %v5235
      %v5504 = vunpack.c.l.b16 %v5236
      %v5505 = vunpack.c.h.b16 %v5236
      %v5506 = vunpack.c.l.b16 %v5237
      %v5507 = vunpack.c.l.b16 %v5238
      %v5508 = vunpack.c.h.b16 %v5238
      %v5509 = vunpack.c.l.b16 %v5239
      %v5510 = vunpack.c.l.b16 %v5240
      %v5511 = vunpack.c.h.b16 %v5240
      %v5512 = vunpack.c.l.b16 %v5241
      %v5513 = vunpack.c.l.b16 %v5242
      %v5514 = vunpack.c.h.b16 %v5242
      %v5515 = vunpack.c.l.b16 %v5243
      %v5516 = vunpack.c.l.b16 %v5244
      %v5517 = vunpack.c.h.b16 %v5244
      %v5518 = vunpack.c.l.b16 %v5245
      %v5519 = vunpack.c.l.b16 %v5246
      %v5520 = vunpack.c.h.b16 %v5246
      %v5521 = vunpack.c.l.b16 %v5247
      %v5522 = vunpack.c.l.b16 %v5248
      %v5523 = vunpack.c.h.b16 %v5248
      %v5524 = vunpack.c.l.b16 %v5249
      %v5525 = vunpack.c.l.b16 %v5250
      %v5526 = vunpack.c.h.b16 %v5250
      %v5527 = vunpack.c.l.b16 %v5251
      %v5528 = vunpack.c.l.b16 %v5252
      %v5529 = vunpack.c.h.b16 %v5252
      %v5530 = vunpack.c.l.b16 %v5253
      %v5531 = vunpack.c.l.b16 %v5254
      %v5532 = vunpack.c.h.b16 %v5254
      %v5533 = vunpack.c.l.b16 %v5255
      %v5534 = vunpack.c.l.b16 %v5256
      %v5535 = vunpack.c.h.b16 %v5256
      %v5536 = vunpack.c.l.b16 %v5257
      %v5537 = vunpack.c.l.b16 %v5258
      %v5538 = vunpack.c.h.b16 %v5258
      %v5539 = vunpack.c.l.b16 %v5259
      %v5540 = vunpack.c.l.b16 %v5260
      %v5541 = vunpack.c.h.b16 %v5260
      %v5542 = vunpack.c.l.b16 %v5261
      %v5543 = vunpack.c.l.b16 %v5262
      %v5544 = vunpack.c.h.b16 %v5262
      %v5545 = vunpack.c.l.b16 %v5263
      %v5546 = vunpack.c.l.b16 %v5264
      %v5547 = vunpack.c.h.b16 %v5264
      %v5548 = vunpack.c.l.b16 %v5265
      %v5549 = vunpack.c.l.b16 %v5266
      %v5550 = vunpack.c.h.b16 %v5266
      %v5551 = vunpack.c.l.b16 %v5267
      %v5552 = vunpack.c.l.b16 %v5268
      %v5553 = vunpack.c.h.b16 %v5268
      %v5554 = vunpack.c.l.b16 %v5269
      %v5555 = vunpack.c.l.b16 %v5270
      %v5556 = vunpack.c.h.b16 %v5270
      %v5557 = vunpack.c.l.b16 %v5271
      %v5558 = vunpack.c.l.b16 %v5272
      %v5559 = vunpack.c.h.b16 %v5272
      %v5560 = vunpack.c.l.b16 %v5273
      %v5561 = vunpack.c.l.b16 %v5274
      %v5562 = vunpack.c.h.b16 %v5274
      %v5563 = vunpack.c.l.b16 %v5275
      %v5564 = vunpack.c.l.b16 %v5276
      %v5565 = vunpack.c.h.b16 %v5276
      %v5566 = vunpack.c.l.b16 %v5277
      %v5567 = vunpack.c.l.b16 %v5278
      %v5568 = vunpack.c.h.b16 %v5278
      %v5569 = vunpack.c.l.b16 %v5279
      %v5570 = vunpack.c.l.b16 %v5280
      %v5571 = vunpack.c.h.b16 %v5280
      %v5572 = vunpack.c.l.b16 %v5281
      %v5573 = vunpack.c.l.b16 %v5282
      %v5574 = vunpack.c.h.b16 %v5282
      %v5575 = vunpack.c.l.b16 %v5283
      %v5576 = vunpack.c.l.b16 %v5284
      %v5577 = vunpack.c.h.b16 %v5284
      %v5578 = vunpack.c.l.b16 %v5285
      %v5579 = vunpack.c.l.b16 %v5286
      %v5580 = vunpack.c.h.b16 %v5286
      %v5581 = vunpack.c.l.b16 %v5287
      %v5582 = vunpack.c.l.b16 %v5288
      %v5583 = vunpack.c.h.b16 %v5288
      %v5584 = vunpack.c.l.b16 %v5289
      %v5585 = vunpack.c.l.b16 %v5290
      %v5586 = vunpack.c.h.b16 %v5290
      %v5587 = vunpack.c.l.b16 %v5291
      %v5588 = vunpack.c.l.b16 %v5292
      %v5589 = vunpack.c.h.b16 %v5292
      %v5590 = vunpack.c.l.b16 %v5293
      %v5591 = vunpack.c.l.b16 %v5294
      %v5592 = vunpack.c.h.b16 %v5294
      %v5593 = vunpack.c.l.b16 %v5295
      %v5594 = vunpack.c.l.b16 %v5296
      %v5595 = vunpack.c.h.b16 %v5296
      %v5596 = vunpack.c.l.b16 %v5297
      %v5597 = vunpack.c.l.b16 %v5298
      %v5598 = vunpack.c.h.b16 %v5298
      %v5599 = vunpack.c.l.b16 %v5299
      %v5600 = vpack.c.b16 %v5423, %v5420
      %v5601 = vpack.c.b16 %v5424, %v5421
      %v5602 = vpack.c.b16 %v5425, %v5422
      %v5603 = vpack.c.b16 %v5429, %v5426
      %v5604 = vpack.c.b16 %v5430, %v5427
      %v5605 = vpack.c.b16 %v5431, %v5428
      %v5606 = vpack.c.b16 %v5435, %v5432
      %v5607 = vpack.c.b16 %v5436, %v5433
      %v5608 = vpack.c.b16 %v5437, %v5434
      %v5609 = vpack.c.b16 %v5441, %v5438
      %v5610 = vpack.c.b16 %v5442, %v5439
      %v5611 = vpack.c.b16 %v5443, %v5440
      %v5612 = vpack.c.b16 %v5447, %v5444
      %v5613 = vpack.c.b16 %v5448, %v5445
      %v5614 = vpack.c.b16 %v5449, %v5446
      %v5615 = vpack.c.b16 %v5453, %v5450
      %v5616 = vpack.c.b16 %v5454, %v5451
      %v5617 = vpack.c.b16 %v5455, %v5452
      %v5618 = vpack.c.b16 %v5459, %v5456
      %v5619 = vpack.c.b16 %v5460, %v5457
      %v5620 = vpack.c.b16 %v5461, %v5458
      %v5621 = vpack.c.b16 %v5465, %v5462
      %v5622 = vpack.c.b16 %v5466, %v5463
      %v5623 = vpack.c.b16 %v5467, %v5464
      %v5624 = vpack.c.b16 %v5471, %v5468
      %v5625 = vpack.c.b16 %v5472, %v5469
      %v5626 = vpack.c.b16 %v5473, %v5470
      %v5627 = vpack.c.b16 %v5477, %v5474
      %v5628 = vpack.c.b16 %v5478, %v5475
      %v5629 = vpack.c.b16 %v5479, %v5476
      %v5630 = vpack.c.b16 %v5483, %v5480
      %v5631 = vpack.c.b16 %v5484, %v5481
      %v5632 = vpack.c.b16 %v5485, %v5482
      %v5633 = vpack.c.b16 %v5489, %v5486
      %v5634 = vpack.c.b16 %v5490, %v5487
      %v5635 = vpack.c.b16 %v5491, %v5488
      %v5636 = vpack.c.b16 %v5495, %v5492
      %v5637 = vpack.c.b16 %v5496, %v5493
      %v5638 = vpack.c.b16 %v5497, %v5494
      %v5639 = vpack.c.b16 %v5501, %v5498
      %v5640 = vpack.c.b16 %v5502, %v5499
      %v5641 = vpack.c.b16 %v5503, %v5500
      %v5642 = vpack.c.b16 %v5507, %v5504
      %v5643 = vpack.c.b16 %v5508, %v5505
      %v5644 = vpack.c.b16 %v5509, %v5506
      %v5645 = vpack.c.b16 %v5513, %v5510
      %v5646 = vpack.c.b16 %v5514, %v5511
      %v5647 = vpack.c.b16 %v5515, %v5512
      %v5648 = vpack.c.b16 %v5519, %v5516
      %v5649 = vpack.c.b16 %v5520, %v5517
      %v5650 = vpack.c.b16 %v5521, %v5518
      %v5651 = vpack.c.b16 %v5525, %v5522
      %v5652 = vpack.c.b16 %v5526, %v5523
      %v5653 = vpack.c.b16 %v5527, %v5524
      %v5654 = vpack.c.b16 %v5531, %v5528
      %v5655 = vpack.c.b16 %v5532, %v5529
      %v5656 = vpack.c.b16 %v5533, %v5530
      %v5657 = vpack.c.b16 %v5537, %v5534
      %v5658 = vpack.c.b16 %v5538, %v5535
      %v5659 = vpack.c.b16 %v5539, %v5536
      %v5660 = vpack.c.b16 %v5543, %v5540
      %v5661 = vpack.c.b16 %v5544, %v5541
      %v5662 = vpack.c.b16 %v5545, %v5542
      %v5663 = vpack.c.b16 %v5549, %v5546
      %v5664 = vpack.c.b16 %v5550, %v5547
      %v5665 = vpack.c.b16 %v5551, %v5548
      %v5666 = vpack.c.b16 %v5555, %v5552
      %v5667 = vpack.c.b16 %v5556, %v5553
      %v5668 = vpack.c.b16 %v5557, %v5554
      %v5669 = vpack.c.b16 %v5561, %v5558
      %v5670 = vpack.c.b16 %v5562, %v5559
      %v5671 = vpack.c.b16 %v5563, %v5560
      %v5672 = vpack.c.b16 %v5567, %v5564
      %v5673 = vpack.c.b16 %v5568, %v5565
      %v5674 = vpack.c.b16 %v5569, %v5566
      %v5675 = vpack.c.b16 %v5573, %v5570
      %v5676 = vpack.c.b16 %v5574, %v5571
      %v5677 = vpack.c.b16 %v5575, %v5572
      %v5678 = vpack.c.b16 %v5579, %v5576
      %v5679 = vpack.c.b16 %v5580, %v5577
      %v5680 = vpack.c.b16 %v5581, %v5578
      %v5681 = vpack.c.b16 %v5585, %v5582
      %v5682 = vpack.c.b16 %v5586, %v5583
      %v5683 = vpack.c.b16 %v5587, %v5584
      %v5684 = vpack.c.b16 %v5591, %v5588
      %v5685 = vpack.c.b16 %v5592, %v5589
      %v5686 = vpack.c.b16 %v5593, %v5590
      %v5687 = vpack.c.b16 %v5597, %v5594
      %v5688 = vpack.c.b16 %v5598, %v5595
      %v5689 = vpack.c.b16 %v5599, %v5596
      %vm5780 = vcmask 785408
      %v5782 = vsel %vm5780, %v5178, 0
      %5784 = vmatpush.bf16.msra.mxu0 %v5621
      %5785 = vmatpush.bf16.msra.mxu0 %v5618
      %5786 = vmatpush.bf16.msra.mxu0 %v5615
      %5787 = vmatpush.bf16.msra.mxu0 %v5612
      %5788 = vmatpush.bf16.msra.mxu0 %v5609
      %5789 = vmatpush.bf16.msra.mxu0 %v5606
      %5790 = vmatpush.bf16.msra.mxu0 %v5603
      %5791 = vmatpush.bf16.msra.mxu0 %v5600
      %5792 = vmatmul.bf16.gmra.mxu0 %v5175
      %v5793 = vpop.f32.mrf.mxu0
      %v5794 = vadd.f32 0.0, %v5793
      %v5795 = vpop.f32.mrf.mxu0
      %5796 = vdwg.mxu0
      %5797 = vmatpush.bf16.msra.mxu0 %v5645
      %5798 = vmatpush.bf16.msra.mxu0 %v5642
      %5799 = vmatpush.bf16.msra.mxu0 %v5639
      %5800 = vmatpush.bf16.msra.mxu0 %v5636
      %5801 = vmatpush.bf16.msra.mxu0 %v5633
      %5802 = vmatpush.bf16.msra.mxu0 %v5630
      %5803 = vmatpush.bf16.msra.mxu0 %v5627
      %5804 = vmatpush.bf16.msra.mxu0 %v5624
      %5805 = vmatmul.bf16.gmra.mxu0 %v5176
      %v5806 = vpop.f32.mrf.mxu0
      %v5807 = vadd.f32 %v5794, %v5806
      %v5808 = vpop.f32.mrf.mxu0
      %5809 = vdwg.mxu0
      %5810 = vmatpush.bf16.msra.mxu0 %v5669
      %5811 = vmatpush.bf16.msra.mxu0 %v5666
      %5812 = vmatpush.bf16.msra.mxu0 %v5663
      %5813 = vmatpush.bf16.msra.mxu0 %v5660
      %5814 = vmatpush.bf16.msra.mxu0 %v5657
      %5815 = vmatpush.bf16.msra.mxu0 %v5654
      %5816 = vmatpush.bf16.msra.mxu0 %v5651
      %5817 = vmatpush.bf16.msra.mxu0 %v5648
      %5818 = vmatmul.bf16.gmra.mxu0 %v5177
      %v5819 = vpop.f32.mrf.mxu0
      %v5820 = vadd.f32 %v5807, %v5819
      %v5821 = vpop.f32.mrf.mxu0
      %5822 = vdwg.mxu0
      %5823 = vmatpush.bf16.msra.mxu0 0
      %5824 = vmatpush.bf16.msra.mxu0 0
      %5825 = vmatpush.bf16.msra.mxu0 %v5687
      %5826 = vmatpush.bf16.msra.mxu0 %v5684
      %5827 = vmatpush.bf16.msra.mxu0 %v5681
      %5828 = vmatpush.bf16.msra.mxu0 %v5678
      %5829 = vmatpush.bf16.msra.mxu0 %v5675
      %5830 = vmatpush.bf16.msra.mxu0 %v5672
      %5831 = vmatmul.bf16.gmra.mxu0 %v5782
      %v5832 = vpop.f32.mrf.mxu0
      %v5833 = vadd.f32 %v5820, %v5832
      %v5834 = vpop.f32.mrf.mxu0
      %5835 = vdwg.mxu0
      %5836 = vmatpush.bf16.msra.mxu0 %v5622
      %5837 = vmatpush.bf16.msra.mxu0 %v5619
      %5838 = vmatpush.bf16.msra.mxu0 %v5616
      %5839 = vmatpush.bf16.msra.mxu0 %v5613
      %5840 = vmatpush.bf16.msra.mxu0 %v5610
      %5841 = vmatpush.bf16.msra.mxu0 %v5607
      %5842 = vmatpush.bf16.msra.mxu0 %v5604
      %5843 = vmatpush.bf16.msra.mxu0 %v5601
      %5844 = vmatmul.bf16.gmra.mxu0 %v5175
      %v5845 = vpop.f32.mrf.mxu0
      %v5846 = vadd.f32 0.0, %v5845
      %v5847 = vpop.f32.mrf.mxu0
      %5848 = vdwg.mxu0
      %5849 = vmatpush.bf16.msra.mxu0 %v5646
      %5850 = vmatpush.bf16.msra.mxu0 %v5643
      %5851 = vmatpush.bf16.msra.mxu0 %v5640
      %5852 = vmatpush.bf16.msra.mxu0 %v5637
      %5853 = vmatpush.bf16.msra.mxu0 %v5634
      %5854 = vmatpush.bf16.msra.mxu0 %v5631
      %5855 = vmatpush.bf16.msra.mxu0 %v5628
      %5856 = vmatpush.bf16.msra.mxu0 %v5625
      %5857 = vmatmul.bf16.gmra.mxu0 %v5176
      %v5858 = vpop.f32.mrf.mxu0
      %v5859 = vadd.f32 %v5846, %v5858
      %v5860 = vpop.f32.mrf.mxu0
      %5861 = vdwg.mxu0
      %5862 = vmatpush.bf16.msra.mxu0 %v5670
      %5863 = vmatpush.bf16.msra.mxu0 %v5667
      %5864 = vmatpush.bf16.msra.mxu0 %v5664
      %5865 = vmatpush.bf16.msra.mxu0 %v5661
      %5866 = vmatpush.bf16.msra.mxu0 %v5658
      %5867 = vmatpush.bf16.msra.mxu0 %v5655
      %5868 = vmatpush.bf16.msra.mxu0 %v5652
      %5869 = vmatpush.bf16.msra.mxu0 %v5649
      %5870 = vmatmul.bf16.gmra.mxu0 %v5177
      %v5871 = vpop.f32.mrf.mxu0
      %v5872 = vadd.f32 %v5859, %v5871
      %v5873 = vpop.f32.mrf.mxu0
      %5874 = vdwg.mxu0
      %5875 = vmatpush.bf16.msra.mxu0 0
      %5876 = vmatpush.bf16.msra.mxu0 0
      %5877 = vmatpush.bf16.msra.mxu0 %v5688
      %5878 = vmatpush.bf16.msra.mxu0 %v5685
      %5879 = vmatpush.bf16.msra.mxu0 %v5682
      %5880 = vmatpush.bf16.msra.mxu0 %v5679
      %5881 = vmatpush.bf16.msra.mxu0 %v5676
      %5882 = vmatpush.bf16.msra.mxu0 %v5673
      %5883 = vmatmul.bf16.gmra.mxu0 %v5782
      %v5884 = vpop.f32.mrf.mxu0
      %v5885 = vadd.f32 %v5872, %v5884
      %v5886 = vpop.f32.mrf.mxu0
      %5887 = vdwg.mxu0
      %5888 = vmatpush.bf16.msra.mxu0 %v5623
      %5889 = vmatpush.bf16.msra.mxu0 %v5620
      %5890 = vmatpush.bf16.msra.mxu0 %v5617
      %5891 = vmatpush.bf16.msra.mxu0 %v5614
      %5892 = vmatpush.bf16.msra.mxu0 %v5611
      %5893 = vmatpush.bf16.msra.mxu0 %v5608
      %5894 = vmatpush.bf16.msra.mxu0 %v5605
      %5895 = vmatpush.bf16.msra.mxu0 %v5602
      %5896 = vmatmul.bf16.gmra.mxu0 %v5175
      %v5897 = vpop.f32.mrf.mxu0
      %v5898 = vadd.f32 0.0, %v5897
      %v5899 = vpop.f32.mrf.mxu0
      %5900 = vdwg.mxu0
      %5901 = vmatpush.bf16.msra.mxu0 %v5647
      %5902 = vmatpush.bf16.msra.mxu0 %v5644
      %5903 = vmatpush.bf16.msra.mxu0 %v5641
      %5904 = vmatpush.bf16.msra.mxu0 %v5638
      %5905 = vmatpush.bf16.msra.mxu0 %v5635
      %5906 = vmatpush.bf16.msra.mxu0 %v5632
      %5907 = vmatpush.bf16.msra.mxu0 %v5629
      %5908 = vmatpush.bf16.msra.mxu0 %v5626
      %5909 = vmatmul.bf16.gmra.mxu0 %v5176
      %v5910 = vpop.f32.mrf.mxu0
      %v5911 = vadd.f32 %v5898, %v5910
      %v5912 = vpop.f32.mrf.mxu0
      %5913 = vdwg.mxu0
      %5914 = vmatpush.bf16.msra.mxu0 %v5671
      %5915 = vmatpush.bf16.msra.mxu0 %v5668
      %5916 = vmatpush.bf16.msra.mxu0 %v5665
      %5917 = vmatpush.bf16.msra.mxu0 %v5662
      %5918 = vmatpush.bf16.msra.mxu0 %v5659
      %5919 = vmatpush.bf16.msra.mxu0 %v5656
      %5920 = vmatpush.bf16.msra.mxu0 %v5653
      %5921 = vmatpush.bf16.msra.mxu0 %v5650
      %5922 = vmatmul.bf16.gmra.mxu0 %v5177
      %v5923 = vpop.f32.mrf.mxu0
      %v5924 = vadd.f32 %v5911, %v5923
      %v5925 = vpop.f32.mrf.mxu0
      %5926 = vdwg.mxu0
      %5927 = vmatpush.bf16.msra.mxu0 0
      %5928 = vmatpush.bf16.msra.mxu0 0
      %5929 = vmatpush.bf16.msra.mxu0 %v5689
      %5930 = vmatpush.bf16.msra.mxu0 %v5686
      %5931 = vmatpush.bf16.msra.mxu0 %v5683
      %5932 = vmatpush.bf16.msra.mxu0 %v5680
      %5933 = vmatpush.bf16.msra.mxu0 %v5677
      %5934 = vmatpush.bf16.msra.mxu0 %v5674
      %5935 = vmatmul.bf16.gmra.mxu0 %v5782
      %v5936 = vpop.f32.mrf.mxu0
      %v5937 = vadd.f32 %v5924, %v5936
      %v5938 = vpop.f32.mrf.mxu0
      %5939 = vdwg.mxu0
      %v6060 = vunpack.c.l.b16 %v4998
      %v6061 = vunpack.c.h.b16 %v4998
      %v6062 = vunpack.c.l.b16 %v4999
      %v6063 = vunpack.c.l.b16 %v5000
      %v6064 = vunpack.c.h.b16 %v5000
      %v6065 = vunpack.c.l.b16 %v5001
      %v6066 = vunpack.c.l.b16 %v5002
      %v6067 = vunpack.c.h.b16 %v5002
      %v6068 = vunpack.c.l.b16 %v5003
      %v6069 = vunpack.c.l.b16 %v5004
      %v6070 = vunpack.c.h.b16 %v5004
      %v6071 = vunpack.c.l.b16 %v5005
      %v6072 = vunpack.c.l.b16 %v5006
      %v6073 = vunpack.c.h.b16 %v5006
      %v6074 = vunpack.c.l.b16 %v5007
      %v6075 = vunpack.c.l.b16 %v5008
      %v6076 = vunpack.c.h.b16 %v5008
      %v6077 = vunpack.c.l.b16 %v5009
      %v6078 = vunpack.c.l.b16 %v5010
      %v6079 = vunpack.c.h.b16 %v5010
      %v6080 = vunpack.c.l.b16 %v5011
      %v6081 = vunpack.c.l.b16 %v5012
      %v6082 = vunpack.c.h.b16 %v5012
      %v6083 = vunpack.c.l.b16 %v5013
      %v6084 = vunpack.c.l.b16 %v5014
      %v6085 = vunpack.c.h.b16 %v5014
      %v6086 = vunpack.c.l.b16 %v5015
      %v6087 = vunpack.c.l.b16 %v5016
      %v6088 = vunpack.c.h.b16 %v5016
      %v6089 = vunpack.c.l.b16 %v5017
      %v6090 = vunpack.c.l.b16 %v5018
      %v6091 = vunpack.c.h.b16 %v5018
      %v6092 = vunpack.c.l.b16 %v5019
      %v6093 = vunpack.c.l.b16 %v5020
      %v6094 = vunpack.c.h.b16 %v5020
      %v6095 = vunpack.c.l.b16 %v5021
      %v6096 = vunpack.c.l.b16 %v5022
      %v6097 = vunpack.c.h.b16 %v5022
      %v6098 = vunpack.c.l.b16 %v5023
      %v6099 = vunpack.c.l.b16 %v5024
      %v6100 = vunpack.c.h.b16 %v5024
      %v6101 = vunpack.c.l.b16 %v5025
      %v6102 = vunpack.c.l.b16 %v5026
      %v6103 = vunpack.c.h.b16 %v5026
      %v6104 = vunpack.c.l.b16 %v5027
      %v6105 = vunpack.c.l.b16 %v5028
      %v6106 = vunpack.c.h.b16 %v5028
      %v6107 = vunpack.c.l.b16 %v5029
      %v6108 = vunpack.c.l.b16 %v5030
      %v6109 = vunpack.c.h.b16 %v5030
      %v6110 = vunpack.c.l.b16 %v5031
      %v6111 = vunpack.c.l.b16 %v5032
      %v6112 = vunpack.c.h.b16 %v5032
      %v6113 = vunpack.c.l.b16 %v5033
      %v6114 = vunpack.c.l.b16 %v5034
      %v6115 = vunpack.c.h.b16 %v5034
      %v6116 = vunpack.c.l.b16 %v5035
      %v6117 = vunpack.c.l.b16 %v5036
      %v6118 = vunpack.c.h.b16 %v5036
      %v6119 = vunpack.c.l.b16 %v5037
      %v6120 = vunpack.c.l.b16 %v5038
      %v6121 = vunpack.c.h.b16 %v5038
      %v6122 = vunpack.c.l.b16 %v5039
      %v6123 = vunpack.c.l.b16 %v5040
      %v6124 = vunpack.c.h.b16 %v5040
      %v6125 = vunpack.c.l.b16 %v5041
      %v6126 = vunpack.c.l.b16 %v5042
      %v6127 = vunpack.c.h.b16 %v5042
      %v6128 = vunpack.c.l.b16 %v5043
      %v6129 = vunpack.c.l.b16 %v5044
      %v6130 = vunpack.c.h.b16 %v5044
      %v6131 = vunpack.c.l.b16 %v5045
      %v6132 = vunpack.c.l.b16 %v5046
      %v6133 = vunpack.c.h.b16 %v5046
      %v6134 = vunpack.c.l.b16 %v5047
      %v6135 = vunpack.c.l.b16 %v5048
      %v6136 = vunpack.c.h.b16 %v5048
      %v6137 = vunpack.c.l.b16 %v5049
      %v6138 = vunpack.c.l.b16 %v5050
      %v6139 = vunpack.c.h.b16 %v5050
      %v6140 = vunpack.c.l.b16 %v5051
      %v6141 = vunpack.c.l.b16 %v5052
      %v6142 = vunpack.c.h.b16 %v5052
      %v6143 = vunpack.c.l.b16 %v5053
      %v6144 = vunpack.c.l.b16 %v5054
      %v6145 = vunpack.c.h.b16 %v5054
      %v6146 = vunpack.c.l.b16 %v5055
      %v6147 = vunpack.c.l.b16 %v5056
      %v6148 = vunpack.c.h.b16 %v5056
      %v6149 = vunpack.c.l.b16 %v5057
      %v6150 = vunpack.c.l.b16 %v5058
      %v6151 = vunpack.c.h.b16 %v5058
      %v6152 = vunpack.c.l.b16 %v5059
      %v6153 = vunpack.c.l.b16 %v5060
      %v6154 = vunpack.c.h.b16 %v5060
      %v6155 = vunpack.c.l.b16 %v5061
      %v6156 = vunpack.c.l.b16 %v5062
      %v6157 = vunpack.c.h.b16 %v5062
      %v6158 = vunpack.c.l.b16 %v5063
      %v6159 = vunpack.c.l.b16 %v5064
      %v6160 = vunpack.c.h.b16 %v5064
      %v6161 = vunpack.c.l.b16 %v5065
      %v6162 = vunpack.c.l.b16 %v5066
      %v6163 = vunpack.c.h.b16 %v5066
      %v6164 = vunpack.c.l.b16 %v5067
      %v6165 = vunpack.c.l.b16 %v5068
      %v6166 = vunpack.c.h.b16 %v5068
      %v6167 = vunpack.c.l.b16 %v5069
      %v6168 = vunpack.c.l.b16 %v5070
      %v6169 = vunpack.c.h.b16 %v5070
      %v6170 = vunpack.c.l.b16 %v5071
      %v6171 = vunpack.c.l.b16 %v5072
      %v6172 = vunpack.c.h.b16 %v5072
      %v6173 = vunpack.c.l.b16 %v5073
      %v6174 = vunpack.c.l.b16 %v5074
      %v6175 = vunpack.c.h.b16 %v5074
      %v6176 = vunpack.c.l.b16 %v5075
      %v6177 = vunpack.c.l.b16 %v5076
      %v6178 = vunpack.c.h.b16 %v5076
      %v6179 = vunpack.c.l.b16 %v5077
      %v6180 = vunpack.c.l.b16 %v5078
      %v6181 = vunpack.c.h.b16 %v5078
      %v6182 = vunpack.c.l.b16 %v5079
      %v6183 = vunpack.c.l.b16 %v5080
      %v6184 = vunpack.c.h.b16 %v5080
      %v6185 = vunpack.c.l.b16 %v5081
      %v6186 = vunpack.c.l.b16 %v5082
      %v6187 = vunpack.c.h.b16 %v5082
      %v6188 = vunpack.c.l.b16 %v5083
      %v6189 = vunpack.c.l.b16 %v5084
      %v6190 = vunpack.c.h.b16 %v5084
      %v6191 = vunpack.c.l.b16 %v5085
      %v6192 = vunpack.c.l.b16 %v5086
      %v6193 = vunpack.c.h.b16 %v5086
      %v6194 = vunpack.c.l.b16 %v5087
      %v6195 = vunpack.c.l.b16 %v5088
      %v6196 = vunpack.c.h.b16 %v5088
      %v6197 = vunpack.c.l.b16 %v5089
      %v6198 = vunpack.c.l.b16 %v5090
      %v6199 = vunpack.c.h.b16 %v5090
      %v6200 = vunpack.c.l.b16 %v5091
      %v6201 = vunpack.c.l.b16 %v5092
      %v6202 = vunpack.c.h.b16 %v5092
      %v6203 = vunpack.c.l.b16 %v5093
      %v6204 = vunpack.c.l.b16 %v5094
      %v6205 = vunpack.c.h.b16 %v5094
      %v6206 = vunpack.c.l.b16 %v5095
      %v6207 = vunpack.c.l.b16 %v5096
      %v6208 = vunpack.c.h.b16 %v5096
      %v6209 = vunpack.c.l.b16 %v5097
      %v6210 = vunpack.c.l.b16 %v5098
      %v6211 = vunpack.c.h.b16 %v5098
      %v6212 = vunpack.c.l.b16 %v5099
      %v6213 = vunpack.c.l.b16 %v5100
      %v6214 = vunpack.c.h.b16 %v5100
      %v6215 = vunpack.c.l.b16 %v5101
      %v6216 = vunpack.c.l.b16 %v5102
      %v6217 = vunpack.c.h.b16 %v5102
      %v6218 = vunpack.c.l.b16 %v5103
      %v6219 = vunpack.c.l.b16 %v5104
      %v6220 = vunpack.c.h.b16 %v5104
      %v6221 = vunpack.c.l.b16 %v5105
      %v6222 = vunpack.c.l.b16 %v5106
      %v6223 = vunpack.c.h.b16 %v5106
      %v6224 = vunpack.c.l.b16 %v5107
      %v6225 = vunpack.c.l.b16 %v5108
      %v6226 = vunpack.c.h.b16 %v5108
      %v6227 = vunpack.c.l.b16 %v5109
      %v6228 = vunpack.c.l.b16 %v5110
      %v6229 = vunpack.c.h.b16 %v5110
      %v6230 = vunpack.c.l.b16 %v5111
      %v6231 = vunpack.c.l.b16 %v5112
      %v6232 = vunpack.c.h.b16 %v5112
      %v6233 = vunpack.c.l.b16 %v5113
      %v6234 = vunpack.c.l.b16 %v5114
      %v6235 = vunpack.c.h.b16 %v5114
      %v6236 = vunpack.c.l.b16 %v5115
      %v6237 = vunpack.c.l.b16 %v5116
      %v6238 = vunpack.c.h.b16 %v5116
      %v6239 = vunpack.c.l.b16 %v5117
      %v6240 = vpack.c.b16 %v6063, %v6060
      %v6241 = vpack.c.b16 %v6064, %v6061
      %v6242 = vpack.c.b16 %v6065, %v6062
      %v6243 = vpack.c.b16 %v6069, %v6066
      %v6244 = vpack.c.b16 %v6070, %v6067
      %v6245 = vpack.c.b16 %v6071, %v6068
      %v6246 = vpack.c.b16 %v6075, %v6072
      %v6247 = vpack.c.b16 %v6076, %v6073
      %v6248 = vpack.c.b16 %v6077, %v6074
      %v6249 = vpack.c.b16 %v6081, %v6078
      %v6250 = vpack.c.b16 %v6082, %v6079
      %v6251 = vpack.c.b16 %v6083, %v6080
      %v6252 = vpack.c.b16 %v6087, %v6084
      %v6253 = vpack.c.b16 %v6088, %v6085
      %v6254 = vpack.c.b16 %v6089, %v6086
      %v6255 = vpack.c.b16 %v6093, %v6090
      %v6256 = vpack.c.b16 %v6094, %v6091
      %v6257 = vpack.c.b16 %v6095, %v6092
      %v6258 = vpack.c.b16 %v6099, %v6096
      %v6259 = vpack.c.b16 %v6100, %v6097
      %v6260 = vpack.c.b16 %v6101, %v6098
      %v6261 = vpack.c.b16 %v6105, %v6102
      %v6262 = vpack.c.b16 %v6106, %v6103
      %v6263 = vpack.c.b16 %v6107, %v6104
      %v6264 = vpack.c.b16 %v6111, %v6108
      %v6265 = vpack.c.b16 %v6112, %v6109
      %v6266 = vpack.c.b16 %v6113, %v6110
      %v6267 = vpack.c.b16 %v6117, %v6114
      %v6268 = vpack.c.b16 %v6118, %v6115
      %v6269 = vpack.c.b16 %v6119, %v6116
      %v6270 = vpack.c.b16 %v6123, %v6120
      %v6271 = vpack.c.b16 %v6124, %v6121
      %v6272 = vpack.c.b16 %v6125, %v6122
      %v6273 = vpack.c.b16 %v6129, %v6126
      %v6274 = vpack.c.b16 %v6130, %v6127
      %v6275 = vpack.c.b16 %v6131, %v6128
      %v6276 = vpack.c.b16 %v6135, %v6132
      %v6277 = vpack.c.b16 %v6136, %v6133
      %v6278 = vpack.c.b16 %v6137, %v6134
      %v6279 = vpack.c.b16 %v6141, %v6138
      %v6280 = vpack.c.b16 %v6142, %v6139
      %v6281 = vpack.c.b16 %v6143, %v6140
      %v6282 = vpack.c.b16 %v6147, %v6144
      %v6283 = vpack.c.b16 %v6148, %v6145
      %v6284 = vpack.c.b16 %v6149, %v6146
      %v6285 = vpack.c.b16 %v6153, %v6150
      %v6286 = vpack.c.b16 %v6154, %v6151
      %v6287 = vpack.c.b16 %v6155, %v6152
      %v6288 = vpack.c.b16 %v6159, %v6156
      %v6289 = vpack.c.b16 %v6160, %v6157
      %v6290 = vpack.c.b16 %v6161, %v6158
      %v6291 = vpack.c.b16 %v6165, %v6162
      %v6292 = vpack.c.b16 %v6166, %v6163
      %v6293 = vpack.c.b16 %v6167, %v6164
      %v6294 = vpack.c.b16 %v6171, %v6168
      %v6295 = vpack.c.b16 %v6172, %v6169
      %v6296 = vpack.c.b16 %v6173, %v6170
      %v6297 = vpack.c.b16 %v6177, %v6174
      %v6298 = vpack.c.b16 %v6178, %v6175
      %v6299 = vpack.c.b16 %v6179, %v6176
      %v6300 = vpack.c.b16 %v6183, %v6180
      %v6301 = vpack.c.b16 %v6184, %v6181
      %v6302 = vpack.c.b16 %v6185, %v6182
      %v6303 = vpack.c.b16 %v6189, %v6186
      %v6304 = vpack.c.b16 %v6190, %v6187
      %v6305 = vpack.c.b16 %v6191, %v6188
      %v6306 = vpack.c.b16 %v6195, %v6192
      %v6307 = vpack.c.b16 %v6196, %v6193
      %v6308 = vpack.c.b16 %v6197, %v6194
      %v6309 = vpack.c.b16 %v6201, %v6198
      %v6310 = vpack.c.b16 %v6202, %v6199
      %v6311 = vpack.c.b16 %v6203, %v6200
      %v6312 = vpack.c.b16 %v6207, %v6204
      %v6313 = vpack.c.b16 %v6208, %v6205
      %v6314 = vpack.c.b16 %v6209, %v6206
      %v6315 = vpack.c.b16 %v6213, %v6210
      %v6316 = vpack.c.b16 %v6214, %v6211
      %v6317 = vpack.c.b16 %v6215, %v6212
      %v6318 = vpack.c.b16 %v6219, %v6216
      %v6319 = vpack.c.b16 %v6220, %v6217
      %v6320 = vpack.c.b16 %v6221, %v6218
      %v6321 = vpack.c.b16 %v6225, %v6222
      %v6322 = vpack.c.b16 %v6226, %v6223
      %v6323 = vpack.c.b16 %v6227, %v6224
      %v6324 = vpack.c.b16 %v6231, %v6228
      %v6325 = vpack.c.b16 %v6232, %v6229
      %v6326 = vpack.c.b16 %v6233, %v6230
      %v6327 = vpack.c.b16 %v6237, %v6234
      %v6328 = vpack.c.b16 %v6238, %v6235
      %v6329 = vpack.c.b16 %v6239, %v6236
      %v6421 = vsel %vm5780, %v4997, 0
      %6423 = vmatpush.bf16.msra.mxu0 %v6261
      %6424 = vmatpush.bf16.msra.mxu0 %v6258
      %6425 = vmatpush.bf16.msra.mxu0 %v6255
      %6426 = vmatpush.bf16.msra.mxu0 %v6252
      %6427 = vmatpush.bf16.msra.mxu0 %v6249
      %6428 = vmatpush.bf16.msra.mxu0 %v6246
      %6429 = vmatpush.bf16.msra.mxu0 %v6243
      %6430 = vmatpush.bf16.msra.mxu0 %v6240
      %6431 = vmatmul.bf16.gmra.mxu0 %v4994
      %v6432 = vpop.f32.mrf.mxu0
      %v6433 = vadd.f32 %v5833, %v6432
      %v6434 = vpop.f32.mrf.mxu0
      %6435 = vdwg.mxu0
      %6436 = vmatpush.bf16.msra.mxu0 %v6285
      %6437 = vmatpush.bf16.msra.mxu0 %v6282
      %6438 = vmatpush.bf16.msra.mxu0 %v6279
      %6439 = vmatpush.bf16.msra.mxu0 %v6276
      %6440 = vmatpush.bf16.msra.mxu0 %v6273
      %6441 = vmatpush.bf16.msra.mxu0 %v6270
      %6442 = vmatpush.bf16.msra.mxu0 %v6267
      %6443 = vmatpush.bf16.msra.mxu0 %v6264
      %6444 = vmatmul.bf16.gmra.mxu0 %v4995
      %v6445 = vpop.f32.mrf.mxu0
      %v6446 = vadd.f32 %v6433, %v6445
      %v6447 = vpop.f32.mrf.mxu0
      %6448 = vdwg.mxu0
      %6449 = vmatpush.bf16.msra.mxu0 %v6309
      %6450 = vmatpush.bf16.msra.mxu0 %v6306
      %6451 = vmatpush.bf16.msra.mxu0 %v6303
      %6452 = vmatpush.bf16.msra.mxu0 %v6300
      %6453 = vmatpush.bf16.msra.mxu0 %v6297
      %6454 = vmatpush.bf16.msra.mxu0 %v6294
      %6455 = vmatpush.bf16.msra.mxu0 %v6291
      %6456 = vmatpush.bf16.msra.mxu0 %v6288
      %6457 = vmatmul.bf16.gmra.mxu0 %v4996
      %v6458 = vpop.f32.mrf.mxu0
      %v6459 = vadd.f32 %v6446, %v6458
      %v6460 = vpop.f32.mrf.mxu0
      %6461 = vdwg.mxu0
      %6462 = vmatpush.bf16.msra.mxu0 0
      %6463 = vmatpush.bf16.msra.mxu0 0
      %6464 = vmatpush.bf16.msra.mxu0 %v6327
      %6465 = vmatpush.bf16.msra.mxu0 %v6324
      %6466 = vmatpush.bf16.msra.mxu0 %v6321
      %6467 = vmatpush.bf16.msra.mxu0 %v6318
      %6468 = vmatpush.bf16.msra.mxu0 %v6315
      %6469 = vmatpush.bf16.msra.mxu0 %v6312
      %6470 = vmatmul.bf16.gmra.mxu0 %v6421
      %v6471 = vpop.f32.mrf.mxu0
      %v6472 = vadd.f32 %v6459, %v6471
      %v6473 = vpop.f32.mrf.mxu0
      %6474 = vdwg.mxu0
      %6475 = vmatpush.bf16.msra.mxu0 %v6262
      %6476 = vmatpush.bf16.msra.mxu0 %v6259
      %6477 = vmatpush.bf16.msra.mxu0 %v6256
      %6478 = vmatpush.bf16.msra.mxu0 %v6253
      %6479 = vmatpush.bf16.msra.mxu0 %v6250
      %6480 = vmatpush.bf16.msra.mxu0 %v6247
      %6481 = vmatpush.bf16.msra.mxu0 %v6244
      %6482 = vmatpush.bf16.msra.mxu0 %v6241
      %6483 = vmatmul.bf16.gmra.mxu0 %v4994
      %v6484 = vpop.f32.mrf.mxu0
      %v6485 = vadd.f32 %v5885, %v6484
      %v6486 = vpop.f32.mrf.mxu0
      %6487 = vdwg.mxu0
      %6488 = vmatpush.bf16.msra.mxu0 %v6286
      %6489 = vmatpush.bf16.msra.mxu0 %v6283
      %6490 = vmatpush.bf16.msra.mxu0 %v6280
      %6491 = vmatpush.bf16.msra.mxu0 %v6277
      %6492 = vmatpush.bf16.msra.mxu0 %v6274
      %6493 = vmatpush.bf16.msra.mxu0 %v6271
      %6494 = vmatpush.bf16.msra.mxu0 %v6268
      %6495 = vmatpush.bf16.msra.mxu0 %v6265
      %6496 = vmatmul.bf16.gmra.mxu0 %v4995
      %v6497 = vpop.f32.mrf.mxu0
      %v6498 = vadd.f32 %v6485, %v6497
      %v6499 = vpop.f32.mrf.mxu0
      %6500 = vdwg.mxu0
      %6501 = vmatpush.bf16.msra.mxu0 %v6310
      %6502 = vmatpush.bf16.msra.mxu0 %v6307
      %6503 = vmatpush.bf16.msra.mxu0 %v6304
      %6504 = vmatpush.bf16.msra.mxu0 %v6301
      %6505 = vmatpush.bf16.msra.mxu0 %v6298
      %6506 = vmatpush.bf16.msra.mxu0 %v6295
      %6507 = vmatpush.bf16.msra.mxu0 %v6292
      %6508 = vmatpush.bf16.msra.mxu0 %v6289
      %6509 = vmatmul.bf16.gmra.mxu0 %v4996
      %v6510 = vpop.f32.mrf.mxu0
      %v6511 = vadd.f32 %v6498, %v6510
      %v6512 = vpop.f32.mrf.mxu0
      %6513 = vdwg.mxu0
      %6514 = vmatpush.bf16.msra.mxu0 0
      %6515 = vmatpush.bf16.msra.mxu0 0
      %6516 = vmatpush.bf16.msra.mxu0 %v6328
      %6517 = vmatpush.bf16.msra.mxu0 %v6325
      %6518 = vmatpush.bf16.msra.mxu0 %v6322
      %6519 = vmatpush.bf16.msra.mxu0 %v6319
      %6520 = vmatpush.bf16.msra.mxu0 %v6316
      %6521 = vmatpush.bf16.msra.mxu0 %v6313
      %6522 = vmatmul.bf16.gmra.mxu0 %v6421
      %v6523 = vpop.f32.mrf.mxu0
      %v6524 = vadd.f32 %v6511, %v6523
      %v6525 = vpop.f32.mrf.mxu0
      %6526 = vdwg.mxu0
      %6527 = vmatpush.bf16.msra.mxu0 %v6263
      %6528 = vmatpush.bf16.msra.mxu0 %v6260
      %6529 = vmatpush.bf16.msra.mxu0 %v6257
      %6530 = vmatpush.bf16.msra.mxu0 %v6254
      %6531 = vmatpush.bf16.msra.mxu0 %v6251
      %6532 = vmatpush.bf16.msra.mxu0 %v6248
      %6533 = vmatpush.bf16.msra.mxu0 %v6245
      %6534 = vmatpush.bf16.msra.mxu0 %v6242
      %6535 = vmatmul.bf16.gmra.mxu0 %v4994
      %v6536 = vpop.f32.mrf.mxu0
      %v6537 = vadd.f32 %v5937, %v6536
      %v6538 = vpop.f32.mrf.mxu0
      %6539 = vdwg.mxu0
      %6540 = vmatpush.bf16.msra.mxu0 %v6287
      %6541 = vmatpush.bf16.msra.mxu0 %v6284
      %6542 = vmatpush.bf16.msra.mxu0 %v6281
      %6543 = vmatpush.bf16.msra.mxu0 %v6278
      %6544 = vmatpush.bf16.msra.mxu0 %v6275
      %6545 = vmatpush.bf16.msra.mxu0 %v6272
      %6546 = vmatpush.bf16.msra.mxu0 %v6269
      %6547 = vmatpush.bf16.msra.mxu0 %v6266
      %6548 = vmatmul.bf16.gmra.mxu0 %v4995
      %v6549 = vpop.f32.mrf.mxu0
      %v6550 = vadd.f32 %v6537, %v6549
      %v6551 = vpop.f32.mrf.mxu0
      %6552 = vdwg.mxu0
      %6553 = vmatpush.bf16.msra.mxu0 %v6311
      %6554 = vmatpush.bf16.msra.mxu0 %v6308
      %6555 = vmatpush.bf16.msra.mxu0 %v6305
      %6556 = vmatpush.bf16.msra.mxu0 %v6302
      %6557 = vmatpush.bf16.msra.mxu0 %v6299
      %6558 = vmatpush.bf16.msra.mxu0 %v6296
      %6559 = vmatpush.bf16.msra.mxu0 %v6293
      %6560 = vmatpush.bf16.msra.mxu0 %v6290
      %6561 = vmatmul.bf16.gmra.mxu0 %v4996
      %v6562 = vpop.f32.mrf.mxu0
      %v6563 = vadd.f32 %v6550, %v6562
      %v6564 = vpop.f32.mrf.mxu0
      %6565 = vdwg.mxu0
      %6566 = vmatpush.bf16.msra.mxu0 0
      %6567 = vmatpush.bf16.msra.mxu0 0
      %6568 = vmatpush.bf16.msra.mxu0 %v6329
      %6569 = vmatpush.bf16.msra.mxu0 %v6326
      %6570 = vmatpush.bf16.msra.mxu0 %v6323
      %6571 = vmatpush.bf16.msra.mxu0 %v6320
      %6572 = vmatpush.bf16.msra.mxu0 %v6317
      %6573 = vmatpush.bf16.msra.mxu0 %v6314
      %6574 = vmatmul.bf16.gmra.mxu0 %v6421
      %v6575 = vpop.f32.mrf.mxu0
      %v6576 = vadd.f32 %v6563, %v6575
      %v6577 = vpop.f32.mrf.mxu0
      %6578 = vdwg.mxu0
      %s6579 = scalar_lea.vmem %s4, 8
      %v6580 = vld [vmem:[%s6579] sm:$0x7]
      %v6582 = vsel %vm4922, %v6580, 0
      %6584 = vmatpush.bf16.msra.mxu0 0
      %6585 = vmatpush.bf16.msra.mxu0 0
      %6586 = vmatpush.bf16.msra.mxu0 0
      %6587 = vmatpush.bf16.msra.mxu0 0
      %6588 = vmatpush.bf16.msra.mxu0 0
      %6589 = vmatpush.bf16.msra.mxu0 0
      %6590 = vmatpush.bf16.msra.mxu0 0
      %6591 = vmatpush.bf16.msra.mxu0 %v4931
      %6592 = vmatmul.bf16.gmra.mxu0 %v6582
      %v6593 = vpop.f32.mrf.mxu0
      %v6594 = vadd.f32 0.0, %v6593
      %v6595 = vpop.f32.mrf.mxu0
      %6596 = vdwg.mxu0
      %6597 = vmatpush.bf16.msra.mxu0 0
      %6598 = vmatpush.bf16.msra.mxu0 0
      %6599 = vmatpush.bf16.msra.mxu0 0
      %6600 = vmatpush.bf16.msra.mxu0 0
      %6601 = vmatpush.bf16.msra.mxu0 0
      %6602 = vmatpush.bf16.msra.mxu0 0
      %6603 = vmatpush.bf16.msra.mxu0 0
      %6604 = vmatpush.bf16.msra.mxu0 %v4934
      %6605 = vmatmul.bf16.gmra.mxu0 %v6582
      %v6606 = vpop.f32.mrf.mxu0
      %v6607 = vadd.f32 0.0, %v6606
      %v6608 = vpop.f32.mrf.mxu0
      %6609 = vdwg.mxu0
      %6610 = vmatpush.bf16.msra.mxu0 0
      %6611 = vmatpush.bf16.msra.mxu0 0
      %6612 = vmatpush.bf16.msra.mxu0 0
      %6613 = vmatpush.bf16.msra.mxu0 0
      %6614 = vmatpush.bf16.msra.mxu0 0
      %6615 = vmatpush.bf16.msra.mxu0 0
      %6616 = vmatpush.bf16.msra.mxu0 0
      %6617 = vmatpush.bf16.msra.mxu0 %v4937
      %6618 = vmatmul.bf16.gmra.mxu0 %v6582
      %v6619 = vpop.f32.mrf.mxu0
      %v6620 = vadd.f32 0.0, %v6619
      %v6621 = vpop.f32.mrf.mxu0
      %6622 = vdwg.mxu0
      %6623 = vmatpush.bf16.msra.mxu0 0
      %6624 = vmatpush.bf16.msra.mxu0 0
      %6625 = vmatpush.bf16.msra.mxu0 0
      %6626 = vmatpush.bf16.msra.mxu0 0
      %6627 = vmatpush.bf16.msra.mxu0 0
      %6628 = vmatpush.bf16.msra.mxu0 0
      %6629 = vmatpush.bf16.msra.mxu0 0
      %6630 = vmatpush.bf16.msra.mxu0 %v4940
      %6631 = vmatmul.bf16.gmra.mxu0 %v6582
      %v6632 = vpop.f32.mrf.mxu0
      %v6633 = vadd.f32 0.0, %v6632
      %v6634 = vpop.f32.mrf.mxu0
      %6635 = vdwg.mxu0
      %v6636 = vpack.c.bf16 %v6594, %v6594
      %v6637 = vpack.c.bf16 %v6607, %v6607
      %v6638 = vpack.c.bf16 %v6620, %v6620
      %v6639 = vpack.c.bf16 %v6633, %v6633
      %s6640 = scalar_lea.vmem %s5, 1440
      %v6641 = vld [vmem:[%s6640] sm:$0xff]
      %v6642 = vld [vmem:[%s6640 + $0x8] sm:$0xf]
      %v6643 = vld [vmem:[%s6640 + $0xc] sm:$0xff]
      %v6644 = vld [vmem:[%s6640 + $0x14] sm:$0xf]
      %v6645 = vld [vmem:[%s6640 + $0x18] sm:$0xff]
      %v6646 = vld [vmem:[%s6640 + $0x20] sm:$0xf]
      %v6647 = vld [vmem:[%s6640 + $0x24] sm:$0xff]
      %v6648 = vld [vmem:[%s6640 + $0x2c] sm:$0xf]
      %v6649 = vld [vmem:[%s6640 + $0x30] sm:$0xff]
      %v6650 = vld [vmem:[%s6640 + $0x38] sm:$0xf]
      %v6651 = vld [vmem:[%s6640 + $0x3c] sm:$0xff]
      %v6652 = vld [vmem:[%s6640 + $0x44] sm:$0xf]
      %v6653 = vld [vmem:[%s6640 + $0x48] sm:$0xff]
      %v6654 = vld [vmem:[%s6640 + $0x50] sm:$0xf]
      %v6655 = vld [vmem:[%s6640 + $0x54] sm:$0xff]
      %v6656 = vld [vmem:[%s6640 + $0x5c] sm:$0xf]
      %v6657 = vld [vmem:[%s6640 + $0x60] sm:$0xff]
      %v6658 = vld [vmem:[%s6640 + $0x68] sm:$0xf]
      %v6659 = vld [vmem:[%s6640 + $0x6c] sm:$0xff]
      %v6660 = vld [vmem:[%s6640 + $0x74] sm:$0xf]
      %v6661 = vld [vmem:[%s6640 + $0x78] sm:$0xff]
      %v6662 = vld [vmem:[%s6640 + $0x80] sm:$0xf]
      %v6663 = vld [vmem:[%s6640 + $0x84] sm:$0xff]
      %v6664 = vld [vmem:[%s6640 + $0x8c] sm:$0xf]
      %v6665 = vld [vmem:[%s6640 + $0x90] sm:$0xff]
      %v6666 = vld [vmem:[%s6640 + $0x98] sm:$0xf]
      %v6667 = vld [vmem:[%s6640 + $0x9c] sm:$0xff]
      %v6668 = vld [vmem:[%s6640 + $0xa4] sm:$0xf]
      %v6669 = vld [vmem:[%s6640 + $0xa8] sm:$0xff]
      %v6670 = vld [vmem:[%s6640 + $0xb0] sm:$0xf]
      %v6671 = vld [vmem:[%s6640 + $0xb4] sm:$0xff]
      %v6672 = vld [vmem:[%s6640 + $0xbc] sm:$0xf]
      %v6673 = vld [vmem:[%s6640 + $0xc0] sm:$0xff]
      %v6674 = vld [vmem:[%s6640 + $0xc8] sm:$0xf]
      %v6675 = vld [vmem:[%s6640 + $0xcc] sm:$0xff]
      %v6676 = vld [vmem:[%s6640 + $0xd4] sm:$0xf]
      %v6677 = vld [vmem:[%s6640 + $0xd8] sm:$0xff]
      %v6678 = vld [vmem:[%s6640 + $0xe0] sm:$0xf]
      %v6679 = vld [vmem:[%s6640 + $0xe4] sm:$0xff]
      %v6680 = vld [vmem:[%s6640 + $0xec] sm:$0xf]
      %v6681 = vld [vmem:[%s6640 + $0xf0] sm:$0xff]
      %v6682 = vld [vmem:[%s6640 + $0xf8] sm:$0xf]
      %v6683 = vld [vmem:[%s6640 + $0xfc] sm:$0xff]
      %v6684 = vld [vmem:[%s6640 + $0x104] sm:$0xf]
      %v6685 = vld [vmem:[%s6640 + $0x108] sm:$0xff]
      %v6686 = vld [vmem:[%s6640 + $0x110] sm:$0xf]
      %v6687 = vld [vmem:[%s6640 + $0x114] sm:$0xff]
      %v6688 = vld [vmem:[%s6640 + $0x11c] sm:$0xf]
      %v6689 = vld [vmem:[%s6640 + $0x120] sm:$0xff]
      %v6690 = vld [vmem:[%s6640 + $0x128] sm:$0xf]
      %v6691 = vld [vmem:[%s6640 + $0x12c] sm:$0xff]
      %v6692 = vld [vmem:[%s6640 + $0x134] sm:$0xf]
      %v6693 = vld [vmem:[%s6640 + $0x138] sm:$0xff]
      %v6694 = vld [vmem:[%s6640 + $0x140] sm:$0xf]
      %v6695 = vld [vmem:[%s6640 + $0x144] sm:$0xff]
      %v6696 = vld [vmem:[%s6640 + $0x14c] sm:$0xf]
      %v6697 = vld [vmem:[%s6640 + $0x150] sm:$0xff]
      %v6698 = vld [vmem:[%s6640 + $0x158] sm:$0xf]
      %v6699 = vld [vmem:[%s6640 + $0x15c] sm:$0xff]
      %v6700 = vld [vmem:[%s6640 + $0x164] sm:$0xf]
      %v6701 = vld [vmem:[%s6640 + $0x168] sm:$0xff]
      %v6702 = vld [vmem:[%s6640 + $0x170] sm:$0xf]
      %v6703 = vld [vmem:[%s6640 + $0x174] sm:$0xff]
      %v6704 = vld [vmem:[%s6640 + $0x17c] sm:$0xf]
      %v6705 = vld [vmem:[%s6640 + $0x180] sm:$0xff]
      %v6706 = vld [vmem:[%s6640 + $0x188] sm:$0xf]
      %v6707 = vld [vmem:[%s6640 + $0x18c] sm:$0xff]
      %v6708 = vld [vmem:[%s6640 + $0x194] sm:$0xf]
      %v6709 = vld [vmem:[%s6640 + $0x198] sm:$0xff]
      %v6710 = vld [vmem:[%s6640 + $0x1a0] sm:$0xf]
      %v6711 = vld [vmem:[%s6640 + $0x1a4] sm:$0xff]
      %v6712 = vld [vmem:[%s6640 + $0x1ac] sm:$0xf]
      %v6713 = vld [vmem:[%s6640 + $0x1b0] sm:$0xff]
      %v6714 = vld [vmem:[%s6640 + $0x1b8] sm:$0xf]
      %v6715 = vld [vmem:[%s6640 + $0x1bc] sm:$0xff]
      %v6716 = vld [vmem:[%s6640 + $0x1c4] sm:$0xf]
      %v6717 = vld [vmem:[%s6640 + $0x1c8] sm:$0xff]
      %v6718 = vld [vmem:[%s6640 + $0x1d0] sm:$0xf]
      %v6719 = vld [vmem:[%s6640 + $0x1d4] sm:$0xff]
      %v6720 = vld [vmem:[%s6640 + $0x1dc] sm:$0xf]
      %v6721 = vld [vmem:[%s6640 + $0x1e0] sm:$0xff]
      %v6722 = vld [vmem:[%s6640 + $0x1e8] sm:$0xf]
      %v6723 = vld [vmem:[%s6640 + $0x1ec] sm:$0xff]
      %v6724 = vld [vmem:[%s6640 + $0x1f4] sm:$0xf]
      %v6725 = vld [vmem:[%s6640 + $0x1f8] sm:$0xff]
      %v6726 = vld [vmem:[%s6640 + $0x200] sm:$0xf]
      %v6727 = vld [vmem:[%s6640 + $0x204] sm:$0xff]
      %v6728 = vld [vmem:[%s6640 + $0x20c] sm:$0xf]
      %v6729 = vld [vmem:[%s6640 + $0x210] sm:$0xff]
      %v6730 = vld [vmem:[%s6640 + $0x218] sm:$0xf]
      %v6731 = vld [vmem:[%s6640 + $0x21c] sm:$0xff]
      %v6732 = vld [vmem:[%s6640 + $0x224] sm:$0xf]
      %v6733 = vld [vmem:[%s6640 + $0x228] sm:$0xff]
      %v6734 = vld [vmem:[%s6640 + $0x230] sm:$0xf]
      %v6735 = vld [vmem:[%s6640 + $0x234] sm:$0xff]
      %v6736 = vld [vmem:[%s6640 + $0x23c] sm:$0xf]
      %v6737 = vld [vmem:[%s6640 + $0x240] sm:$0xff]
      %v6738 = vld [vmem:[%s6640 + $0x248] sm:$0xf]
      %v6739 = vld [vmem:[%s6640 + $0x24c] sm:$0xff]
      %v6740 = vld [vmem:[%s6640 + $0x254] sm:$0xf]
      %v6741 = vld [vmem:[%s6640 + $0x258] sm:$0xff]
      %v6742 = vld [vmem:[%s6640 + $0x260] sm:$0xf]
      %v6743 = vld [vmem:[%s6640 + $0x264] sm:$0xff]
      %v6744 = vld [vmem:[%s6640 + $0x26c] sm:$0xf]
      %v6745 = vld [vmem:[%s6640 + $0x270] sm:$0xff]
      %v6746 = vld [vmem:[%s6640 + $0x278] sm:$0xf]
      %v6747 = vld [vmem:[%s6640 + $0x27c] sm:$0xff]
      %v6748 = vld [vmem:[%s6640 + $0x284] sm:$0xf]
      %v6749 = vld [vmem:[%s6640 + $0x288] sm:$0xff]
      %v6750 = vld [vmem:[%s6640 + $0x290] sm:$0xf]
      %v6751 = vld [vmem:[%s6640 + $0x294] sm:$0xff]
      %v6752 = vld [vmem:[%s6640 + $0x29c] sm:$0xf]
      %v6753 = vld [vmem:[%s6640 + $0x2a0] sm:$0xff]
      %v6754 = vld [vmem:[%s6640 + $0x2a8] sm:$0xf]
      %v6755 = vld [vmem:[%s6640 + $0x2ac] sm:$0xff]
      %v6756 = vld [vmem:[%s6640 + $0x2b4] sm:$0xf]
      %v6757 = vld [vmem:[%s6640 + $0x2b8] sm:$0xff]
      %v6758 = vld [vmem:[%s6640 + $0x2c0] sm:$0xf]
      %v6759 = vld [vmem:[%s6640 + $0x2c4] sm:$0xff]
      %v6760 = vld [vmem:[%s6640 + $0x2cc] sm:$0xf]
      %v6881 = vunpack.c.l.b16 %v6641
      %v6882 = vunpack.c.h.b16 %v6641
      %v6883 = vunpack.c.l.b16 %v6642
      %v6884 = vunpack.c.l.b16 %v6643
      %v6885 = vunpack.c.h.b16 %v6643
      %v6886 = vunpack.c.l.b16 %v6644
      %v6887 = vunpack.c.l.b16 %v6645
      %v6888 = vunpack.c.h.b16 %v6645
      %v6889 = vunpack.c.l.b16 %v6646
      %v6890 = vunpack.c.l.b16 %v6647
      %v6891 = vunpack.c.h.b16 %v6647
      %v6892 = vunpack.c.l.b16 %v6648
      %v6893 = vunpack.c.l.b16 %v6649
      %v6894 = vunpack.c.h.b16 %v6649
      %v6895 = vunpack.c.l.b16 %v6650
      %v6896 = vunpack.c.l.b16 %v6651
      %v6897 = vunpack.c.h.b16 %v6651
      %v6898 = vunpack.c.l.b16 %v6652
      %v6899 = vunpack.c.l.b16 %v6653
      %v6900 = vunpack.c.h.b16 %v6653
      %v6901 = vunpack.c.l.b16 %v6654
      %v6902 = vunpack.c.l.b16 %v6655
      %v6903 = vunpack.c.h.b16 %v6655
      %v6904 = vunpack.c.l.b16 %v6656
      %v6905 = vunpack.c.l.b16 %v6657
      %v6906 = vunpack.c.h.b16 %v6657
      %v6907 = vunpack.c.l.b16 %v6658
      %v6908 = vunpack.c.l.b16 %v6659
      %v6909 = vunpack.c.h.b16 %v6659
      %v6910 = vunpack.c.l.b16 %v6660
      %v6911 = vunpack.c.l.b16 %v6661
      %v6912 = vunpack.c.h.b16 %v6661
      %v6913 = vunpack.c.l.b16 %v6662
      %v6914 = vunpack.c.l.b16 %v6663
      %v6915 = vunpack.c.h.b16 %v6663
      %v6916 = vunpack.c.l.b16 %v6664
      %v6917 = vunpack.c.l.b16 %v6665
      %v6918 = vunpack.c.h.b16 %v6665
      %v6919 = vunpack.c.l.b16 %v6666
      %v6920 = vunpack.c.l.b16 %v6667
      %v6921 = vunpack.c.h.b16 %v6667
      %v6922 = vunpack.c.l.b16 %v6668
      %v6923 = vunpack.c.l.b16 %v6669
      %v6924 = vunpack.c.h.b16 %v6669
      %v6925 = vunpack.c.l.b16 %v6670
      %v6926 = vunpack.c.l.b16 %v6671
      %v6927 = vunpack.c.h.b16 %v6671
      %v6928 = vunpack.c.l.b16 %v6672
      %v6929 = vunpack.c.l.b16 %v6673
      %v6930 = vunpack.c.h.b16 %v6673
      %v6931 = vunpack.c.l.b16 %v6674
      %v6932 = vunpack.c.l.b16 %v6675
      %v6933 = vunpack.c.h.b16 %v6675
      %v6934 = vunpack.c.l.b16 %v6676
      %v6935 = vunpack.c.l.b16 %v6677
      %v6936 = vunpack.c.h.b16 %v6677
      %v6937 = vunpack.c.l.b16 %v6678
      %v6938 = vunpack.c.l.b16 %v6679
      %v6939 = vunpack.c.h.b16 %v6679
      %v6940 = vunpack.c.l.b16 %v6680
      %v6941 = vunpack.c.l.b16 %v6681
      %v6942 = vunpack.c.h.b16 %v6681
      %v6943 = vunpack.c.l.b16 %v6682
      %v6944 = vunpack.c.l.b16 %v6683
      %v6945 = vunpack.c.h.b16 %v6683
      %v6946 = vunpack.c.l.b16 %v6684
      %v6947 = vunpack.c.l.b16 %v6685
      %v6948 = vunpack.c.h.b16 %v6685
      %v6949 = vunpack.c.l.b16 %v6686
      %v6950 = vunpack.c.l.b16 %v6687
      %v6951 = vunpack.c.h.b16 %v6687
      %v6952 = vunpack.c.l.b16 %v6688
      %v6953 = vunpack.c.l.b16 %v6689
      %v6954 = vunpack.c.h.b16 %v6689
      %v6955 = vunpack.c.l.b16 %v6690
      %v6956 = vunpack.c.l.b16 %v6691
      %v6957 = vunpack.c.h.b16 %v6691
      %v6958 = vunpack.c.l.b16 %v6692
      %v6959 = vunpack.c.l.b16 %v6693
      %v6960 = vunpack.c.h.b16 %v6693
      %v6961 = vunpack.c.l.b16 %v6694
      %v6962 = vunpack.c.l.b16 %v6695
      %v6963 = vunpack.c.h.b16 %v6695
      %v6964 = vunpack.c.l.b16 %v6696
      %v6965 = vunpack.c.l.b16 %v6697
      %v6966 = vunpack.c.h.b16 %v6697
      %v6967 = vunpack.c.l.b16 %v6698
      %v6968 = vunpack.c.l.b16 %v6699
      %v6969 = vunpack.c.h.b16 %v6699
      %v6970 = vunpack.c.l.b16 %v6700
      %v6971 = vunpack.c.l.b16 %v6701
      %v6972 = vunpack.c.h.b16 %v6701
      %v6973 = vunpack.c.l.b16 %v6702
      %v6974 = vunpack.c.l.b16 %v6703
      %v6975 = vunpack.c.h.b16 %v6703
      %v6976 = vunpack.c.l.b16 %v6704
      %v6977 = vunpack.c.l.b16 %v6705
      %v6978 = vunpack.c.h.b16 %v6705
      %v6979 = vunpack.c.l.b16 %v6706
      %v6980 = vunpack.c.l.b16 %v6707
      %v6981 = vunpack.c.h.b16 %v6707
      %v6982 = vunpack.c.l.b16 %v6708
      %v6983 = vunpack.c.l.b16 %v6709
      %v6984 = vunpack.c.h.b16 %v6709
      %v6985 = vunpack.c.l.b16 %v6710
      %v6986 = vunpack.c.l.b16 %v6711
      %v6987 = vunpack.c.h.b16 %v6711
      %v6988 = vunpack.c.l.b16 %v6712
      %v6989 = vunpack.c.l.b16 %v6713
      %v6990 = vunpack.c.h.b16 %v6713
      %v6991 = vunpack.c.l.b16 %v6714
      %v6992 = vunpack.c.l.b16 %v6715
      %v6993 = vunpack.c.h.b16 %v6715
      %v6994 = vunpack.c.l.b16 %v6716
      %v6995 = vunpack.c.l.b16 %v6717
      %v6996 = vunpack.c.h.b16 %v6717
      %v6997 = vunpack.c.l.b16 %v6718
      %v6998 = vunpack.c.l.b16 %v6719
      %v6999 = vunpack.c.h.b16 %v6719
      %v7000 = vunpack.c.l.b16 %v6720
      %v7001 = vunpack.c.l.b16 %v6721
      %v7002 = vunpack.c.h.b16 %v6721
      %v7003 = vunpack.c.l.b16 %v6722
      %v7004 = vunpack.c.l.b16 %v6723
      %v7005 = vunpack.c.h.b16 %v6723
      %v7006 = vunpack.c.l.b16 %v6724
      %v7007 = vunpack.c.l.b16 %v6725
      %v7008 = vunpack.c.h.b16 %v6725
      %v7009 = vunpack.c.l.b16 %v6726
      %v7010 = vunpack.c.l.b16 %v6727
      %v7011 = vunpack.c.h.b16 %v6727
      %v7012 = vunpack.c.l.b16 %v6728
      %v7013 = vunpack.c.l.b16 %v6729
      %v7014 = vunpack.c.h.b16 %v6729
      %v7015 = vunpack.c.l.b16 %v6730
      %v7016 = vunpack.c.l.b16 %v6731
      %v7017 = vunpack.c.h.b16 %v6731
      %v7018 = vunpack.c.l.b16 %v6732
      %v7019 = vunpack.c.l.b16 %v6733
      %v7020 = vunpack.c.h.b16 %v6733
      %v7021 = vunpack.c.l.b16 %v6734
      %v7022 = vunpack.c.l.b16 %v6735
      %v7023 = vunpack.c.h.b16 %v6735
      %v7024 = vunpack.c.l.b16 %v6736
      %v7025 = vunpack.c.l.b16 %v6737
      %v7026 = vunpack.c.h.b16 %v6737
      %v7027 = vunpack.c.l.b16 %v6738
      %v7028 = vunpack.c.l.b16 %v6739
      %v7029 = vunpack.c.h.b16 %v6739
      %v7030 = vunpack.c.l.b16 %v6740
      %v7031 = vunpack.c.l.b16 %v6741
      %v7032 = vunpack.c.h.b16 %v6741
      %v7033 = vunpack.c.l.b16 %v6742
      %v7034 = vunpack.c.l.b16 %v6743
      %v7035 = vunpack.c.h.b16 %v6743
      %v7036 = vunpack.c.l.b16 %v6744
      %v7037 = vunpack.c.l.b16 %v6745
      %v7038 = vunpack.c.h.b16 %v6745
      %v7039 = vunpack.c.l.b16 %v6746
      %v7040 = vunpack.c.l.b16 %v6747
      %v7041 = vunpack.c.h.b16 %v6747
      %v7042 = vunpack.c.l.b16 %v6748
      %v7043 = vunpack.c.l.b16 %v6749
      %v7044 = vunpack.c.h.b16 %v6749
      %v7045 = vunpack.c.l.b16 %v6750
      %v7046 = vunpack.c.l.b16 %v6751
      %v7047 = vunpack.c.h.b16 %v6751
      %v7048 = vunpack.c.l.b16 %v6752
      %v7049 = vunpack.c.l.b16 %v6753
      %v7050 = vunpack.c.h.b16 %v6753
      %v7051 = vunpack.c.l.b16 %v6754
      %v7052 = vunpack.c.l.b16 %v6755
      %v7053 = vunpack.c.h.b16 %v6755
      %v7054 = vunpack.c.l.b16 %v6756
      %v7055 = vunpack.c.l.b16 %v6757
      %v7056 = vunpack.c.h.b16 %v6757
      %v7057 = vunpack.c.l.b16 %v6758
      %v7058 = vunpack.c.l.b16 %v6759
      %v7059 = vunpack.c.h.b16 %v6759
      %v7060 = vunpack.c.l.b16 %v6760
      %v7061 = vpack.c.b16 %v6884, %v6881
      %v7062 = vpack.c.b16 %v6885, %v6882
      %v7063 = vpack.c.b16 %v6886, %v6883
      %v7064 = vpack.c.b16 %v6890, %v6887
      %v7065 = vpack.c.b16 %v6891, %v6888
      %v7066 = vpack.c.b16 %v6892, %v6889
      %v7067 = vpack.c.b16 %v6896, %v6893
      %v7068 = vpack.c.b16 %v6897, %v6894
      %v7069 = vpack.c.b16 %v6898, %v6895
      %v7070 = vpack.c.b16 %v6902, %v6899
      %v7071 = vpack.c.b16 %v6903, %v6900
      %v7072 = vpack.c.b16 %v6904, %v6901
      %v7073 = vpack.c.b16 %v6908, %v6905
      %v7074 = vpack.c.b16 %v6909, %v6906
      %v7075 = vpack.c.b16 %v6910, %v6907
      %v7076 = vpack.c.b16 %v6914, %v6911
      %v7077 = vpack.c.b16 %v6915, %v6912
      %v7078 = vpack.c.b16 %v6916, %v6913
      %v7079 = vpack.c.b16 %v6920, %v6917
      %v7080 = vpack.c.b16 %v6921, %v6918
      %v7081 = vpack.c.b16 %v6922, %v6919
      %v7082 = vpack.c.b16 %v6926, %v6923
      %v7083 = vpack.c.b16 %v6927, %v6924
      %v7084 = vpack.c.b16 %v6928, %v6925
      %v7085 = vpack.c.b16 %v6932, %v6929
      %v7086 = vpack.c.b16 %v6933, %v6930
      %v7087 = vpack.c.b16 %v6934, %v6931
      %v7088 = vpack.c.b16 %v6938, %v6935
      %v7089 = vpack.c.b16 %v6939, %v6936
      %v7090 = vpack.c.b16 %v6940, %v6937
      %v7091 = vpack.c.b16 %v6944, %v6941
      %v7092 = vpack.c.b16 %v6945, %v6942
      %v7093 = vpack.c.b16 %v6946, %v6943
      %v7094 = vpack.c.b16 %v6950, %v6947
      %v7095 = vpack.c.b16 %v6951, %v6948
      %v7096 = vpack.c.b16 %v6952, %v6949
      %v7097 = vpack.c.b16 %v6956, %v6953
      %v7098 = vpack.c.b16 %v6957, %v6954
      %v7099 = vpack.c.b16 %v6958, %v6955
      %v7100 = vpack.c.b16 %v6962, %v6959
      %v7101 = vpack.c.b16 %v6963, %v6960
      %v7102 = vpack.c.b16 %v6964, %v6961
      %v7103 = vpack.c.b16 %v6968, %v6965
      %v7104 = vpack.c.b16 %v6969, %v6966
      %v7105 = vpack.c.b16 %v6970, %v6967
      %v7106 = vpack.c.b16 %v6974, %v6971
      %v7107 = vpack.c.b16 %v6975, %v6972
      %v7108 = vpack.c.b16 %v6976, %v6973
      %v7109 = vpack.c.b16 %v6980, %v6977
      %v7110 = vpack.c.b16 %v6981, %v6978
      %v7111 = vpack.c.b16 %v6982, %v6979
      %v7112 = vpack.c.b16 %v6986, %v6983
      %v7113 = vpack.c.b16 %v6987, %v6984
      %v7114 = vpack.c.b16 %v6988, %v6985
      %v7115 = vpack.c.b16 %v6992, %v6989
      %v7116 = vpack.c.b16 %v6993, %v6990
      %v7117 = vpack.c.b16 %v6994, %v6991
      %v7118 = vpack.c.b16 %v6998, %v6995
      %v7119 = vpack.c.b16 %v6999, %v6996
      %v7120 = vpack.c.b16 %v7000, %v6997
      %v7121 = vpack.c.b16 %v7004, %v7001
      %v7122 = vpack.c.b16 %v7005, %v7002
      %v7123 = vpack.c.b16 %v7006, %v7003
      %v7124 = vpack.c.b16 %v7010, %v7007
      %v7125 = vpack.c.b16 %v7011, %v7008
      %v7126 = vpack.c.b16 %v7012, %v7009
      %v7127 = vpack.c.b16 %v7016, %v7013
      %v7128 = vpack.c.b16 %v7017, %v7014
      %v7129 = vpack.c.b16 %v7018, %v7015
      %v7130 = vpack.c.b16 %v7022, %v7019
      %v7131 = vpack.c.b16 %v7023, %v7020
      %v7132 = vpack.c.b16 %v7024, %v7021
      %v7133 = vpack.c.b16 %v7028, %v7025
      %v7134 = vpack.c.b16 %v7029, %v7026
      %v7135 = vpack.c.b16 %v7030, %v7027
      %v7136 = vpack.c.b16 %v7034, %v7031
      %v7137 = vpack.c.b16 %v7035, %v7032
      %v7138 = vpack.c.b16 %v7036, %v7033
      %v7139 = vpack.c.b16 %v7040, %v7037
      %v7140 = vpack.c.b16 %v7041, %v7038
      %v7141 = vpack.c.b16 %v7042, %v7039
      %v7142 = vpack.c.b16 %v7046, %v7043
      %v7143 = vpack.c.b16 %v7047, %v7044
      %v7144 = vpack.c.b16 %v7048, %v7045
      %v7145 = vpack.c.b16 %v7052, %v7049
      %v7146 = vpack.c.b16 %v7053, %v7050
      %v7147 = vpack.c.b16 %v7054, %v7051
      %v7148 = vpack.c.b16 %v7058, %v7055
      %v7149 = vpack.c.b16 %v7059, %v7056
      %v7150 = vpack.c.b16 %v7060, %v7057
      %v7242 = vsel %vm5780, %v6639, 0
      %7244 = vmatpush.bf16.msra.mxu0 %v7082
      %7245 = vmatpush.bf16.msra.mxu0 %v7079
      %7246 = vmatpush.bf16.msra.mxu0 %v7076
      %7247 = vmatpush.bf16.msra.mxu0 %v7073
      %7248 = vmatpush.bf16.msra.mxu0 %v7070
      %7249 = vmatpush.bf16.msra.mxu0 %v7067
      %7250 = vmatpush.bf16.msra.mxu0 %v7064
      %7251 = vmatpush.bf16.msra.mxu0 %v7061
      %7252 = vmatmul.bf16.gmra.mxu0 %v6636
      %v7253 = vpop.f32.mrf.mxu0
      %v7254 = vadd.f32 0.0, %v7253
      %v7255 = vpop.f32.mrf.mxu0
      %7256 = vdwg.mxu0
      %7257 = vmatpush.bf16.msra.mxu0 %v7106
      %7258 = vmatpush.bf16.msra.mxu0 %v7103
      %7259 = vmatpush.bf16.msra.mxu0 %v7100
      %7260 = vmatpush.bf16.msra.mxu0 %v7097
      %7261 = vmatpush.bf16.msra.mxu0 %v7094
      %7262 = vmatpush.bf16.msra.mxu0 %v7091
      %7263 = vmatpush.bf16.msra.mxu0 %v7088
      %7264 = vmatpush.bf16.msra.mxu0 %v7085
      %7265 = vmatmul.bf16.gmra.mxu0 %v6637
      %v7266 = vpop.f32.mrf.mxu0
      %v7267 = vadd.f32 %v7254, %v7266
      %v7268 = vpop.f32.mrf.mxu0
      %7269 = vdwg.mxu0
      %7270 = vmatpush.bf16.msra.mxu0 %v7130
      %7271 = vmatpush.bf16.msra.mxu0 %v7127
      %7272 = vmatpush.bf16.msra.mxu0 %v7124
      %7273 = vmatpush.bf16.msra.mxu0 %v7121
      %7274 = vmatpush.bf16.msra.mxu0 %v7118
      %7275 = vmatpush.bf16.msra.mxu0 %v7115
      %7276 = vmatpush.bf16.msra.mxu0 %v7112
      %7277 = vmatpush.bf16.msra.mxu0 %v7109
      %7278 = vmatmul.bf16.gmra.mxu0 %v6638
      %v7279 = vpop.f32.mrf.mxu0
      %v7280 = vadd.f32 %v7267, %v7279
      %v7281 = vpop.f32.mrf.mxu0
      %7282 = vdwg.mxu0
      %7283 = vmatpush.bf16.msra.mxu0 0
      %7284 = vmatpush.bf16.msra.mxu0 0
      %7285 = vmatpush.bf16.msra.mxu0 %v7148
      %7286 = vmatpush.bf16.msra.mxu0 %v7145
      %7287 = vmatpush.bf16.msra.mxu0 %v7142
      %7288 = vmatpush.bf16.msra.mxu0 %v7139
      %7289 = vmatpush.bf16.msra.mxu0 %v7136
      %7290 = vmatpush.bf16.msra.mxu0 %v7133
      %7291 = vmatmul.bf16.gmra.mxu0 %v7242
      %v7292 = vpop.f32.mrf.mxu0
      %v7293 = vadd.f32 %v7280, %v7292
      %v7294 = vpop.f32.mrf.mxu0
      %7295 = vdwg.mxu0
      %7296 = vmatpush.bf16.msra.mxu0 %v7083
      %7297 = vmatpush.bf16.msra.mxu0 %v7080
      %7298 = vmatpush.bf16.msra.mxu0 %v7077
      %7299 = vmatpush.bf16.msra.mxu0 %v7074
      %7300 = vmatpush.bf16.msra.mxu0 %v7071
      %7301 = vmatpush.bf16.msra.mxu0 %v7068
      %7302 = vmatpush.bf16.msra.mxu0 %v7065
      %7303 = vmatpush.bf16.msra.mxu0 %v7062
      %7304 = vmatmul.bf16.gmra.mxu0 %v6636
      %v7305 = vpop.f32.mrf.mxu0
      %v7306 = vadd.f32 0.0, %v7305
      %v7307 = vpop.f32.mrf.mxu0
      %7308 = vdwg.mxu0
      %7309 = vmatpush.bf16.msra.mxu0 %v7107
      %7310 = vmatpush.bf16.msra.mxu0 %v7104
      %7311 = vmatpush.bf16.msra.mxu0 %v7101
      %7312 = vmatpush.bf16.msra.mxu0 %v7098
      %7313 = vmatpush.bf16.msra.mxu0 %v7095
      %7314 = vmatpush.bf16.msra.mxu0 %v7092
      %7315 = vmatpush.bf16.msra.mxu0 %v7089
      %7316 = vmatpush.bf16.msra.mxu0 %v7086
      %7317 = vmatmul.bf16.gmra.mxu0 %v6637
      %v7318 = vpop.f32.mrf.mxu0
      %v7319 = vadd.f32 %v7306, %v7318
      %v7320 = vpop.f32.mrf.mxu0
      %7321 = vdwg.mxu0
      %7322 = vmatpush.bf16.msra.mxu0 %v7131
      %7323 = vmatpush.bf16.msra.mxu0 %v7128
      %7324 = vmatpush.bf16.msra.mxu0 %v7125
      %7325 = vmatpush.bf16.msra.mxu0 %v7122
      %7326 = vmatpush.bf16.msra.mxu0 %v7119
      %7327 = vmatpush.bf16.msra.mxu0 %v7116
      %7328 = vmatpush.bf16.msra.mxu0 %v7113
      %7329 = vmatpush.bf16.msra.mxu0 %v7110
      %7330 = vmatmul.bf16.gmra.mxu0 %v6638
      %v7331 = vpop.f32.mrf.mxu0
      %v7332 = vadd.f32 %v7319, %v7331
      %v7333 = vpop.f32.mrf.mxu0
      %7334 = vdwg.mxu0
      %7335 = vmatpush.bf16.msra.mxu0 0
      %7336 = vmatpush.bf16.msra.mxu0 0
      %7337 = vmatpush.bf16.msra.mxu0 %v7149
      %7338 = vmatpush.bf16.msra.mxu0 %v7146
      %7339 = vmatpush.bf16.msra.mxu0 %v7143
      %7340 = vmatpush.bf16.msra.mxu0 %v7140
      %7341 = vmatpush.bf16.msra.mxu0 %v7137
      %7342 = vmatpush.bf16.msra.mxu0 %v7134
      %7343 = vmatmul.bf16.gmra.mxu0 %v7242
      %v7344 = vpop.f32.mrf.mxu0
      %v7345 = vadd.f32 %v7332, %v7344
      %v7346 = vpop.f32.mrf.mxu0
      %7347 = vdwg.mxu0
      %7348 = vmatpush.bf16.msra.mxu0 %v7084
      %7349 = vmatpush.bf16.msra.mxu0 %v7081
      %7350 = vmatpush.bf16.msra.mxu0 %v7078
      %7351 = vmatpush.bf16.msra.mxu0 %v7075
      %7352 = vmatpush.bf16.msra.mxu0 %v7072
      %7353 = vmatpush.bf16.msra.mxu0 %v7069
      %7354 = vmatpush.bf16.msra.mxu0 %v7066
      %7355 = vmatpush.bf16.msra.mxu0 %v7063
      %7356 = vmatmul.bf16.gmra.mxu0 %v6636
      %v7357 = vpop.f32.mrf.mxu0
      %v7358 = vadd.f32 0.0, %v7357
      %v7359 = vpop.f32.mrf.mxu0
      %7360 = vdwg.mxu0
      %7361 = vmatpush.bf16.msra.mxu0 %v7108
      %7362 = vmatpush.bf16.msra.mxu0 %v7105
      %7363 = vmatpush.bf16.msra.mxu0 %v7102
      %7364 = vmatpush.bf16.msra.mxu0 %v7099
      %7365 = vmatpush.bf16.msra.mxu0 %v7096
      %7366 = vmatpush.bf16.msra.mxu0 %v7093
      %7367 = vmatpush.bf16.msra.mxu0 %v7090
      %7368 = vmatpush.bf16.msra.mxu0 %v7087
      %7369 = vmatmul.bf16.gmra.mxu0 %v6637
      %v7370 = vpop.f32.mrf.mxu0
      %v7371 = vadd.f32 %v7358, %v7370
      %v7372 = vpop.f32.mrf.mxu0
      %7373 = vdwg.mxu0
      %7374 = vmatpush.bf16.msra.mxu0 %v7132
      %7375 = vmatpush.bf16.msra.mxu0 %v7129
      %7376 = vmatpush.bf16.msra.mxu0 %v7126
      %7377 = vmatpush.bf16.msra.mxu0 %v7123
      %7378 = vmatpush.bf16.msra.mxu0 %v7120
      %7379 = vmatpush.bf16.msra.mxu0 %v7117
      %7380 = vmatpush.bf16.msra.mxu0 %v7114
      %7381 = vmatpush.bf16.msra.mxu0 %v7111
      %7382 = vmatmul.bf16.gmra.mxu0 %v6638
      %v7383 = vpop.f32.mrf.mxu0
      %v7384 = vadd.f32 %v7371, %v7383
      %v7385 = vpop.f32.mrf.mxu0
      %7386 = vdwg.mxu0
      %7387 = vmatpush.bf16.msra.mxu0 0
      %7388 = vmatpush.bf16.msra.mxu0 0
      %7389 = vmatpush.bf16.msra.mxu0 %v7150
      %7390 = vmatpush.bf16.msra.mxu0 %v7147
      %7391 = vmatpush.bf16.msra.mxu0 %v7144
      %7392 = vmatpush.bf16.msra.mxu0 %v7141
      %7393 = vmatpush.bf16.msra.mxu0 %v7138
      %7394 = vmatpush.bf16.msra.mxu0 %v7135
      %7395 = vmatmul.bf16.gmra.mxu0 %v7242
      %v7396 = vpop.f32.mrf.mxu0
      %v7397 = vadd.f32 %v7384, %v7396
      %v7398 = vpop.f32.mrf.mxu0
      %7399 = vdwg.mxu0
      %v7400 = vadd.f32 %v6472, %v7293
      %v7401 = vadd.f32 %v6524, %v7345
      %v7402 = vadd.f32 %v6576, %v7397
      %s7403 = scalar_lea.vmem %s4, 12
      %v7404 = vld [vmem:[%s7403] sm:$0x7]
      %v7406 = vsel %vm4922, %v7404, 0
      %7408 = vmatpush.bf16.msra.mxu0 0
      %7409 = vmatpush.bf16.msra.mxu0 0
      %7410 = vmatpush.bf16.msra.mxu0 0
      %7411 = vmatpush.bf16.msra.mxu0 0
      %7412 = vmatpush.bf16.msra.mxu0 0
      %7413 = vmatpush.bf16.msra.mxu0 0
      %7414 = vmatpush.bf16.msra.mxu0 0
      %7415 = vmatpush.bf16.msra.mxu0 %v4931
      %7416 = vmatmul.bf16.gmra.mxu0 %v7406
      %v7417 = vpop.f32.mrf.mxu0
      %v7418 = vadd.f32 0.0, %v7417
      %v7419 = vpop.f32.mrf.mxu0
      %7420 = vdwg.mxu0
      %7421 = vmatpush.bf16.msra.mxu0 0
      %7422 = vmatpush.bf16.msra.mxu0 0
      %7423 = vmatpush.bf16.msra.mxu0 0
      %7424 = vmatpush.bf16.msra.mxu0 0
      %7425 = vmatpush.bf16.msra.mxu0 0
      %7426 = vmatpush.bf16.msra.mxu0 0
      %7427 = vmatpush.bf16.msra.mxu0 0
      %7428 = vmatpush.bf16.msra.mxu0 %v4934
      %7429 = vmatmul.bf16.gmra.mxu0 %v7406
      %v7430 = vpop.f32.mrf.mxu0
      %v7431 = vadd.f32 0.0, %v7430
      %v7432 = vpop.f32.mrf.mxu0
      %7433 = vdwg.mxu0
      %7434 = vmatpush.bf16.msra.mxu0 0
      %7435 = vmatpush.bf16.msra.mxu0 0
      %7436 = vmatpush.bf16.msra.mxu0 0
      %7437 = vmatpush.bf16.msra.mxu0 0
      %7438 = vmatpush.bf16.msra.mxu0 0
      %7439 = vmatpush.bf16.msra.mxu0 0
      %7440 = vmatpush.bf16.msra.mxu0 0
      %7441 = vmatpush.bf16.msra.mxu0 %v4937
      %7442 = vmatmul.bf16.gmra.mxu0 %v7406
      %v7443 = vpop.f32.mrf.mxu0
      %v7444 = vadd.f32 0.0, %v7443
      %v7445 = vpop.f32.mrf.mxu0
      %7446 = vdwg.mxu0
      %7447 = vmatpush.bf16.msra.mxu0 0
      %7448 = vmatpush.bf16.msra.mxu0 0
      %7449 = vmatpush.bf16.msra.mxu0 0
      %7450 = vmatpush.bf16.msra.mxu0 0
      %7451 = vmatpush.bf16.msra.mxu0 0
      %7452 = vmatpush.bf16.msra.mxu0 0
      %7453 = vmatpush.bf16.msra.mxu0 0
      %7454 = vmatpush.bf16.msra.mxu0 %v4940
      %7455 = vmatmul.bf16.gmra.mxu0 %v7406
      %v7456 = vpop.f32.mrf.mxu0
      %v7457 = vadd.f32 0.0, %v7456
      %v7458 = vpop.f32.mrf.mxu0
      %7459 = vdwg.mxu0
      %v7460 = vpack.c.bf16 %v7418, %v7418
      %v7461 = vpack.c.bf16 %v7431, %v7431
      %v7462 = vpack.c.bf16 %v7444, %v7444
      %v7463 = vpack.c.bf16 %v7457, %v7457
      %s7464 = scalar_lea.vmem %s5, 2160
      %v7465 = vld [vmem:[%s7464] sm:$0xff]
      %v7466 = vld [vmem:[%s7464 + $0x8] sm:$0xf]
      %v7467 = vld [vmem:[%s7464 + $0xc] sm:$0xff]
      %v7468 = vld [vmem:[%s7464 + $0x14] sm:$0xf]
      %v7469 = vld [vmem:[%s7464 + $0x18] sm:$0xff]
      %v7470 = vld [vmem:[%s7464 + $0x20] sm:$0xf]
      %v7471 = vld [vmem:[%s7464 + $0x24] sm:$0xff]
      %v7472 = vld [vmem:[%s7464 + $0x2c] sm:$0xf]
      %v7473 = vld [vmem:[%s7464 + $0x30] sm:$0xff]
      %v7474 = vld [vmem:[%s7464 + $0x38] sm:$0xf]
      %v7475 = vld [vmem:[%s7464 + $0x3c] sm:$0xff]
      %v7476 = vld [vmem:[%s7464 + $0x44] sm:$0xf]
      %v7477 = vld [vmem:[%s7464 + $0x48] sm:$0xff]
      %v7478 = vld [vmem:[%s7464 + $0x50] sm:$0xf]
      %v7479 = vld [vmem:[%s7464 + $0x54] sm:$0xff]
      %v7480 = vld [vmem:[%s7464 + $0x5c] sm:$0xf]
      %v7481 = vld [vmem:[%s7464 + $0x60] sm:$0xff]
      %v7482 = vld [vmem:[%s7464 + $0x68] sm:$0xf]
      %v7483 = vld [vmem:[%s7464 + $0x6c] sm:$0xff]
      %v7484 = vld [vmem:[%s7464 + $0x74] sm:$0xf]
      %v7485 = vld [vmem:[%s7464 + $0x78] sm:$0xff]
      %v7486 = vld [vmem:[%s7464 + $0x80] sm:$0xf]
      %v7487 = vld [vmem:[%s7464 + $0x84] sm:$0xff]
      %v7488 = vld [vmem:[%s7464 + $0x8c] sm:$0xf]
      %v7489 = vld [vmem:[%s7464 + $0x90] sm:$0xff]
      %v7490 = vld [vmem:[%s7464 + $0x98] sm:$0xf]
      %v7491 = vld [vmem:[%s7464 + $0x9c] sm:$0xff]
      %v7492 = vld [vmem:[%s7464 + $0xa4] sm:$0xf]
      %v7493 = vld [vmem:[%s7464 + $0xa8] sm:$0xff]
      %v7494 = vld [vmem:[%s7464 + $0xb0] sm:$0xf]
      %v7495 = vld [vmem:[%s7464 + $0xb4] sm:$0xff]
      %v7496 = vld [vmem:[%s7464 + $0xbc] sm:$0xf]
      %v7497 = vld [vmem:[%s7464 + $0xc0] sm:$0xff]
      %v7498 = vld [vmem:[%s7464 + $0xc8] sm:$0xf]
      %v7499 = vld [vmem:[%s7464 + $0xcc] sm:$0xff]
      %v7500 = vld [vmem:[%s7464 + $0xd4] sm:$0xf]
      %v7501 = vld [vmem:[%s7464 + $0xd8] sm:$0xff]
      %v7502 = vld [vmem:[%s7464 + $0xe0] sm:$0xf]
      %v7503 = vld [vmem:[%s7464 + $0xe4] sm:$0xff]
      %v7504 = vld [vmem:[%s7464 + $0xec] sm:$0xf]
      %v7505 = vld [vmem:[%s7464 + $0xf0] sm:$0xff]
      %v7506 = vld [vmem:[%s7464 + $0xf8] sm:$0xf]
      %v7507 = vld [vmem:[%s7464 + $0xfc] sm:$0xff]
      %v7508 = vld [vmem:[%s7464 + $0x104] sm:$0xf]
      %v7509 = vld [vmem:[%s7464 + $0x108] sm:$0xff]
      %v7510 = vld [vmem:[%s7464 + $0x110] sm:$0xf]
      %v7511 = vld [vmem:[%s7464 + $0x114] sm:$0xff]
      %v7512 = vld [vmem:[%s7464 + $0x11c] sm:$0xf]
      %v7513 = vld [vmem:[%s7464 + $0x120] sm:$0xff]
      %v7514 = vld [vmem:[%s7464 + $0x128] sm:$0xf]
      %v7515 = vld [vmem:[%s7464 + $0x12c] sm:$0xff]
      %v7516 = vld [vmem:[%s7464 + $0x134] sm:$0xf]
      %v7517 = vld [vmem:[%s7464 + $0x138] sm:$0xff]
      %v7518 = vld [vmem:[%s7464 + $0x140] sm:$0xf]
      %v7519 = vld [vmem:[%s7464 + $0x144] sm:$0xff]
      %v7520 = vld [vmem:[%s7464 + $0x14c] sm:$0xf]
      %v7521 = vld [vmem:[%s7464 + $0x150] sm:$0xff]
      %v7522 = vld [vmem:[%s7464 + $0x158] sm:$0xf]
      %v7523 = vld [vmem:[%s7464 + $0x15c] sm:$0xff]
      %v7524 = vld [vmem:[%s7464 + $0x164] sm:$0xf]
      %v7525 = vld [vmem:[%s7464 + $0x168] sm:$0xff]
      %v7526 = vld [vmem:[%s7464 + $0x170] sm:$0xf]
      %v7527 = vld [vmem:[%s7464 + $0x174] sm:$0xff]
      %v7528 = vld [vmem:[%s7464 + $0x17c] sm:$0xf]
      %v7529 = vld [vmem:[%s7464 + $0x180] sm:$0xff]
      %v7530 = vld [vmem:[%s7464 + $0x188] sm:$0xf]
      %v7531 = vld [vmem:[%s7464 + $0x18c] sm:$0xff]
      %v7532 = vld [vmem:[%s7464 + $0x194] sm:$0xf]
      %v7533 = vld [vmem:[%s7464 + $0x198] sm:$0xff]
      %v7534 = vld [vmem:[%s7464 + $0x1a0] sm:$0xf]
      %v7535 = vld [vmem:[%s7464 + $0x1a4] sm:$0xff]
      %v7536 = vld [vmem:[%s7464 + $0x1ac] sm:$0xf]
      %v7537 = vld [vmem:[%s7464 + $0x1b0] sm:$0xff]
      %v7538 = vld [vmem:[%s7464 + $0x1b8] sm:$0xf]
      %v7539 = vld [vmem:[%s7464 + $0x1bc] sm:$0xff]
      %v7540 = vld [vmem:[%s7464 + $0x1c4] sm:$0xf]
      %v7541 = vld [vmem:[%s7464 + $0x1c8] sm:$0xff]
      %v7542 = vld [vmem:[%s7464 + $0x1d0] sm:$0xf]
      %v7543 = vld [vmem:[%s7464 + $0x1d4] sm:$0xff]
      %v7544 = vld [vmem:[%s7464 + $0x1dc] sm:$0xf]
      %v7545 = vld [vmem:[%s7464 + $0x1e0] sm:$0xff]
      %v7546 = vld [vmem:[%s7464 + $0x1e8] sm:$0xf]
      %v7547 = vld [vmem:[%s7464 + $0x1ec] sm:$0xff]
      %v7548 = vld [vmem:[%s7464 + $0x1f4] sm:$0xf]
      %v7549 = vld [vmem:[%s7464 + $0x1f8] sm:$0xff]
      %v7550 = vld [vmem:[%s7464 + $0x200] sm:$0xf]
      %v7551 = vld [vmem:[%s7464 + $0x204] sm:$0xff]
      %v7552 = vld [vmem:[%s7464 + $0x20c] sm:$0xf]
      %v7553 = vld [vmem:[%s7464 + $0x210] sm:$0xff]
      %v7554 = vld [vmem:[%s7464 + $0x218] sm:$0xf]
      %v7555 = vld [vmem:[%s7464 + $0x21c] sm:$0xff]
      %v7556 = vld [vmem:[%s7464 + $0x224] sm:$0xf]
      %v7557 = vld [vmem:[%s7464 + $0x228] sm:$0xff]
      %v7558 = vld [vmem:[%s7464 + $0x230] sm:$0xf]
      %v7559 = vld [vmem:[%s7464 + $0x234] sm:$0xff]
      %v7560 = vld [vmem:[%s7464 + $0x23c] sm:$0xf]
      %v7561 = vld [vmem:[%s7464 + $0x240] sm:$0xff]
      %v7562 = vld [vmem:[%s7464 + $0x248] sm:$0xf]
      %v7563 = vld [vmem:[%s7464 + $0x24c] sm:$0xff]
      %v7564 = vld [vmem:[%s7464 + $0x254] sm:$0xf]
      %v7565 = vld [vmem:[%s7464 + $0x258] sm:$0xff]
      %v7566 = vld [vmem:[%s7464 + $0x260] sm:$0xf]
      %v7567 = vld [vmem:[%s7464 + $0x264] sm:$0xff]
      %v7568 = vld [vmem:[%s7464 + $0x26c] sm:$0xf]
      %v7569 = vld [vmem:[%s7464 + $0x270] sm:$0xff]
      %v7570 = vld [vmem:[%s7464 + $0x278] sm:$0xf]
      %v7571 = vld [vmem:[%s7464 + $0x27c] sm:$0xff]
      %v7572 = vld [vmem:[%s7464 + $0x284] sm:$0xf]
      %v7573 = vld [vmem:[%s7464 + $0x288] sm:$0xff]
      %v7574 = vld [vmem:[%s7464 + $0x290] sm:$0xf]
      %v7575 = vld [vmem:[%s7464 + $0x294] sm:$0xff]
      %v7576 = vld [vmem:[%s7464 + $0x29c] sm:$0xf]
      %v7577 = vld [vmem:[%s7464 + $0x2a0] sm:$0xff]
      %v7578 = vld [vmem:[%s7464 + $0x2a8] sm:$0xf]
      %v7579 = vld [vmem:[%s7464 + $0x2ac] sm:$0xff]
      %v7580 = vld [vmem:[%s7464 + $0x2b4] sm:$0xf]
      %v7581 = vld [vmem:[%s7464 + $0x2b8] sm:$0xff]
      %v7582 = vld [vmem:[%s7464 + $0x2c0] sm:$0xf]
      %v7583 = vld [vmem:[%s7464 + $0x2c4] sm:$0xff]
      %v7584 = vld [vmem:[%s7464 + $0x2cc] sm:$0xf]
      %v7705 = vunpack.c.l.b16 %v7465
      %v7706 = vunpack.c.h.b16 %v7465
      %v7707 = vunpack.c.l.b16 %v7466
      %v7708 = vunpack.c.l.b16 %v7467
      %v7709 = vunpack.c.h.b16 %v7467
      %v7710 = vunpack.c.l.b16 %v7468
      %v7711 = vunpack.c.l.b16 %v7469
      %v7712 = vunpack.c.h.b16 %v7469
      %v7713 = vunpack.c.l.b16 %v7470
      %v7714 = vunpack.c.l.b16 %v7471
      %v7715 = vunpack.c.h.b16 %v7471
      %v7716 = vunpack.c.l.b16 %v7472
      %v7717 = vunpack.c.l.b16 %v7473
      %v7718 = vunpack.c.h.b16 %v7473
      %v7719 = vunpack.c.l.b16 %v7474
      %v7720 = vunpack.c.l.b16 %v7475
      %v7721 = vunpack.c.h.b16 %v7475
      %v7722 = vunpack.c.l.b16 %v7476
      %v7723 = vunpack.c.l.b16 %v7477
      %v7724 = vunpack.c.h.b16 %v7477
      %v7725 = vunpack.c.l.b16 %v7478
      %v7726 = vunpack.c.l.b16 %v7479
      %v7727 = vunpack.c.h.b16 %v7479
      %v7728 = vunpack.c.l.b16 %v7480
      %v7729 = vunpack.c.l.b16 %v7481
      %v7730 = vunpack.c.h.b16 %v7481
      %v7731 = vunpack.c.l.b16 %v7482
      %v7732 = vunpack.c.l.b16 %v7483
      %v7733 = vunpack.c.h.b16 %v7483
      %v7734 = vunpack.c.l.b16 %v7484
      %v7735 = vunpack.c.l.b16 %v7485
      %v7736 = vunpack.c.h.b16 %v7485
      %v7737 = vunpack.c.l.b16 %v7486
      %v7738 = vunpack.c.l.b16 %v7487
      %v7739 = vunpack.c.h.b16 %v7487
      %v7740 = vunpack.c.l.b16 %v7488
      %v7741 = vunpack.c.l.b16 %v7489
      %v7742 = vunpack.c.h.b16 %v7489
      %v7743 = vunpack.c.l.b16 %v7490
      %v7744 = vunpack.c.l.b16 %v7491
      %v7745 = vunpack.c.h.b16 %v7491
      %v7746 = vunpack.c.l.b16 %v7492
      %v7747 = vunpack.c.l.b16 %v7493
      %v7748 = vunpack.c.h.b16 %v7493
      %v7749 = vunpack.c.l.b16 %v7494
      %v7750 = vunpack.c.l.b16 %v7495
      %v7751 = vunpack.c.h.b16 %v7495
      %v7752 = vunpack.c.l.b16 %v7496
      %v7753 = vunpack.c.l.b16 %v7497
      %v7754 = vunpack.c.h.b16 %v7497
      %v7755 = vunpack.c.l.b16 %v7498
      %v7756 = vunpack.c.l.b16 %v7499
      %v7757 = vunpack.c.h.b16 %v7499
      %v7758 = vunpack.c.l.b16 %v7500
      %v7759 = vunpack.c.l.b16 %v7501
      %v7760 = vunpack.c.h.b16 %v7501
      %v7761 = vunpack.c.l.b16 %v7502
      %v7762 = vunpack.c.l.b16 %v7503
      %v7763 = vunpack.c.h.b16 %v7503
      %v7764 = vunpack.c.l.b16 %v7504
      %v7765 = vunpack.c.l.b16 %v7505
      %v7766 = vunpack.c.h.b16 %v7505
      %v7767 = vunpack.c.l.b16 %v7506
      %v7768 = vunpack.c.l.b16 %v7507
      %v7769 = vunpack.c.h.b16 %v7507
      %v7770 = vunpack.c.l.b16 %v7508
      %v7771 = vunpack.c.l.b16 %v7509
      %v7772 = vunpack.c.h.b16 %v7509
      %v7773 = vunpack.c.l.b16 %v7510
      %v7774 = vunpack.c.l.b16 %v7511
      %v7775 = vunpack.c.h.b16 %v7511
      %v7776 = vunpack.c.l.b16 %v7512
      %v7777 = vunpack.c.l.b16 %v7513
      %v7778 = vunpack.c.h.b16 %v7513
      %v7779 = vunpack.c.l.b16 %v7514
      %v7780 = vunpack.c.l.b16 %v7515
      %v7781 = vunpack.c.h.b16 %v7515
      %v7782 = vunpack.c.l.b16 %v7516
      %v7783 = vunpack.c.l.b16 %v7517
      %v7784 = vunpack.c.h.b16 %v7517
      %v7785 = vunpack.c.l.b16 %v7518
      %v7786 = vunpack.c.l.b16 %v7519
      %v7787 = vunpack.c.h.b16 %v7519
      %v7788 = vunpack.c.l.b16 %v7520
      %v7789 = vunpack.c.l.b16 %v7521
      %v7790 = vunpack.c.h.b16 %v7521
      %v7791 = vunpack.c.l.b16 %v7522
      %v7792 = vunpack.c.l.b16 %v7523
      %v7793 = vunpack.c.h.b16 %v7523
      %v7794 = vunpack.c.l.b16 %v7524
      %v7795 = vunpack.c.l.b16 %v7525
      %v7796 = vunpack.c.h.b16 %v7525
      %v7797 = vunpack.c.l.b16 %v7526
      %v7798 = vunpack.c.l.b16 %v7527
      %v7799 = vunpack.c.h.b16 %v7527
      %v7800 = vunpack.c.l.b16 %v7528
      %v7801 = vunpack.c.l.b16 %v7529
      %v7802 = vunpack.c.h.b16 %v7529
      %v7803 = vunpack.c.l.b16 %v7530
      %v7804 = vunpack.c.l.b16 %v7531
      %v7805 = vunpack.c.h.b16 %v7531
      %v7806 = vunpack.c.l.b16 %v7532
      %v7807 = vunpack.c.l.b16 %v7533
      %v7808 = vunpack.c.h.b16 %v7533
      %v7809 = vunpack.c.l.b16 %v7534
      %v7810 = vunpack.c.l.b16 %v7535
      %v7811 = vunpack.c.h.b16 %v7535
      %v7812 = vunpack.c.l.b16 %v7536
      %v7813 = vunpack.c.l.b16 %v7537
      %v7814 = vunpack.c.h.b16 %v7537
      %v7815 = vunpack.c.l.b16 %v7538
      %v7816 = vunpack.c.l.b16 %v7539
      %v7817 = vunpack.c.h.b16 %v7539
      %v7818 = vunpack.c.l.b16 %v7540
      %v7819 = vunpack.c.l.b16 %v7541
      %v7820 = vunpack.c.h.b16 %v7541
      %v7821 = vunpack.c.l.b16 %v7542
      %v7822 = vunpack.c.l.b16 %v7543
      %v7823 = vunpack.c.h.b16 %v7543
      %v7824 = vunpack.c.l.b16 %v7544
      %v7825 = vunpack.c.l.b16 %v7545
      %v7826 = vunpack.c.h.b16 %v7545
      %v7827 = vunpack.c.l.b16 %v7546
      %v7828 = vunpack.c.l.b16 %v7547
      %v7829 = vunpack.c.h.b16 %v7547
      %v7830 = vunpack.c.l.b16 %v7548
      %v7831 = vunpack.c.l.b16 %v7549
      %v7832 = vunpack.c.h.b16 %v7549
      %v7833 = vunpack.c.l.b16 %v7550
      %v7834 = vunpack.c.l.b16 %v7551
      %v7835 = vunpack.c.h.b16 %v7551
      %v7836 = vunpack.c.l.b16 %v7552
      %v7837 = vunpack.c.l.b16 %v7553
      %v7838 = vunpack.c.h.b16 %v7553
      %v7839 = vunpack.c.l.b16 %v7554
      %v7840 = vunpack.c.l.b16 %v7555
      %v7841 = vunpack.c.h.b16 %v7555
      %v7842 = vunpack.c.l.b16 %v7556
      %v7843 = vunpack.c.l.b16 %v7557
      %v7844 = vunpack.c.h.b16 %v7557
      %v7845 = vunpack.c.l.b16 %v7558
      %v7846 = vunpack.c.l.b16 %v7559
      %v7847 = vunpack.c.h.b16 %v7559
      %v7848 = vunpack.c.l.b16 %v7560
      %v7849 = vunpack.c.l.b16 %v7561
      %v7850 = vunpack.c.h.b16 %v7561
      %v7851 = vunpack.c.l.b16 %v7562
      %v7852 = vunpack.c.l.b16 %v7563
      %v7853 = vunpack.c.h.b16 %v7563
      %v7854 = vunpack.c.l.b16 %v7564
      %v7855 = vunpack.c.l.b16 %v7565
      %v7856 = vunpack.c.h.b16 %v7565
      %v7857 = vunpack.c.l.b16 %v7566
      %v7858 = vunpack.c.l.b16 %v7567
      %v7859 = vunpack.c.h.b16 %v7567
      %v7860 = vunpack.c.l.b16 %v7568
      %v7861 = vunpack.c.l.b16 %v7569
      %v7862 = vunpack.c.h.b16 %v7569
      %v7863 = vunpack.c.l.b16 %v7570
      %v7864 = vunpack.c.l.b16 %v7571
      %v7865 = vunpack.c.h.b16 %v7571
      %v7866 = vunpack.c.l.b16 %v7572
      %v7867 = vunpack.c.l.b16 %v7573
      %v7868 = vunpack.c.h.b16 %v7573
      %v7869 = vunpack.c.l.b16 %v7574
      %v7870 = vunpack.c.l.b16 %v7575
      %v7871 = vunpack.c.h.b16 %v7575
      %v7872 = vunpack.c.l.b16 %v7576
      %v7873 = vunpack.c.l.b16 %v7577
      %v7874 = vunpack.c.h.b16 %v7577
      %v7875 = vunpack.c.l.b16 %v7578
      %v7876 = vunpack.c.l.b16 %v7579
      %v7877 = vunpack.c.h.b16 %v7579
      %v7878 = vunpack.c.l.b16 %v7580
      %v7879 = vunpack.c.l.b16 %v7581
      %v7880 = vunpack.c.h.b16 %v7581
      %v7881 = vunpack.c.l.b16 %v7582
      %v7882 = vunpack.c.l.b16 %v7583
      %v7883 = vunpack.c.h.b16 %v7583
      %v7884 = vunpack.c.l.b16 %v7584
      %v7885 = vpack.c.b16 %v7708, %v7705
      %v7886 = vpack.c.b16 %v7709, %v7706
      %v7887 = vpack.c.b16 %v7710, %v7707
      %v7888 = vpack.c.b16 %v7714, %v7711
      %v7889 = vpack.c.b16 %v7715, %v7712
      %v7890 = vpack.c.b16 %v7716, %v7713
      %v7891 = vpack.c.b16 %v7720, %v7717
      %v7892 = vpack.c.b16 %v7721, %v7718
      %v7893 = vpack.c.b16 %v7722, %v7719
      %v7894 = vpack.c.b16 %v7726, %v7723
      %v7895 = vpack.c.b16 %v7727, %v7724
      %v7896 = vpack.c.b16 %v7728, %v7725
      %v7897 = vpack.c.b16 %v7732, %v7729
      %v7898 = vpack.c.b16 %v7733, %v7730
      %v7899 = vpack.c.b16 %v7734, %v7731
      %v7900 = vpack.c.b16 %v7738, %v7735
      %v7901 = vpack.c.b16 %v7739, %v7736
      %v7902 = vpack.c.b16 %v7740, %v7737
      %v7903 = vpack.c.b16 %v7744, %v7741
      %v7904 = vpack.c.b16 %v7745, %v7742
      %v7905 = vpack.c.b16 %v7746, %v7743
      %v7906 = vpack.c.b16 %v7750, %v7747
      %v7907 = vpack.c.b16 %v7751, %v7748
      %v7908 = vpack.c.b16 %v7752, %v7749
      %v7909 = vpack.c.b16 %v7756, %v7753
      %v7910 = vpack.c.b16 %v7757, %v7754
      %v7911 = vpack.c.b16 %v7758, %v7755
      %v7912 = vpack.c.b16 %v7762, %v7759
      %v7913 = vpack.c.b16 %v7763, %v7760
      %v7914 = vpack.c.b16 %v7764, %v7761
      %v7915 = vpack.c.b16 %v7768, %v7765
      %v7916 = vpack.c.b16 %v7769, %v7766
      %v7917 = vpack.c.b16 %v7770, %v7767
      %v7918 = vpack.c.b16 %v7774, %v7771
      %v7919 = vpack.c.b16 %v7775, %v7772
      %v7920 = vpack.c.b16 %v7776, %v7773
      %v7921 = vpack.c.b16 %v7780, %v7777
      %v7922 = vpack.c.b16 %v7781, %v7778
      %v7923 = vpack.c.b16 %v7782, %v7779
      %v7924 = vpack.c.b16 %v7786, %v7783
      %v7925 = vpack.c.b16 %v7787, %v7784
      %v7926 = vpack.c.b16 %v7788, %v7785
      %v7927 = vpack.c.b16 %v7792, %v7789
      %v7928 = vpack.c.b16 %v7793, %v7790
      %v7929 = vpack.c.b16 %v7794, %v7791
      %v7930 = vpack.c.b16 %v7798, %v7795
      %v7931 = vpack.c.b16 %v7799, %v7796
      %v7932 = vpack.c.b16 %v7800, %v7797
      %v7933 = vpack.c.b16 %v7804, %v7801
      %v7934 = vpack.c.b16 %v7805, %v7802
      %v7935 = vpack.c.b16 %v7806, %v7803
      %v7936 = vpack.c.b16 %v7810, %v7807
      %v7937 = vpack.c.b16 %v7811, %v7808
      %v7938 = vpack.c.b16 %v7812, %v7809
      %v7939 = vpack.c.b16 %v7816, %v7813
      %v7940 = vpack.c.b16 %v7817, %v7814
      %v7941 = vpack.c.b16 %v7818, %v7815
      %v7942 = vpack.c.b16 %v7822, %v7819
      %v7943 = vpack.c.b16 %v7823, %v7820
      %v7944 = vpack.c.b16 %v7824, %v7821
      %v7945 = vpack.c.b16 %v7828, %v7825
      %v7946 = vpack.c.b16 %v7829, %v7826
      %v7947 = vpack.c.b16 %v7830, %v7827
      %v7948 = vpack.c.b16 %v7834, %v7831
      %v7949 = vpack.c.b16 %v7835, %v7832
      %v7950 = vpack.c.b16 %v7836, %v7833
      %v7951 = vpack.c.b16 %v7840, %v7837
      %v7952 = vpack.c.b16 %v7841, %v7838
      %v7953 = vpack.c.b16 %v7842, %v7839
      %v7954 = vpack.c.b16 %v7846, %v7843
      %v7955 = vpack.c.b16 %v7847, %v7844
      %v7956 = vpack.c.b16 %v7848, %v7845
      %v7957 = vpack.c.b16 %v7852, %v7849
      %v7958 = vpack.c.b16 %v7853, %v7850
      %v7959 = vpack.c.b16 %v7854, %v7851
      %v7960 = vpack.c.b16 %v7858, %v7855
      %v7961 = vpack.c.b16 %v7859, %v7856
      %v7962 = vpack.c.b16 %v7860, %v7857
      %v7963 = vpack.c.b16 %v7864, %v7861
      %v7964 = vpack.c.b16 %v7865, %v7862
      %v7965 = vpack.c.b16 %v7866, %v7863
      %v7966 = vpack.c.b16 %v7870, %v7867
      %v7967 = vpack.c.b16 %v7871, %v7868
      %v7968 = vpack.c.b16 %v7872, %v7869
      %v7969 = vpack.c.b16 %v7876, %v7873
      %v7970 = vpack.c.b16 %v7877, %v7874
      %v7971 = vpack.c.b16 %v7878, %v7875
      %v7972 = vpack.c.b16 %v7882, %v7879
      %v7973 = vpack.c.b16 %v7883, %v7880
      %v7974 = vpack.c.b16 %v7884, %v7881
      %v8066 = vsel %vm5780, %v7463, 0
      %8068 = vmatpush.bf16.msra.mxu0 %v7906
      %8069 = vmatpush.bf16.msra.mxu0 %v7903
      %8070 = vmatpush.bf16.msra.mxu0 %v7900
      %8071 = vmatpush.bf16.msra.mxu0 %v7897
      %8072 = vmatpush.bf16.msra.mxu0 %v7894
      %8073 = vmatpush.bf16.msra.mxu0 %v7891
      %8074 = vmatpush.bf16.msra.mxu0 %v7888
      %8075 = vmatpush.bf16.msra.mxu0 %v7885
      %8076 = vmatmul.bf16.gmra.mxu0 %v7460
      %v8077 = vpop.f32.mrf.mxu0
      %v8078 = vadd.f32 0.0, %v8077
      %v8079 = vpop.f32.mrf.mxu0
      %8080 = vdwg.mxu0
      %8081 = vmatpush.bf16.msra.mxu0 %v7930
      %8082 = vmatpush.bf16.msra.mxu0 %v7927
      %8083 = vmatpush.bf16.msra.mxu0 %v7924
      %8084 = vmatpush.bf16.msra.mxu0 %v7921
      %8085 = vmatpush.bf16.msra.mxu0 %v7918
      %8086 = vmatpush.bf16.msra.mxu0 %v7915
      %8087 = vmatpush.bf16.msra.mxu0 %v7912
      %8088 = vmatpush.bf16.msra.mxu0 %v7909
      %8089 = vmatmul.bf16.gmra.mxu0 %v7461
      %v8090 = vpop.f32.mrf.mxu0
      %v8091 = vadd.f32 %v8078, %v8090
      %v8092 = vpop.f32.mrf.mxu0
      %8093 = vdwg.mxu0
      %8094 = vmatpush.bf16.msra.mxu0 %v7954
      %8095 = vmatpush.bf16.msra.mxu0 %v7951
      %8096 = vmatpush.bf16.msra.mxu0 %v7948
      %8097 = vmatpush.bf16.msra.mxu0 %v7945
      %8098 = vmatpush.bf16.msra.mxu0 %v7942
      %8099 = vmatpush.bf16.msra.mxu0 %v7939
      %8100 = vmatpush.bf16.msra.mxu0 %v7936
      %8101 = vmatpush.bf16.msra.mxu0 %v7933
      %8102 = vmatmul.bf16.gmra.mxu0 %v7462
      %v8103 = vpop.f32.mrf.mxu0
      %v8104 = vadd.f32 %v8091, %v8103
      %v8105 = vpop.f32.mrf.mxu0
      %8106 = vdwg.mxu0
      %8107 = vmatpush.bf16.msra.mxu0 0
      %8108 = vmatpush.bf16.msra.mxu0 0
      %8109 = vmatpush.bf16.msra.mxu0 %v7972
      %8110 = vmatpush.bf16.msra.mxu0 %v7969
      %8111 = vmatpush.bf16.msra.mxu0 %v7966
      %8112 = vmatpush.bf16.msra.mxu0 %v7963
      %8113 = vmatpush.bf16.msra.mxu0 %v7960
      %8114 = vmatpush.bf16.msra.mxu0 %v7957
      %8115 = vmatmul.bf16.gmra.mxu0 %v8066
      %v8116 = vpop.f32.mrf.mxu0
      %v8117 = vadd.f32 %v8104, %v8116
      %v8118 = vpop.f32.mrf.mxu0
      %8119 = vdwg.mxu0
      %8120 = vmatpush.bf16.msra.mxu0 %v7907
      %8121 = vmatpush.bf16.msra.mxu0 %v7904
      %8122 = vmatpush.bf16.msra.mxu0 %v7901
      %8123 = vmatpush.bf16.msra.mxu0 %v7898
      %8124 = vmatpush.bf16.msra.mxu0 %v7895
      %8125 = vmatpush.bf16.msra.mxu0 %v7892
      %8126 = vmatpush.bf16.msra.mxu0 %v7889
      %8127 = vmatpush.bf16.msra.mxu0 %v7886
      %8128 = vmatmul.bf16.gmra.mxu0 %v7460
      %v8129 = vpop.f32.mrf.mxu0
      %v8130 = vadd.f32 0.0, %v8129
      %v8131 = vpop.f32.mrf.mxu0
      %8132 = vdwg.mxu0
      %8133 = vmatpush.bf16.msra.mxu0 %v7931
      %8134 = vmatpush.bf16.msra.mxu0 %v7928
      %8135 = vmatpush.bf16.msra.mxu0 %v7925
      %8136 = vmatpush.bf16.msra.mxu0 %v7922
      %8137 = vmatpush.bf16.msra.mxu0 %v7919
      %8138 = vmatpush.bf16.msra.mxu0 %v7916
      %8139 = vmatpush.bf16.msra.mxu0 %v7913
      %8140 = vmatpush.bf16.msra.mxu0 %v7910
      %8141 = vmatmul.bf16.gmra.mxu0 %v7461
      %v8142 = vpop.f32.mrf.mxu0
      %v8143 = vadd.f32 %v8130, %v8142
      %v8144 = vpop.f32.mrf.mxu0
      %8145 = vdwg.mxu0
      %8146 = vmatpush.bf16.msra.mxu0 %v7955
      %8147 = vmatpush.bf16.msra.mxu0 %v7952
      %8148 = vmatpush.bf16.msra.mxu0 %v7949
      %8149 = vmatpush.bf16.msra.mxu0 %v7946
      %8150 = vmatpush.bf16.msra.mxu0 %v7943
      %8151 = vmatpush.bf16.msra.mxu0 %v7940
      %8152 = vmatpush.bf16.msra.mxu0 %v7937
      %8153 = vmatpush.bf16.msra.mxu0 %v7934
      %8154 = vmatmul.bf16.gmra.mxu0 %v7462
      %v8155 = vpop.f32.mrf.mxu0
      %v8156 = vadd.f32 %v8143, %v8155
      %v8157 = vpop.f32.mrf.mxu0
      %8158 = vdwg.mxu0
      %8159 = vmatpush.bf16.msra.mxu0 0
      %8160 = vmatpush.bf16.msra.mxu0 0
      %8161 = vmatpush.bf16.msra.mxu0 %v7973
      %8162 = vmatpush.bf16.msra.mxu0 %v7970
      %8163 = vmatpush.bf16.msra.mxu0 %v7967
      %8164 = vmatpush.bf16.msra.mxu0 %v7964
      %8165 = vmatpush.bf16.msra.mxu0 %v7961
      %8166 = vmatpush.bf16.msra.mxu0 %v7958
      %8167 = vmatmul.bf16.gmra.mxu0 %v8066
      %v8168 = vpop.f32.mrf.mxu0
      %v8169 = vadd.f32 %v8156, %v8168
      %v8170 = vpop.f32.mrf.mxu0
      %8171 = vdwg.mxu0
      %8172 = vmatpush.bf16.msra.mxu0 %v7908
      %8173 = vmatpush.bf16.msra.mxu0 %v7905
      %8174 = vmatpush.bf16.msra.mxu0 %v7902
      %8175 = vmatpush.bf16.msra.mxu0 %v7899
      %8176 = vmatpush.bf16.msra.mxu0 %v7896
      %8177 = vmatpush.bf16.msra.mxu0 %v7893
      %8178 = vmatpush.bf16.msra.mxu0 %v7890
      %8179 = vmatpush.bf16.msra.mxu0 %v7887
      %8180 = vmatmul.bf16.gmra.mxu0 %v7460
      %v8181 = vpop.f32.mrf.mxu0
      %v8182 = vadd.f32 0.0, %v8181
      %v8183 = vpop.f32.mrf.mxu0
      %8184 = vdwg.mxu0
      %8185 = vmatpush.bf16.msra.mxu0 %v7932
      %8186 = vmatpush.bf16.msra.mxu0 %v7929
      %8187 = vmatpush.bf16.msra.mxu0 %v7926
      %8188 = vmatpush.bf16.msra.mxu0 %v7923
      %8189 = vmatpush.bf16.msra.mxu0 %v7920
      %8190 = vmatpush.bf16.msra.mxu0 %v7917
      %8191 = vmatpush.bf16.msra.mxu0 %v7914
      %8192 = vmatpush.bf16.msra.mxu0 %v7911
      %8193 = vmatmul.bf16.gmra.mxu0 %v7461
      %v8194 = vpop.f32.mrf.mxu0
      %v8195 = vadd.f32 %v8182, %v8194
      %v8196 = vpop.f32.mrf.mxu0
      %8197 = vdwg.mxu0
      %8198 = vmatpush.bf16.msra.mxu0 %v7956
      %8199 = vmatpush.bf16.msra.mxu0 %v7953
      %8200 = vmatpush.bf16.msra.mxu0 %v7950
      %8201 = vmatpush.bf16.msra.mxu0 %v7947
      %8202 = vmatpush.bf16.msra.mxu0 %v7944
      %8203 = vmatpush.bf16.msra.mxu0 %v7941
      %8204 = vmatpush.bf16.msra.mxu0 %v7938
      %8205 = vmatpush.bf16.msra.mxu0 %v7935
      %8206 = vmatmul.bf16.gmra.mxu0 %v7462
      %v8207 = vpop.f32.mrf.mxu0
      %v8208 = vadd.f32 %v8195, %v8207
      %v8209 = vpop.f32.mrf.mxu0
      %8210 = vdwg.mxu0
      %8211 = vmatpush.bf16.msra.mxu0 0
      %8212 = vmatpush.bf16.msra.mxu0 0
      %8213 = vmatpush.bf16.msra.mxu0 %v7974
      %8214 = vmatpush.bf16.msra.mxu0 %v7971
      %8215 = vmatpush.bf16.msra.mxu0 %v7968
      %8216 = vmatpush.bf16.msra.mxu0 %v7965
      %8217 = vmatpush.bf16.msra.mxu0 %v7962
      %8218 = vmatpush.bf16.msra.mxu0 %v7959
      %8219 = vmatmul.bf16.gmra.mxu0 %v8066
      %v8220 = vpop.f32.mrf.mxu0
      %v8221 = vadd.f32 %v8208, %v8220
      %v8222 = vpop.f32.mrf.mxu0
      %8223 = vdwg.mxu0
      %v8224 = vadd.f32 %v7400, %v8117
      %v8225 = vadd.f32 %v7401, %v8169
      %v8226 = vadd.f32 %v7402, %v8221
      %v8227 = vld [vmem:[%s6] sm:$0x7]
      %v8229 = vperm.slane %v8227, 0
      %v8230 = vperm.slane %v8227, 1
      %v8231 = vperm.slane %v8227, 2
      %v8235 = vadd.f32 %v8224, %v8229
      %v8236 = vadd.f32 %v8225, %v8230
      %v8237 = vadd.f32 %v8226, %v8231
      %v8238 = vmax.f32 %v8235, 0.0
      %v8239 = vmax.f32 %v8236, 0.0
      %v8240 = vmax.f32 %v8237, 0.0
      %v8241 = vpack.c.bf16 %v8238, %v8238
      %v8242 = vpack.c.bf16 %v8239, %v8239
      %v8243 = vpack.c.bf16 %v8240, %v8240
      %v8244 = vld [vmem:[%s7] sm:$0x3]
      %vm8245 = vcmask 48128
      %v8247 = vsel %vm8245, %v8244, 0
      %vm8249 = vcmask 1042432
      %v8251 = vsel %vm8249, %v8241, 0
      %v8254 = vsel %vm8249, %v8242, 0
      %v8257 = vsel %vm8249, %v8243, 0
      %8259 = vmatpush.bf16.msra.mxu0 0
      %8260 = vmatpush.bf16.msra.mxu0 0
      %8261 = vmatpush.bf16.msra.mxu0 0
      %8262 = vmatpush.bf16.msra.mxu0 0
      %8263 = vmatpush.bf16.msra.mxu0 0
      %8264 = vmatpush.bf16.msra.mxu0 0
      %8265 = vmatpush.bf16.msra.mxu0 0
      %8266 = vmatpush.bf16.msra.mxu0 %v8251
      %8267 = vmatmul.bf16.gmra.mxu0 %v8247
      %v8268 = vpop.f32.mrf.mxu0
      %v8269 = vadd.f32 0.0, %v8268
      %v8270 = vpop.f32.mrf.mxu0
      %8271 = vdwg.mxu0
      %8272 = vmatpush.bf16.msra.mxu0 0
      %8273 = vmatpush.bf16.msra.mxu0 0
      %8274 = vmatpush.bf16.msra.mxu0 0
      %8275 = vmatpush.bf16.msra.mxu0 0
      %8276 = vmatpush.bf16.msra.mxu0 0
      %8277 = vmatpush.bf16.msra.mxu0 0
      %8278 = vmatpush.bf16.msra.mxu0 0
      %8279 = vmatpush.bf16.msra.mxu0 %v8254
      %8280 = vmatmul.bf16.gmra.mxu0 %v8247
      %v8281 = vpop.f32.mrf.mxu0
      %v8282 = vadd.f32 0.0, %v8281
      %v8283 = vpop.f32.mrf.mxu0
      %8284 = vdwg.mxu0
      %8285 = vmatpush.bf16.msra.mxu0 0
      %8286 = vmatpush.bf16.msra.mxu0 0
      %8287 = vmatpush.bf16.msra.mxu0 0
      %8288 = vmatpush.bf16.msra.mxu0 0
      %8289 = vmatpush.bf16.msra.mxu0 0
      %8290 = vmatpush.bf16.msra.mxu0 0
      %8291 = vmatpush.bf16.msra.mxu0 0
      %8292 = vmatpush.bf16.msra.mxu0 %v8257
      %8293 = vmatmul.bf16.gmra.mxu0 %v8247
      %v8294 = vpop.f32.mrf.mxu0
      %v8295 = vadd.f32 0.0, %v8294
      %v8296 = vpop.f32.mrf.mxu0
      %8297 = vdwg.mxu0
      %v8298 = vpack.c.bf16 %v8269, %v8269
      %v8299 = vpack.c.bf16 %v8282, %v8282
      %v8300 = vpack.c.bf16 %v8295, %v8295
      %v8301 = vld [vmem:[%s8] sm:$0xff]
      %v8302 = vld [vmem:[%s8 + $0x8] sm:$0xff]
      %v8303 = vld [vmem:[%s8 + $0x10] sm:$0xff]
      %v8304 = vld [vmem:[%s8 + $0x18] sm:$0xff]
      %v8305 = vld [vmem:[%s8 + $0x20] sm:$0xff]
      %v8306 = vld [vmem:[%s8 + $0x28] sm:$0xff]
      %v8307 = vld [vmem:[%s8 + $0x30] sm:$0xff]
      %v8308 = vld [vmem:[%s8 + $0x38] sm:$0xff]
      %v8309 = vld [vmem:[%s8 + $0x40] sm:$0xff]
      %v8310 = vld [vmem:[%s8 + $0x48] sm:$0xff]
      %v8311 = vld [vmem:[%s8 + $0x50] sm:$0xff]
      %v8312 = vld [vmem:[%s8 + $0x58] sm:$0xff]
      %v8313 = vld [vmem:[%s8 + $0x60] sm:$0xff]
      %v8314 = vld [vmem:[%s8 + $0x68] sm:$0xff]
      %v8315 = vld [vmem:[%s8 + $0x70] sm:$0xff]
      %v8316 = vld [vmem:[%s8 + $0x78] sm:$0xff]
      %v8317 = vld [vmem:[%s8 + $0x80] sm:$0xff]
      %v8318 = vld [vmem:[%s8 + $0x88] sm:$0xff]
      %v8319 = vld [vmem:[%s8 + $0x90] sm:$0xff]
      %v8320 = vld [vmem:[%s8 + $0x98] sm:$0xff]
      %v8321 = vld [vmem:[%s8 + $0xa0] sm:$0xff]
      %v8322 = vld [vmem:[%s8 + $0xa8] sm:$0xff]
      %v8323 = vld [vmem:[%s8 + $0xb0] sm:$0xff]
      %v8324 = vld [vmem:[%s8 + $0xb8] sm:$0xff]
      %v8325 = vld [vmem:[%s8 + $0xc0] sm:$0xff]
      %v8326 = vld [vmem:[%s8 + $0xc8] sm:$0xff]
      %v8327 = vld [vmem:[%s8 + $0xd0] sm:$0xff]
      %v8328 = vld [vmem:[%s8 + $0xd8] sm:$0xff]
      %v8329 = vld [vmem:[%s8 + $0xe0] sm:$0xff]
      %v8330 = vld [vmem:[%s8 + $0xe8] sm:$0xff]
      %v8331 = vld [vmem:[%s8 + $0xf0] sm:$0xff]
      %v8332 = vld [vmem:[%s8 + $0xf8] sm:$0xff]
      %v8333 = vld [vmem:[%s8 + $0x100] sm:$0xff]
      %v8334 = vld [vmem:[%s8 + $0x108] sm:$0xff]
      %v8335 = vld [vmem:[%s8 + $0x110] sm:$0xff]
      %v8336 = vld [vmem:[%s8 + $0x118] sm:$0xff]
      %v8337 = vld [vmem:[%s8 + $0x120] sm:$0xff]
      %v8338 = vld [vmem:[%s8 + $0x128] sm:$0xff]
      %v8339 = vld [vmem:[%s8 + $0x130] sm:$0xff]
      %v8340 = vld [vmem:[%s8 + $0x138] sm:$0xff]
      %v8341 = vld [vmem:[%s8 + $0x140] sm:$0xff]
      %v8342 = vld [vmem:[%s8 + $0x148] sm:$0xff]
      %v8343 = vld [vmem:[%s8 + $0x150] sm:$0xff]
      %v8344 = vld [vmem:[%s8 + $0x158] sm:$0xff]
      %v8345 = vld [vmem:[%s8 + $0x160] sm:$0xff]
      %v8346 = vld [vmem:[%s8 + $0x168] sm:$0xff]
      %v8347 = vld [vmem:[%s8 + $0x170] sm:$0xff]
      %v8348 = vld [vmem:[%s8 + $0x178] sm:$0xff]
      %s8349 = scalar_lea.vmem %s7, 2
      %v8350 = vld [vmem:[%s8349] sm:$0x3]
      %v8352 = vsel %vm8245, %v8350, 0
      %8354 = vmatpush.bf16.msra.mxu0 0
      %8355 = vmatpush.bf16.msra.mxu0 0
      %8356 = vmatpush.bf16.msra.mxu0 0
      %8357 = vmatpush.bf16.msra.mxu0 0
      %8358 = vmatpush.bf16.msra.mxu0 0
      %8359 = vmatpush.bf16.msra.mxu0 0
      %8360 = vmatpush.bf16.msra.mxu0 0
      %8361 = vmatpush.bf16.msra.mxu0 %v8251
      %8362 = vmatmul.bf16.gmra.mxu0 %v8352
      %v8363 = vpop.f32.mrf.mxu0
      %v8364 = vadd.f32 0.0, %v8363
      %v8365 = vpop.f32.mrf.mxu0
      %8366 = vdwg.mxu0
      %8367 = vmatpush.bf16.msra.mxu0 0
      %8368 = vmatpush.bf16.msra.mxu0 0
      %8369 = vmatpush.bf16.msra.mxu0 0
      %8370 = vmatpush.bf16.msra.mxu0 0
      %8371 = vmatpush.bf16.msra.mxu0 0
      %8372 = vmatpush.bf16.msra.mxu0 0
      %8373 = vmatpush.bf16.msra.mxu0 0
      %8374 = vmatpush.bf16.msra.mxu0 %v8254
      %8375 = vmatmul.bf16.gmra.mxu0 %v8352
      %v8376 = vpop.f32.mrf.mxu0
      %v8377 = vadd.f32 0.0, %v8376
      %v8378 = vpop.f32.mrf.mxu0
      %8379 = vdwg.mxu0
      %8380 = vmatpush.bf16.msra.mxu0 0
      %8381 = vmatpush.bf16.msra.mxu0 0
      %8382 = vmatpush.bf16.msra.mxu0 0
      %8383 = vmatpush.bf16.msra.mxu0 0
      %8384 = vmatpush.bf16.msra.mxu0 0
      %8385 = vmatpush.bf16.msra.mxu0 0
      %8386 = vmatpush.bf16.msra.mxu0 0
      %8387 = vmatpush.bf16.msra.mxu0 %v8257
      %8388 = vmatmul.bf16.gmra.mxu0 %v8352
      %v8389 = vpop.f32.mrf.mxu0
      %v8390 = vadd.f32 0.0, %v8389
      %v8391 = vpop.f32.mrf.mxu0
      %8392 = vdwg.mxu0
      %v8393 = vpack.c.bf16 %v8364, %v8364
      %v8394 = vpack.c.bf16 %v8377, %v8377
      %v8395 = vpack.c.bf16 %v8390, %v8390
      %s8396 = scalar_lea.vmem %s8, 384
      %v8397 = vld [vmem:[%s8396] sm:$0xff]
      %v8398 = vld [vmem:[%s8396 + $0x8] sm:$0xff]
      %v8399 = vld [vmem:[%s8396 + $0x10] sm:$0xff]
      %v8400 = vld [vmem:[%s8396 + $0x18] sm:$0xff]
      %v8401 = vld [vmem:[%s8396 + $0x20] sm:$0xff]
      %v8402 = vld [vmem:[%s8396 + $0x28] sm:$0xff]
      %v8403 = vld [vmem:[%s8396 + $0x30] sm:$0xff]
      %v8404 = vld [vmem:[%s8396 + $0x38] sm:$0xff]
      %v8405 = vld [vmem:[%s8396 + $0x40] sm:$0xff]
      %v8406 = vld [vmem:[%s8396 + $0x48] sm:$0xff]
      %v8407 = vld [vmem:[%s8396 + $0x50] sm:$0xff]
      %v8408 = vld [vmem:[%s8396 + $0x58] sm:$0xff]
      %v8409 = vld [vmem:[%s8396 + $0x60] sm:$0xff]
      %v8410 = vld [vmem:[%s8396 + $0x68] sm:$0xff]
      %v8411 = vld [vmem:[%s8396 + $0x70] sm:$0xff]
      %v8412 = vld [vmem:[%s8396 + $0x78] sm:$0xff]
      %v8413 = vld [vmem:[%s8396 + $0x80] sm:$0xff]
      %v8414 = vld [vmem:[%s8396 + $0x88] sm:$0xff]
      %v8415 = vld [vmem:[%s8396 + $0x90] sm:$0xff]
      %v8416 = vld [vmem:[%s8396 + $0x98] sm:$0xff]
      %v8417 = vld [vmem:[%s8396 + $0xa0] sm:$0xff]
      %v8418 = vld [vmem:[%s8396 + $0xa8] sm:$0xff]
      %v8419 = vld [vmem:[%s8396 + $0xb0] sm:$0xff]
      %v8420 = vld [vmem:[%s8396 + $0xb8] sm:$0xff]
      %v8421 = vld [vmem:[%s8396 + $0xc0] sm:$0xff]
      %v8422 = vld [vmem:[%s8396 + $0xc8] sm:$0xff]
      %v8423 = vld [vmem:[%s8396 + $0xd0] sm:$0xff]
      %v8424 = vld [vmem:[%s8396 + $0xd8] sm:$0xff]
      %v8425 = vld [vmem:[%s8396 + $0xe0] sm:$0xff]
      %v8426 = vld [vmem:[%s8396 + $0xe8] sm:$0xff]
      %v8427 = vld [vmem:[%s8396 + $0xf0] sm:$0xff]
      %v8428 = vld [vmem:[%s8396 + $0xf8] sm:$0xff]
      %v8429 = vld [vmem:[%s8396 + $0x100] sm:$0xff]
      %v8430 = vld [vmem:[%s8396 + $0x108] sm:$0xff]
      %v8431 = vld [vmem:[%s8396 + $0x110] sm:$0xff]
      %v8432 = vld [vmem:[%s8396 + $0x118] sm:$0xff]
      %v8433 = vld [vmem:[%s8396 + $0x120] sm:$0xff]
      %v8434 = vld [vmem:[%s8396 + $0x128] sm:$0xff]
      %v8435 = vld [vmem:[%s8396 + $0x130] sm:$0xff]
      %v8436 = vld [vmem:[%s8396 + $0x138] sm:$0xff]
      %v8437 = vld [vmem:[%s8396 + $0x140] sm:$0xff]
      %v8438 = vld [vmem:[%s8396 + $0x148] sm:$0xff]
      %v8439 = vld [vmem:[%s8396 + $0x150] sm:$0xff]
      %v8440 = vld [vmem:[%s8396 + $0x158] sm:$0xff]
      %v8441 = vld [vmem:[%s8396 + $0x160] sm:$0xff]
      %v8442 = vld [vmem:[%s8396 + $0x168] sm:$0xff]
      %v8443 = vld [vmem:[%s8396 + $0x170] sm:$0xff]
      %v8444 = vld [vmem:[%s8396 + $0x178] sm:$0xff]
      %v8493 = vunpack.c.l.b16 %v8397
      %v8494 = vunpack.c.h.b16 %v8397
      %v8495 = vunpack.c.l.b16 %v8398
      %v8496 = vunpack.c.h.b16 %v8398
      %v8497 = vunpack.c.l.b16 %v8399
      %v8498 = vunpack.c.h.b16 %v8399
      %v8499 = vunpack.c.l.b16 %v8400
      %v8500 = vunpack.c.h.b16 %v8400
      %v8501 = vunpack.c.l.b16 %v8401
      %v8502 = vunpack.c.h.b16 %v8401
      %v8503 = vunpack.c.l.b16 %v8402
      %v8504 = vunpack.c.h.b16 %v8402
      %v8505 = vunpack.c.l.b16 %v8403
      %v8506 = vunpack.c.h.b16 %v8403
      %v8507 = vunpack.c.l.b16 %v8404
      %v8508 = vunpack.c.h.b16 %v8404
      %v8509 = vunpack.c.l.b16 %v8405
      %v8510 = vunpack.c.h.b16 %v8405
      %v8511 = vunpack.c.l.b16 %v8406
      %v8512 = vunpack.c.h.b16 %v8406
      %v8513 = vunpack.c.l.b16 %v8407
      %v8514 = vunpack.c.h.b16 %v8407
      %v8515 = vunpack.c.l.b16 %v8408
      %v8516 = vunpack.c.h.b16 %v8408
      %v8517 = vunpack.c.l.b16 %v8409
      %v8518 = vunpack.c.h.b16 %v8409
      %v8519 = vunpack.c.l.b16 %v8410
      %v8520 = vunpack.c.h.b16 %v8410
      %v8521 = vunpack.c.l.b16 %v8411
      %v8522 = vunpack.c.h.b16 %v8411
      %v8523 = vunpack.c.l.b16 %v8412
      %v8524 = vunpack.c.h.b16 %v8412
      %v8525 = vunpack.c.l.b16 %v8413
      %v8526 = vunpack.c.h.b16 %v8413
      %v8527 = vunpack.c.l.b16 %v8414
      %v8528 = vunpack.c.h.b16 %v8414
      %v8529 = vunpack.c.l.b16 %v8415
      %v8530 = vunpack.c.h.b16 %v8415
      %v8531 = vunpack.c.l.b16 %v8416
      %v8532 = vunpack.c.h.b16 %v8416
      %v8533 = vunpack.c.l.b16 %v8417
      %v8534 = vunpack.c.h.b16 %v8417
      %v8535 = vunpack.c.l.b16 %v8418
      %v8536 = vunpack.c.h.b16 %v8418
      %v8537 = vunpack.c.l.b16 %v8419
      %v8538 = vunpack.c.h.b16 %v8419
      %v8539 = vunpack.c.l.b16 %v8420
      %v8540 = vunpack.c.h.b16 %v8420
      %v8541 = vunpack.c.l.b16 %v8421
      %v8542 = vunpack.c.h.b16 %v8421
      %v8543 = vunpack.c.l.b16 %v8422
      %v8544 = vunpack.c.h.b16 %v8422
      %v8545 = vunpack.c.l.b16 %v8423
      %v8546 = vunpack.c.h.b16 %v8423
      %v8547 = vunpack.c.l.b16 %v8424
      %v8548 = vunpack.c.h.b16 %v8424
      %v8549 = vunpack.c.l.b16 %v8425
      %v8550 = vunpack.c.h.b16 %v8425
      %v8551 = vunpack.c.l.b16 %v8426
      %v8552 = vunpack.c.h.b16 %v8426
      %v8553 = vunpack.c.l.b16 %v8427
      %v8554 = vunpack.c.h.b16 %v8427
      %v8555 = vunpack.c.l.b16 %v8428
      %v8556 = vunpack.c.h.b16 %v8428
      %v8557 = vunpack.c.l.b16 %v8429
      %v8558 = vunpack.c.h.b16 %v8429
      %v8559 = vunpack.c.l.b16 %v8430
      %v8560 = vunpack.c.h.b16 %v8430
      %v8561 = vunpack.c.l.b16 %v8431
      %v8562 = vunpack.c.h.b16 %v8431
      %v8563 = vunpack.c.l.b16 %v8432
      %v8564 = vunpack.c.h.b16 %v8432
      %v8565 = vunpack.c.l.b16 %v8433
      %v8566 = vunpack.c.h.b16 %v8433
      %v8567 = vunpack.c.l.b16 %v8434
      %v8568 = vunpack.c.h.b16 %v8434
      %v8569 = vunpack.c.l.b16 %v8435
      %v8570 = vunpack.c.h.b16 %v8435
      %v8571 = vunpack.c.l.b16 %v8436
      %v8572 = vunpack.c.h.b16 %v8436
      %v8573 = vunpack.c.l.b16 %v8437
      %v8574 = vunpack.c.h.b16 %v8437
      %v8575 = vunpack.c.l.b16 %v8438
      %v8576 = vunpack.c.h.b16 %v8438
      %v8577 = vunpack.c.l.b16 %v8439
      %v8578 = vunpack.c.h.b16 %v8439
      %v8579 = vunpack.c.l.b16 %v8440
      %v8580 = vunpack.c.h.b16 %v8440
      %v8581 = vunpack.c.l.b16 %v8441
      %v8582 = vunpack.c.h.b16 %v8441
      %v8583 = vunpack.c.l.b16 %v8442
      %v8584 = vunpack.c.h.b16 %v8442
      %v8585 = vunpack.c.l.b16 %v8443
      %v8586 = vunpack.c.h.b16 %v8443
      %v8587 = vunpack.c.l.b16 %v8444
      %v8588 = vunpack.c.h.b16 %v8444
      %v8589 = vpack.c.b16 %v8495, %v8493
      %v8590 = vpack.c.b16 %v8496, %v8494
      %v8591 = vpack.c.b16 %v8499, %v8497
      %v8592 = vpack.c.b16 %v8500, %v8498
      %v8593 = vpack.c.b16 %v8503, %v8501
      %v8594 = vpack.c.b16 %v8504, %v8502
      %v8595 = vpack.c.b16 %v8507, %v8505
      %v8596 = vpack.c.b16 %v8508, %v8506
      %v8597 = vpack.c.b16 %v8511, %v8509
      %v8598 = vpack.c.b16 %v8512, %v8510
      %v8599 = vpack.c.b16 %v8515, %v8513
      %v8600 = vpack.c.b16 %v8516, %v8514
      %v8601 = vpack.c.b16 %v8519, %v8517
      %v8602 = vpack.c.b16 %v8520, %v8518
      %v8603 = vpack.c.b16 %v8523, %v8521
      %v8604 = vpack.c.b16 %v8524, %v8522
      %v8605 = vpack.c.b16 %v8527, %v8525
      %v8606 = vpack.c.b16 %v8528, %v8526
      %v8607 = vpack.c.b16 %v8531, %v8529
      %v8608 = vpack.c.b16 %v8532, %v8530
      %v8609 = vpack.c.b16 %v8535, %v8533
      %v8610 = vpack.c.b16 %v8536, %v8534
      %v8611 = vpack.c.b16 %v8539, %v8537
      %v8612 = vpack.c.b16 %v8540, %v8538
      %v8613 = vpack.c.b16 %v8543, %v8541
      %v8614 = vpack.c.b16 %v8544, %v8542
      %v8615 = vpack.c.b16 %v8547, %v8545
      %v8616 = vpack.c.b16 %v8548, %v8546
      %v8617 = vpack.c.b16 %v8551, %v8549
      %v8618 = vpack.c.b16 %v8552, %v8550
      %v8619 = vpack.c.b16 %v8555, %v8553
      %v8620 = vpack.c.b16 %v8556, %v8554
      %v8621 = vpack.c.b16 %v8559, %v8557
      %v8622 = vpack.c.b16 %v8560, %v8558
      %v8623 = vpack.c.b16 %v8563, %v8561
      %v8624 = vpack.c.b16 %v8564, %v8562
      %v8625 = vpack.c.b16 %v8567, %v8565
      %v8626 = vpack.c.b16 %v8568, %v8566
      %v8627 = vpack.c.b16 %v8571, %v8569
      %v8628 = vpack.c.b16 %v8572, %v8570
      %v8629 = vpack.c.b16 %v8575, %v8573
      %v8630 = vpack.c.b16 %v8576, %v8574
      %v8631 = vpack.c.b16 %v8579, %v8577
      %v8632 = vpack.c.b16 %v8580, %v8578
      %v8633 = vpack.c.b16 %v8583, %v8581
      %v8634 = vpack.c.b16 %v8584, %v8582
      %v8635 = vpack.c.b16 %v8587, %v8585
      %v8636 = vpack.c.b16 %v8588, %v8586
      %8685 = vmatpush.bf16.msra.mxu0 %v8603
      %8686 = vmatpush.bf16.msra.mxu0 %v8601
      %8687 = vmatpush.bf16.msra.mxu0 %v8599
      %8688 = vmatpush.bf16.msra.mxu0 %v8597
      %8689 = vmatpush.bf16.msra.mxu0 %v8595
      %8690 = vmatpush.bf16.msra.mxu0 %v8593
      %8691 = vmatpush.bf16.msra.mxu0 %v8591
      %8692 = vmatpush.bf16.msra.mxu0 %v8589
      %8693 = vmatmul.bf16.gmra.mxu0 %v8393
      %v8694 = vpop.f32.mrf.mxu0
      %v8695 = vadd.f32 0.0, %v8694
      %v8696 = vpop.f32.mrf.mxu0
      %8697 = vdwg.mxu0
      %8698 = vmatpush.bf16.msra.mxu0 %v8619
      %8699 = vmatpush.bf16.msra.mxu0 %v8617
      %8700 = vmatpush.bf16.msra.mxu0 %v8615
      %8701 = vmatpush.bf16.msra.mxu0 %v8613
      %8702 = vmatpush.bf16.msra.mxu0 %v8611
      %8703 = vmatpush.bf16.msra.mxu0 %v8609
      %8704 = vmatpush.bf16.msra.mxu0 %v8607
      %8705 = vmatpush.bf16.msra.mxu0 %v8605
      %8706 = vmatmul.bf16.gmra.mxu0 %v8394
      %v8707 = vpop.f32.mrf.mxu0
      %v8708 = vadd.f32 %v8695, %v8707
      %v8709 = vpop.f32.mrf.mxu0
      %8710 = vdwg.mxu0
      %8711 = vmatpush.bf16.msra.mxu0 %v8635
      %8712 = vmatpush.bf16.msra.mxu0 %v8633
      %8713 = vmatpush.bf16.msra.mxu0 %v8631
      %8714 = vmatpush.bf16.msra.mxu0 %v8629
      %8715 = vmatpush.bf16.msra.mxu0 %v8627
      %8716 = vmatpush.bf16.msra.mxu0 %v8625
      %8717 = vmatpush.bf16.msra.mxu0 %v8623
      %8718 = vmatpush.bf16.msra.mxu0 %v8621
      %8719 = vmatmul.bf16.gmra.mxu0 %v8395
      %v8720 = vpop.f32.mrf.mxu0
      %v8721 = vadd.f32 %v8708, %v8720
      %v8722 = vpop.f32.mrf.mxu0
      %8723 = vdwg.mxu0
      %8724 = vmatpush.bf16.msra.mxu0 %v8604
      %8725 = vmatpush.bf16.msra.mxu0 %v8602
      %8726 = vmatpush.bf16.msra.mxu0 %v8600
      %8727 = vmatpush.bf16.msra.mxu0 %v8598
      %8728 = vmatpush.bf16.msra.mxu0 %v8596
      %8729 = vmatpush.bf16.msra.mxu0 %v8594
      %8730 = vmatpush.bf16.msra.mxu0 %v8592
      %8731 = vmatpush.bf16.msra.mxu0 %v8590
      %8732 = vmatmul.bf16.gmra.mxu0 %v8393
      %v8733 = vpop.f32.mrf.mxu0
      %v8734 = vadd.f32 0.0, %v8733
      %v8735 = vpop.f32.mrf.mxu0
      %8736 = vdwg.mxu0
      %8737 = vmatpush.bf16.msra.mxu0 %v8620
      %8738 = vmatpush.bf16.msra.mxu0 %v8618
      %8739 = vmatpush.bf16.msra.mxu0 %v8616
      %8740 = vmatpush.bf16.msra.mxu0 %v8614
      %8741 = vmatpush.bf16.msra.mxu0 %v8612
      %8742 = vmatpush.bf16.msra.mxu0 %v8610
      %8743 = vmatpush.bf16.msra.mxu0 %v8608
      %8744 = vmatpush.bf16.msra.mxu0 %v8606
      %8745 = vmatmul.bf16.gmra.mxu0 %v8394
      %v8746 = vpop.f32.mrf.mxu0
      %v8747 = vadd.f32 %v8734, %v8746
      %v8748 = vpop.f32.mrf.mxu0
      %8749 = vdwg.mxu0
      %8750 = vmatpush.bf16.msra.mxu0 %v8636
      %8751 = vmatpush.bf16.msra.mxu0 %v8634
      %8752 = vmatpush.bf16.msra.mxu0 %v8632
      %8753 = vmatpush.bf16.msra.mxu0 %v8630
      %8754 = vmatpush.bf16.msra.mxu0 %v8628
      %8755 = vmatpush.bf16.msra.mxu0 %v8626
      %8756 = vmatpush.bf16.msra.mxu0 %v8624
      %8757 = vmatpush.bf16.msra.mxu0 %v8622
      %8758 = vmatmul.bf16.gmra.mxu0 %v8395
      %v8759 = vpop.f32.mrf.mxu0
      %v8760 = vadd.f32 %v8747, %v8759
      %v8761 = vpop.f32.mrf.mxu0
      %8762 = vdwg.mxu0
      %v8811 = vunpack.c.l.b16 %v8301
      %v8812 = vunpack.c.h.b16 %v8301
      %v8813 = vunpack.c.l.b16 %v8302
      %v8814 = vunpack.c.h.b16 %v8302
      %v8815 = vunpack.c.l.b16 %v8303
      %v8816 = vunpack.c.h.b16 %v8303
      %v8817 = vunpack.c.l.b16 %v8304
      %v8818 = vunpack.c.h.b16 %v8304
      %v8819 = vunpack.c.l.b16 %v8305
      %v8820 = vunpack.c.h.b16 %v8305
      %v8821 = vunpack.c.l.b16 %v8306
      %v8822 = vunpack.c.h.b16 %v8306
      %v8823 = vunpack.c.l.b16 %v8307
      %v8824 = vunpack.c.h.b16 %v8307
      %v8825 = vunpack.c.l.b16 %v8308
      %v8826 = vunpack.c.h.b16 %v8308
      %v8827 = vunpack.c.l.b16 %v8309
      %v8828 = vunpack.c.h.b16 %v8309
      %v8829 = vunpack.c.l.b16 %v8310
      %v8830 = vunpack.c.h.b16 %v8310
      %v8831 = vunpack.c.l.b16 %v8311
      %v8832 = vunpack.c.h.b16 %v8311
      %v8833 = vunpack.c.l.b16 %v8312
      %v8834 = vunpack.c.h.b16 %v8312
      %v8835 = vunpack.c.l.b16 %v8313
      %v8836 = vunpack.c.h.b16 %v8313
      %v8837 = vunpack.c.l.b16 %v8314
      %v8838 = vunpack.c.h.b16 %v8314
      %v8839 = vunpack.c.l.b16 %v8315
      %v8840 = vunpack.c.h.b16 %v8315
      %v8841 = vunpack.c.l.b16 %v8316
      %v8842 = vunpack.c.h.b16 %v8316
      %v8843 = vunpack.c.l.b16 %v8317
      %v8844 = vunpack.c.h.b16 %v8317
      %v8845 = vunpack.c.l.b16 %v8318
      %v8846 = vunpack.c.h.b16 %v8318
      %v8847 = vunpack.c.l.b16 %v8319
      %v8848 = vunpack.c.h.b16 %v8319
      %v8849 = vunpack.c.l.b16 %v8320
      %v8850 = vunpack.c.h.b16 %v8320
      %v8851 = vunpack.c.l.b16 %v8321
      %v8852 = vunpack.c.h.b16 %v8321
      %v8853 = vunpack.c.l.b16 %v8322
      %v8854 = vunpack.c.h.b16 %v8322
      %v8855 = vunpack.c.l.b16 %v8323
      %v8856 = vunpack.c.h.b16 %v8323
      %v8857 = vunpack.c.l.b16 %v8324
      %v8858 = vunpack.c.h.b16 %v8324
      %v8859 = vunpack.c.l.b16 %v8325
      %v8860 = vunpack.c.h.b16 %v8325
      %v8861 = vunpack.c.l.b16 %v8326
      %v8862 = vunpack.c.h.b16 %v8326
      %v8863 = vunpack.c.l.b16 %v8327
      %v8864 = vunpack.c.h.b16 %v8327
      %v8865 = vunpack.c.l.b16 %v8328
      %v8866 = vunpack.c.h.b16 %v8328
      %v8867 = vunpack.c.l.b16 %v8329
      %v8868 = vunpack.c.h.b16 %v8329
      %v8869 = vunpack.c.l.b16 %v8330
      %v8870 = vunpack.c.h.b16 %v8330
      %v8871 = vunpack.c.l.b16 %v8331
      %v8872 = vunpack.c.h.b16 %v8331
      %v8873 = vunpack.c.l.b16 %v8332
      %v8874 = vunpack.c.h.b16 %v8332
      %v8875 = vunpack.c.l.b16 %v8333
      %v8876 = vunpack.c.h.b16 %v8333
      %v8877 = vunpack.c.l.b16 %v8334
      %v8878 = vunpack.c.h.b16 %v8334
      %v8879 = vunpack.c.l.b16 %v8335
      %v8880 = vunpack.c.h.b16 %v8335
      %v8881 = vunpack.c.l.b16 %v8336
      %v8882 = vunpack.c.h.b16 %v8336
      %v8883 = vunpack.c.l.b16 %v8337
      %v8884 = vunpack.c.h.b16 %v8337
      %v8885 = vunpack.c.l.b16 %v8338
      %v8886 = vunpack.c.h.b16 %v8338
      %v8887 = vunpack.c.l.b16 %v8339
      %v8888 = vunpack.c.h.b16 %v8339
      %v8889 = vunpack.c.l.b16 %v8340
      %v8890 = vunpack.c.h.b16 %v8340
      %v8891 = vunpack.c.l.b16 %v8341
      %v8892 = vunpack.c.h.b16 %v8341
      %v8893 = vunpack.c.l.b16 %v8342
      %v8894 = vunpack.c.h.b16 %v8342
      %v8895 = vunpack.c.l.b16 %v8343
      %v8896 = vunpack.c.h.b16 %v8343
      %v8897 = vunpack.c.l.b16 %v8344
      %v8898 = vunpack.c.h.b16 %v8344
      %v8899 = vunpack.c.l.b16 %v8345
      %v8900 = vunpack.c.h.b16 %v8345
      %v8901 = vunpack.c.l.b16 %v8346
      %v8902 = vunpack.c.h.b16 %v8346
      %v8903 = vunpack.c.l.b16 %v8347
      %v8904 = vunpack.c.h.b16 %v8347
      %v8905 = vunpack.c.l.b16 %v8348
      %v8906 = vunpack.c.h.b16 %v8348
      %v8907 = vpack.c.b16 %v8813, %v8811
      %v8908 = vpack.c.b16 %v8814, %v8812
      %v8909 = vpack.c.b16 %v8817, %v8815
      %v8910 = vpack.c.b16 %v8818, %v8816
      %v8911 = vpack.c.b16 %v8821, %v8819
      %v8912 = vpack.c.b16 %v8822, %v8820
      %v8913 = vpack.c.b16 %v8825, %v8823
      %v8914 = vpack.c.b16 %v8826, %v8824
      %v8915 = vpack.c.b16 %v8829, %v8827
      %v8916 = vpack.c.b16 %v8830, %v8828
      %v8917 = vpack.c.b16 %v8833, %v8831
      %v8918 = vpack.c.b16 %v8834, %v8832
      %v8919 = vpack.c.b16 %v8837, %v8835
      %v8920 = vpack.c.b16 %v8838, %v8836
      %v8921 = vpack.c.b16 %v8841, %v8839
      %v8922 = vpack.c.b16 %v8842, %v8840
      %v8923 = vpack.c.b16 %v8845, %v8843
      %v8924 = vpack.c.b16 %v8846, %v8844
      %v8925 = vpack.c.b16 %v8849, %v8847
      %v8926 = vpack.c.b16 %v8850, %v8848
      %v8927 = vpack.c.b16 %v8853, %v8851
      %v8928 = vpack.c.b16 %v8854, %v8852
      %v8929 = vpack.c.b16 %v8857, %v8855
      %v8930 = vpack.c.b16 %v8858, %v8856
      %v8931 = vpack.c.b16 %v8861, %v8859
      %v8932 = vpack.c.b16 %v8862, %v8860
      %v8933 = vpack.c.b16 %v8865, %v8863
      %v8934 = vpack.c.b16 %v8866, %v8864
      %v8935 = vpack.c.b16 %v8869, %v8867
      %v8936 = vpack.c.b16 %v8870, %v8868
      %v8937 = vpack.c.b16 %v8873, %v8871
      %v8938 = vpack.c.b16 %v8874, %v8872
      %v8939 = vpack.c.b16 %v8877, %v8875
      %v8940 = vpack.c.b16 %v8878, %v8876
      %v8941 = vpack.c.b16 %v8881, %v8879
      %v8942 = vpack.c.b16 %v8882, %v8880
      %v8943 = vpack.c.b16 %v8885, %v8883
      %v8944 = vpack.c.b16 %v8886, %v8884
      %v8945 = vpack.c.b16 %v8889, %v8887
      %v8946 = vpack.c.b16 %v8890, %v8888
      %v8947 = vpack.c.b16 %v8893, %v8891
      %v8948 = vpack.c.b16 %v8894, %v8892
      %v8949 = vpack.c.b16 %v8897, %v8895
      %v8950 = vpack.c.b16 %v8898, %v8896
      %v8951 = vpack.c.b16 %v8901, %v8899
      %v8952 = vpack.c.b16 %v8902, %v8900
      %v8953 = vpack.c.b16 %v8905, %v8903
      %v8954 = vpack.c.b16 %v8906, %v8904
      %9003 = vmatpush.bf16.msra.mxu0 %v8921
      %9004 = vmatpush.bf16.msra.mxu0 %v8919
      %9005 = vmatpush.bf16.msra.mxu0 %v8917
      %9006 = vmatpush.bf16.msra.mxu0 %v8915
      %9007 = vmatpush.bf16.msra.mxu0 %v8913
      %9008 = vmatpush.bf16.msra.mxu0 %v8911
      %9009 = vmatpush.bf16.msra.mxu0 %v8909
      %9010 = vmatpush.bf16.msra.mxu0 %v8907
      %9011 = vmatmul.bf16.gmra.mxu0 %v8298
      %v9012 = vpop.f32.mrf.mxu0
      %v9013 = vadd.f32 %v8721, %v9012
      %v9014 = vpop.f32.mrf.mxu0
      %9015 = vdwg.mxu0
      %9016 = vmatpush.bf16.msra.mxu0 %v8937
      %9017 = vmatpush.bf16.msra.mxu0 %v8935
      %9018 = vmatpush.bf16.msra.mxu0 %v8933
      %9019 = vmatpush.bf16.msra.mxu0 %v8931
      %9020 = vmatpush.bf16.msra.mxu0 %v8929
      %9021 = vmatpush.bf16.msra.mxu0 %v8927
      %9022 = vmatpush.bf16.msra.mxu0 %v8925
      %9023 = vmatpush.bf16.msra.mxu0 %v8923
      %9024 = vmatmul.bf16.gmra.mxu0 %v8299
      %v9025 = vpop.f32.mrf.mxu0
      %v9026 = vadd.f32 %v9013, %v9025
      %v9027 = vpop.f32.mrf.mxu0
      %9028 = vdwg.mxu0
      %9029 = vmatpush.bf16.msra.mxu0 %v8953
      %9030 = vmatpush.bf16.msra.mxu0 %v8951
      %9031 = vmatpush.bf16.msra.mxu0 %v8949
      %9032 = vmatpush.bf16.msra.mxu0 %v8947
      %9033 = vmatpush.bf16.msra.mxu0 %v8945
      %9034 = vmatpush.bf16.msra.mxu0 %v8943
      %9035 = vmatpush.bf16.msra.mxu0 %v8941
      %9036 = vmatpush.bf16.msra.mxu0 %v8939
      %9037 = vmatmul.bf16.gmra.mxu0 %v8300
      %v9038 = vpop.f32.mrf.mxu0
      %v9039 = vadd.f32 %v9026, %v9038
      %v9040 = vpop.f32.mrf.mxu0
      %9041 = vdwg.mxu0
      %9042 = vmatpush.bf16.msra.mxu0 %v8922
      %9043 = vmatpush.bf16.msra.mxu0 %v8920
      %9044 = vmatpush.bf16.msra.mxu0 %v8918
      %9045 = vmatpush.bf16.msra.mxu0 %v8916
      %9046 = vmatpush.bf16.msra.mxu0 %v8914
      %9047 = vmatpush.bf16.msra.mxu0 %v8912
      %9048 = vmatpush.bf16.msra.mxu0 %v8910
      %9049 = vmatpush.bf16.msra.mxu0 %v8908
      %9050 = vmatmul.bf16.gmra.mxu0 %v8298
      %v9051 = vpop.f32.mrf.mxu0
      %v9052 = vadd.f32 %v8760, %v9051
      %v9053 = vpop.f32.mrf.mxu0
      %9054 = vdwg.mxu0
      %9055 = vmatpush.bf16.msra.mxu0 %v8938
      %9056 = vmatpush.bf16.msra.mxu0 %v8936
      %9057 = vmatpush.bf16.msra.mxu0 %v8934
      %9058 = vmatpush.bf16.msra.mxu0 %v8932
      %9059 = vmatpush.bf16.msra.mxu0 %v8930
      %9060 = vmatpush.bf16.msra.mxu0 %v8928
      %9061 = vmatpush.bf16.msra.mxu0 %v8926
      %9062 = vmatpush.bf16.msra.mxu0 %v8924
      %9063 = vmatmul.bf16.gmra.mxu0 %v8299
      %v9064 = vpop.f32.mrf.mxu0
      %v9065 = vadd.f32 %v9052, %v9064
      %v9066 = vpop.f32.mrf.mxu0
      %9067 = vdwg.mxu0
      %9068 = vmatpush.bf16.msra.mxu0 %v8954
      %9069 = vmatpush.bf16.msra.mxu0 %v8952
      %9070 = vmatpush.bf16.msra.mxu0 %v8950
      %9071 = vmatpush.bf16.msra.mxu0 %v8948
      %9072 = vmatpush.bf16.msra.mxu0 %v8946
      %9073 = vmatpush.bf16.msra.mxu0 %v8944
      %9074 = vmatpush.bf16.msra.mxu0 %v8942
      %9075 = vmatpush.bf16.msra.mxu0 %v8940
      %9076 = vmatmul.bf16.gmra.mxu0 %v8300
      %v9077 = vpop.f32.mrf.mxu0
      %v9078 = vadd.f32 %v9065, %v9077
      %v9079 = vpop.f32.mrf.mxu0
      %9080 = vdwg.mxu0
      %s9081 = scalar_lea.vmem %s7, 4
      %v9082 = vld [vmem:[%s9081] sm:$0x3]
      %v9084 = vsel %vm8245, %v9082, 0
      %9086 = vmatpush.bf16.msra.mxu0 0
      %9087 = vmatpush.bf16.msra.mxu0 0
      %9088 = vmatpush.bf16.msra.mxu0 0
      %9089 = vmatpush.bf16.msra.mxu0 0
      %9090 = vmatpush.bf16.msra.mxu0 0
      %9091 = vmatpush.bf16.msra.mxu0 0
      %9092 = vmatpush.bf16.msra.mxu0 0
      %9093 = vmatpush.bf16.msra.mxu0 %v8251
      %9094 = vmatmul.bf16.gmra.mxu0 %v9084
      %v9095 = vpop.f32.mrf.mxu0
      %v9096 = vadd.f32 0.0, %v9095
      %v9097 = vpop.f32.mrf.mxu0
      %9098 = vdwg.mxu0
      %9099 = vmatpush.bf16.msra.mxu0 0
      %9100 = vmatpush.bf16.msra.mxu0 0
      %9101 = vmatpush.bf16.msra.mxu0 0
      %9102 = vmatpush.bf16.msra.mxu0 0
      %9103 = vmatpush.bf16.msra.mxu0 0
      %9104 = vmatpush.bf16.msra.mxu0 0
      %9105 = vmatpush.bf16.msra.mxu0 0
      %9106 = vmatpush.bf16.msra.mxu0 %v8254
      %9107 = vmatmul.bf16.gmra.mxu0 %v9084
      %v9108 = vpop.f32.mrf.mxu0
      %v9109 = vadd.f32 0.0, %v9108
      %v9110 = vpop.f32.mrf.mxu0
      %9111 = vdwg.mxu0
      %9112 = vmatpush.bf16.msra.mxu0 0
      %9113 = vmatpush.bf16.msra.mxu0 0
      %9114 = vmatpush.bf16.msra.mxu0 0
      %9115 = vmatpush.bf16.msra.mxu0 0
      %9116 = vmatpush.bf16.msra.mxu0 0
      %9117 = vmatpush.bf16.msra.mxu0 0
      %9118 = vmatpush.bf16.msra.mxu0 0
      %9119 = vmatpush.bf16.msra.mxu0 %v8257
      %9120 = vmatmul.bf16.gmra.mxu0 %v9084
      %v9121 = vpop.f32.mrf.mxu0
      %v9122 = vadd.f32 0.0, %v9121
      %v9123 = vpop.f32.mrf.mxu0
      %9124 = vdwg.mxu0
      %v9125 = vpack.c.bf16 %v9096, %v9096
      %v9126 = vpack.c.bf16 %v9109, %v9109
      %v9127 = vpack.c.bf16 %v9122, %v9122
      %s9128 = scalar_lea.vmem %s8, 768
      %v9129 = vld [vmem:[%s9128] sm:$0xff]
      %v9130 = vld [vmem:[%s9128 + $0x8] sm:$0xff]
      %v9131 = vld [vmem:[%s9128 + $0x10] sm:$0xff]
      %v9132 = vld [vmem:[%s9128 + $0x18] sm:$0xff]
      %v9133 = vld [vmem:[%s9128 + $0x20] sm:$0xff]
      %v9134 = vld [vmem:[%s9128 + $0x28] sm:$0xff]
      %v9135 = vld [vmem:[%s9128 + $0x30] sm:$0xff]
      %v9136 = vld [vmem:[%s9128 + $0x38] sm:$0xff]
      %v9137 = vld [vmem:[%s9128 + $0x40] sm:$0xff]
      %v9138 = vld [vmem:[%s9128 + $0x48] sm:$0xff]
      %v9139 = vld [vmem:[%s9128 + $0x50] sm:$0xff]
      %v9140 = vld [vmem:[%s9128 + $0x58] sm:$0xff]
      %v9141 = vld [vmem:[%s9128 + $0x60] sm:$0xff]
      %v9142 = vld [vmem:[%s9128 + $0x68] sm:$0xff]
      %v9143 = vld [vmem:[%s9128 + $0x70] sm:$0xff]
      %v9144 = vld [vmem:[%s9128 + $0x78] sm:$0xff]
      %v9145 = vld [vmem:[%s9128 + $0x80] sm:$0xff]
      %v9146 = vld [vmem:[%s9128 + $0x88] sm:$0xff]
      %v9147 = vld [vmem:[%s9128 + $0x90] sm:$0xff]
      %v9148 = vld [vmem:[%s9128 + $0x98] sm:$0xff]
      %v9149 = vld [vmem:[%s9128 + $0xa0] sm:$0xff]
      %v9150 = vld [vmem:[%s9128 + $0xa8] sm:$0xff]
      %v9151 = vld [vmem:[%s9128 + $0xb0] sm:$0xff]
      %v9152 = vld [vmem:[%s9128 + $0xb8] sm:$0xff]
      %v9153 = vld [vmem:[%s9128 + $0xc0] sm:$0xff]
      %v9154 = vld [vmem:[%s9128 + $0xc8] sm:$0xff]
      %v9155 = vld [vmem:[%s9128 + $0xd0] sm:$0xff]
      %v9156 = vld [vmem:[%s9128 + $0xd8] sm:$0xff]
      %v9157 = vld [vmem:[%s9128 + $0xe0] sm:$0xff]
      %v9158 = vld [vmem:[%s9128 + $0xe8] sm:$0xff]
      %v9159 = vld [vmem:[%s9128 + $0xf0] sm:$0xff]
      %v9160 = vld [vmem:[%s9128 + $0xf8] sm:$0xff]
      %v9161 = vld [vmem:[%s9128 + $0x100] sm:$0xff]
      %v9162 = vld [vmem:[%s9128 + $0x108] sm:$0xff]
      %v9163 = vld [vmem:[%s9128 + $0x110] sm:$0xff]
      %v9164 = vld [vmem:[%s9128 + $0x118] sm:$0xff]
      %v9165 = vld [vmem:[%s9128 + $0x120] sm:$0xff]
      %v9166 = vld [vmem:[%s9128 + $0x128] sm:$0xff]
      %v9167 = vld [vmem:[%s9128 + $0x130] sm:$0xff]
      %v9168 = vld [vmem:[%s9128 + $0x138] sm:$0xff]
      %v9169 = vld [vmem:[%s9128 + $0x140] sm:$0xff]
      %v9170 = vld [vmem:[%s9128 + $0x148] sm:$0xff]
      %v9171 = vld [vmem:[%s9128 + $0x150] sm:$0xff]
      %v9172 = vld [vmem:[%s9128 + $0x158] sm:$0xff]
      %v9173 = vld [vmem:[%s9128 + $0x160] sm:$0xff]
      %v9174 = vld [vmem:[%s9128 + $0x168] sm:$0xff]
      %v9175 = vld [vmem:[%s9128 + $0x170] sm:$0xff]
      %v9176 = vld [vmem:[%s9128 + $0x178] sm:$0xff]
      %v9225 = vunpack.c.l.b16 %v9129
      %v9226 = vunpack.c.h.b16 %v9129
      %v9227 = vunpack.c.l.b16 %v9130
      %v9228 = vunpack.c.h.b16 %v9130
      %v9229 = vunpack.c.l.b16 %v9131
      %v9230 = vunpack.c.h.b16 %v9131
      %v9231 = vunpack.c.l.b16 %v9132
      %v9232 = vunpack.c.h.b16 %v9132
      %v9233 = vunpack.c.l.b16 %v9133
      %v9234 = vunpack.c.h.b16 %v9133
      %v9235 = vunpack.c.l.b16 %v9134
      %v9236 = vunpack.c.h.b16 %v9134
      %v9237 = vunpack.c.l.b16 %v9135
      %v9238 = vunpack.c.h.b16 %v9135
      %v9239 = vunpack.c.l.b16 %v9136
      %v9240 = vunpack.c.h.b16 %v9136
      %v9241 = vunpack.c.l.b16 %v9137
      %v9242 = vunpack.c.h.b16 %v9137
      %v9243 = vunpack.c.l.b16 %v9138
      %v9244 = vunpack.c.h.b16 %v9138
      %v9245 = vunpack.c.l.b16 %v9139
      %v9246 = vunpack.c.h.b16 %v9139
      %v9247 = vunpack.c.l.b16 %v9140
      %v9248 = vunpack.c.h.b16 %v9140
      %v9249 = vunpack.c.l.b16 %v9141
      %v9250 = vunpack.c.h.b16 %v9141
      %v9251 = vunpack.c.l.b16 %v9142
      %v9252 = vunpack.c.h.b16 %v9142
      %v9253 = vunpack.c.l.b16 %v9143
      %v9254 = vunpack.c.h.b16 %v9143
      %v9255 = vunpack.c.l.b16 %v9144
      %v9256 = vunpack.c.h.b16 %v9144
      %v9257 = vunpack.c.l.b16 %v9145
      %v9258 = vunpack.c.h.b16 %v9145
      %v9259 = vunpack.c.l.b16 %v9146
      %v9260 = vunpack.c.h.b16 %v9146
      %v9261 = vunpack.c.l.b16 %v9147
      %v9262 = vunpack.c.h.b16 %v9147
      %v9263 = vunpack.c.l.b16 %v9148
      %v9264 = vunpack.c.h.b16 %v9148
      %v9265 = vunpack.c.l.b16 %v9149
      %v9266 = vunpack.c.h.b16 %v9149
      %v9267 = vunpack.c.l.b16 %v9150
      %v9268 = vunpack.c.h.b16 %v9150
      %v9269 = vunpack.c.l.b16 %v9151
      %v9270 = vunpack.c.h.b16 %v9151
      %v9271 = vunpack.c.l.b16 %v9152
      %v9272 = vunpack.c.h.b16 %v9152
      %v9273 = vunpack.c.l.b16 %v9153
      %v9274 = vunpack.c.h.b16 %v9153
      %v9275 = vunpack.c.l.b16 %v9154
      %v9276 = vunpack.c.h.b16 %v9154
      %v9277 = vunpack.c.l.b16 %v9155
      %v9278 = vunpack.c.h.b16 %v9155
      %v9279 = vunpack.c.l.b16 %v9156
      %v9280 = vunpack.c.h.b16 %v9156
      %v9281 = vunpack.c.l.b16 %v9157
      %v9282 = vunpack.c.h.b16 %v9157
      %v9283 = vunpack.c.l.b16 %v9158
      %v9284 = vunpack.c.h.b16 %v9158
      %v9285 = vunpack.c.l.b16 %v9159
      %v9286 = vunpack.c.h.b16 %v9159
      %v9287 = vunpack.c.l.b16 %v9160
      %v9288 = vunpack.c.h.b16 %v9160
      %v9289 = vunpack.c.l.b16 %v9161
      %v9290 = vunpack.c.h.b16 %v9161
      %v9291 = vunpack.c.l.b16 %v9162
      %v9292 = vunpack.c.h.b16 %v9162
      %v9293 = vunpack.c.l.b16 %v9163
      %v9294 = vunpack.c.h.b16 %v9163
      %v9295 = vunpack.c.l.b16 %v9164
      %v9296 = vunpack.c.h.b16 %v9164
      %v9297 = vunpack.c.l.b16 %v9165
      %v9298 = vunpack.c.h.b16 %v9165
      %v9299 = vunpack.c.l.b16 %v9166
      %v9300 = vunpack.c.h.b16 %v9166
      %v9301 = vunpack.c.l.b16 %v9167
      %v9302 = vunpack.c.h.b16 %v9167
      %v9303 = vunpack.c.l.b16 %v9168
      %v9304 = vunpack.c.h.b16 %v9168
      %v9305 = vunpack.c.l.b16 %v9169
      %v9306 = vunpack.c.h.b16 %v9169
      %v9307 = vunpack.c.l.b16 %v9170
      %v9308 = vunpack.c.h.b16 %v9170
      %v9309 = vunpack.c.l.b16 %v9171
      %v9310 = vunpack.c.h.b16 %v9171
      %v9311 = vunpack.c.l.b16 %v9172
      %v9312 = vunpack.c.h.b16 %v9172
      %v9313 = vunpack.c.l.b16 %v9173
      %v9314 = vunpack.c.h.b16 %v9173
      %v9315 = vunpack.c.l.b16 %v9174
      %v9316 = vunpack.c.h.b16 %v9174
      %v9317 = vunpack.c.l.b16 %v9175
      %v9318 = vunpack.c.h.b16 %v9175
      %v9319 = vunpack.c.l.b16 %v9176
      %v9320 = vunpack.c.h.b16 %v9176
      %v9321 = vpack.c.b16 %v9227, %v9225
      %v9322 = vpack.c.b16 %v9228, %v9226
      %v9323 = vpack.c.b16 %v9231, %v9229
      %v9324 = vpack.c.b16 %v9232, %v9230
      %v9325 = vpack.c.b16 %v9235, %v9233
      %v9326 = vpack.c.b16 %v9236, %v9234
      %v9327 = vpack.c.b16 %v9239, %v9237
      %v9328 = vpack.c.b16 %v9240, %v9238
      %v9329 = vpack.c.b16 %v9243, %v9241
      %v9330 = vpack.c.b16 %v9244, %v9242
      %v9331 = vpack.c.b16 %v9247, %v9245
      %v9332 = vpack.c.b16 %v9248, %v9246
      %v9333 = vpack.c.b16 %v9251, %v9249
      %v9334 = vpack.c.b16 %v9252, %v9250
      %v9335 = vpack.c.b16 %v9255, %v9253
      %v9336 = vpack.c.b16 %v9256, %v9254
      %v9337 = vpack.c.b16 %v9259, %v9257
      %v9338 = vpack.c.b16 %v9260, %v9258
      %v9339 = vpack.c.b16 %v9263, %v9261
      %v9340 = vpack.c.b16 %v9264, %v9262
      %v9341 = vpack.c.b16 %v9267, %v9265
      %v9342 = vpack.c.b16 %v9268, %v9266
      %v9343 = vpack.c.b16 %v9271, %v9269
      %v9344 = vpack.c.b16 %v9272, %v9270
      %v9345 = vpack.c.b16 %v9275, %v9273
      %v9346 = vpack.c.b16 %v9276, %v9274
      %v9347 = vpack.c.b16 %v9279, %v9277
      %v9348 = vpack.c.b16 %v9280, %v9278
      %v9349 = vpack.c.b16 %v9283, %v9281
      %v9350 = vpack.c.b16 %v9284, %v9282
      %v9351 = vpack.c.b16 %v9287, %v9285
      %v9352 = vpack.c.b16 %v9288, %v9286
      %v9353 = vpack.c.b16 %v9291, %v9289
      %v9354 = vpack.c.b16 %v9292, %v9290
      %v9355 = vpack.c.b16 %v9295, %v9293
      %v9356 = vpack.c.b16 %v9296, %v9294
      %v9357 = vpack.c.b16 %v9299, %v9297
      %v9358 = vpack.c.b16 %v9300, %v9298
      %v9359 = vpack.c.b16 %v9303, %v9301
      %v9360 = vpack.c.b16 %v9304, %v9302
      %v9361 = vpack.c.b16 %v9307, %v9305
      %v9362 = vpack.c.b16 %v9308, %v9306
      %v9363 = vpack.c.b16 %v9311, %v9309
      %v9364 = vpack.c.b16 %v9312, %v9310
      %v9365 = vpack.c.b16 %v9315, %v9313
      %v9366 = vpack.c.b16 %v9316, %v9314
      %v9367 = vpack.c.b16 %v9319, %v9317
      %v9368 = vpack.c.b16 %v9320, %v9318
      %9417 = vmatpush.bf16.msra.mxu0 %v9335
      %9418 = vmatpush.bf16.msra.mxu0 %v9333
      %9419 = vmatpush.bf16.msra.mxu0 %v9331
      %9420 = vmatpush.bf16.msra.mxu0 %v9329
      %9421 = vmatpush.bf16.msra.mxu0 %v9327
      %9422 = vmatpush.bf16.msra.mxu0 %v9325
      %9423 = vmatpush.bf16.msra.mxu0 %v9323
      %9424 = vmatpush.bf16.msra.mxu0 %v9321
      %9425 = vmatmul.bf16.gmra.mxu0 %v9125
      %v9426 = vpop.f32.mrf.mxu0
      %v9427 = vadd.f32 0.0, %v9426
      %v9428 = vpop.f32.mrf.mxu0
      %9429 = vdwg.mxu0
      %9430 = vmatpush.bf16.msra.mxu0 %v9351
      %9431 = vmatpush.bf16.msra.mxu0 %v9349
      %9432 = vmatpush.bf16.msra.mxu0 %v9347
      %9433 = vmatpush.bf16.msra.mxu0 %v9345
      %9434 = vmatpush.bf16.msra.mxu0 %v9343
      %9435 = vmatpush.bf16.msra.mxu0 %v9341
      %9436 = vmatpush.bf16.msra.mxu0 %v9339
      %9437 = vmatpush.bf16.msra.mxu0 %v9337
      %9438 = vmatmul.bf16.gmra.mxu0 %v9126
      %v9439 = vpop.f32.mrf.mxu0
      %v9440 = vadd.f32 %v9427, %v9439
      %v9441 = vpop.f32.mrf.mxu0
      %9442 = vdwg.mxu0
      %9443 = vmatpush.bf16.msra.mxu0 %v9367
      %9444 = vmatpush.bf16.msra.mxu0 %v9365
      %9445 = vmatpush.bf16.msra.mxu0 %v9363
      %9446 = vmatpush.bf16.msra.mxu0 %v9361
      %9447 = vmatpush.bf16.msra.mxu0 %v9359
      %9448 = vmatpush.bf16.msra.mxu0 %v9357
      %9449 = vmatpush.bf16.msra.mxu0 %v9355
      %9450 = vmatpush.bf16.msra.mxu0 %v9353
      %9451 = vmatmul.bf16.gmra.mxu0 %v9127
      %v9452 = vpop.f32.mrf.mxu0
      %v9453 = vadd.f32 %v9440, %v9452
      %v9454 = vpop.f32.mrf.mxu0
      %9455 = vdwg.mxu0
      %9456 = vmatpush.bf16.msra.mxu0 %v9336
      %9457 = vmatpush.bf16.msra.mxu0 %v9334
      %9458 = vmatpush.bf16.msra.mxu0 %v9332
      %9459 = vmatpush.bf16.msra.mxu0 %v9330
      %9460 = vmatpush.bf16.msra.mxu0 %v9328
      %9461 = vmatpush.bf16.msra.mxu0 %v9326
      %9462 = vmatpush.bf16.msra.mxu0 %v9324
      %9463 = vmatpush.bf16.msra.mxu0 %v9322
      %9464 = vmatmul.bf16.gmra.mxu0 %v9125
      %v9465 = vpop.f32.mrf.mxu0
      %v9466 = vadd.f32 0.0, %v9465
      %v9467 = vpop.f32.mrf.mxu0
      %9468 = vdwg.mxu0
      %9469 = vmatpush.bf16.msra.mxu0 %v9352
      %9470 = vmatpush.bf16.msra.mxu0 %v9350
      %9471 = vmatpush.bf16.msra.mxu0 %v9348
      %9472 = vmatpush.bf16.msra.mxu0 %v9346
      %9473 = vmatpush.bf16.msra.mxu0 %v9344
      %9474 = vmatpush.bf16.msra.mxu0 %v9342
      %9475 = vmatpush.bf16.msra.mxu0 %v9340
      %9476 = vmatpush.bf16.msra.mxu0 %v9338
      %9477 = vmatmul.bf16.gmra.mxu0 %v9126
      %v9478 = vpop.f32.mrf.mxu0
      %v9479 = vadd.f32 %v9466, %v9478
      %v9480 = vpop.f32.mrf.mxu0
      %9481 = vdwg.mxu0
      %9482 = vmatpush.bf16.msra.mxu0 %v9368
      %9483 = vmatpush.bf16.msra.mxu0 %v9366
      %9484 = vmatpush.bf16.msra.mxu0 %v9364
      %9485 = vmatpush.bf16.msra.mxu0 %v9362
      %9486 = vmatpush.bf16.msra.mxu0 %v9360
      %9487 = vmatpush.bf16.msra.mxu0 %v9358
      %9488 = vmatpush.bf16.msra.mxu0 %v9356
      %9489 = vmatpush.bf16.msra.mxu0 %v9354
      %9490 = vmatmul.bf16.gmra.mxu0 %v9127
      %v9491 = vpop.f32.mrf.mxu0
      %v9492 = vadd.f32 %v9479, %v9491
      %v9493 = vpop.f32.mrf.mxu0
      %9494 = vdwg.mxu0
      %v9495 = vadd.f32 %v9039, %v9453
      %v9496 = vadd.f32 %v9078, %v9492
      %v9497 = vld [vmem:[%s9] sm:$0x3]
      %v9499 = vperm.slane %v9497, 0
      %v9500 = vperm.slane %v9497, 1
      %v9503 = vadd.f32 %v9495, %v9499
      %v9504 = vadd.f32 %v9496, %v9500
      %v9505 = vmax.f32 %v9503, 0.0
      %v9506 = vmax.f32 %v9504, 0.0
      %v9507 = vpack.c.bf16 %v9505, %v9505
      %v9508 = vpack.c.bf16 %v9506, %v9506
      %v9509 = vld [vmem:[%s10] sm:$0x1]
      %vm9510 = vcmask 31744
      %v9512 = vsel %vm9510, %v9509, 0
      %vm9514 = vcmask 1041408
      %v9516 = vsel %vm9514, %v9507, 0
      %v9519 = vsel %vm9514, %v9508, 0
      %9521 = vmatpush.bf16.msra.mxu0 0
      %9522 = vmatpush.bf16.msra.mxu0 0
      %9523 = vmatpush.bf16.msra.mxu0 0
      %9524 = vmatpush.bf16.msra.mxu0 0
      %9525 = vmatpush.bf16.msra.mxu0 0
      %9526 = vmatpush.bf16.msra.mxu0 0
      %9527 = vmatpush.bf16.msra.mxu0 0
      %9528 = vmatpush.bf16.msra.mxu0 %v9516
      %9529 = vmatmul.bf16.gmra.mxu0 %v9512
      %v9530 = vpop.f32.mrf.mxu0
      %v9531 = vadd.f32 0.0, %v9530
      %v9532 = vpop.f32.mrf.mxu0
      %9533 = vdwg.mxu0
      %9534 = vmatpush.bf16.msra.mxu0 0
      %9535 = vmatpush.bf16.msra.mxu0 0
      %9536 = vmatpush.bf16.msra.mxu0 0
      %9537 = vmatpush.bf16.msra.mxu0 0
      %9538 = vmatpush.bf16.msra.mxu0 0
      %9539 = vmatpush.bf16.msra.mxu0 0
      %9540 = vmatpush.bf16.msra.mxu0 0
      %9541 = vmatpush.bf16.msra.mxu0 %v9519
      %9542 = vmatmul.bf16.gmra.mxu0 %v9512
      %v9543 = vpop.f32.mrf.mxu0
      %v9544 = vadd.f32 0.0, %v9543
      %v9545 = vpop.f32.mrf.mxu0
      %9546 = vdwg.mxu0
      %v9547 = vpack.c.bf16 %v9531, %v9531
      %v9548 = vpack.c.bf16 %v9544, %v9544
      %v9549 = vld [vmem:[%s11] sm:$0xff]
      %v9550 = vld [vmem:[%s11 + $0x8] sm:$0xff]
      %v9551 = vld [vmem:[%s11 + $0x10] sm:$0xff]
      %v9552 = vld [vmem:[%s11 + $0x18] sm:$0xff]
      %v9553 = vld [vmem:[%s11 + $0x20] sm:$0xff]
      %v9554 = vld [vmem:[%s11 + $0x28] sm:$0xff]
      %v9555 = vld [vmem:[%s11 + $0x30] sm:$0xff]
      %v9556 = vld [vmem:[%s11 + $0x38] sm:$0xff]
      %v9557 = vld [vmem:[%s11 + $0x40] sm:$0xff]
      %v9558 = vld [vmem:[%s11 + $0x48] sm:$0xff]
      %v9559 = vld [vmem:[%s11 + $0x50] sm:$0xff]
      %v9560 = vld [vmem:[%s11 + $0x58] sm:$0xff]
      %v9561 = vld [vmem:[%s11 + $0x60] sm:$0xff]
      %v9562 = vld [vmem:[%s11 + $0x68] sm:$0xff]
      %v9563 = vld [vmem:[%s11 + $0x70] sm:$0xff]
      %v9564 = vld [vmem:[%s11 + $0x78] sm:$0xff]
      %v9565 = vld [vmem:[%s11 + $0x80] sm:$0xff]
      %v9566 = vld [vmem:[%s11 + $0x88] sm:$0xff]
      %v9567 = vld [vmem:[%s11 + $0x90] sm:$0xff]
      %v9568 = vld [vmem:[%s11 + $0x98] sm:$0xff]
      %v9569 = vld [vmem:[%s11 + $0xa0] sm:$0xff]
      %v9570 = vld [vmem:[%s11 + $0xa8] sm:$0xff]
      %v9571 = vld [vmem:[%s11 + $0xb0] sm:$0xff]
      %v9572 = vld [vmem:[%s11 + $0xb8] sm:$0xff]
      %v9573 = vld [vmem:[%s11 + $0xc0] sm:$0xff]
      %v9574 = vld [vmem:[%s11 + $0xc8] sm:$0xff]
      %v9575 = vld [vmem:[%s11 + $0xd0] sm:$0xff]
      %v9576 = vld [vmem:[%s11 + $0xd8] sm:$0xff]
      %v9577 = vld [vmem:[%s11 + $0xe0] sm:$0xff]
      %v9578 = vld [vmem:[%s11 + $0xe8] sm:$0xff]
      %v9579 = vld [vmem:[%s11 + $0xf0] sm:$0xff]
      %v9580 = vld [vmem:[%s11 + $0xf8] sm:$0xff]
      %v9581 = vld [vmem:[%s11 + $0x100] sm:$0xff]
      %v9582 = vld [vmem:[%s11 + $0x108] sm:$0xff]
      %v9583 = vld [vmem:[%s11 + $0x110] sm:$0xff]
      %v9584 = vld [vmem:[%s11 + $0x118] sm:$0xff]
      %v9585 = vld [vmem:[%s11 + $0x120] sm:$0xff]
      %v9586 = vld [vmem:[%s11 + $0x128] sm:$0xff]
      %v9587 = vld [vmem:[%s11 + $0x130] sm:$0xff]
      %v9588 = vld [vmem:[%s11 + $0x138] sm:$0xff]
      %v9589 = vld [vmem:[%s11 + $0x140] sm:$0xff]
      %v9590 = vld [vmem:[%s11 + $0x148] sm:$0xff]
      %v9591 = vld [vmem:[%s11 + $0x150] sm:$0xff]
      %v9592 = vld [vmem:[%s11 + $0x158] sm:$0xff]
      %v9593 = vld [vmem:[%s11 + $0x160] sm:$0xff]
      %v9594 = vld [vmem:[%s11 + $0x168] sm:$0xff]
      %v9595 = vld [vmem:[%s11 + $0x170] sm:$0xff]
      %v9596 = vld [vmem:[%s11 + $0x178] sm:$0xff]
      %v9597 = vld [vmem:[%s11 + $0x180] sm:$0xff]
      %v9598 = vld [vmem:[%s11 + $0x188] sm:$0xff]
      %v9599 = vld [vmem:[%s11 + $0x190] sm:$0xff]
      %v9600 = vld [vmem:[%s11 + $0x198] sm:$0xff]
      %v9601 = vld [vmem:[%s11 + $0x1a0] sm:$0xff]
      %v9602 = vld [vmem:[%s11 + $0x1a8] sm:$0xff]
      %v9603 = vld [vmem:[%s11 + $0x1b0] sm:$0xff]
      %v9604 = vld [vmem:[%s11 + $0x1b8] sm:$0xff]
      %v9605 = vld [vmem:[%s11 + $0x1c0] sm:$0xff]
      %v9606 = vld [vmem:[%s11 + $0x1c8] sm:$0xff]
      %v9607 = vld [vmem:[%s11 + $0x1d0] sm:$0xff]
      %v9608 = vld [vmem:[%s11 + $0x1d8] sm:$0xff]
      %v9609 = vld [vmem:[%s11 + $0x1e0] sm:$0xff]
      %v9610 = vld [vmem:[%s11 + $0x1e8] sm:$0xff]
      %v9611 = vld [vmem:[%s11 + $0x1f0] sm:$0xff]
      %v9612 = vld [vmem:[%s11 + $0x1f8] sm:$0xff]
      %s9613 = scalar_lea.vmem %s10, 1
      %v9614 = vld [vmem:[%s9613] sm:$0x1]
      %v9616 = vsel %vm9510, %v9614, 0
      %9618 = vmatpush.bf16.msra.mxu0 0
      %9619 = vmatpush.bf16.msra.mxu0 0
      %9620 = vmatpush.bf16.msra.mxu0 0
      %9621 = vmatpush.bf16.msra.mxu0 0
      %9622 = vmatpush.bf16.msra.mxu0 0
      %9623 = vmatpush.bf16.msra.mxu0 0
      %9624 = vmatpush.bf16.msra.mxu0 0
      %9625 = vmatpush.bf16.msra.mxu0 %v9516
      %9626 = vmatmul.bf16.gmra.mxu0 %v9616
      %v9627 = vpop.f32.mrf.mxu0
      %v9628 = vadd.f32 0.0, %v9627
      %v9629 = vpop.f32.mrf.mxu0
      %9630 = vdwg.mxu0
      %9631 = vmatpush.bf16.msra.mxu0 0
      %9632 = vmatpush.bf16.msra.mxu0 0
      %9633 = vmatpush.bf16.msra.mxu0 0
      %9634 = vmatpush.bf16.msra.mxu0 0
      %9635 = vmatpush.bf16.msra.mxu0 0
      %9636 = vmatpush.bf16.msra.mxu0 0
      %9637 = vmatpush.bf16.msra.mxu0 0
      %9638 = vmatpush.bf16.msra.mxu0 %v9519
      %9639 = vmatmul.bf16.gmra.mxu0 %v9616
      %v9640 = vpop.f32.mrf.mxu0
      %v9641 = vadd.f32 0.0, %v9640
      %v9642 = vpop.f32.mrf.mxu0
      %9643 = vdwg.mxu0
      %v9644 = vpack.c.bf16 %v9628, %v9628
      %v9645 = vpack.c.bf16 %v9641, %v9641
      %s9646 = scalar_lea.vmem %s11, 512
      %v9647 = vld [vmem:[%s9646] sm:$0xff]
      %v9648 = vld [vmem:[%s9646 + $0x8] sm:$0xff]
      %v9649 = vld [vmem:[%s9646 + $0x10] sm:$0xff]
      %v9650 = vld [vmem:[%s9646 + $0x18] sm:$0xff]
      %v9651 = vld [vmem:[%s9646 + $0x20] sm:$0xff]
      %v9652 = vld [vmem:[%s9646 + $0x28] sm:$0xff]
      %v9653 = vld [vmem:[%s9646 + $0x30] sm:$0xff]
      %v9654 = vld [vmem:[%s9646 + $0x38] sm:$0xff]
      %v9655 = vld [vmem:[%s9646 + $0x40] sm:$0xff]
      %v9656 = vld [vmem:[%s9646 + $0x48] sm:$0xff]
      %v9657 = vld [vmem:[%s9646 + $0x50] sm:$0xff]
      %v9658 = vld [vmem:[%s9646 + $0x58] sm:$0xff]
      %v9659 = vld [vmem:[%s9646 + $0x60] sm:$0xff]
      %v9660 = vld [vmem:[%s9646 + $0x68] sm:$0xff]
      %v9661 = vld [vmem:[%s9646 + $0x70] sm:$0xff]
      %v9662 = vld [vmem:[%s9646 + $0x78] sm:$0xff]
      %v9663 = vld [vmem:[%s9646 + $0x80] sm:$0xff]
      %v9664 = vld [vmem:[%s9646 + $0x88] sm:$0xff]
      %v9665 = vld [vmem:[%s9646 + $0x90] sm:$0xff]
      %v9666 = vld [vmem:[%s9646 + $0x98] sm:$0xff]
      %v9667 = vld [vmem:[%s9646 + $0xa0] sm:$0xff]
      %v9668 = vld [vmem:[%s9646 + $0xa8] sm:$0xff]
      %v9669 = vld [vmem:[%s9646 + $0xb0] sm:$0xff]
      %v9670 = vld [vmem:[%s9646 + $0xb8] sm:$0xff]
      %v9671 = vld [vmem:[%s9646 + $0xc0] sm:$0xff]
      %v9672 = vld [vmem:[%s9646 + $0xc8] sm:$0xff]
      %v9673 = vld [vmem:[%s9646 + $0xd0] sm:$0xff]
      %v9674 = vld [vmem:[%s9646 + $0xd8] sm:$0xff]
      %v9675 = vld [vmem:[%s9646 + $0xe0] sm:$0xff]
      %v9676 = vld [vmem:[%s9646 + $0xe8] sm:$0xff]
      %v9677 = vld [vmem:[%s9646 + $0xf0] sm:$0xff]
      %v9678 = vld [vmem:[%s9646 + $0xf8] sm:$0xff]
      %v9679 = vld [vmem:[%s9646 + $0x100] sm:$0xff]
      %v9680 = vld [vmem:[%s9646 + $0x108] sm:$0xff]
      %v9681 = vld [vmem:[%s9646 + $0x110] sm:$0xff]
      %v9682 = vld [vmem:[%s9646 + $0x118] sm:$0xff]
      %v9683 = vld [vmem:[%s9646 + $0x120] sm:$0xff]
      %v9684 = vld [vmem:[%s9646 + $0x128] sm:$0xff]
      %v9685 = vld [vmem:[%s9646 + $0x130] sm:$0xff]
      %v9686 = vld [vmem:[%s9646 + $0x138] sm:$0xff]
      %v9687 = vld [vmem:[%s9646 + $0x140] sm:$0xff]
      %v9688 = vld [vmem:[%s9646 + $0x148] sm:$0xff]
      %v9689 = vld [vmem:[%s9646 + $0x150] sm:$0xff]
      %v9690 = vld [vmem:[%s9646 + $0x158] sm:$0xff]
      %v9691 = vld [vmem:[%s9646 + $0x160] sm:$0xff]
      %v9692 = vld [vmem:[%s9646 + $0x168] sm:$0xff]
      %v9693 = vld [vmem:[%s9646 + $0x170] sm:$0xff]
      %v9694 = vld [vmem:[%s9646 + $0x178] sm:$0xff]
      %v9695 = vld [vmem:[%s9646 + $0x180] sm:$0xff]
      %v9696 = vld [vmem:[%s9646 + $0x188] sm:$0xff]
      %v9697 = vld [vmem:[%s9646 + $0x190] sm:$0xff]
      %v9698 = vld [vmem:[%s9646 + $0x198] sm:$0xff]
      %v9699 = vld [vmem:[%s9646 + $0x1a0] sm:$0xff]
      %v9700 = vld [vmem:[%s9646 + $0x1a8] sm:$0xff]
      %v9701 = vld [vmem:[%s9646 + $0x1b0] sm:$0xff]
      %v9702 = vld [vmem:[%s9646 + $0x1b8] sm:$0xff]
      %v9703 = vld [vmem:[%s9646 + $0x1c0] sm:$0xff]
      %v9704 = vld [vmem:[%s9646 + $0x1c8] sm:$0xff]
      %v9705 = vld [vmem:[%s9646 + $0x1d0] sm:$0xff]
      %v9706 = vld [vmem:[%s9646 + $0x1d8] sm:$0xff]
      %v9707 = vld [vmem:[%s9646 + $0x1e0] sm:$0xff]
      %v9708 = vld [vmem:[%s9646 + $0x1e8] sm:$0xff]
      %v9709 = vld [vmem:[%s9646 + $0x1f0] sm:$0xff]
      %v9710 = vld [vmem:[%s9646 + $0x1f8] sm:$0xff]
      %v9775 = vunpack.c.l.b16 %v9647
      %v9776 = vunpack.c.h.b16 %v9647
      %v9777 = vunpack.c.l.b16 %v9648
      %v9778 = vunpack.c.h.b16 %v9648
      %v9779 = vunpack.c.l.b16 %v9649
      %v9780 = vunpack.c.h.b16 %v9649
      %v9781 = vunpack.c.l.b16 %v9650
      %v9782 = vunpack.c.h.b16 %v9650
      %v9783 = vunpack.c.l.b16 %v9651
      %v9784 = vunpack.c.h.b16 %v9651
      %v9785 = vunpack.c.l.b16 %v9652
      %v9786 = vunpack.c.h.b16 %v9652
      %v9787 = vunpack.c.l.b16 %v9653
      %v9788 = vunpack.c.h.b16 %v9653
      %v9789 = vunpack.c.l.b16 %v9654
      %v9790 = vunpack.c.h.b16 %v9654
      %v9791 = vunpack.c.l.b16 %v9655
      %v9792 = vunpack.c.h.b16 %v9655
      %v9793 = vunpack.c.l.b16 %v9656
      %v9794 = vunpack.c.h.b16 %v9656
      %v9795 = vunpack.c.l.b16 %v9657
      %v9796 = vunpack.c.h.b16 %v9657
      %v9797 = vunpack.c.l.b16 %v9658
      %v9798 = vunpack.c.h.b16 %v9658
      %v9799 = vunpack.c.l.b16 %v9659
      %v9800 = vunpack.c.h.b16 %v9659
      %v9801 = vunpack.c.l.b16 %v9660
      %v9802 = vunpack.c.h.b16 %v9660
      %v9803 = vunpack.c.l.b16 %v9661
      %v9804 = vunpack.c.h.b16 %v9661
      %v9805 = vunpack.c.l.b16 %v9662
      %v9806 = vunpack.c.h.b16 %v9662
      %v9807 = vunpack.c.l.b16 %v9663
      %v9808 = vunpack.c.h.b16 %v9663
      %v9809 = vunpack.c.l.b16 %v9664
      %v9810 = vunpack.c.h.b16 %v9664
      %v9811 = vunpack.c.l.b16 %v9665
      %v9812 = vunpack.c.h.b16 %v9665
      %v9813 = vunpack.c.l.b16 %v9666
      %v9814 = vunpack.c.h.b16 %v9666
      %v9815 = vunpack.c.l.b16 %v9667
      %v9816 = vunpack.c.h.b16 %v9667
      %v9817 = vunpack.c.l.b16 %v9668
      %v9818 = vunpack.c.h.b16 %v9668
      %v9819 = vunpack.c.l.b16 %v9669
      %v9820 = vunpack.c.h.b16 %v9669
      %v9821 = vunpack.c.l.b16 %v9670
      %v9822 = vunpack.c.h.b16 %v9670
      %v9823 = vunpack.c.l.b16 %v9671
      %v9824 = vunpack.c.h.b16 %v9671
      %v9825 = vunpack.c.l.b16 %v9672
      %v9826 = vunpack.c.h.b16 %v9672
      %v9827 = vunpack.c.l.b16 %v9673
      %v9828 = vunpack.c.h.b16 %v9673
      %v9829 = vunpack.c.l.b16 %v9674
      %v9830 = vunpack.c.h.b16 %v9674
      %v9831 = vunpack.c.l.b16 %v9675
      %v9832 = vunpack.c.h.b16 %v9675
      %v9833 = vunpack.c.l.b16 %v9676
      %v9834 = vunpack.c.h.b16 %v9676
      %v9835 = vunpack.c.l.b16 %v9677
      %v9836 = vunpack.c.h.b16 %v9677
      %v9837 = vunpack.c.l.b16 %v9678
      %v9838 = vunpack.c.h.b16 %v9678
      %v9839 = vunpack.c.l.b16 %v9679
      %v9840 = vunpack.c.h.b16 %v9679
      %v9841 = vunpack.c.l.b16 %v9680
      %v9842 = vunpack.c.h.b16 %v9680
      %v9843 = vunpack.c.l.b16 %v9681
      %v9844 = vunpack.c.h.b16 %v9681
      %v9845 = vunpack.c.l.b16 %v9682
      %v9846 = vunpack.c.h.b16 %v9682
      %v9847 = vunpack.c.l.b16 %v9683
      %v9848 = vunpack.c.h.b16 %v9683
      %v9849 = vunpack.c.l.b16 %v9684
      %v9850 = vunpack.c.h.b16 %v9684
      %v9851 = vunpack.c.l.b16 %v9685
      %v9852 = vunpack.c.h.b16 %v9685
      %v9853 = vunpack.c.l.b16 %v9686
      %v9854 = vunpack.c.h.b16 %v9686
      %v9855 = vunpack.c.l.b16 %v9687
      %v9856 = vunpack.c.h.b16 %v9687
      %v9857 = vunpack.c.l.b16 %v9688
      %v9858 = vunpack.c.h.b16 %v9688
      %v9859 = vunpack.c.l.b16 %v9689
      %v9860 = vunpack.c.h.b16 %v9689
      %v9861 = vunpack.c.l.b16 %v9690
      %v9862 = vunpack.c.h.b16 %v9690
      %v9863 = vunpack.c.l.b16 %v9691
      %v9864 = vunpack.c.h.b16 %v9691
      %v9865 = vunpack.c.l.b16 %v9692
      %v9866 = vunpack.c.h.b16 %v9692
      %v9867 = vunpack.c.l.b16 %v9693
      %v9868 = vunpack.c.h.b16 %v9693
      %v9869 = vunpack.c.l.b16 %v9694
      %v9870 = vunpack.c.h.b16 %v9694
      %v9871 = vunpack.c.l.b16 %v9695
      %v9872 = vunpack.c.h.b16 %v9695
      %v9873 = vunpack.c.l.b16 %v9696
      %v9874 = vunpack.c.h.b16 %v9696
      %v9875 = vunpack.c.l.b16 %v9697
      %v9876 = vunpack.c.h.b16 %v9697
      %v9877 = vunpack.c.l.b16 %v9698
      %v9878 = vunpack.c.h.b16 %v9698
      %v9879 = vunpack.c.l.b16 %v9699
      %v9880 = vunpack.c.h.b16 %v9699
      %v9881 = vunpack.c.l.b16 %v9700
      %v9882 = vunpack.c.h.b16 %v9700
      %v9883 = vunpack.c.l.b16 %v9701
      %v9884 = vunpack.c.h.b16 %v9701
      %v9885 = vunpack.c.l.b16 %v9702
      %v9886 = vunpack.c.h.b16 %v9702
      %v9887 = vunpack.c.l.b16 %v9703
      %v9888 = vunpack.c.h.b16 %v9703
      %v9889 = vunpack.c.l.b16 %v9704
      %v9890 = vunpack.c.h.b16 %v9704
      %v9891 = vunpack.c.l.b16 %v9705
      %v9892 = vunpack.c.h.b16 %v9705
      %v9893 = vunpack.c.l.b16 %v9706
      %v9894 = vunpack.c.h.b16 %v9706
      %v9895 = vunpack.c.l.b16 %v9707
      %v9896 = vunpack.c.h.b16 %v9707
      %v9897 = vunpack.c.l.b16 %v9708
      %v9898 = vunpack.c.h.b16 %v9708
      %v9899 = vunpack.c.l.b16 %v9709
      %v9900 = vunpack.c.h.b16 %v9709
      %v9901 = vunpack.c.l.b16 %v9710
      %v9902 = vunpack.c.h.b16 %v9710
      %v9903 = vpack.c.b16 %v9779, %v9775
      %v9904 = vpack.c.b16 %v9780, %v9776
      %v9905 = vpack.c.b16 %v9781, %v9777
      %v9906 = vpack.c.b16 %v9782, %v9778
      %v9907 = vpack.c.b16 %v9787, %v9783
      %v9908 = vpack.c.b16 %v9788, %v9784
      %v9909 = vpack.c.b16 %v9789, %v9785
      %v9910 = vpack.c.b16 %v9790, %v9786
      %v9911 = vpack.c.b16 %v9795, %v9791
      %v9912 = vpack.c.b16 %v9796, %v9792
      %v9913 = vpack.c.b16 %v9797, %v9793
      %v9914 = vpack.c.b16 %v9798, %v9794
      %v9915 = vpack.c.b16 %v9803, %v9799
      %v9916 = vpack.c.b16 %v9804, %v9800
      %v9917 = vpack.c.b16 %v9805, %v9801
      %v9918 = vpack.c.b16 %v9806, %v9802
      %v9919 = vpack.c.b16 %v9811, %v9807
      %v9920 = vpack.c.b16 %v9812, %v9808
      %v9921 = vpack.c.b16 %v9813, %v9809
      %v9922 = vpack.c.b16 %v9814, %v9810
      %v9923 = vpack.c.b16 %v9819, %v9815
      %v9924 = vpack.c.b16 %v9820, %v9816
      %v9925 = vpack.c.b16 %v9821, %v9817
      %v9926 = vpack.c.b16 %v9822, %v9818
      %v9927 = vpack.c.b16 %v9827, %v9823
      %v9928 = vpack.c.b16 %v9828, %v9824
      %v9929 = vpack.c.b16 %v9829, %v9825
      %v9930 = vpack.c.b16 %v9830, %v9826
      %v9931 = vpack.c.b16 %v9835, %v9831
      %v9932 = vpack.c.b16 %v9836, %v9832
      %v9933 = vpack.c.b16 %v9837, %v9833
      %v9934 = vpack.c.b16 %v9838, %v9834
      %v9935 = vpack.c.b16 %v9843, %v9839
      %v9936 = vpack.c.b16 %v9844, %v9840
      %v9937 = vpack.c.b16 %v9845, %v9841
      %v9938 = vpack.c.b16 %v9846, %v9842
      %v9939 = vpack.c.b16 %v9851, %v9847
      %v9940 = vpack.c.b16 %v9852, %v9848
      %v9941 = vpack.c.b16 %v9853, %v9849
      %v9942 = vpack.c.b16 %v9854, %v9850
      %v9943 = vpack.c.b16 %v9859, %v9855
      %v9944 = vpack.c.b16 %v9860, %v9856
      %v9945 = vpack.c.b16 %v9861, %v9857
      %v9946 = vpack.c.b16 %v9862, %v9858
      %v9947 = vpack.c.b16 %v9867, %v9863
      %v9948 = vpack.c.b16 %v9868, %v9864
      %v9949 = vpack.c.b16 %v9869, %v9865
      %v9950 = vpack.c.b16 %v9870, %v9866
      %v9951 = vpack.c.b16 %v9875, %v9871
      %v9952 = vpack.c.b16 %v9876, %v9872
      %v9953 = vpack.c.b16 %v9877, %v9873
      %v9954 = vpack.c.b16 %v9878, %v9874
      %v9955 = vpack.c.b16 %v9883, %v9879
      %v9956 = vpack.c.b16 %v9884, %v9880
      %v9957 = vpack.c.b16 %v9885, %v9881
      %v9958 = vpack.c.b16 %v9886, %v9882
      %v9959 = vpack.c.b16 %v9891, %v9887
      %v9960 = vpack.c.b16 %v9892, %v9888
      %v9961 = vpack.c.b16 %v9893, %v9889
      %v9962 = vpack.c.b16 %v9894, %v9890
      %v9963 = vpack.c.b16 %v9899, %v9895
      %v9964 = vpack.c.b16 %v9900, %v9896
      %v9965 = vpack.c.b16 %v9901, %v9897
      %v9966 = vpack.c.b16 %v9902, %v9898
      %10031 = vmatpush.bf16.msra.mxu0 %v9931
      %10032 = vmatpush.bf16.msra.mxu0 %v9927
      %10033 = vmatpush.bf16.msra.mxu0 %v9923
      %10034 = vmatpush.bf16.msra.mxu0 %v9919
      %10035 = vmatpush.bf16.msra.mxu0 %v9915
      %10036 = vmatpush.bf16.msra.mxu0 %v9911
      %10037 = vmatpush.bf16.msra.mxu0 %v9907
      %10038 = vmatpush.bf16.msra.mxu0 %v9903
      %10039 = vmatmul.bf16.gmra.mxu0 %v9644
      %v10040 = vpop.f32.mrf.mxu0
      %v10041 = vadd.f32 0.0, %v10040
      %v10042 = vpop.f32.mrf.mxu0
      %10043 = vdwg.mxu0
      %10044 = vmatpush.bf16.msra.mxu0 %v9963
      %10045 = vmatpush.bf16.msra.mxu0 %v9959
      %10046 = vmatpush.bf16.msra.mxu0 %v9955
      %10047 = vmatpush.bf16.msra.mxu0 %v9951
      %10048 = vmatpush.bf16.msra.mxu0 %v9947
      %10049 = vmatpush.bf16.msra.mxu0 %v9943
      %10050 = vmatpush.bf16.msra.mxu0 %v9939
      %10051 = vmatpush.bf16.msra.mxu0 %v9935
      %10052 = vmatmul.bf16.gmra.mxu0 %v9645
      %v10053 = vpop.f32.mrf.mxu0
      %v10054 = vadd.f32 %v10041, %v10053
      %v10055 = vpop.f32.mrf.mxu0
      %10056 = vdwg.mxu0
      %10057 = vmatpush.bf16.msra.mxu0 %v9932
      %10058 = vmatpush.bf16.msra.mxu0 %v9928
      %10059 = vmatpush.bf16.msra.mxu0 %v9924
      %10060 = vmatpush.bf16.msra.mxu0 %v9920
      %10061 = vmatpush.bf16.msra.mxu0 %v9916
      %10062 = vmatpush.bf16.msra.mxu0 %v9912
      %10063 = vmatpush.bf16.msra.mxu0 %v9908
      %10064 = vmatpush.bf16.msra.mxu0 %v9904
      %10065 = vmatmul.bf16.gmra.mxu0 %v9644
      %v10066 = vpop.f32.mrf.mxu0
      %v10067 = vadd.f32 0.0, %v10066
      %v10068 = vpop.f32.mrf.mxu0
      %10069 = vdwg.mxu0
      %10070 = vmatpush.bf16.msra.mxu0 %v9964
      %10071 = vmatpush.bf16.msra.mxu0 %v9960
      %10072 = vmatpush.bf16.msra.mxu0 %v9956
      %10073 = vmatpush.bf16.msra.mxu0 %v9952
      %10074 = vmatpush.bf16.msra.mxu0 %v9948
      %10075 = vmatpush.bf16.msra.mxu0 %v9944
      %10076 = vmatpush.bf16.msra.mxu0 %v9940
      %10077 = vmatpush.bf16.msra.mxu0 %v9936
      %10078 = vmatmul.bf16.gmra.mxu0 %v9645
      %v10079 = vpop.f32.mrf.mxu0
      %v10080 = vadd.f32 %v10067, %v10079
      %v10081 = vpop.f32.mrf.mxu0
      %10082 = vdwg.mxu0
      %10083 = vmatpush.bf16.msra.mxu0 %v9933
      %10084 = vmatpush.bf16.msra.mxu0 %v9929
      %10085 = vmatpush.bf16.msra.mxu0 %v9925
      %10086 = vmatpush.bf16.msra.mxu0 %v9921
      %10087 = vmatpush.bf16.msra.mxu0 %v9917
      %10088 = vmatpush.bf16.msra.mxu0 %v9913
      %10089 = vmatpush.bf16.msra.mxu0 %v9909
      %10090 = vmatpush.bf16.msra.mxu0 %v9905
      %10091 = vmatmul.bf16.gmra.mxu0 %v9644
      %v10092 = vpop.f32.mrf.mxu0
      %v10093 = vadd.f32 0.0, %v10092
      %v10094 = vpop.f32.mrf.mxu0
      %10095 = vdwg.mxu0
      %10096 = vmatpush.bf16.msra.mxu0 %v9965
      %10097 = vmatpush.bf16.msra.mxu0 %v9961
      %10098 = vmatpush.bf16.msra.mxu0 %v9957
      %10099 = vmatpush.bf16.msra.mxu0 %v9953
      %10100 = vmatpush.bf16.msra.mxu0 %v9949
      %10101 = vmatpush.bf16.msra.mxu0 %v9945
      %10102 = vmatpush.bf16.msra.mxu0 %v9941
      %10103 = vmatpush.bf16.msra.mxu0 %v9937
      %10104 = vmatmul.bf16.gmra.mxu0 %v9645
      %v10105 = vpop.f32.mrf.mxu0
      %v10106 = vadd.f32 %v10093, %v10105
      %v10107 = vpop.f32.mrf.mxu0
      %10108 = vdwg.mxu0
      %10109 = vmatpush.bf16.msra.mxu0 %v9934
      %10110 = vmatpush.bf16.msra.mxu0 %v9930
      %10111 = vmatpush.bf16.msra.mxu0 %v9926
      %10112 = vmatpush.bf16.msra.mxu0 %v9922
      %10113 = vmatpush.bf16.msra.mxu0 %v9918
      %10114 = vmatpush.bf16.msra.mxu0 %v9914
      %10115 = vmatpush.bf16.msra.mxu0 %v9910
      %10116 = vmatpush.bf16.msra.mxu0 %v9906
      %10117 = vmatmul.bf16.gmra.mxu0 %v9644
      %v10118 = vpop.f32.mrf.mxu0
      %v10119 = vadd.f32 0.0, %v10118
      %v10120 = vpop.f32.mrf.mxu0
      %10121 = vdwg.mxu0
      %10122 = vmatpush.bf16.msra.mxu0 %v9966
      %10123 = vmatpush.bf16.msra.mxu0 %v9962
      %10124 = vmatpush.bf16.msra.mxu0 %v9958
      %10125 = vmatpush.bf16.msra.mxu0 %v9954
      %10126 = vmatpush.bf16.msra.mxu0 %v9950
      %10127 = vmatpush.bf16.msra.mxu0 %v9946
      %10128 = vmatpush.bf16.msra.mxu0 %v9942
      %10129 = vmatpush.bf16.msra.mxu0 %v9938
      %10130 = vmatmul.bf16.gmra.mxu0 %v9645
      %v10131 = vpop.f32.mrf.mxu0
      %v10132 = vadd.f32 %v10119, %v10131
      %v10133 = vpop.f32.mrf.mxu0
      %10134 = vdwg.mxu0
      %v10199 = vunpack.c.l.b16 %v9549
      %v10200 = vunpack.c.h.b16 %v9549
      %v10201 = vunpack.c.l.b16 %v9550
      %v10202 = vunpack.c.h.b16 %v9550
      %v10203 = vunpack.c.l.b16 %v9551
      %v10204 = vunpack.c.h.b16 %v9551
      %v10205 = vunpack.c.l.b16 %v9552
      %v10206 = vunpack.c.h.b16 %v9552
      %v10207 = vunpack.c.l.b16 %v9553
      %v10208 = vunpack.c.h.b16 %v9553
      %v10209 = vunpack.c.l.b16 %v9554
      %v10210 = vunpack.c.h.b16 %v9554
      %v10211 = vunpack.c.l.b16 %v9555
      %v10212 = vunpack.c.h.b16 %v9555
      %v10213 = vunpack.c.l.b16 %v9556
      %v10214 = vunpack.c.h.b16 %v9556
      %v10215 = vunpack.c.l.b16 %v9557
      %v10216 = vunpack.c.h.b16 %v9557
      %v10217 = vunpack.c.l.b16 %v9558
      %v10218 = vunpack.c.h.b16 %v9558
      %v10219 = vunpack.c.l.b16 %v9559
      %v10220 = vunpack.c.h.b16 %v9559
      %v10221 = vunpack.c.l.b16 %v9560
      %v10222 = vunpack.c.h.b16 %v9560
      %v10223 = vunpack.c.l.b16 %v9561
      %v10224 = vunpack.c.h.b16 %v9561
      %v10225 = vunpack.c.l.b16 %v9562
      %v10226 = vunpack.c.h.b16 %v9562
      %v10227 = vunpack.c.l.b16 %v9563
      %v10228 = vunpack.c.h.b16 %v9563
      %v10229 = vunpack.c.l.b16 %v9564
      %v10230 = vunpack.c.h.b16 %v9564
      %v10231 = vunpack.c.l.b16 %v9565
      %v10232 = vunpack.c.h.b16 %v9565
      %v10233 = vunpack.c.l.b16 %v9566
      %v10234 = vunpack.c.h.b16 %v9566
      %v10235 = vunpack.c.l.b16 %v9567
      %v10236 = vunpack.c.h.b16 %v9567
      %v10237 = vunpack.c.l.b16 %v9568
      %v10238 = vunpack.c.h.b16 %v9568
      %v10239 = vunpack.c.l.b16 %v9569
      %v10240 = vunpack.c.h.b16 %v9569
      %v10241 = vunpack.c.l.b16 %v9570
      %v10242 = vunpack.c.h.b16 %v9570
      %v10243 = vunpack.c.l.b16 %v9571
      %v10244 = vunpack.c.h.b16 %v9571
      %v10245 = vunpack.c.l.b16 %v9572
      %v10246 = vunpack.c.h.b16 %v9572
      %v10247 = vunpack.c.l.b16 %v9573
      %v10248 = vunpack.c.h.b16 %v9573
      %v10249 = vunpack.c.l.b16 %v9574
      %v10250 = vunpack.c.h.b16 %v9574
      %v10251 = vunpack.c.l.b16 %v9575
      %v10252 = vunpack.c.h.b16 %v9575
      %v10253 = vunpack.c.l.b16 %v9576
      %v10254 = vunpack.c.h.b16 %v9576
      %v10255 = vunpack.c.l.b16 %v9577
      %v10256 = vunpack.c.h.b16 %v9577
      %v10257 = vunpack.c.l.b16 %v9578
      %v10258 = vunpack.c.h.b16 %v9578
      %v10259 = vunpack.c.l.b16 %v9579
      %v10260 = vunpack.c.h.b16 %v9579
      %v10261 = vunpack.c.l.b16 %v9580
      %v10262 = vunpack.c.h.b16 %v9580
      %v10263 = vunpack.c.l.b16 %v9581
      %v10264 = vunpack.c.h.b16 %v9581
      %v10265 = vunpack.c.l.b16 %v9582
      %v10266 = vunpack.c.h.b16 %v9582
      %v10267 = vunpack.c.l.b16 %v9583
      %v10268 = vunpack.c.h.b16 %v9583
      %v10269 = vunpack.c.l.b16 %v9584
      %v10270 = vunpack.c.h.b16 %v9584
      %v10271 = vunpack.c.l.b16 %v9585
      %v10272 = vunpack.c.h.b16 %v9585
      %v10273 = vunpack.c.l.b16 %v9586
      %v10274 = vunpack.c.h.b16 %v9586
      %v10275 = vunpack.c.l.b16 %v9587
      %v10276 = vunpack.c.h.b16 %v9587
      %v10277 = vunpack.c.l.b16 %v9588
      %v10278 = vunpack.c.h.b16 %v9588
      %v10279 = vunpack.c.l.b16 %v9589
      %v10280 = vunpack.c.h.b16 %v9589
      %v10281 = vunpack.c.l.b16 %v9590
      %v10282 = vunpack.c.h.b16 %v9590
      %v10283 = vunpack.c.l.b16 %v9591
      %v10284 = vunpack.c.h.b16 %v9591
      %v10285 = vunpack.c.l.b16 %v9592
      %v10286 = vunpack.c.h.b16 %v9592
      %v10287 = vunpack.c.l.b16 %v9593
      %v10288 = vunpack.c.h.b16 %v9593
      %v10289 = vunpack.c.l.b16 %v9594
      %v10290 = vunpack.c.h.b16 %v9594
      %v10291 = vunpack.c.l.b16 %v9595
      %v10292 = vunpack.c.h.b16 %v9595
      %v10293 = vunpack.c.l.b16 %v9596
      %v10294 = vunpack.c.h.b16 %v9596
      %v10295 = vunpack.c.l.b16 %v9597
      %v10296 = vunpack.c.h.b16 %v9597
      %v10297 = vunpack.c.l.b16 %v9598
      %v10298 = vunpack.c.h.b16 %v9598
      %v10299 = vunpack.c.l.b16 %v9599
      %v10300 = vunpack.c.h.b16 %v9599
      %v10301 = vunpack.c.l.b16 %v9600
      %v10302 = vunpack.c.h.b16 %v9600
      %v10303 = vunpack.c.l.b16 %v9601
      %v10304 = vunpack.c.h.b16 %v9601
      %v10305 = vunpack.c.l.b16 %v9602
      %v10306 = vunpack.c.h.b16 %v9602
      %v10307 = vunpack.c.l.b16 %v9603
      %v10308 = vunpack.c.h.b16 %v9603
      %v10309 = vunpack.c.l.b16 %v9604
      %v10310 = vunpack.c.h.b16 %v9604
      %v10311 = vunpack.c.l.b16 %v9605
      %v10312 = vunpack.c.h.b16 %v9605
      %v10313 = vunpack.c.l.b16 %v9606
      %v10314 = vunpack.c.h.b16 %v9606
      %v10315 = vunpack.c.l.b16 %v9607
      %v10316 = vunpack.c.h.b16 %v9607
      %v10317 = vunpack.c.l.b16 %v9608
      %v10318 = vunpack.c.h.b16 %v9608
      %v10319 = vunpack.c.l.b16 %v9609
      %v10320 = vunpack.c.h.b16 %v9609
      %v10321 = vunpack.c.l.b16 %v9610
      %v10322 = vunpack.c.h.b16 %v9610
      %v10323 = vunpack.c.l.b16 %v9611
      %v10324 = vunpack.c.h.b16 %v9611
      %v10325 = vunpack.c.l.b16 %v9612
      %v10326 = vunpack.c.h.b16 %v9612
      %v10327 = vpack.c.b16 %v10203, %v10199
      %v10328 = vpack.c.b16 %v10204, %v10200
      %v10329 = vpack.c.b16 %v10205, %v10201
      %v10330 = vpack.c.b16 %v10206, %v10202
      %v10331 = vpack.c.b16 %v10211, %v10207
      %v10332 = vpack.c.b16 %v10212, %v10208
      %v10333 = vpack.c.b16 %v10213, %v10209
      %v10334 = vpack.c.b16 %v10214, %v10210
      %v10335 = vpack.c.b16 %v10219, %v10215
      %v10336 = vpack.c.b16 %v10220, %v10216
      %v10337 = vpack.c.b16 %v10221, %v10217
      %v10338 = vpack.c.b16 %v10222, %v10218
      %v10339 = vpack.c.b16 %v10227, %v10223
      %v10340 = vpack.c.b16 %v10228, %v10224
      %v10341 = vpack.c.b16 %v10229, %v10225
      %v10342 = vpack.c.b16 %v10230, %v10226
      %v10343 = vpack.c.b16 %v10235, %v10231
      %v10344 = vpack.c.b16 %v10236, %v10232
      %v10345 = vpack.c.b16 %v10237, %v10233
      %v10346 = vpack.c.b16 %v10238, %v10234
      %v10347 = vpack.c.b16 %v10243, %v10239
      %v10348 = vpack.c.b16 %v10244, %v10240
      %v10349 = vpack.c.b16 %v10245, %v10241
      %v10350 = vpack.c.b16 %v10246, %v10242
      %v10351 = vpack.c.b16 %v10251, %v10247
      %v10352 = vpack.c.b16 %v10252, %v10248
      %v10353 = vpack.c.b16 %v10253, %v10249
      %v10354 = vpack.c.b16 %v10254, %v10250
      %v10355 = vpack.c.b16 %v10259, %v10255
      %v10356 = vpack.c.b16 %v10260, %v10256
      %v10357 = vpack.c.b16 %v10261, %v10257
      %v10358 = vpack.c.b16 %v10262, %v10258
      %v10359 = vpack.c.b16 %v10267, %v10263
      %v10360 = vpack.c.b16 %v10268, %v10264
      %v10361 = vpack.c.b16 %v10269, %v10265
      %v10362 = vpack.c.b16 %v10270, %v10266
      %v10363 = vpack.c.b16 %v10275, %v10271
      %v10364 = vpack.c.b16 %v10276, %v10272
      %v10365 = vpack.c.b16 %v10277, %v10273
      %v10366 = vpack.c.b16 %v10278, %v10274
      %v10367 = vpack.c.b16 %v10283, %v10279
      %v10368 = vpack.c.b16 %v10284, %v10280
      %v10369 = vpack.c.b16 %v10285, %v10281
      %v10370 = vpack.c.b16 %v10286, %v10282
      %v10371 = vpack.c.b16 %v10291, %v10287
      %v10372 = vpack.c.b16 %v10292, %v10288
      %v10373 = vpack.c.b16 %v10293, %v10289
      %v10374 = vpack.c.b16 %v10294, %v10290
      %v10375 = vpack.c.b16 %v10299, %v10295
      %v10376 = vpack.c.b16 %v10300, %v10296
      %v10377 = vpack.c.b16 %v10301, %v10297
      %v10378 = vpack.c.b16 %v10302, %v10298
      %v10379 = vpack.c.b16 %v10307, %v10303
      %v10380 = vpack.c.b16 %v10308, %v10304
      %v10381 = vpack.c.b16 %v10309, %v10305
      %v10382 = vpack.c.b16 %v10310, %v10306
      %v10383 = vpack.c.b16 %v10315, %v10311
      %v10384 = vpack.c.b16 %v10316, %v10312
      %v10385 = vpack.c.b16 %v10317, %v10313
      %v10386 = vpack.c.b16 %v10318, %v10314
      %v10387 = vpack.c.b16 %v10323, %v10319
      %v10388 = vpack.c.b16 %v10324, %v10320
      %v10389 = vpack.c.b16 %v10325, %v10321
      %v10390 = vpack.c.b16 %v10326, %v10322
      %10455 = vmatpush.bf16.msra.mxu0 %v10355
      %10456 = vmatpush.bf16.msra.mxu0 %v10351
      %10457 = vmatpush.bf16.msra.mxu0 %v10347
      %10458 = vmatpush.bf16.msra.mxu0 %v10343
      %10459 = vmatpush.bf16.msra.mxu0 %v10339
      %10460 = vmatpush.bf16.msra.mxu0 %v10335
      %10461 = vmatpush.bf16.msra.mxu0 %v10331
      %10462 = vmatpush.bf16.msra.mxu0 %v10327
      %10463 = vmatmul.bf16.gmra.mxu0 %v9547
      %v10464 = vpop.f32.mrf.mxu0
      %v10465 = vadd.f32 %v10054, %v10464
      %v10466 = vpop.f32.mrf.mxu0
      %10467 = vdwg.mxu0
      %10468 = vmatpush.bf16.msra.mxu0 %v10387
      %10469 = vmatpush.bf16.msra.mxu0 %v10383
      %10470 = vmatpush.bf16.msra.mxu0 %v10379
      %10471 = vmatpush.bf16.msra.mxu0 %v10375
      %10472 = vmatpush.bf16.msra.mxu0 %v10371
      %10473 = vmatpush.bf16.msra.mxu0 %v10367
      %10474 = vmatpush.bf16.msra.mxu0 %v10363
      %10475 = vmatpush.bf16.msra.mxu0 %v10359
      %10476 = vmatmul.bf16.gmra.mxu0 %v9548
      %v10477 = vpop.f32.mrf.mxu0
      %v10478 = vadd.f32 %v10465, %v10477
      %v10479 = vpop.f32.mrf.mxu0
      %10480 = vdwg.mxu0
      %10481 = vmatpush.bf16.msra.mxu0 %v10356
      %10482 = vmatpush.bf16.msra.mxu0 %v10352
      %10483 = vmatpush.bf16.msra.mxu0 %v10348
      %10484 = vmatpush.bf16.msra.mxu0 %v10344
      %10485 = vmatpush.bf16.msra.mxu0 %v10340
      %10486 = vmatpush.bf16.msra.mxu0 %v10336
      %10487 = vmatpush.bf16.msra.mxu0 %v10332
      %10488 = vmatpush.bf16.msra.mxu0 %v10328
      %10489 = vmatmul.bf16.gmra.mxu0 %v9547
      %v10490 = vpop.f32.mrf.mxu0
      %v10491 = vadd.f32 %v10080, %v10490
      %v10492 = vpop.f32.mrf.mxu0
      %10493 = vdwg.mxu0
      %10494 = vmatpush.bf16.msra.mxu0 %v10388
      %10495 = vmatpush.bf16.msra.mxu0 %v10384
      %10496 = vmatpush.bf16.msra.mxu0 %v10380
      %10497 = vmatpush.bf16.msra.mxu0 %v10376
      %10498 = vmatpush.bf16.msra.mxu0 %v10372
      %10499 = vmatpush.bf16.msra.mxu0 %v10368
      %10500 = vmatpush.bf16.msra.mxu0 %v10364
      %10501 = vmatpush.bf16.msra.mxu0 %v10360
      %10502 = vmatmul.bf16.gmra.mxu0 %v9548
      %v10503 = vpop.f32.mrf.mxu0
      %v10504 = vadd.f32 %v10491, %v10503
      %v10505 = vpop.f32.mrf.mxu0
      %10506 = vdwg.mxu0
      %10507 = vmatpush.bf16.msra.mxu0 %v10357
      %10508 = vmatpush.bf16.msra.mxu0 %v10353
      %10509 = vmatpush.bf16.msra.mxu0 %v10349
      %10510 = vmatpush.bf16.msra.mxu0 %v10345
      %10511 = vmatpush.bf16.msra.mxu0 %v10341
      %10512 = vmatpush.bf16.msra.mxu0 %v10337
      %10513 = vmatpush.bf16.msra.mxu0 %v10333
      %10514 = vmatpush.bf16.msra.mxu0 %v10329
      %10515 = vmatmul.bf16.gmra.mxu0 %v9547
      %v10516 = vpop.f32.mrf.mxu0
      %v10517 = vadd.f32 %v10106, %v10516
      %v10518 = vpop.f32.mrf.mxu0
      %10519 = vdwg.mxu0
      %10520 = vmatpush.bf16.msra.mxu0 %v10389
      %10521 = vmatpush.bf16.msra.mxu0 %v10385
      %10522 = vmatpush.bf16.msra.mxu0 %v10381
      %10523 = vmatpush.bf16.msra.mxu0 %v10377
      %10524 = vmatpush.bf16.msra.mxu0 %v10373
      %10525 = vmatpush.bf16.msra.mxu0 %v10369
      %10526 = vmatpush.bf16.msra.mxu0 %v10365
      %10527 = vmatpush.bf16.msra.mxu0 %v10361
      %10528 = vmatmul.bf16.gmra.mxu0 %v9548
      %v10529 = vpop.f32.mrf.mxu0
      %v10530 = vadd.f32 %v10517, %v10529
      %v10531 = vpop.f32.mrf.mxu0
      %10532 = vdwg.mxu0
      %10533 = vmatpush.bf16.msra.mxu0 %v10358
      %10534 = vmatpush.bf16.msra.mxu0 %v10354
      %10535 = vmatpush.bf16.msra.mxu0 %v10350
      %10536 = vmatpush.bf16.msra.mxu0 %v10346
      %10537 = vmatpush.bf16.msra.mxu0 %v10342
      %10538 = vmatpush.bf16.msra.mxu0 %v10338
      %10539 = vmatpush.bf16.msra.mxu0 %v10334
      %10540 = vmatpush.bf16.msra.mxu0 %v10330
      %10541 = vmatmul.bf16.gmra.mxu0 %v9547
      %v10542 = vpop.f32.mrf.mxu0
      %v10543 = vadd.f32 %v10132, %v10542
      %v10544 = vpop.f32.mrf.mxu0
      %10545 = vdwg.mxu0
      %10546 = vmatpush.bf16.msra.mxu0 %v10390
      %10547 = vmatpush.bf16.msra.mxu0 %v10386
      %10548 = vmatpush.bf16.msra.mxu0 %v10382
      %10549 = vmatpush.bf16.msra.mxu0 %v10378
      %10550 = vmatpush.bf16.msra.mxu0 %v10374
      %10551 = vmatpush.bf16.msra.mxu0 %v10370
      %10552 = vmatpush.bf16.msra.mxu0 %v10366
      %10553 = vmatpush.bf16.msra.mxu0 %v10362
      %10554 = vmatmul.bf16.gmra.mxu0 %v9548
      %v10555 = vpop.f32.mrf.mxu0
      %v10556 = vadd.f32 %v10543, %v10555
      %v10557 = vpop.f32.mrf.mxu0
      %10558 = vdwg.mxu0
      %s10559 = scalar_lea.vmem %s10, 2
      %v10560 = vld [vmem:[%s10559] sm:$0x1]
      %v10562 = vsel %vm9510, %v10560, 0
      %10564 = vmatpush.bf16.msra.mxu0 0
      %10565 = vmatpush.bf16.msra.mxu0 0
      %10566 = vmatpush.bf16.msra.mxu0 0
      %10567 = vmatpush.bf16.msra.mxu0 0
      %10568 = vmatpush.bf16.msra.mxu0 0
      %10569 = vmatpush.bf16.msra.mxu0 0
      %10570 = vmatpush.bf16.msra.mxu0 0
      %10571 = vmatpush.bf16.msra.mxu0 %v9516
      %10572 = vmatmul.bf16.gmra.mxu0 %v10562
      %v10573 = vpop.f32.mrf.mxu0
      %v10574 = vadd.f32 0.0, %v10573
      %v10575 = vpop.f32.mrf.mxu0
      %10576 = vdwg.mxu0
      %10577 = vmatpush.bf16.msra.mxu0 0
      %10578 = vmatpush.bf16.msra.mxu0 0
      %10579 = vmatpush.bf16.msra.mxu0 0
      %10580 = vmatpush.bf16.msra.mxu0 0
      %10581 = vmatpush.bf16.msra.mxu0 0
      %10582 = vmatpush.bf16.msra.mxu0 0
      %10583 = vmatpush.bf16.msra.mxu0 0
      %10584 = vmatpush.bf16.msra.mxu0 %v9519
      %10585 = vmatmul.bf16.gmra.mxu0 %v10562
      %v10586 = vpop.f32.mrf.mxu0
      %v10587 = vadd.f32 0.0, %v10586
      %v10588 = vpop.f32.mrf.mxu0
      %10589 = vdwg.mxu0
      %v10590 = vpack.c.bf16 %v10574, %v10574
      %v10591 = vpack.c.bf16 %v10587, %v10587
      %s10592 = scalar_lea.vmem %s11, 1024
      %v10593 = vld [vmem:[%s10592] sm:$0xff]
      %v10594 = vld [vmem:[%s10592 + $0x8] sm:$0xff]
      %v10595 = vld [vmem:[%s10592 + $0x10] sm:$0xff]
      %v10596 = vld [vmem:[%s10592 + $0x18] sm:$0xff]
      %v10597 = vld [vmem:[%s10592 + $0x20] sm:$0xff]
      %v10598 = vld [vmem:[%s10592 + $0x28] sm:$0xff]
      %v10599 = vld [vmem:[%s10592 + $0x30] sm:$0xff]
      %v10600 = vld [vmem:[%s10592 + $0x38] sm:$0xff]
      %v10601 = vld [vmem:[%s10592 + $0x40] sm:$0xff]
      %v10602 = vld [vmem:[%s10592 + $0x48] sm:$0xff]
      %v10603 = vld [vmem:[%s10592 + $0x50] sm:$0xff]
      %v10604 = vld [vmem:[%s10592 + $0x58] sm:$0xff]
      %v10605 = vld [vmem:[%s10592 + $0x60] sm:$0xff]
      %v10606 = vld [vmem:[%s10592 + $0x68] sm:$0xff]
      %v10607 = vld [vmem:[%s10592 + $0x70] sm:$0xff]
      %v10608 = vld [vmem:[%s10592 + $0x78] sm:$0xff]
      %v10609 = vld [vmem:[%s10592 + $0x80] sm:$0xff]
      %v10610 = vld [vmem:[%s10592 + $0x88] sm:$0xff]
      %v10611 = vld [vmem:[%s10592 + $0x90] sm:$0xff]
      %v10612 = vld [vmem:[%s10592 + $0x98] sm:$0xff]
      %v10613 = vld [vmem:[%s10592 + $0xa0] sm:$0xff]
      %v10614 = vld [vmem:[%s10592 + $0xa8] sm:$0xff]
      %v10615 = vld [vmem:[%s10592 + $0xb0] sm:$0xff]
      %v10616 = vld [vmem:[%s10592 + $0xb8] sm:$0xff]
      %v10617 = vld [vmem:[%s10592 + $0xc0] sm:$0xff]
      %v10618 = vld [vmem:[%s10592 + $0xc8] sm:$0xff]
      %v10619 = vld [vmem:[%s10592 + $0xd0] sm:$0xff]
      %v10620 = vld [vmem:[%s10592 + $0xd8] sm:$0xff]
      %v10621 = vld [vmem:[%s10592 + $0xe0] sm:$0xff]
      %v10622 = vld [vmem:[%s10592 + $0xe8] sm:$0xff]
      %v10623 = vld [vmem:[%s10592 + $0xf0] sm:$0xff]
      %v10624 = vld [vmem:[%s10592 + $0xf8] sm:$0xff]
      %v10625 = vld [vmem:[%s10592 + $0x100] sm:$0xff]
      %v10626 = vld [vmem:[%s10592 + $0x108] sm:$0xff]
      %v10627 = vld [vmem:[%s10592 + $0x110] sm:$0xff]
      %v10628 = vld [vmem:[%s10592 + $0x118] sm:$0xff]
      %v10629 = vld [vmem:[%s10592 + $0x120] sm:$0xff]
      %v10630 = vld [vmem:[%s10592 + $0x128] sm:$0xff]
      %v10631 = vld [vmem:[%s10592 + $0x130] sm:$0xff]
      %v10632 = vld [vmem:[%s10592 + $0x138] sm:$0xff]
      %v10633 = vld [vmem:[%s10592 + $0x140] sm:$0xff]
      %v10634 = vld [vmem:[%s10592 + $0x148] sm:$0xff]
      %v10635 = vld [vmem:[%s10592 + $0x150] sm:$0xff]
      %v10636 = vld [vmem:[%s10592 + $0x158] sm:$0xff]
      %v10637 = vld [vmem:[%s10592 + $0x160] sm:$0xff]
      %v10638 = vld [vmem:[%s10592 + $0x168] sm:$0xff]
      %v10639 = vld [vmem:[%s10592 + $0x170] sm:$0xff]
      %v10640 = vld [vmem:[%s10592 + $0x178] sm:$0xff]
      %v10641 = vld [vmem:[%s10592 + $0x180] sm:$0xff]
      %v10642 = vld [vmem:[%s10592 + $0x188] sm:$0xff]
      %v10643 = vld [vmem:[%s10592 + $0x190] sm:$0xff]
      %v10644 = vld [vmem:[%s10592 + $0x198] sm:$0xff]
      %v10645 = vld [vmem:[%s10592 + $0x1a0] sm:$0xff]
      %v10646 = vld [vmem:[%s10592 + $0x1a8] sm:$0xff]
      %v10647 = vld [vmem:[%s10592 + $0x1b0] sm:$0xff]
      %v10648 = vld [vmem:[%s10592 + $0x1b8] sm:$0xff]
      %v10649 = vld [vmem:[%s10592 + $0x1c0] sm:$0xff]
      %v10650 = vld [vmem:[%s10592 + $0x1c8] sm:$0xff]
      %v10651 = vld [vmem:[%s10592 + $0x1d0] sm:$0xff]
      %v10652 = vld [vmem:[%s10592 + $0x1d8] sm:$0xff]
      %v10653 = vld [vmem:[%s10592 + $0x1e0] sm:$0xff]
      %v10654 = vld [vmem:[%s10592 + $0x1e8] sm:$0xff]
      %v10655 = vld [vmem:[%s10592 + $0x1f0] sm:$0xff]
      %v10656 = vld [vmem:[%s10592 + $0x1f8] sm:$0xff]
      %v10721 = vunpack.c.l.b16 %v10593
      %v10722 = vunpack.c.h.b16 %v10593
      %v10723 = vunpack.c.l.b16 %v10594
      %v10724 = vunpack.c.h.b16 %v10594
      %v10725 = vunpack.c.l.b16 %v10595
      %v10726 = vunpack.c.h.b16 %v10595
      %v10727 = vunpack.c.l.b16 %v10596
      %v10728 = vunpack.c.h.b16 %v10596
      %v10729 = vunpack.c.l.b16 %v10597
      %v10730 = vunpack.c.h.b16 %v10597
      %v10731 = vunpack.c.l.b16 %v10598
      %v10732 = vunpack.c.h.b16 %v10598
      %v10733 = vunpack.c.l.b16 %v10599
      %v10734 = vunpack.c.h.b16 %v10599
      %v10735 = vunpack.c.l.b16 %v10600
      %v10736 = vunpack.c.h.b16 %v10600
      %v10737 = vunpack.c.l.b16 %v10601
      %v10738 = vunpack.c.h.b16 %v10601
      %v10739 = vunpack.c.l.b16 %v10602
      %v10740 = vunpack.c.h.b16 %v10602
      %v10741 = vunpack.c.l.b16 %v10603
      %v10742 = vunpack.c.h.b16 %v10603
      %v10743 = vunpack.c.l.b16 %v10604
      %v10744 = vunpack.c.h.b16 %v10604
      %v10745 = vunpack.c.l.b16 %v10605
      %v10746 = vunpack.c.h.b16 %v10605
      %v10747 = vunpack.c.l.b16 %v10606
      %v10748 = vunpack.c.h.b16 %v10606
      %v10749 = vunpack.c.l.b16 %v10607
      %v10750 = vunpack.c.h.b16 %v10607
      %v10751 = vunpack.c.l.b16 %v10608
      %v10752 = vunpack.c.h.b16 %v10608
      %v10753 = vunpack.c.l.b16 %v10609
      %v10754 = vunpack.c.h.b16 %v10609
      %v10755 = vunpack.c.l.b16 %v10610
      %v10756 = vunpack.c.h.b16 %v10610
      %v10757 = vunpack.c.l.b16 %v10611
      %v10758 = vunpack.c.h.b16 %v10611
      %v10759 = vunpack.c.l.b16 %v10612
      %v10760 = vunpack.c.h.b16 %v10612
      %v10761 = vunpack.c.l.b16 %v10613
      %v10762 = vunpack.c.h.b16 %v10613
      %v10763 = vunpack.c.l.b16 %v10614
      %v10764 = vunpack.c.h.b16 %v10614
      %v10765 = vunpack.c.l.b16 %v10615
      %v10766 = vunpack.c.h.b16 %v10615
      %v10767 = vunpack.c.l.b16 %v10616
      %v10768 = vunpack.c.h.b16 %v10616
      %v10769 = vunpack.c.l.b16 %v10617
      %v10770 = vunpack.c.h.b16 %v10617
      %v10771 = vunpack.c.l.b16 %v10618
      %v10772 = vunpack.c.h.b16 %v10618
      %v10773 = vunpack.c.l.b16 %v10619
      %v10774 = vunpack.c.h.b16 %v10619
      %v10775 = vunpack.c.l.b16 %v10620
      %v10776 = vunpack.c.h.b16 %v10620
      %v10777 = vunpack.c.l.b16 %v10621
      %v10778 = vunpack.c.h.b16 %v10621
      %v10779 = vunpack.c.l.b16 %v10622
      %v10780 = vunpack.c.h.b16 %v10622
      %v10781 = vunpack.c.l.b16 %v10623
      %v10782 = vunpack.c.h.b16 %v10623
      %v10783 = vunpack.c.l.b16 %v10624
      %v10784 = vunpack.c.h.b16 %v10624
      %v10785 = vunpack.c.l.b16 %v10625
      %v10786 = vunpack.c.h.b16 %v10625
      %v10787 = vunpack.c.l.b16 %v10626
      %v10788 = vunpack.c.h.b16 %v10626
      %v10789 = vunpack.c.l.b16 %v10627
      %v10790 = vunpack.c.h.b16 %v10627
      %v10791 = vunpack.c.l.b16 %v10628
      %v10792 = vunpack.c.h.b16 %v10628
      %v10793 = vunpack.c.l.b16 %v10629
      %v10794 = vunpack.c.h.b16 %v10629
      %v10795 = vunpack.c.l.b16 %v10630
      %v10796 = vunpack.c.h.b16 %v10630
      %v10797 = vunpack.c.l.b16 %v10631
      %v10798 = vunpack.c.h.b16 %v10631
      %v10799 = vunpack.c.l.b16 %v10632
      %v10800 = vunpack.c.h.b16 %v10632
      %v10801 = vunpack.c.l.b16 %v10633
      %v10802 = vunpack.c.h.b16 %v10633
      %v10803 = vunpack.c.l.b16 %v10634
      %v10804 = vunpack.c.h.b16 %v10634
      %v10805 = vunpack.c.l.b16 %v10635
      %v10806 = vunpack.c.h.b16 %v10635
      %v10807 = vunpack.c.l.b16 %v10636
      %v10808 = vunpack.c.h.b16 %v10636
      %v10809 = vunpack.c.l.b16 %v10637
      %v10810 = vunpack.c.h.b16 %v10637
      %v10811 = vunpack.c.l.b16 %v10638
      %v10812 = vunpack.c.h.b16 %v10638
      %v10813 = vunpack.c.l.b16 %v10639
      %v10814 = vunpack.c.h.b16 %v10639
      %v10815 = vunpack.c.l.b16 %v10640
      %v10816 = vunpack.c.h.b16 %v10640
      %v10817 = vunpack.c.l.b16 %v10641
      %v10818 = vunpack.c.h.b16 %v10641
      %v10819 = vunpack.c.l.b16 %v10642
      %v10820 = vunpack.c.h.b16 %v10642
      %v10821 = vunpack.c.l.b16 %v10643
      %v10822 = vunpack.c.h.b16 %v10643
      %v10823 = vunpack.c.l.b16 %v10644
      %v10824 = vunpack.c.h.b16 %v10644
      %v10825 = vunpack.c.l.b16 %v10645
      %v10826 = vunpack.c.h.b16 %v10645
      %v10827 = vunpack.c.l.b16 %v10646
      %v10828 = vunpack.c.h.b16 %v10646
      %v10829 = vunpack.c.l.b16 %v10647
      %v10830 = vunpack.c.h.b16 %v10647
      %v10831 = vunpack.c.l.b16 %v10648
      %v10832 = vunpack.c.h.b16 %v10648
      %v10833 = vunpack.c.l.b16 %v10649
      %v10834 = vunpack.c.h.b16 %v10649
      %v10835 = vunpack.c.l.b16 %v10650
      %v10836 = vunpack.c.h.b16 %v10650
      %v10837 = vunpack.c.l.b16 %v10651
      %v10838 = vunpack.c.h.b16 %v10651
      %v10839 = vunpack.c.l.b16 %v10652
      %v10840 = vunpack.c.h.b16 %v10652
      %v10841 = vunpack.c.l.b16 %v10653
      %v10842 = vunpack.c.h.b16 %v10653
      %v10843 = vunpack.c.l.b16 %v10654
      %v10844 = vunpack.c.h.b16 %v10654
      %v10845 = vunpack.c.l.b16 %v10655
      %v10846 = vunpack.c.h.b16 %v10655
      %v10847 = vunpack.c.l.b16 %v10656
      %v10848 = vunpack.c.h.b16 %v10656
      %v10849 = vpack.c.b16 %v10725, %v10721
      %v10850 = vpack.c.b16 %v10726, %v10722
      %v10851 = vpack.c.b16 %v10727, %v10723
      %v10852 = vpack.c.b16 %v10728, %v10724
      %v10853 = vpack.c.b16 %v10733, %v10729
      %v10854 = vpack.c.b16 %v10734, %v10730
      %v10855 = vpack.c.b16 %v10735, %v10731
      %v10856 = vpack.c.b16 %v10736, %v10732
      %v10857 = vpack.c.b16 %v10741, %v10737
      %v10858 = vpack.c.b16 %v10742, %v10738
      %v10859 = vpack.c.b16 %v10743, %v10739
      %v10860 = vpack.c.b16 %v10744, %v10740
      %v10861 = vpack.c.b16 %v10749, %v10745
      %v10862 = vpack.c.b16 %v10750, %v10746
      %v10863 = vpack.c.b16 %v10751, %v10747
      %v10864 = vpack.c.b16 %v10752, %v10748
      %v10865 = vpack.c.b16 %v10757, %v10753
      %v10866 = vpack.c.b16 %v10758, %v10754
      %v10867 = vpack.c.b16 %v10759, %v10755
      %v10868 = vpack.c.b16 %v10760, %v10756
      %v10869 = vpack.c.b16 %v10765, %v10761
      %v10870 = vpack.c.b16 %v10766, %v10762
      %v10871 = vpack.c.b16 %v10767, %v10763
      %v10872 = vpack.c.b16 %v10768, %v10764
      %v10873 = vpack.c.b16 %v10773, %v10769
      %v10874 = vpack.c.b16 %v10774, %v10770
      %v10875 = vpack.c.b16 %v10775, %v10771
      %v10876 = vpack.c.b16 %v10776, %v10772
      %v10877 = vpack.c.b16 %v10781, %v10777
      %v10878 = vpack.c.b16 %v10782, %v10778
      %v10879 = vpack.c.b16 %v10783, %v10779
      %v10880 = vpack.c.b16 %v10784, %v10780
      %v10881 = vpack.c.b16 %v10789, %v10785
      %v10882 = vpack.c.b16 %v10790, %v10786
      %v10883 = vpack.c.b16 %v10791, %v10787
      %v10884 = vpack.c.b16 %v10792, %v10788
      %v10885 = vpack.c.b16 %v10797, %v10793
      %v10886 = vpack.c.b16 %v10798, %v10794
      %v10887 = vpack.c.b16 %v10799, %v10795
      %v10888 = vpack.c.b16 %v10800, %v10796
      %v10889 = vpack.c.b16 %v10805, %v10801
      %v10890 = vpack.c.b16 %v10806, %v10802
      %v10891 = vpack.c.b16 %v10807, %v10803
      %v10892 = vpack.c.b16 %v10808, %v10804
      %v10893 = vpack.c.b16 %v10813, %v10809
      %v10894 = vpack.c.b16 %v10814, %v10810
      %v10895 = vpack.c.b16 %v10815, %v10811
      %v10896 = vpack.c.b16 %v10816, %v10812
      %v10897 = vpack.c.b16 %v10821, %v10817
      %v10898 = vpack.c.b16 %v10822, %v10818
      %v10899 = vpack.c.b16 %v10823, %v10819
      %v10900 = vpack.c.b16 %v10824, %v10820
      %v10901 = vpack.c.b16 %v10829, %v10825
      %v10902 = vpack.c.b16 %v10830, %v10826
      %v10903 = vpack.c.b16 %v10831, %v10827
      %v10904 = vpack.c.b16 %v10832, %v10828
      %v10905 = vpack.c.b16 %v10837, %v10833
      %v10906 = vpack.c.b16 %v10838, %v10834
      %v10907 = vpack.c.b16 %v10839, %v10835
      %v10908 = vpack.c.b16 %v10840, %v10836
      %v10909 = vpack.c.b16 %v10845, %v10841
      %v10910 = vpack.c.b16 %v10846, %v10842
      %v10911 = vpack.c.b16 %v10847, %v10843
      %v10912 = vpack.c.b16 %v10848, %v10844
      %10977 = vmatpush.bf16.msra.mxu0 %v10877
      %10978 = vmatpush.bf16.msra.mxu0 %v10873
      %10979 = vmatpush.bf16.msra.mxu0 %v10869
      %10980 = vmatpush.bf16.msra.mxu0 %v10865
      %10981 = vmatpush.bf16.msra.mxu0 %v10861
      %10982 = vmatpush.bf16.msra.mxu0 %v10857
      %10983 = vmatpush.bf16.msra.mxu0 %v10853
      %10984 = vmatpush.bf16.msra.mxu0 %v10849
      %10985 = vmatmul.bf16.gmra.mxu0 %v10590
      %v10986 = vpop.f32.mrf.mxu0
      %v10987 = vadd.f32 0.0, %v10986
      %v10988 = vpop.f32.mrf.mxu0
      %10989 = vdwg.mxu0
      %10990 = vmatpush.bf16.msra.mxu0 %v10909
      %10991 = vmatpush.bf16.msra.mxu0 %v10905
      %10992 = vmatpush.bf16.msra.mxu0 %v10901
      %10993 = vmatpush.bf16.msra.mxu0 %v10897
      %10994 = vmatpush.bf16.msra.mxu0 %v10893
      %10995 = vmatpush.bf16.msra.mxu0 %v10889
      %10996 = vmatpush.bf16.msra.mxu0 %v10885
      %10997 = vmatpush.bf16.msra.mxu0 %v10881
      %10998 = vmatmul.bf16.gmra.mxu0 %v10591
      %v10999 = vpop.f32.mrf.mxu0
      %v11000 = vadd.f32 %v10987, %v10999
      %v11001 = vpop.f32.mrf.mxu0
      %11002 = vdwg.mxu0
      %11003 = vmatpush.bf16.msra.mxu0 %v10878
      %11004 = vmatpush.bf16.msra.mxu0 %v10874
      %11005 = vmatpush.bf16.msra.mxu0 %v10870
      %11006 = vmatpush.bf16.msra.mxu0 %v10866
      %11007 = vmatpush.bf16.msra.mxu0 %v10862
      %11008 = vmatpush.bf16.msra.mxu0 %v10858
      %11009 = vmatpush.bf16.msra.mxu0 %v10854
      %11010 = vmatpush.bf16.msra.mxu0 %v10850
      %11011 = vmatmul.bf16.gmra.mxu0 %v10590
      %v11012 = vpop.f32.mrf.mxu0
      %v11013 = vadd.f32 0.0, %v11012
      %v11014 = vpop.f32.mrf.mxu0
      %11015 = vdwg.mxu0
      %11016 = vmatpush.bf16.msra.mxu0 %v10910
      %11017 = vmatpush.bf16.msra.mxu0 %v10906
      %11018 = vmatpush.bf16.msra.mxu0 %v10902
      %11019 = vmatpush.bf16.msra.mxu0 %v10898
      %11020 = vmatpush.bf16.msra.mxu0 %v10894
      %11021 = vmatpush.bf16.msra.mxu0 %v10890
      %11022 = vmatpush.bf16.msra.mxu0 %v10886
      %11023 = vmatpush.bf16.msra.mxu0 %v10882
      %11024 = vmatmul.bf16.gmra.mxu0 %v10591
      %v11025 = vpop.f32.mrf.mxu0
      %v11026 = vadd.f32 %v11013, %v11025
      %v11027 = vpop.f32.mrf.mxu0
      %11028 = vdwg.mxu0
      %11029 = vmatpush.bf16.msra.mxu0 %v10879
      %11030 = vmatpush.bf16.msra.mxu0 %v10875
      %11031 = vmatpush.bf16.msra.mxu0 %v10871
      %11032 = vmatpush.bf16.msra.mxu0 %v10867
      %11033 = vmatpush.bf16.msra.mxu0 %v10863
      %11034 = vmatpush.bf16.msra.mxu0 %v10859
      %11035 = vmatpush.bf16.msra.mxu0 %v10855
      %11036 = vmatpush.bf16.msra.mxu0 %v10851
      %11037 = vmatmul.bf16.gmra.mxu0 %v10590
      %v11038 = vpop.f32.mrf.mxu0
      %v11039 = vadd.f32 0.0, %v11038
      %v11040 = vpop.f32.mrf.mxu0
      %11041 = vdwg.mxu0
      %11042 = vmatpush.bf16.msra.mxu0 %v10911
      %11043 = vmatpush.bf16.msra.mxu0 %v10907
      %11044 = vmatpush.bf16.msra.mxu0 %v10903
      %11045 = vmatpush.bf16.msra.mxu0 %v10899
      %11046 = vmatpush.bf16.msra.mxu0 %v10895
      %11047 = vmatpush.bf16.msra.mxu0 %v10891
      %11048 = vmatpush.bf16.msra.mxu0 %v10887
      %11049 = vmatpush.bf16.msra.mxu0 %v10883
      %11050 = vmatmul.bf16.gmra.mxu0 %v10591
      %v11051 = vpop.f32.mrf.mxu0
      %v11052 = vadd.f32 %v11039, %v11051
      %v11053 = vpop.f32.mrf.mxu0
      %11054 = vdwg.mxu0
      %11055 = vmatpush.bf16.msra.mxu0 %v10880
      %11056 = vmatpush.bf16.msra.mxu0 %v10876
      %11057 = vmatpush.bf16.msra.mxu0 %v10872
      %11058 = vmatpush.bf16.msra.mxu0 %v10868
      %11059 = vmatpush.bf16.msra.mxu0 %v10864
      %11060 = vmatpush.bf16.msra.mxu0 %v10860
      %11061 = vmatpush.bf16.msra.mxu0 %v10856
      %11062 = vmatpush.bf16.msra.mxu0 %v10852
      %11063 = vmatmul.bf16.gmra.mxu0 %v10590
      %v11064 = vpop.f32.mrf.mxu0
      %v11065 = vadd.f32 0.0, %v11064
      %v11066 = vpop.f32.mrf.mxu0
      %11067 = vdwg.mxu0
      %11068 = vmatpush.bf16.msra.mxu0 %v10912
      %11069 = vmatpush.bf16.msra.mxu0 %v10908
      %11070 = vmatpush.bf16.msra.mxu0 %v10904
      %11071 = vmatpush.bf16.msra.mxu0 %v10900
      %11072 = vmatpush.bf16.msra.mxu0 %v10896
      %11073 = vmatpush.bf16.msra.mxu0 %v10892
      %11074 = vmatpush.bf16.msra.mxu0 %v10888
      %11075 = vmatpush.bf16.msra.mxu0 %v10884
      %11076 = vmatmul.bf16.gmra.mxu0 %v10591
      %v11077 = vpop.f32.mrf.mxu0
      %v11078 = vadd.f32 %v11065, %v11077
      %v11079 = vpop.f32.mrf.mxu0
      %11080 = vdwg.mxu0
      %v11081 = vadd.f32 %v10478, %v11000
      %v11082 = vadd.f32 %v10504, %v11026
      %v11083 = vadd.f32 %v10530, %v11052
      %v11084 = vadd.f32 %v10556, %v11078
      %s11085 = scalar_lea.vmem %s10, 3
      %v11086 = vld [vmem:[%s11085] sm:$0x1]
      %v11088 = vsel %vm9510, %v11086, 0
      %11090 = vmatpush.bf16.msra.mxu0 0
      %11091 = vmatpush.bf16.msra.mxu0 0
      %11092 = vmatpush.bf16.msra.mxu0 0
      %11093 = vmatpush.bf16.msra.mxu0 0
      %11094 = vmatpush.bf16.msra.mxu0 0
      %11095 = vmatpush.bf16.msra.mxu0 0
      %11096 = vmatpush.bf16.msra.mxu0 0
      %11097 = vmatpush.bf16.msra.mxu0 %v9516
      %11098 = vmatmul.bf16.gmra.mxu0 %v11088
      %v11099 = vpop.f32.mrf.mxu0
      %v11100 = vadd.f32 0.0, %v11099
      %v11101 = vpop.f32.mrf.mxu0
      %11102 = vdwg.mxu0
      %11103 = vmatpush.bf16.msra.mxu0 0
      %11104 = vmatpush.bf16.msra.mxu0 0
      %11105 = vmatpush.bf16.msra.mxu0 0
      %11106 = vmatpush.bf16.msra.mxu0 0
      %11107 = vmatpush.bf16.msra.mxu0 0
      %11108 = vmatpush.bf16.msra.mxu0 0
      %11109 = vmatpush.bf16.msra.mxu0 0
      %11110 = vmatpush.bf16.msra.mxu0 %v9519
      %11111 = vmatmul.bf16.gmra.mxu0 %v11088
      %v11112 = vpop.f32.mrf.mxu0
      %v11113 = vadd.f32 0.0, %v11112
      %v11114 = vpop.f32.mrf.mxu0
      %11115 = vdwg.mxu0
      %v11116 = vpack.c.bf16 %v11100, %v11100
      %v11117 = vpack.c.bf16 %v11113, %v11113
      %s11118 = scalar_lea.vmem %s11, 1536
      %v11119 = vld [vmem:[%s11118] sm:$0xff]
      %v11120 = vld [vmem:[%s11118 + $0x8] sm:$0xff]
      %v11121 = vld [vmem:[%s11118 + $0x10] sm:$0xff]
      %v11122 = vld [vmem:[%s11118 + $0x18] sm:$0xff]
      %v11123 = vld [vmem:[%s11118 + $0x20] sm:$0xff]
      %v11124 = vld [vmem:[%s11118 + $0x28] sm:$0xff]
      %v11125 = vld [vmem:[%s11118 + $0x30] sm:$0xff]
      %v11126 = vld [vmem:[%s11118 + $0x38] sm:$0xff]
      %v11127 = vld [vmem:[%s11118 + $0x40] sm:$0xff]
      %v11128 = vld [vmem:[%s11118 + $0x48] sm:$0xff]
      %v11129 = vld [vmem:[%s11118 + $0x50] sm:$0xff]
      %v11130 = vld [vmem:[%s11118 + $0x58] sm:$0xff]
      %v11131 = vld [vmem:[%s11118 + $0x60] sm:$0xff]
      %v11132 = vld [vmem:[%s11118 + $0x68] sm:$0xff]
      %v11133 = vld [vmem:[%s11118 + $0x70] sm:$0xff]
      %v11134 = vld [vmem:[%s11118 + $0x78] sm:$0xff]
      %v11135 = vld [vmem:[%s11118 + $0x80] sm:$0xff]
      %v11136 = vld [vmem:[%s11118 + $0x88] sm:$0xff]
      %v11137 = vld [vmem:[%s11118 + $0x90] sm:$0xff]
      %v11138 = vld [vmem:[%s11118 + $0x98] sm:$0xff]
      %v11139 = vld [vmem:[%s11118 + $0xa0] sm:$0xff]
      %v11140 = vld [vmem:[%s11118 + $0xa8] sm:$0xff]
      %v11141 = vld [vmem:[%s11118 + $0xb0] sm:$0xff]
      %v11142 = vld [vmem:[%s11118 + $0xb8] sm:$0xff]
      %v11143 = vld [vmem:[%s11118 + $0xc0] sm:$0xff]
      %v11144 = vld [vmem:[%s11118 + $0xc8] sm:$0xff]
      %v11145 = vld [vmem:[%s11118 + $0xd0] sm:$0xff]
      %v11146 = vld [vmem:[%s11118 + $0xd8] sm:$0xff]
      %v11147 = vld [vmem:[%s11118 + $0xe0] sm:$0xff]
      %v11148 = vld [vmem:[%s11118 + $0xe8] sm:$0xff]
      %v11149 = vld [vmem:[%s11118 + $0xf0] sm:$0xff]
      %v11150 = vld [vmem:[%s11118 + $0xf8] sm:$0xff]
      %v11151 = vld [vmem:[%s11118 + $0x100] sm:$0xff]
      %v11152 = vld [vmem:[%s11118 + $0x108] sm:$0xff]
      %v11153 = vld [vmem:[%s11118 + $0x110] sm:$0xff]
      %v11154 = vld [vmem:[%s11118 + $0x118] sm:$0xff]
      %v11155 = vld [vmem:[%s11118 + $0x120] sm:$0xff]
      %v11156 = vld [vmem:[%s11118 + $0x128] sm:$0xff]
      %v11157 = vld [vmem:[%s11118 + $0x130] sm:$0xff]
      %v11158 = vld [vmem:[%s11118 + $0x138] sm:$0xff]
      %v11159 = vld [vmem:[%s11118 + $0x140] sm:$0xff]
      %v11160 = vld [vmem:[%s11118 + $0x148] sm:$0xff]
      %v11161 = vld [vmem:[%s11118 + $0x150] sm:$0xff]
      %v11162 = vld [vmem:[%s11118 + $0x158] sm:$0xff]
      %v11163 = vld [vmem:[%s11118 + $0x160] sm:$0xff]
      %v11164 = vld [vmem:[%s11118 + $0x168] sm:$0xff]
      %v11165 = vld [vmem:[%s11118 + $0x170] sm:$0xff]
      %v11166 = vld [vmem:[%s11118 + $0x178] sm:$0xff]
      %v11167 = vld [vmem:[%s11118 + $0x180] sm:$0xff]
      %v11168 = vld [vmem:[%s11118 + $0x188] sm:$0xff]
      %v11169 = vld [vmem:[%s11118 + $0x190] sm:$0xff]
      %v11170 = vld [vmem:[%s11118 + $0x198] sm:$0xff]
      %v11171 = vld [vmem:[%s11118 + $0x1a0] sm:$0xff]
      %v11172 = vld [vmem:[%s11118 + $0x1a8] sm:$0xff]
      %v11173 = vld [vmem:[%s11118 + $0x1b0] sm:$0xff]
      %v11174 = vld [vmem:[%s11118 + $0x1b8] sm:$0xff]
      %v11175 = vld [vmem:[%s11118 + $0x1c0] sm:$0xff]
      %v11176 = vld [vmem:[%s11118 + $0x1c8] sm:$0xff]
      %v11177 = vld [vmem:[%s11118 + $0x1d0] sm:$0xff]
      %v11178 = vld [vmem:[%s11118 + $0x1d8] sm:$0xff]
      %v11179 = vld [vmem:[%s11118 + $0x1e0] sm:$0xff]
      %v11180 = vld [vmem:[%s11118 + $0x1e8] sm:$0xff]
      %v11181 = vld [vmem:[%s11118 + $0x1f0] sm:$0xff]
      %v11182 = vld [vmem:[%s11118 + $0x1f8] sm:$0xff]
      %v11247 = vunpack.c.l.b16 %v11119
      %v11248 = vunpack.c.h.b16 %v11119
      %v11249 = vunpack.c.l.b16 %v11120
      %v11250 = vunpack.c.h.b16 %v11120
      %v11251 = vunpack.c.l.b16 %v11121
      %v11252 = vunpack.c.h.b16 %v11121
      %v11253 = vunpack.c.l.b16 %v11122
      %v11254 = vunpack.c.h.b16 %v11122
      %v11255 = vunpack.c.l.b16 %v11123
      %v11256 = vunpack.c.h.b16 %v11123
      %v11257 = vunpack.c.l.b16 %v11124
      %v11258 = vunpack.c.h.b16 %v11124
      %v11259 = vunpack.c.l.b16 %v11125
      %v11260 = vunpack.c.h.b16 %v11125
      %v11261 = vunpack.c.l.b16 %v11126
      %v11262 = vunpack.c.h.b16 %v11126
      %v11263 = vunpack.c.l.b16 %v11127
      %v11264 = vunpack.c.h.b16 %v11127
      %v11265 = vunpack.c.l.b16 %v11128
      %v11266 = vunpack.c.h.b16 %v11128
      %v11267 = vunpack.c.l.b16 %v11129
      %v11268 = vunpack.c.h.b16 %v11129
      %v11269 = vunpack.c.l.b16 %v11130
      %v11270 = vunpack.c.h.b16 %v11130
      %v11271 = vunpack.c.l.b16 %v11131
      %v11272 = vunpack.c.h.b16 %v11131
      %v11273 = vunpack.c.l.b16 %v11132
      %v11274 = vunpack.c.h.b16 %v11132
      %v11275 = vunpack.c.l.b16 %v11133
      %v11276 = vunpack.c.h.b16 %v11133
      %v11277 = vunpack.c.l.b16 %v11134
      %v11278 = vunpack.c.h.b16 %v11134
      %v11279 = vunpack.c.l.b16 %v11135
      %v11280 = vunpack.c.h.b16 %v11135
      %v11281 = vunpack.c.l.b16 %v11136
      %v11282 = vunpack.c.h.b16 %v11136
      %v11283 = vunpack.c.l.b16 %v11137
      %v11284 = vunpack.c.h.b16 %v11137
      %v11285 = vunpack.c.l.b16 %v11138
      %v11286 = vunpack.c.h.b16 %v11138
      %v11287 = vunpack.c.l.b16 %v11139
      %v11288 = vunpack.c.h.b16 %v11139
      %v11289 = vunpack.c.l.b16 %v11140
      %v11290 = vunpack.c.h.b16 %v11140
      %v11291 = vunpack.c.l.b16 %v11141
      %v11292 = vunpack.c.h.b16 %v11141
      %v11293 = vunpack.c.l.b16 %v11142
      %v11294 = vunpack.c.h.b16 %v11142
      %v11295 = vunpack.c.l.b16 %v11143
      %v11296 = vunpack.c.h.b16 %v11143
      %v11297 = vunpack.c.l.b16 %v11144
      %v11298 = vunpack.c.h.b16 %v11144
      %v11299 = vunpack.c.l.b16 %v11145
      %v11300 = vunpack.c.h.b16 %v11145
      %v11301 = vunpack.c.l.b16 %v11146
      %v11302 = vunpack.c.h.b16 %v11146
      %v11303 = vunpack.c.l.b16 %v11147
      %v11304 = vunpack.c.h.b16 %v11147
      %v11305 = vunpack.c.l.b16 %v11148
      %v11306 = vunpack.c.h.b16 %v11148
      %v11307 = vunpack.c.l.b16 %v11149
      %v11308 = vunpack.c.h.b16 %v11149
      %v11309 = vunpack.c.l.b16 %v11150
      %v11310 = vunpack.c.h.b16 %v11150
      %v11311 = vunpack.c.l.b16 %v11151
      %v11312 = vunpack.c.h.b16 %v11151
      %v11313 = vunpack.c.l.b16 %v11152
      %v11314 = vunpack.c.h.b16 %v11152
      %v11315 = vunpack.c.l.b16 %v11153
      %v11316 = vunpack.c.h.b16 %v11153
      %v11317 = vunpack.c.l.b16 %v11154
      %v11318 = vunpack.c.h.b16 %v11154
      %v11319 = vunpack.c.l.b16 %v11155
      %v11320 = vunpack.c.h.b16 %v11155
      %v11321 = vunpack.c.l.b16 %v11156
      %v11322 = vunpack.c.h.b16 %v11156
      %v11323 = vunpack.c.l.b16 %v11157
      %v11324 = vunpack.c.h.b16 %v11157
      %v11325 = vunpack.c.l.b16 %v11158
      %v11326 = vunpack.c.h.b16 %v11158
      %v11327 = vunpack.c.l.b16 %v11159
      %v11328 = vunpack.c.h.b16 %v11159
      %v11329 = vunpack.c.l.b16 %v11160
      %v11330 = vunpack.c.h.b16 %v11160
      %v11331 = vunpack.c.l.b16 %v11161
      %v11332 = vunpack.c.h.b16 %v11161
      %v11333 = vunpack.c.l.b16 %v11162
      %v11334 = vunpack.c.h.b16 %v11162
      %v11335 = vunpack.c.l.b16 %v11163
      %v11336 = vunpack.c.h.b16 %v11163
      %v11337 = vunpack.c.l.b16 %v11164
      %v11338 = vunpack.c.h.b16 %v11164
      %v11339 = vunpack.c.l.b16 %v11165
      %v11340 = vunpack.c.h.b16 %v11165
      %v11341 = vunpack.c.l.b16 %v11166
      %v11342 = vunpack.c.h.b16 %v11166
      %v11343 = vunpack.c.l.b16 %v11167
      %v11344 = vunpack.c.h.b16 %v11167
      %v11345 = vunpack.c.l.b16 %v11168
      %v11346 = vunpack.c.h.b16 %v11168
      %v11347 = vunpack.c.l.b16 %v11169
      %v11348 = vunpack.c.h.b16 %v11169
      %v11349 = vunpack.c.l.b16 %v11170
      %v11350 = vunpack.c.h.b16 %v11170
      %v11351 = vunpack.c.l.b16 %v11171
      %v11352 = vunpack.c.h.b16 %v11171
      %v11353 = vunpack.c.l.b16 %v11172
      %v11354 = vunpack.c.h.b16 %v11172
      %v11355 = vunpack.c.l.b16 %v11173
      %v11356 = vunpack.c.h.b16 %v11173
      %v11357 = vunpack.c.l.b16 %v11174
      %v11358 = vunpack.c.h.b16 %v11174
      %v11359 = vunpack.c.l.b16 %v11175
      %v11360 = vunpack.c.h.b16 %v11175
      %v11361 = vunpack.c.l.b16 %v11176
      %v11362 = vunpack.c.h.b16 %v11176
      %v11363 = vunpack.c.l.b16 %v11177
      %v11364 = vunpack.c.h.b16 %v11177
      %v11365 = vunpack.c.l.b16 %v11178
      %v11366 = vunpack.c.h.b16 %v11178
      %v11367 = vunpack.c.l.b16 %v11179
      %v11368 = vunpack.c.h.b16 %v11179
      %v11369 = vunpack.c.l.b16 %v11180
      %v11370 = vunpack.c.h.b16 %v11180
      %v11371 = vunpack.c.l.b16 %v11181
      %v11372 = vunpack.c.h.b16 %v11181
      %v11373 = vunpack.c.l.b16 %v11182
      %v11374 = vunpack.c.h.b16 %v11182
      %v11375 = vpack.c.b16 %v11251, %v11247
      %v11376 = vpack.c.b16 %v11252, %v11248
      %v11377 = vpack.c.b16 %v11253, %v11249
      %v11378 = vpack.c.b16 %v11254, %v11250
      %v11379 = vpack.c.b16 %v11259, %v11255
      %v11380 = vpack.c.b16 %v11260, %v11256
      %v11381 = vpack.c.b16 %v11261, %v11257
      %v11382 = vpack.c.b16 %v11262, %v11258
      %v11383 = vpack.c.b16 %v11267, %v11263
      %v11384 = vpack.c.b16 %v11268, %v11264
      %v11385 = vpack.c.b16 %v11269, %v11265
      %v11386 = vpack.c.b16 %v11270, %v11266
      %v11387 = vpack.c.b16 %v11275, %v11271
      %v11388 = vpack.c.b16 %v11276, %v11272
      %v11389 = vpack.c.b16 %v11277, %v11273
      %v11390 = vpack.c.b16 %v11278, %v11274
      %v11391 = vpack.c.b16 %v11283, %v11279
      %v11392 = vpack.c.b16 %v11284, %v11280
      %v11393 = vpack.c.b16 %v11285, %v11281
      %v11394 = vpack.c.b16 %v11286, %v11282
      %v11395 = vpack.c.b16 %v11291, %v11287
      %v11396 = vpack.c.b16 %v11292, %v11288
      %v11397 = vpack.c.b16 %v11293, %v11289
      %v11398 = vpack.c.b16 %v11294, %v11290
      %v11399 = vpack.c.b16 %v11299, %v11295
      %v11400 = vpack.c.b16 %v11300, %v11296
      %v11401 = vpack.c.b16 %v11301, %v11297
      %v11402 = vpack.c.b16 %v11302, %v11298
      %v11403 = vpack.c.b16 %v11307, %v11303
      %v11404 = vpack.c.b16 %v11308, %v11304
      %v11405 = vpack.c.b16 %v11309, %v11305
      %v11406 = vpack.c.b16 %v11310, %v11306
      %v11407 = vpack.c.b16 %v11315, %v11311
      %v11408 = vpack.c.b16 %v11316, %v11312
      %v11409 = vpack.c.b16 %v11317, %v11313
      %v11410 = vpack.c.b16 %v11318, %v11314
      %v11411 = vpack.c.b16 %v11323, %v11319
      %v11412 = vpack.c.b16 %v11324, %v11320
      %v11413 = vpack.c.b16 %v11325, %v11321
      %v11414 = vpack.c.b16 %v11326, %v11322
      %v11415 = vpack.c.b16 %v11331, %v11327
      %v11416 = vpack.c.b16 %v11332, %v11328
      %v11417 = vpack.c.b16 %v11333, %v11329
      %v11418 = vpack.c.b16 %v11334, %v11330
      %v11419 = vpack.c.b16 %v11339, %v11335
      %v11420 = vpack.c.b16 %v11340, %v11336
      %v11421 = vpack.c.b16 %v11341, %v11337
      %v11422 = vpack.c.b16 %v11342, %v11338
      %v11423 = vpack.c.b16 %v11347, %v11343
      %v11424 = vpack.c.b16 %v11348, %v11344
      %v11425 = vpack.c.b16 %v11349, %v11345
      %v11426 = vpack.c.b16 %v11350, %v11346
      %v11427 = vpack.c.b16 %v11355, %v11351
      %v11428 = vpack.c.b16 %v11356, %v11352
      %v11429 = vpack.c.b16 %v11357, %v11353
      %v11430 = vpack.c.b16 %v11358, %v11354
      %v11431 = vpack.c.b16 %v11363, %v11359
      %v11432 = vpack.c.b16 %v11364, %v11360
      %v11433 = vpack.c.b16 %v11365, %v11361
      %v11434 = vpack.c.b16 %v11366, %v11362
      %v11435 = vpack.c.b16 %v11371, %v11367
      %v11436 = vpack.c.b16 %v11372, %v11368
      %v11437 = vpack.c.b16 %v11373, %v11369
      %v11438 = vpack.c.b16 %v11374, %v11370
      %11503 = vmatpush.bf16.msra.mxu0 %v11403
      %11504 = vmatpush.bf16.msra.mxu0 %v11399
      %11505 = vmatpush.bf16.msra.mxu0 %v11395
      %11506 = vmatpush.bf16.msra.mxu0 %v11391
      %11507 = vmatpush.bf16.msra.mxu0 %v11387
      %11508 = vmatpush.bf16.msra.mxu0 %v11383
      %11509 = vmatpush.bf16.msra.mxu0 %v11379
      %11510 = vmatpush.bf16.msra.mxu0 %v11375
      %11511 = vmatmul.bf16.gmra.mxu0 %v11116
      %v11512 = vpop.f32.mrf.mxu0
      %v11513 = vadd.f32 0.0, %v11512
      %v11514 = vpop.f32.mrf.mxu0
      %11515 = vdwg.mxu0
      %11516 = vmatpush.bf16.msra.mxu0 %v11435
      %11517 = vmatpush.bf16.msra.mxu0 %v11431
      %11518 = vmatpush.bf16.msra.mxu0 %v11427
      %11519 = vmatpush.bf16.msra.mxu0 %v11423
      %11520 = vmatpush.bf16.msra.mxu0 %v11419
      %11521 = vmatpush.bf16.msra.mxu0 %v11415
      %11522 = vmatpush.bf16.msra.mxu0 %v11411
      %11523 = vmatpush.bf16.msra.mxu0 %v11407
      %11524 = vmatmul.bf16.gmra.mxu0 %v11117
      %v11525 = vpop.f32.mrf.mxu0
      %v11526 = vadd.f32 %v11513, %v11525
      %v11527 = vpop.f32.mrf.mxu0
      %11528 = vdwg.mxu0
      %11529 = vmatpush.bf16.msra.mxu0 %v11404
      %11530 = vmatpush.bf16.msra.mxu0 %v11400
      %11531 = vmatpush.bf16.msra.mxu0 %v11396
      %11532 = vmatpush.bf16.msra.mxu0 %v11392
      %11533 = vmatpush.bf16.msra.mxu0 %v11388
      %11534 = vmatpush.bf16.msra.mxu0 %v11384
      %11535 = vmatpush.bf16.msra.mxu0 %v11380
      %11536 = vmatpush.bf16.msra.mxu0 %v11376
      %11537 = vmatmul.bf16.gmra.mxu0 %v11116
      %v11538 = vpop.f32.mrf.mxu0
      %v11539 = vadd.f32 0.0, %v11538
      %v11540 = vpop.f32.mrf.mxu0
      %11541 = vdwg.mxu0
      %11542 = vmatpush.bf16.msra.mxu0 %v11436
      %11543 = vmatpush.bf16.msra.mxu0 %v11432
      %11544 = vmatpush.bf16.msra.mxu0 %v11428
      %11545 = vmatpush.bf16.msra.mxu0 %v11424
      %11546 = vmatpush.bf16.msra.mxu0 %v11420
      %11547 = vmatpush.bf16.msra.mxu0 %v11416
      %11548 = vmatpush.bf16.msra.mxu0 %v11412
      %11549 = vmatpush.bf16.msra.mxu0 %v11408
      %11550 = vmatmul.bf16.gmra.mxu0 %v11117
      %v11551 = vpop.f32.mrf.mxu0
      %v11552 = vadd.f32 %v11539, %v11551
      %v11553 = vpop.f32.mrf.mxu0
      %11554 = vdwg.mxu0
      %11555 = vmatpush.bf16.msra.mxu0 %v11405
      %11556 = vmatpush.bf16.msra.mxu0 %v11401
      %11557 = vmatpush.bf16.msra.mxu0 %v11397
      %11558 = vmatpush.bf16.msra.mxu0 %v11393
      %11559 = vmatpush.bf16.msra.mxu0 %v11389
      %11560 = vmatpush.bf16.msra.mxu0 %v11385
      %11561 = vmatpush.bf16.msra.mxu0 %v11381
      %11562 = vmatpush.bf16.msra.mxu0 %v11377
      %11563 = vmatmul.bf16.gmra.mxu0 %v11116
      %v11564 = vpop.f32.mrf.mxu0
      %v11565 = vadd.f32 0.0, %v11564
      %v11566 = vpop.f32.mrf.mxu0
      %11567 = vdwg.mxu0
      %11568 = vmatpush.bf16.msra.mxu0 %v11437
      %11569 = vmatpush.bf16.msra.mxu0 %v11433
      %11570 = vmatpush.bf16.msra.mxu0 %v11429
      %11571 = vmatpush.bf16.msra.mxu0 %v11425
      %11572 = vmatpush.bf16.msra.mxu0 %v11421
      %11573 = vmatpush.bf16.msra.mxu0 %v11417
      %11574 = vmatpush.bf16.msra.mxu0 %v11413
      %11575 = vmatpush.bf16.msra.mxu0 %v11409
      %11576 = vmatmul.bf16.gmra.mxu0 %v11117
      %v11577 = vpop.f32.mrf.mxu0
      %v11578 = vadd.f32 %v11565, %v11577
      %v11579 = vpop.f32.mrf.mxu0
      %11580 = vdwg.mxu0
      %11581 = vmatpush.bf16.msra.mxu0 %v11406
      %11582 = vmatpush.bf16.msra.mxu0 %v11402
      %11583 = vmatpush.bf16.msra.mxu0 %v11398
      %11584 = vmatpush.bf16.msra.mxu0 %v11394
      %11585 = vmatpush.bf16.msra.mxu0 %v11390
      %11586 = vmatpush.bf16.msra.mxu0 %v11386
      %11587 = vmatpush.bf16.msra.mxu0 %v11382
      %11588 = vmatpush.bf16.msra.mxu0 %v11378
      %11589 = vmatmul.bf16.gmra.mxu0 %v11116
      %v11590 = vpop.f32.mrf.mxu0
      %v11591 = vadd.f32 0.0, %v11590
      %v11592 = vpop.f32.mrf.mxu0
      %11593 = vdwg.mxu0
      %11594 = vmatpush.bf16.msra.mxu0 %v11438
      %11595 = vmatpush.bf16.msra.mxu0 %v11434
      %11596 = vmatpush.bf16.msra.mxu0 %v11430
      %11597 = vmatpush.bf16.msra.mxu0 %v11426
      %11598 = vmatpush.bf16.msra.mxu0 %v11422
      %11599 = vmatpush.bf16.msra.mxu0 %v11418
      %11600 = vmatpush.bf16.msra.mxu0 %v11414
      %11601 = vmatpush.bf16.msra.mxu0 %v11410
      %11602 = vmatmul.bf16.gmra.mxu0 %v11117
      %v11603 = vpop.f32.mrf.mxu0
      %v11604 = vadd.f32 %v11591, %v11603
      %v11605 = vpop.f32.mrf.mxu0
      %11606 = vdwg.mxu0
      %v11607 = vadd.f32 %v11081, %v11526
      %v11608 = vadd.f32 %v11082, %v11552
      %v11609 = vadd.f32 %v11083, %v11578
      %v11610 = vadd.f32 %v11084, %v11604
      %v11611 = vld [vmem:[%s12] sm:$0xf]
      %v11613 = vperm.slane %v11611, 0
      %v11614 = vperm.slane %v11611, 1
      %v11615 = vperm.slane %v11611, 2
      %v11616 = vperm.slane %v11611, 3
      %v11621 = vadd.f32 %v11607, %v11613
      %v11622 = vadd.f32 %v11608, %v11614
      %v11623 = vadd.f32 %v11609, %v11615
      %v11624 = vadd.f32 %v11610, %v11616
      %v11625 = vmax.f32 %v11621, 0.0
      %v11626 = vmax.f32 %v11622, 0.0
      %v11627 = vmax.f32 %v11623, 0.0
      %v11628 = vmax.f32 %v11624, 0.0
      %v11629 = vld [vmem:[%s13] sm:$0xff]
      %v11630 = vld [vmem:[%s13 + $0x8] sm:$0xff]
      %v11631 = vld [vmem:[%s13 + $0x10] sm:$0xff]
      %v11632 = vld [vmem:[%s13 + $0x18] sm:$0xff]
      %v11633 = vld [vmem:[%s13 + $0x20] sm:$0xff]
      %v11634 = vld [vmem:[%s13 + $0x28] sm:$0xff]
      %v11635 = vld [vmem:[%s13 + $0x30] sm:$0xff]
      %v11636 = vld [vmem:[%s13 + $0x38] sm:$0xff]
      %v11637 = vld [vmem:[%s13 + $0x40] sm:$0xff]
      %v11638 = vld [vmem:[%s13 + $0x48] sm:$0xff]
      %v11639 = vld [vmem:[%s13 + $0x50] sm:$0xff]
      %v11640 = vld [vmem:[%s13 + $0x58] sm:$0xff]
      %v11641 = vld [vmem:[%s13 + $0x60] sm:$0xff]
      %v11642 = vld [vmem:[%s13 + $0x68] sm:$0xff]
      %v11643 = vld [vmem:[%s13 + $0x70] sm:$0xff]
      %v11644 = vld [vmem:[%s13 + $0x78] sm:$0xff]
      %v11645 = vld [vmem:[%s13 + $0x80] sm:$0xff]
      %v11646 = vld [vmem:[%s13 + $0x88] sm:$0xff]
      %v11647 = vld [vmem:[%s13 + $0x90] sm:$0xff]
      %v11648 = vld [vmem:[%s13 + $0x98] sm:$0xff]
      %v11649 = vld [vmem:[%s13 + $0xa0] sm:$0xff]
      %v11650 = vld [vmem:[%s13 + $0xa8] sm:$0xff]
      %v11651 = vld [vmem:[%s13 + $0xb0] sm:$0xff]
      %v11652 = vld [vmem:[%s13 + $0xb8] sm:$0xff]
      %v11653 = vld [vmem:[%s13 + $0xc0] sm:$0xff]
      %v11654 = vld [vmem:[%s13 + $0xc8] sm:$0xff]
      %v11655 = vld [vmem:[%s13 + $0xd0] sm:$0xff]
      %v11656 = vld [vmem:[%s13 + $0xd8] sm:$0xff]
      %v11657 = vld [vmem:[%s13 + $0xe0] sm:$0xff]
      %v11658 = vld [vmem:[%s13 + $0xe8] sm:$0xff]
      %v11659 = vld [vmem:[%s13 + $0xf0] sm:$0xff]
      %v11660 = vld [vmem:[%s13 + $0xf8] sm:$0xff]
      %v11661 = vld [vmem:[%s13 + $0x100] sm:$0xff]
      %v11662 = vld [vmem:[%s13 + $0x108] sm:$0xff]
      %v11663 = vld [vmem:[%s13 + $0x110] sm:$0xff]
      %v11664 = vld [vmem:[%s13 + $0x118] sm:$0xff]
      %v11665 = vld [vmem:[%s13 + $0x120] sm:$0xff]
      %v11666 = vld [vmem:[%s13 + $0x128] sm:$0xff]
      %v11667 = vld [vmem:[%s13 + $0x130] sm:$0xff]
      %v11668 = vld [vmem:[%s13 + $0x138] sm:$0xff]
      %v11669 = vld [vmem:[%s13 + $0x140] sm:$0xff]
      %v11670 = vld [vmem:[%s13 + $0x148] sm:$0xff]
      %v11671 = vld [vmem:[%s13 + $0x150] sm:$0xff]
      %v11672 = vld [vmem:[%s13 + $0x158] sm:$0xff]
      %v11673 = vld [vmem:[%s13 + $0x160] sm:$0xff]
      %v11674 = vld [vmem:[%s13 + $0x168] sm:$0xff]
      %v11675 = vld [vmem:[%s13 + $0x170] sm:$0xff]
      %v11676 = vld [vmem:[%s13 + $0x178] sm:$0xff]
      %v11677 = vld [vmem:[%s13 + $0x180] sm:$0xff]
      %v11678 = vld [vmem:[%s13 + $0x188] sm:$0xff]
      %v11679 = vld [vmem:[%s13 + $0x190] sm:$0xff]
      %v11680 = vld [vmem:[%s13 + $0x198] sm:$0xff]
      %v11681 = vld [vmem:[%s13 + $0x1a0] sm:$0xff]
      %v11682 = vld [vmem:[%s13 + $0x1a8] sm:$0xff]
      %v11683 = vld [vmem:[%s13 + $0x1b0] sm:$0xff]
      %v11684 = vld [vmem:[%s13 + $0x1b8] sm:$0xff]
      %v11685 = vld [vmem:[%s13 + $0x1c0] sm:$0xff]
      %v11686 = vld [vmem:[%s13 + $0x1c8] sm:$0xff]
      %v11687 = vld [vmem:[%s13 + $0x1d0] sm:$0xff]
      %v11688 = vld [vmem:[%s13 + $0x1d8] sm:$0xff]
      %v11689 = vld [vmem:[%s13 + $0x1e0] sm:$0xff]
      %v11690 = vld [vmem:[%s13 + $0x1e8] sm:$0xff]
      %v11691 = vld [vmem:[%s13 + $0x1f0] sm:$0xff]
      %v11692 = vld [vmem:[%s13 + $0x1f8] sm:$0xff]
      %v11693 = vld [vmem:[%s14] sm:$0x1]
      %11694 = vmatpush.msra.mxu0 %v11644
      %11695 = vmatpush.msra.mxu0 %v11643
      %11696 = vmatpush.msra.mxu0 %v11642
      %11697 = vmatpush.msra.mxu0 %v11641
      %11698 = vmatpush.msra.mxu0 %v11640
      %11699 = vmatpush.msra.mxu0 %v11639
      %11700 = vmatpush.msra.mxu0 %v11638
      %11701 = vmatpush.msra.mxu0 %v11637
      %11702 = vmatpush.msra.mxu0 %v11636
      %11703 = vmatpush.msra.mxu0 %v11635
      %11704 = vmatpush.msra.mxu0 %v11634
      %11705 = vmatpush.msra.mxu0 %v11633
      %11706 = vmatpush.msra.mxu0 %v11632
      %11707 = vmatpush.msra.mxu0 %v11631
      %11708 = vmatpush.msra.mxu0 %v11630
      %11709 = vmatpush.msra.mxu0 %v11629
      %11710 = vmatmul.f32.gmra.mxu0 %v11625
      %v11711 = vpop.f32.mrf.mxu0
      %v11712 = vadd.f32 %v11693, %v11711
      %11713 = vdwg.mxu0
      %11714 = vmatpush.msra.mxu0 %v11660
      %11715 = vmatpush.msra.mxu0 %v11659
      %11716 = vmatpush.msra.mxu0 %v11658
      %11717 = vmatpush.msra.mxu0 %v11657
      %11718 = vmatpush.msra.mxu0 %v11656
      %11719 = vmatpush.msra.mxu0 %v11655
      %11720 = vmatpush.msra.mxu0 %v11654
      %11721 = vmatpush.msra.mxu0 %v11653
      %11722 = vmatpush.msra.mxu0 %v11652
      %11723 = vmatpush.msra.mxu0 %v11651
      %11724 = vmatpush.msra.mxu0 %v11650
      %11725 = vmatpush.msra.mxu0 %v11649
      %11726 = vmatpush.msra.mxu0 %v11648
      %11727 = vmatpush.msra.mxu0 %v11647
      %11728 = vmatpush.msra.mxu0 %v11646
      %11729 = vmatpush.msra.mxu0 %v11645
      %11730 = vmatmul.f32.gmra.mxu0 %v11626
      %v11731 = vpop.f32.mrf.mxu0
      %v11732 = vadd.f32 %v11712, %v11731
      %11733 = vdwg.mxu0
      %11734 = vmatpush.msra.mxu0 %v11676
      %11735 = vmatpush.msra.mxu0 %v11675
      %11736 = vmatpush.msra.mxu0 %v11674
      %11737 = vmatpush.msra.mxu0 %v11673
      %11738 = vmatpush.msra.mxu0 %v11672
      %11739 = vmatpush.msra.mxu0 %v11671
      %11740 = vmatpush.msra.mxu0 %v11670
      %11741 = vmatpush.msra.mxu0 %v11669
      %11742 = vmatpush.msra.mxu0 %v11668
      %11743 = vmatpush.msra.mxu0 %v11667
      %11744 = vmatpush.msra.mxu0 %v11666
      %11745 = vmatpush.msra.mxu0 %v11665
      %11746 = vmatpush.msra.mxu0 %v11664
      %11747 = vmatpush.msra.mxu0 %v11663
      %11748 = vmatpush.msra.mxu0 %v11662
      %11749 = vmatpush.msra.mxu0 %v11661
      %11750 = vmatmul.f32.gmra.mxu0 %v11627
      %v11751 = vpop.f32.mrf.mxu0
      %v11752 = vadd.f32 %v11732, %v11751
      %11753 = vdwg.mxu0
      %11754 = vmatpush.msra.mxu0 %v11692
      %11755 = vmatpush.msra.mxu0 %v11691
      %11756 = vmatpush.msra.mxu0 %v11690
      %11757 = vmatpush.msra.mxu0 %v11689
      %11758 = vmatpush.msra.mxu0 %v11688
      %11759 = vmatpush.msra.mxu0 %v11687
      %11760 = vmatpush.msra.mxu0 %v11686
      %11761 = vmatpush.msra.mxu0 %v11685
      %11762 = vmatpush.msra.mxu0 %v11684
      %11763 = vmatpush.msra.mxu0 %v11683
      %11764 = vmatpush.msra.mxu0 %v11682
      %11765 = vmatpush.msra.mxu0 %v11681
      %11766 = vmatpush.msra.mxu0 %v11680
      %11767 = vmatpush.msra.mxu0 %v11679
      %11768 = vmatpush.msra.mxu0 %v11678
      %11769 = vmatpush.msra.mxu0 %v11677
      %11770 = vmatmul.f32.gmra.mxu0 %v11628
      %v11771 = vpop.f32.mrf.mxu0
      %v11772 = vadd.f32 %v11752, %v11771
      %11773 = vdwg.mxu0
      %v11774 = vlaneseq
      %v11775 = vand.u32 %v11774, 127
      %vm11776 = vcmp.lt.s32.totalorder %v11775, 6
      %v11777 = vsel %vm11776, %v11772, -1e+30
      %vm11778 = vcmask 49152
      %v11779 = vsel %vm11778, %v11777, -inf
      %11780 = vmax.xlane.f32.xlu0 %v11779
      %v11781 = vpop.xlane.xlu0 %11780
      %v11782 = vsub.f32 %v11777, %v11781
      %v11783 = vmul.f32 %v11782, 1.442695
      %v11784 = vpow.pop %v11783
      %v11785 = vsel %vm11778, %v11784, 0.0
      %11786 = vadd.xlane.f32.xlu0 %v11785
      %v11787 = vpop.xlane.xlu0 %11786
      %v11788 = vrcp.pop %v11787
      %v11789 = vmul.f32 %v11787, %v11788
      %v11790 = vsub.f32 1.0, %v11789
      %v11791 = vmul.f32 %v11788, %v11790
      %v11792 = vadd.f32 %v11788, %v11791
      %vm11793 = vweird.f32 %v11787
      %vm11794 = vweird.f32 %v11788
      %vm11795 = vmor %vm11793, %vm11794
      %v11796 = vsel %vm11795, %v11788, %v11792
      %v11797 = vand.u32 2147483647, %v11787
      %vm11798 = vcmp.eq.f32.partialorder %v11797, 8.507059e+37
      %v11799 = vand.u32 %v11787, 2147483648
      %v11800 = vor.u32 1.1754944e-38, %v11799
      %v11801 = vsel %vm11798, %v11800, %v11796
      %v11802 = vmul.f32 %v11784, %v11801
      %v11803 = vsel %vm11776, %v11802, %v11772
      %11804 = vst.msk [vmem:[%s490] sm:$0x1] %vm11778, %v11803
      %p11805 = scmp.lt.s32.totalorder %s26, 1
      %s11806 = scalar_select %p11805, %s26, 1
      %s11807 = scalar_lea.vmem %s15, %s11806
      // Predicated region
      $region81: #{a2c_cnn_forward.1} parent=79 // pred_check
        %p11808 = pneg %p364
      $region82: #{a2c_cnn_forward.1} parent=79 // pred_check_branch
        %11810 = sbr.rel (%p11808) target = $region84
      $region83: #{a2c_cnn_forward.1} parent=79 // pred_region
        _
      $region84: #{a2c_cnn_forward.1} parent=79 // pred_fallthru
        _
    $region80: #{a2c_cnn_forward.1} parent=5 // pred_fallthru
      _
    %p11811 = scmp.le.s32.totalorder 2, %s21
    // Predicated region
    $region85: #{a2c_cnn_forward.1} parent=5 // pred_check
      %p11812 = pneg %p11811
    $region86: #{a2c_cnn_forward.1} parent=5 // pred_check_branch
      %11814 = sbr.rel (%p11812) target = $region88
    $region87: #{a2c_cnn_forward.1} parent=5 // pred_region
      %s11815 = ssub.s32 %s21, 2
      // Predicated region
      $region89: #{a2c_cnn_forward.1} parent=87 // pred_check
        %p11816 = pneg %p370
      $region90: #{a2c_cnn_forward.1} parent=87 // pred_check_branch
        %11818 = sbr.rel (%p11816) target = $region92
      $region91: #{a2c_cnn_forward.1} parent=87 // pred_region
        %p11819 = scmp.lt.s32.totalorder %s27, 1
        %s11820 = scalar_select %p11819, %s27, 1
        %s11821 = scalar_lea.vmem %s15, %s11820
      $region92: #{a2c_cnn_forward.1} parent=87 // pred_fallthru
        _
    $region88: #{a2c_cnn_forward.1} parent=5 // pred_fallthru
      _
  $region6: #{a2c_cnn_forward.1} parent=0 // loop_footer
    %s25 = sadd.s32 1, %s21
  $region7: #{a2c_cnn_forward.1} parent=0 // loop_footer_branch
    %20 = sbr.rel target = $region3
  $region8: #{a2c_cnn_forward.1} parent=0 // loop_exit
    _

</llo_original>
